<compile_context>
chip_gen: v6e
topology: v6e:2x2x1
jax: 0.10.0
libtpu: 0.0.40
codegen_flags: <defaults>
</compile_context>

<pallas_src>
import jax
import jax.numpy as jnp
from jax import lax
from jax.experimental import pallas as pl
from jax.experimental.pallas import tpu as pltpu

GROUPS = 32
EPS = 1e-6


def _group_norm_swish(h, gamma, beta, m):
    # h: (HW, C) f32, gamma/beta: (1, C) f32, m: (C, G) one-hot group membership.
    hw, c = h.shape
    g = m.shape[1]
    cnt = float(hw * (c // g))
    s = jnp.sum(h, axis=0, keepdims=True)                       # (1, C)
    s2 = jnp.sum(h * h, axis=0, keepdims=True)                  # (1, C)
    sg = jnp.dot(s, m, preferred_element_type=jnp.float32)      # (1, G)
    s2g = jnp.dot(s2, m, preferred_element_type=jnp.float32)    # (1, G)
    mean_g = sg / cnt
    var_g = jnp.maximum(s2g / cnt - mean_g * mean_g, 0.0)       # clamp (cancellation)
    inv_g = lax.rsqrt(var_g + EPS)
    dn = (((1,), (1,)), ((), ()))                                # contract G -> (1, C)
    mean_c = lax.dot_general(mean_g, m, dn, preferred_element_type=jnp.float32)
    inv_c = lax.dot_general(inv_g, m, dn, preferred_element_type=jnp.float32)
    y = (h - mean_c) * inv_c * gamma + beta
    return y * jax.nn.sigmoid(y)                                 # swish


def _conv3x3(h, pad_ref, w_ref, bias, not_left, not_right, HW, W, PW):
    # h: (HW, Ci) f32.  pad_ref: (2*PW + HW, Ci) f32 VMEM halo scratch.
    # w_ref: (9, Ci, Co) bf16 VMEM ref.  bias: (1, Co) f32.
    ci = pad_ref.shape[1]
    co = w_ref.shape[-1]

    # Zero the row halos (cheap: 2*PW rows) and write the interior.
    halo = jnp.zeros((PW, ci), pad_ref.dtype)
    pad_ref[pl.ds(0, PW), :] = halo
    pad_ref[pl.ds(PW + HW, PW), :] = halo
    pad_ref[pl.ds(PW, HW), :] = h

    acc = jnp.zeros((HW, co), jnp.float32)
    for k in range(9):
        dr = k // 3 - 1
        dc = k % 3 - 1
        # Row shifts come from the zero-padded halo; only column wrap-around
        # needs masking (dc != 0 taps).
        tap = pad_ref[pl.ds(PW + dr * W + dc, HW), :]
        if dc == -1:
            tap = jnp.where(not_left, tap, 0.0)
        elif dc == 1:
            tap = jnp.where(not_right, tap, 0.0)
        acc = acc + jnp.dot(tap.astype(jnp.bfloat16), w_ref[k],
                            preferred_element_type=jnp.float32)
    return acc + bias


def _make_kernel(H, W, PW, use_shortcut):
    HW = H * W

    def kernel(x_ref, g1_ref, bn1_ref, w1_ref, b1_ref,
               g2_ref, bn2_ref, w2_ref, b2_ref, m1_ref, m2_ref, *rest):
        if use_shortcut:
            ws_ref, bs_ref, o_ref, pad1_ref, pad2_ref = rest
        else:
            o_ref, pad1_ref, pad2_ref = rest
            ws_ref = bs_ref = None

        # Hoisted column-edge masks, shared by both convs.
        col = lax.broadcasted_iota(jnp.int32, (HW, 1), 0) % W
        not_left = col != 0            # tap dc = -1 reads col-1
        not_right = col != (W - 1)     # tap dc = +1 reads col+1

        x = x_ref[0].astype(jnp.float32)                           # (HW, Cin)

        h = _group_norm_swish(x, g1_ref[...], bn1_ref[...], m1_ref[...])
        h = _conv3x3(h, pad1_ref, w1_ref, b1_ref[...], not_left, not_right, HW, W, PW)
        h = _group_norm_swish(h, g2_ref[...], bn2_ref[...], m2_ref[...])
        h = _conv3x3(h, pad2_ref, w2_ref, b2_ref[...], not_left, not_right, HW, W, PW)

        if use_shortcut:
            sc = jnp.dot(x.astype(jnp.bfloat16), ws_ref[...],
                         preferred_element_type=jnp.float32) + bs_ref[...]
        else:
            sc = x
        o_ref[0] = (sc + h).astype(o_ref.dtype)

    return kernel


def _group_matrix(c, g):
    cg = c // g
    return (jnp.arange(c)[:, None] // cg == jnp.arange(g)[None, :]).astype(jnp.float32)


def resnet_block_pallas(x_nchw, params):
    N, Cin, H, W = x_nchw.shape
    Cout = params["w1"].shape[-1]
    use_shortcut = Cin != Cout
    HW = H * W
    PW = W + 8                      # halo rows front/back (>= W+1; 8-aligned if W%8==0)
    PAD_ROWS = HW + 2 * PW

    x = jnp.transpose(x_nchw, (0, 2, 3, 1)).reshape(N, HW, Cin)
    m1 = _group_matrix(Cin, GROUPS)
    m2 = _group_matrix(Cout, GROUPS)

    bf16 = jnp.bfloat16
    w1 = params["w1"].astype(bf16)
    w2 = params["w2"].astype(bf16)

    kern = _make_kernel(H=H, W=W, PW=PW, use_shortcut=use_shortcut)
    const2 = lambda n: (0, 0)
    const3 = lambda n: (0, 0, 0)

    in_specs = [
        pl.BlockSpec((1, HW, Cin), lambda n: (n, 0, 0)),     # x
        pl.BlockSpec((1, Cin), const2),                      # norm1 gamma
        pl.BlockSpec((1, Cin), const2),                      # norm1 beta
        pl.BlockSpec((9, Cin, Cout), const3),                # conv1 weight (bf16)
        pl.BlockSpec((1, Cout), const2),                     # conv1 bias
        pl.BlockSpec((1, Cout), const2),                     # norm2 gamma
        pl.BlockSpec((1, Cout), const2),                     # norm2 beta
        pl.BlockSpec((9, Cout, Cout), const3),               # conv2 weight (bf16)
        pl.BlockSpec((1, Cout), const2),                     # conv2 bias
        pl.BlockSpec((Cin, GROUPS), const2),                 # group matrix 1
        pl.BlockSpec((Cout, GROUPS), const2),                # group matrix 2
    ]
    args = [x, params["g1"], params["bn1"], w1, params["b1"],
            params["g2"], params["bn2"], w2, params["b2"], m1, m2]
    if use_shortcut:
        # Only DMA the nin_shortcut params when they are actually used.
        in_specs += [pl.BlockSpec((Cin, Cout), const2),      # shortcut weight (bf16)
                     pl.BlockSpec((1, Cout), const2)]        # shortcut bias
        args += [params["ws"].astype(bf16), params["bs"]]

    grid_spec = pltpu.PrefetchScalarGridSpec(
        num_scalar_prefetch=0,
        grid=(N,),
        in_specs=in_specs,
        out_specs=pl.BlockSpec((1, HW, Cout), lambda n: (n, 0, 0)),
        scratch_shapes=[pltpu.VMEM((PAD_ROWS, Cin), jnp.float32),
                        pltpu.VMEM((PAD_ROWS, Cout), jnp.float32)],
    )

    out = pl.pallas_call(
        kern,
        out_shape=jax.ShapeDtypeStruct((N, HW, Cout), x_nchw.dtype),
        grid_spec=grid_spec,
        compiler_params=pltpu.CompilerParams(
            dimension_semantics=("parallel",),
            vmem_limit_bytes=48 * 1024 * 1024),
    )(*args)

    return jnp.transpose(out.reshape(N, H, W, Cout), (0, 3, 1, 2))


def init_params(key, cin, cout):
    ks = jax.random.split(key, 10)
    return {
        "g1": 1.0 + 0.1 * jax.random.normal(ks[0], (1, cin), jnp.float32),
        "bn1": 0.1 * jax.random.normal(ks[1], (1, cin), jnp.float32),
        "w1": jax.random.normal(ks[2], (9, cin, cout), jnp.float32) / (3.0 * cin ** 0.5),
        "b1": 0.05 * jax.random.normal(ks[3], (1, cout), jnp.float32),
        "g2": 1.0 + 0.1 * jax.random.normal(ks[4], (1, cout), jnp.float32),
        "bn2": 0.1 * jax.random.normal(ks[5], (1, cout), jnp.float32),
        "w2": jax.random.normal(ks[6], (9, cout, cout), jnp.float32) / (3.0 * cout ** 0.5),
        "b2": 0.05 * jax.random.normal(ks[7], (1, cout), jnp.float32),
        # nin_shortcut params (only used when cin != cout).
        "ws": jax.random.normal(ks[8], (cin, cout), jnp.float32) / (cin ** 0.5),
        "bs": 0.05 * jax.random.normal(ks[9], (1, cout), jnp.float32),
    }


def resnet_block_ref(x_nchw, params):
    """Pure-JAX f32 reference matching the PyTorch forward (NCHW in/out)."""
    N, Cin, H, W = x_nchw.shape
    Cout = params["w1"].shape[-1]
    x = jnp.transpose(x_nchw, (0, 2, 3, 1)).astype(jnp.float32)

    def gn(h, gamma, beta, c):
        cg = c // GROUPS
        hg = h.reshape(N, H, W, GROUPS, cg)
        mean = hg.mean(axis=(1, 2, 4), keepdims=True)
        var = hg.var(axis=(1, 2, 4), keepdims=True)
        hn = ((hg - mean) / jnp.sqrt(var + EPS)).reshape(N, H, W, c)
        return hn * gamma.reshape(c) + beta.reshape(c)

    def conv(h, w9, b):
        ci, co = w9.shape[1], w9.shape[2]
        w = w9.reshape(3, 3, ci, co)
        return lax.conv_general_dilated(
            h, w, window_strides=(1, 1), padding="SAME",
            dimension_numbers=("NHWC", "HWIO", "NHWC")) + b.reshape(co)

    def sw(h):
        return h * jax.nn.sigmoid(h)

    h = conv(sw(gn(x, params["g1"], params["bn1"], Cin)), params["w1"], params["b1"])
    h = conv(sw(gn(h, params["g2"], params["bn2"], Cout)), params["w2"], params["b2"])
    if Cin != Cout:
        x = x @ params["ws"] + params["bs"].reshape(Cout)
    return jnp.transpose(x + h, (0, 3, 1, 2))


if __name__ == "__main__":
    key = jax.random.PRNGKey(0)

    # GroupNorm(32) requires channels % 32 == 0.
    # Config 1: in != out -> exercises nin_shortcut; Cout=128 gives lane-dense stores.
    # Config 2: in == out -> identity residual, ws/bs never passed to the kernel.
    configs = [(2, 64, 128, 16, 16), (2, 64, 64, 16, 16)]

    for (N, Cin, Cout, H, W) in configs:
        key, kx, kp = jax.random.split(key, 3)
        x = jax.random.normal(kx, (N, Cin, H, W), dtype=jnp.float32)
        params = init_params(kp, Cin, Cout)

        out = jax.block_until_ready(resnet_block_pallas(x, params))
        ref = resnet_block_ref(x, params)

        assert out.shape == (N, Cout, H, W)
        max_err = float(jnp.max(jnp.abs(out - ref)))
        # bf16 MXU operands with f32 accumulation: allow ~1e-2 level deviation.
        assert max_err < 2e-2, f"max abs err = {max_err} (Cin={Cin}, Cout={Cout})"

    print("KERNEL_OK")
</pallas_src>

<mosaic_0001>
module attributes {stable_mosaic.version = 11 : i64} {
  func.func @kernel(%arg0: i32, %arg1: memref<1x256x64xf32, #tpu.memory_space<vmem>>, %arg2: memref<1x64xf32, #tpu.memory_space<vmem>>, %arg3: memref<1x64xf32, #tpu.memory_space<vmem>>, %arg4: memref<9x64x128xbf16, #tpu.memory_space<vmem>>, %arg5: memref<1x128xf32, #tpu.memory_space<vmem>>, %arg6: memref<1x128xf32, #tpu.memory_space<vmem>>, %arg7: memref<1x128xf32, #tpu.memory_space<vmem>>, %arg8: memref<9x128x128xbf16, #tpu.memory_space<vmem>>, %arg9: memref<1x128xf32, #tpu.memory_space<vmem>>, %arg10: memref<64x32xf32, #tpu.memory_space<vmem>>, %arg11: memref<128x32xf32, #tpu.memory_space<vmem>>, %arg12: memref<64x128xbf16, #tpu.memory_space<vmem>>, %arg13: memref<1x128xf32, #tpu.memory_space<vmem>>, %arg14: memref<1x256x128xf32, #tpu.memory_space<vmem>>, %arg15: memref<304x64xf32, #tpu.memory_space<vmem>>, %arg16: memref<304x128xf32, #tpu.memory_space<vmem>>) attributes {dimension_semantics = [#tpu.dimension_semantics<parallel>], iteration_bounds = array<i64: 2>, scalar_prefetch = 0 : i64, scratch_operands = 2 : i64, tpu.core_type = #tpu.core_type<tc>, window_params = [{transform_indices = @transform_0, window_bounds = array<i64: 1, 256, 64>}, {pipeline_mode = #tpu.pipeline_mode<synchronous>, transform_indices = @transform_1, window_bounds = array<i64: 1, 64>}, {pipeline_mode = #tpu.pipeline_mode<synchronous>, transform_indices = @transform_2, window_bounds = array<i64: 1, 64>}, {pipeline_mode = #tpu.pipeline_mode<synchronous>, transform_indices = @transform_3, window_bounds = array<i64: 9, 64, 128>}, {pipeline_mode = #tpu.pipeline_mode<synchronous>, transform_indices = @transform_4, window_bounds = array<i64: 1, 128>}, {pipeline_mode = #tpu.pipeline_mode<synchronous>, transform_indices = @transform_5, window_bounds = array<i64: 1, 128>}, {pipeline_mode = #tpu.pipeline_mode<synchronous>, transform_indices = @transform_6, window_bounds = array<i64: 1, 128>}, {pipeline_mode = #tpu.pipeline_mode<synchronous>, transform_indices = @transform_7, window_bounds = array<i64: 9, 128, 128>}, {pipeline_mode = #tpu.pipeline_mode<synchronous>, transform_indices = @transform_8, window_bounds = array<i64: 1, 128>}, {pipeline_mode = #tpu.pipeline_mode<synchronous>, transform_indices = @transform_9, window_bounds = array<i64: 64, 32>}, {pipeline_mode = #tpu.pipeline_mode<synchronous>, transform_indices = @transform_10, window_bounds = array<i64: 128, 32>}, {pipeline_mode = #tpu.pipeline_mode<synchronous>, transform_indices = @transform_11, window_bounds = array<i64: 64, 128>}, {pipeline_mode = #tpu.pipeline_mode<synchronous>, transform_indices = @transform_12, window_bounds = array<i64: 1, 128>}, {transform_indices = @transform_13, window_bounds = array<i64: 1, 256, 128>}]} {
    %0 = tpu.iota {dimensions = array<i32: 0>} : vector<256x1xi32>
    %c16_i32 = arith.constant 16 : i32
    %c0_i32 = arith.constant 0 : i32
    %1 = arith.cmpi eq, %c16_i32, %c0_i32 : i32
    %c1_i32 = arith.constant 1 : i32
    %2 = arith.select %1, %c1_i32, %c16_i32 : i32
    %3 = vector.broadcast %2 : i32 to vector<256x1xi32>
    %4 = arith.remsi %0, %3 : vector<256x1xi32>
    %c0_i32_0 = arith.constant 0 : i32
    %5 = vector.broadcast %c0_i32_0 : i32 to vector<256x1xi32>
    %6 = arith.cmpi ne, %4, %5 : vector<256x1xi32>
    %c0_i32_1 = arith.constant 0 : i32
    %7 = vector.broadcast %c0_i32_1 : i32 to vector<256x1xi32>
    %8 = arith.cmpi slt, %4, %7 : vector<256x1xi32>
    %c0_i32_2 = arith.constant 0 : i32
    %9 = arith.cmpi slt, %2, %c0_i32_2 : i32
    %10 = vector.broadcast %9 : i1 to vector<256x1xi1>
    %11 = vector.broadcast %10 : vector<256x1xi1> to vector<256x1xi1>
    %12 = arith.xori %8, %11 : vector<256x1xi1>
    %13 = arith.andi %12, %6 : vector<256x1xi1>
    %14 = vector.broadcast %2 : i32 to vector<256x1xi32>
    %15 = arith.addi %4, %14 : vector<256x1xi32>
    %16 = arith.select %13, %15, %4 : vector<256x1xi1>, vector<256x1xi32>
    %c0_i32_3 = arith.constant 0 : i32
    %17 = vector.broadcast %c0_i32_3 : i32 to vector<256x1xi32>
    %18 = arith.cmpi ne, %16, %17 : vector<256x1xi32>
    %c15_i32 = arith.constant 15 : i32
    %19 = vector.broadcast %c15_i32 : i32 to vector<256x1xi32>
    %20 = arith.cmpi ne, %16, %19 : vector<256x1xi32>
    %c0 = arith.constant 0 : index
    %c0_4 = arith.constant 0 : index
    %c0_5 = arith.constant 0 : index
    %21 = vector.load %arg1[%c0, %c0_4, %c0_5] : memref<1x256x64xf32, #tpu.memory_space<vmem>>, vector<1x256x64xf32>
    %22 = vector.shape_cast %21 : vector<1x256x64xf32> to vector<256x64xf32>
    %c0_6 = arith.constant 0 : index
    %c0_7 = arith.constant 0 : index
    %23 = vector.load %arg2[%c0_6, %c0_7] : memref<1x64xf32, #tpu.memory_space<vmem>>, vector<1x64xf32>
    %c0_8 = arith.constant 0 : index
    %c0_9 = arith.constant 0 : index
    %24 = vector.load %arg3[%c0_8, %c0_9] : memref<1x64xf32, #tpu.memory_space<vmem>>, vector<1x64xf32>
    %c0_10 = arith.constant 0 : index
    %c0_11 = arith.constant 0 : index
    %25 = vector.load %arg10[%c0_10, %c0_11] : memref<64x32xf32, #tpu.memory_space<vmem>>, vector<64x32xf32>
    %cst = arith.constant dense<0.000000e+00> : vector<64xf32>
    %26 = vector.multi_reduction <add>, %22, %cst [0] : vector<256x64xf32> to vector<64xf32>
    %27 = vector.shape_cast %26 : vector<64xf32> to vector<1x64xf32>
    %28 = arith.mulf %22, %22 : vector<256x64xf32>
    %cst_12 = arith.constant dense<0.000000e+00> : vector<64xf32>
    %29 = vector.multi_reduction <add>, %28, %cst_12 [0] : vector<256x64xf32> to vector<64xf32>
    %30 = vector.shape_cast %29 : vector<64xf32> to vector<1x64xf32>
    %cst_13 = arith.constant dense<0.000000e+00> : vector<1x32xf32>
    %31 = tpu.matmul %27, %25, %cst_13 {dimension_numbers = #tpu.dot_dimension_numbers<[1], [0], [0], [1], [0, 0, 1, 1], [], []>} : vector<1x64xf32>, vector<64x32xf32>, vector<1x32xf32> -> vector<1x32xf32>
    %cst_14 = arith.constant dense<0.000000e+00> : vector<1x32xf32>
    %32 = tpu.matmul %30, %25, %cst_14 {dimension_numbers = #tpu.dot_dimension_numbers<[1], [0], [0], [1], [0, 0, 1, 1], [], []>} : vector<1x64xf32>, vector<64x32xf32>, vector<1x32xf32> -> vector<1x32xf32>
    %cst_15 = arith.constant 5.120000e+02 : f32
    %33 = vector.broadcast %cst_15 : f32 to vector<1x32xf32>
    %34 = arith.divf %31, %33 : vector<1x32xf32>
    %cst_16 = arith.constant 5.120000e+02 : f32
    %35 = vector.broadcast %cst_16 : f32 to vector<1x32xf32>
    %36 = arith.divf %32, %35 : vector<1x32xf32>
    %37 = arith.mulf %34, %34 : vector<1x32xf32>
    %38 = arith.subf %36, %37 : vector<1x32xf32>
    %cst_17 = arith.constant 0.000000e+00 : f32
    %39 = vector.broadcast %cst_17 : f32 to vector<1x32xf32>
    %40 = arith.maximumf %38, %39 : vector<1x32xf32>
    %cst_18 = arith.constant 9.99999997E-7 : f32
    %41 = vector.broadcast %cst_18 : f32 to vector<1x32xf32>
    %42 = arith.addf %40, %41 : vector<1x32xf32>
    %43 = math.rsqrt %42 : vector<1x32xf32>
    %cst_19 = arith.constant dense<0.000000e+00> : vector<1x64xf32>
    %44 = tpu.matmul %34, %25, %cst_19 {dimension_numbers = #tpu.dot_dimension_numbers<[1], [1], [0], [0], [0, 0, 1, 0], [], []>} : vector<1x32xf32>, vector<64x32xf32>, vector<1x64xf32> -> vector<1x64xf32>
    %cst_20 = arith.constant dense<0.000000e+00> : vector<1x64xf32>
    %45 = tpu.matmul %43, %25, %cst_20 {dimension_numbers = #tpu.dot_dimension_numbers<[1], [1], [0], [0], [0, 0, 1, 0], [], []>} : vector<1x32xf32>, vector<64x32xf32>, vector<1x64xf32> -> vector<1x64xf32>
    %46 = vector.broadcast %44 : vector<1x64xf32> to vector<256x64xf32>
    %47 = arith.subf %22, %46 : vector<256x64xf32>
    %48 = vector.broadcast %45 : vector<1x64xf32> to vector<256x64xf32>
    %49 = arith.mulf %47, %48 : vector<256x64xf32>
    %50 = vector.broadcast %23 : vector<1x64xf32> to vector<256x64xf32>
    %51 = arith.mulf %49, %50 : vector<256x64xf32>
    %52 = vector.broadcast %24 : vector<1x64xf32> to vector<256x64xf32>
    %53 = arith.addf %51, %52 : vector<256x64xf32>
    %54 = arith.negf %53 : vector<256x64xf32>
    %55 = math.exp %54 : vector<256x64xf32>
    %cst_21 = arith.constant 1.000000e+00 : f32
    %56 = vector.broadcast %cst_21 : f32 to vector<256x64xf32>
    %57 = arith.addf %56, %55 : vector<256x64xf32>
    %58 = arith.divf %56, %57 : vector<256x64xf32>
    %59 = arith.mulf %53, %58 : vector<256x64xf32>
    %c0_22 = arith.constant 0 : index
    %c0_23 = arith.constant 0 : index
    %60 = vector.load %arg5[%c0_22, %c0_23] : memref<1x128xf32, #tpu.memory_space<vmem>>, vector<1x128xf32>
    %cst_24 = arith.constant 0.000000e+00 : f32
    %61 = vector.broadcast %cst_24 : f32 to vector<24x64xf32>
    %c0_25 = arith.constant 0 : index
    %c0_26 = arith.constant 0 : index
    %62 = vector.load %arg15[%c0_25, %c0_26] : memref<304x64xf32, #tpu.memory_space<vmem>>, vector<24x64xf32>
    tpu.vector_store %arg15[%c0_25, %c0_26], %61 {strides = array<i32>} : memref<304x64xf32, #tpu.memory_space<vmem>>, vector<24x64xf32>,
    %c280 = arith.constant 280 : index
    %c0_27 = arith.constant 0 : index
    %63 = vector.load %arg15[%c280, %c0_27] : memref<304x64xf32, #tpu.memory_space<vmem>>, vector<24x64xf32>
    tpu.vector_store %arg15[%c280, %c0_27], %61 {strides = array<i32>} : memref<304x64xf32, #tpu.memory_space<vmem>>, vector<24x64xf32>,
    %c24 = arith.constant 24 : index
    %c0_28 = arith.constant 0 : index
    %64 = vector.load %arg15[%c24, %c0_28] : memref<304x64xf32, #tpu.memory_space<vmem>>, vector<256x64xf32>
    tpu.vector_store %arg15[%c24, %c0_28], %59 {strides = array<i32>} : memref<304x64xf32, #tpu.memory_space<vmem>>, vector<256x64xf32>,
    %cst_29 = arith.constant 0.000000e+00 : f32
    %65 = vector.broadcast %cst_29 : f32 to vector<256x128xf32>
    %c7 = arith.constant 7 : index
    %c0_30 = arith.constant 0 : index
    %66 = vector.load %arg15[%c7, %c0_30] : memref<304x64xf32, #tpu.memory_space<vmem>>, vector<256x64xf32>
    %cst_31 = arith.constant 0.000000e+00 : f32
    %67 = vector.shape_cast %18 : vector<256x1xi1> to vector<256x1xi1>
    %68 = vector.broadcast %67 : vector<256x1xi1> to vector<256x64xi1>
    %69 = vector.broadcast %cst_31 : f32 to vector<256x64xf32>
    %70 = arith.select %68, %66, %69 : vector<256x64xi1>, vector<256x64xf32>
    %71 = arith.truncf %70 : vector<256x64xf32> to vector<256x64xbf16>
    %c0_32 = arith.constant 0 : index
    %c0_33 = arith.constant 0 : index
    %c0_34 = arith.constant 0 : index
    %72 = vector.load %arg4[%c0_32, %c0_33, %c0_34] : memref<9x64x128xbf16, #tpu.memory_space<vmem>>, vector<1x64x128xbf16>
    %73 = vector.shape_cast %72 : vector<1x64x128xbf16> to vector<64x128xbf16>
    %cst_35 = arith.constant dense<0.000000e+00> : vector<256x128xf32>
    %74 = tpu.matmul %71, %73, %cst_35 {dimension_numbers = #tpu.dot_dimension_numbers<[1], [0], [0], [1], [0, 0, 1, 1], [], []>} : vector<256x64xbf16>, vector<64x128xbf16>, vector<256x128xf32> -> vector<256x128xf32>
    %75 = arith.addf %65, %74 : vector<256x128xf32>
    %c8 = arith.constant 8 : index
    %c0_36 = arith.constant 0 : index
    %76 = vector.load %arg15[%c8, %c0_36] : memref<304x64xf32, #tpu.memory_space<vmem>>, vector<256x64xf32>
    %77 = arith.truncf %76 : vector<256x64xf32> to vector<256x64xbf16>
    %c1 = arith.constant 1 : index
    %c0_37 = arith.constant 0 : index
    %c0_38 = arith.constant 0 : index
    %78 = vector.load %arg4[%c1, %c0_37, %c0_38] : memref<9x64x128xbf16, #tpu.memory_space<vmem>>, vector<1x64x128xbf16>
    %79 = vector.shape_cast %78 : vector<1x64x128xbf16> to vector<64x128xbf16>
    %cst_39 = arith.constant dense<0.000000e+00> : vector<256x128xf32>
    %80 = tpu.matmul %77, %79, %cst_39 {dimension_numbers = #tpu.dot_dimension_numbers<[1], [0], [0], [1], [0, 0, 1, 1], [], []>} : vector<256x64xbf16>, vector<64x128xbf16>, vector<256x128xf32> -> vector<256x128xf32>
    %81 = arith.addf %75, %80 : vector<256x128xf32>
    %c9 = arith.constant 9 : index
    %c0_40 = arith.constant 0 : index
    %82 = vector.load %arg15[%c9, %c0_40] : memref<304x64xf32, #tpu.memory_space<vmem>>, vector<256x64xf32>
    %cst_41 = arith.constant 0.000000e+00 : f32
    %83 = vector.shape_cast %20 : vector<256x1xi1> to vector<256x1xi1>
    %84 = vector.broadcast %83 : vector<256x1xi1> to vector<256x64xi1>
    %85 = vector.broadcast %cst_41 : f32 to vector<256x64xf32>
    %86 = arith.select %84, %82, %85 : vector<256x64xi1>, vector<256x64xf32>
    %87 = arith.truncf %86 : vector<256x64xf32> to vector<256x64xbf16>
    %c2 = arith.constant 2 : index
    %c0_42 = arith.constant 0 : index
    %c0_43 = arith.constant 0 : index
    %88 = vector.load %arg4[%c2, %c0_42, %c0_43] : memref<9x64x128xbf16, #tpu.memory_space<vmem>>, vector<1x64x128xbf16>
    %89 = vector.shape_cast %88 : vector<1x64x128xbf16> to vector<64x128xbf16>
    %cst_44 = arith.constant dense<0.000000e+00> : vector<256x128xf32>
    %90 = tpu.matmul %87, %89, %cst_44 {dimension_numbers = #tpu.dot_dimension_numbers<[1], [0], [0], [1], [0, 0, 1, 1], [], []>} : vector<256x64xbf16>, vector<64x128xbf16>, vector<256x128xf32> -> vector<256x128xf32>
    %91 = arith.addf %81, %90 : vector<256x128xf32>
    %c23 = arith.constant 23 : index
    %c0_45 = arith.constant 0 : index
    %92 = vector.load %arg15[%c23, %c0_45] : memref<304x64xf32, #tpu.memory_space<vmem>>, vector<256x64xf32>
    %cst_46 = arith.constant 0.000000e+00 : f32
    %93 = vector.shape_cast %18 : vector<256x1xi1> to vector<256x1xi1>
    %94 = vector.broadcast %93 : vector<256x1xi1> to vector<256x64xi1>
    %95 = vector.broadcast %cst_46 : f32 to vector<256x64xf32>
    %96 = arith.select %94, %92, %95 : vector<256x64xi1>, vector<256x64xf32>
    %97 = arith.truncf %96 : vector<256x64xf32> to vector<256x64xbf16>
    %c3 = arith.constant 3 : index
    %c0_47 = arith.constant 0 : index
    %c0_48 = arith.constant 0 : index
    %98 = vector.load %arg4[%c3, %c0_47, %c0_48] : memref<9x64x128xbf16, #tpu.memory_space<vmem>>, vector<1x64x128xbf16>
    %99 = vector.shape_cast %98 : vector<1x64x128xbf16> to vector<64x128xbf16>
    %cst_49 = arith.constant dense<0.000000e+00> : vector<256x128xf32>
    %100 = tpu.matmul %97, %99, %cst_49 {dimension_numbers = #tpu.dot_dimension_numbers<[1], [0], [0], [1], [0, 0, 1, 1], [], []>} : vector<256x64xbf16>, vector<64x128xbf16>, vector<256x128xf32> -> vector<256x128xf32>
    %101 = arith.addf %91, %100 : vector<256x128xf32>
    %c24_50 = arith.constant 24 : index
    %c0_51 = arith.constant 0 : index
    %102 = vector.load %arg15[%c24_50, %c0_51] : memref<304x64xf32, #tpu.memory_space<vmem>>, vector<256x64xf32>
    %103 = arith.truncf %102 : vector<256x64xf32> to vector<256x64xbf16>
    %c4 = arith.constant 4 : index
    %c0_52 = arith.constant 0 : index
    %c0_53 = arith.constant 0 : index
    %104 = vector.load %arg4[%c4, %c0_52, %c0_53] : memref<9x64x128xbf16, #tpu.memory_space<vmem>>, vector<1x64x128xbf16>
    %105 = vector.shape_cast %104 : vector<1x64x128xbf16> to vector<64x128xbf16>
    %cst_54 = arith.constant dense<0.000000e+00> : vector<256x128xf32>
    %106 = tpu.matmul %103, %105, %cst_54 {dimension_numbers = #tpu.dot_dimension_numbers<[1], [0], [0], [1], [0, 0, 1, 1], [], []>} : vector<256x64xbf16>, vector<64x128xbf16>, vector<256x128xf32> -> vector<256x128xf32>
    %107 = arith.addf %101, %106 : vector<256x128xf32>
    %c25 = arith.constant 25 : index
    %c0_55 = arith.constant 0 : index
    %108 = vector.load %arg15[%c25, %c0_55] : memref<304x64xf32, #tpu.memory_space<vmem>>, vector<256x64xf32>
    %cst_56 = arith.constant 0.000000e+00 : f32
    %109 = vector.shape_cast %20 : vector<256x1xi1> to vector<256x1xi1>
    %110 = vector.broadcast %109 : vector<256x1xi1> to vector<256x64xi1>
    %111 = vector.broadcast %cst_56 : f32 to vector<256x64xf32>
    %112 = arith.select %110, %108, %111 : vector<256x64xi1>, vector<256x64xf32>
    %113 = arith.truncf %112 : vector<256x64xf32> to vector<256x64xbf16>
    %c5 = arith.constant 5 : index
    %c0_57 = arith.constant 0 : index
    %c0_58 = arith.constant 0 : index
    %114 = vector.load %arg4[%c5, %c0_57, %c0_58] : memref<9x64x128xbf16, #tpu.memory_space<vmem>>, vector<1x64x128xbf16>
    %115 = vector.shape_cast %114 : vector<1x64x128xbf16> to vector<64x128xbf16>
    %cst_59 = arith.constant dense<0.000000e+00> : vector<256x128xf32>
    %116 = tpu.matmul %113, %115, %cst_59 {dimension_numbers = #tpu.dot_dimension_numbers<[1], [0], [0], [1], [0, 0, 1, 1], [], []>} : vector<256x64xbf16>, vector<64x128xbf16>, vector<256x128xf32> -> vector<256x128xf32>
    %117 = arith.addf %107, %116 : vector<256x128xf32>
    %c39 = arith.constant 39 : index
    %c0_60 = arith.constant 0 : index
    %118 = vector.load %arg15[%c39, %c0_60] : memref<304x64xf32, #tpu.memory_space<vmem>>, vector<256x64xf32>
    %cst_61 = arith.constant 0.000000e+00 : f32
    %119 = vector.shape_cast %18 : vector<256x1xi1> to vector<256x1xi1>
    %120 = vector.broadcast %119 : vector<256x1xi1> to vector<256x64xi1>
    %121 = vector.broadcast %cst_61 : f32 to vector<256x64xf32>
    %122 = arith.select %120, %118, %121 : vector<256x64xi1>, vector<256x64xf32>
    %123 = arith.truncf %122 : vector<256x64xf32> to vector<256x64xbf16>
    %c6 = arith.constant 6 : index
    %c0_62 = arith.constant 0 : index
    %c0_63 = arith.constant 0 : index
    %124 = vector.load %arg4[%c6, %c0_62, %c0_63] : memref<9x64x128xbf16, #tpu.memory_space<vmem>>, vector<1x64x128xbf16>
    %125 = vector.shape_cast %124 : vector<1x64x128xbf16> to vector<64x128xbf16>
    %cst_64 = arith.constant dense<0.000000e+00> : vector<256x128xf32>
    %126 = tpu.matmul %123, %125, %cst_64 {dimension_numbers = #tpu.dot_dimension_numbers<[1], [0], [0], [1], [0, 0, 1, 1], [], []>} : vector<256x64xbf16>, vector<64x128xbf16>, vector<256x128xf32> -> vector<256x128xf32>
    %127 = arith.addf %117, %126 : vector<256x128xf32>
    %c40 = arith.constant 40 : index
    %c0_65 = arith.constant 0 : index
    %128 = vector.load %arg15[%c40, %c0_65] : memref<304x64xf32, #tpu.memory_space<vmem>>, vector<256x64xf32>
    %129 = arith.truncf %128 : vector<256x64xf32> to vector<256x64xbf16>
    %c7_66 = arith.constant 7 : index
    %c0_67 = arith.constant 0 : index
    %c0_68 = arith.constant 0 : index
    %130 = vector.load %arg4[%c7_66, %c0_67, %c0_68] : memref<9x64x128xbf16, #tpu.memory_space<vmem>>, vector<1x64x128xbf16>
    %131 = vector.shape_cast %130 : vector<1x64x128xbf16> to vector<64x128xbf16>
    %cst_69 = arith.constant dense<0.000000e+00> : vector<256x128xf32>
    %132 = tpu.matmul %129, %131, %cst_69 {dimension_numbers = #tpu.dot_dimension_numbers<[1], [0], [0], [1], [0, 0, 1, 1], [], []>} : vector<256x64xbf16>, vector<64x128xbf16>, vector<256x128xf32> -> vector<256x128xf32>
    %133 = arith.addf %127, %132 : vector<256x128xf32>
    %c41 = arith.constant 41 : index
    %c0_70 = arith.constant 0 : index
    %134 = vector.load %arg15[%c41, %c0_70] : memref<304x64xf32, #tpu.memory_space<vmem>>, vector<256x64xf32>
    %cst_71 = arith.constant 0.000000e+00 : f32
    %135 = vector.shape_cast %20 : vector<256x1xi1> to vector<256x1xi1>
    %136 = vector.broadcast %135 : vector<256x1xi1> to vector<256x64xi1>
    %137 = vector.broadcast %cst_71 : f32 to vector<256x64xf32>
    %138 = arith.select %136, %134, %137 : vector<256x64xi1>, vector<256x64xf32>
    %139 = arith.truncf %138 : vector<256x64xf32> to vector<256x64xbf16>
    %c8_72 = arith.constant 8 : index
    %c0_73 = arith.constant 0 : index
    %c0_74 = arith.constant 0 : index
    %140 = vector.load %arg4[%c8_72, %c0_73, %c0_74] : memref<9x64x128xbf16, #tpu.memory_space<vmem>>, vector<1x64x128xbf16>
    %141 = vector.shape_cast %140 : vector<1x64x128xbf16> to vector<64x128xbf16>
    %cst_75 = arith.constant dense<0.000000e+00> : vector<256x128xf32>
    %142 = tpu.matmul %139, %141, %cst_75 {dimension_numbers = #tpu.dot_dimension_numbers<[1], [0], [0], [1], [0, 0, 1, 1], [], []>} : vector<256x64xbf16>, vector<64x128xbf16>, vector<256x128xf32> -> vector<256x128xf32>
    %143 = arith.addf %133, %142 : vector<256x128xf32>
    %144 = vector.broadcast %60 : vector<1x128xf32> to vector<256x128xf32>
    %145 = arith.addf %143, %144 : vector<256x128xf32>
    %c0_76 = arith.constant 0 : index
    %c0_77 = arith.constant 0 : index
    %146 = vector.load %arg6[%c0_76, %c0_77] : memref<1x128xf32, #tpu.memory_space<vmem>>, vector<1x128xf32>
    %c0_78 = arith.constant 0 : index
    %c0_79 = arith.constant 0 : index
    %147 = vector.load %arg7[%c0_78, %c0_79] : memref<1x128xf32, #tpu.memory_space<vmem>>, vector<1x128xf32>
    %c0_80 = arith.constant 0 : index
    %c0_81 = arith.constant 0 : index
    %148 = vector.load %arg11[%c0_80, %c0_81] : memref<128x32xf32, #tpu.memory_space<vmem>>, vector<128x32xf32>
    %cst_82 = arith.constant dense<0.000000e+00> : vector<128xf32>
    %149 = vector.multi_reduction <add>, %145, %cst_82 [0] : vector<256x128xf32> to vector<128xf32>
    %150 = vector.shape_cast %149 : vector<128xf32> to vector<1x128xf32>
    %151 = arith.mulf %145, %145 : vector<256x128xf32>
    %cst_83 = arith.constant dense<0.000000e+00> : vector<128xf32>
    %152 = vector.multi_reduction <add>, %151, %cst_83 [0] : vector<256x128xf32> to vector<128xf32>
    %153 = vector.shape_cast %152 : vector<128xf32> to vector<1x128xf32>
    %cst_84 = arith.constant dense<0.000000e+00> : vector<1x32xf32>
    %154 = tpu.matmul %150, %148, %cst_84 {dimension_numbers = #tpu.dot_dimension_numbers<[1], [0], [0], [1], [0, 0, 1, 1], [], []>} : vector<1x128xf32>, vector<128x32xf32>, vector<1x32xf32> -> vector<1x32xf32>
    %cst_85 = arith.constant dense<0.000000e+00> : vector<1x32xf32>
    %155 = tpu.matmul %153, %148, %cst_85 {dimension_numbers = #tpu.dot_dimension_numbers<[1], [0], [0], [1], [0, 0, 1, 1], [], []>} : vector<1x128xf32>, vector<128x32xf32>, vector<1x32xf32> -> vector<1x32xf32>
    %cst_86 = arith.constant 1.024000e+03 : f32
    %156 = vector.broadcast %cst_86 : f32 to vector<1x32xf32>
    %157 = arith.divf %154, %156 : vector<1x32xf32>
    %cst_87 = arith.constant 1.024000e+03 : f32
    %158 = vector.broadcast %cst_87 : f32 to vector<1x32xf32>
    %159 = arith.divf %155, %158 : vector<1x32xf32>
    %160 = arith.mulf %157, %157 : vector<1x32xf32>
    %161 = arith.subf %159, %160 : vector<1x32xf32>
    %cst_88 = arith.constant 0.000000e+00 : f32
    %162 = vector.broadcast %cst_88 : f32 to vector<1x32xf32>
    %163 = arith.maximumf %161, %162 : vector<1x32xf32>
    %cst_89 = arith.constant 9.99999997E-7 : f32
    %164 = vector.broadcast %cst_89 : f32 to vector<1x32xf32>
    %165 = arith.addf %163, %164 : vector<1x32xf32>
    %166 = math.rsqrt %165 : vector<1x32xf32>
    %cst_90 = arith.constant dense<0.000000e+00> : vector<1x128xf32>
    %167 = tpu.matmul %157, %148, %cst_90 {dimension_numbers = #tpu.dot_dimension_numbers<[1], [1], [0], [0], [0, 0, 1, 0], [], []>} : vector<1x32xf32>, vector<128x32xf32>, vector<1x128xf32> -> vector<1x128xf32>
    %cst_91 = arith.constant dense<0.000000e+00> : vector<1x128xf32>
    %168 = tpu.matmul %166, %148, %cst_91 {dimension_numbers = #tpu.dot_dimension_numbers<[1], [1], [0], [0], [0, 0, 1, 0], [], []>} : vector<1x32xf32>, vector<128x32xf32>, vector<1x128xf32> -> vector<1x128xf32>
    %169 = vector.broadcast %167 : vector<1x128xf32> to vector<256x128xf32>
    %170 = arith.subf %145, %169 : vector<256x128xf32>
    %171 = vector.broadcast %168 : vector<1x128xf32> to vector<256x128xf32>
    %172 = arith.mulf %170, %171 : vector<256x128xf32>
    %173 = vector.broadcast %146 : vector<1x128xf32> to vector<256x128xf32>
    %174 = arith.mulf %172, %173 : vector<256x128xf32>
    %175 = vector.broadcast %147 : vector<1x128xf32> to vector<256x128xf32>
    %176 = arith.addf %174, %175 : vector<256x128xf32>
    %177 = arith.negf %176 : vector<256x128xf32>
    %178 = math.exp %177 : vector<256x128xf32>
    %cst_92 = arith.constant 1.000000e+00 : f32
    %179 = vector.broadcast %cst_92 : f32 to vector<256x128xf32>
    %180 = arith.addf %179, %178 : vector<256x128xf32>
    %181 = arith.divf %179, %180 : vector<256x128xf32>
    %182 = arith.mulf %176, %181 : vector<256x128xf32>
    %c0_93 = arith.constant 0 : index
    %c0_94 = arith.constant 0 : index
    %183 = vector.load %arg9[%c0_93, %c0_94] : memref<1x128xf32, #tpu.memory_space<vmem>>, vector<1x128xf32>
    %cst_95 = arith.constant 0.000000e+00 : f32
    %184 = vector.broadcast %cst_95 : f32 to vector<24x128xf32>
    %c0_96 = arith.constant 0 : index
    %c0_97 = arith.constant 0 : index
    %185 = vector.load %arg16[%c0_96, %c0_97] : memref<304x128xf32, #tpu.memory_space<vmem>>, vector<24x128xf32>
    tpu.vector_store %arg16[%c0_96, %c0_97], %184 {strides = array<i32>} : memref<304x128xf32, #tpu.memory_space<vmem>>, vector<24x128xf32>,
    %c280_98 = arith.constant 280 : index
    %c0_99 = arith.constant 0 : index
    %186 = vector.load %arg16[%c280_98, %c0_99] : memref<304x128xf32, #tpu.memory_space<vmem>>, vector<24x128xf32>
    tpu.vector_store %arg16[%c280_98, %c0_99], %184 {strides = array<i32>} : memref<304x128xf32, #tpu.memory_space<vmem>>, vector<24x128xf32>,
    %c24_100 = arith.constant 24 : index
    %c0_101 = arith.constant 0 : index
    %187 = vector.load %arg16[%c24_100, %c0_101] : memref<304x128xf32, #tpu.memory_space<vmem>>, vector<256x128xf32>
    tpu.vector_store %arg16[%c24_100, %c0_101], %182 {strides = array<i32>} : memref<304x128xf32, #tpu.memory_space<vmem>>, vector<256x128xf32>,
    %cst_102 = arith.constant 0.000000e+00 : f32
    %188 = vector.broadcast %cst_102 : f32 to vector<256x128xf32>
    %c7_103 = arith.constant 7 : index
    %c0_104 = arith.constant 0 : index
    %189 = vector.load %arg16[%c7_103, %c0_104] : memref<304x128xf32, #tpu.memory_space<vmem>>, vector<256x128xf32>
    %cst_105 = arith.constant 0.000000e+00 : f32
    %190 = vector.shape_cast %18 : vector<256x1xi1> to vector<256x1xi1>
    %191 = vector.broadcast %190 : vector<256x1xi1> to vector<256x128xi1>
    %192 = vector.broadcast %cst_105 : f32 to vector<256x128xf32>
    %193 = arith.select %191, %189, %192 : vector<256x128xi1>, vector<256x128xf32>
    %194 = arith.truncf %193 : vector<256x128xf32> to vector<256x128xbf16>
    %c0_106 = arith.constant 0 : index
    %c0_107 = arith.constant 0 : index
    %c0_108 = arith.constant 0 : index
    %195 = vector.load %arg8[%c0_106, %c0_107, %c0_108] : memref<9x128x128xbf16, #tpu.memory_space<vmem>>, vector<1x128x128xbf16>
    %196 = vector.shape_cast %195 : vector<1x128x128xbf16> to vector<128x128xbf16>
    %cst_109 = arith.constant dense<0.000000e+00> : vector<256x128xf32>
    %197 = tpu.matmul %194, %196, %cst_109 {dimension_numbers = #tpu.dot_dimension_numbers<[1], [0], [0], [1], [0, 0, 1, 1], [], []>} : vector<256x128xbf16>, vector<128x128xbf16>, vector<256x128xf32> -> vector<256x128xf32>
    %198 = arith.addf %188, %197 : vector<256x128xf32>
    %c8_110 = arith.constant 8 : index
    %c0_111 = arith.constant 0 : index
    %199 = vector.load %arg16[%c8_110, %c0_111] : memref<304x128xf32, #tpu.memory_space<vmem>>, vector<256x128xf32>
    %200 = arith.truncf %199 : vector<256x128xf32> to vector<256x128xbf16>
    %c1_112 = arith.constant 1 : index
    %c0_113 = arith.constant 0 : index
    %c0_114 = arith.constant 0 : index
    %201 = vector.load %arg8[%c1_112, %c0_113, %c0_114] : memref<9x128x128xbf16, #tpu.memory_space<vmem>>, vector<1x128x128xbf16>
    %202 = vector.shape_cast %201 : vector<1x128x128xbf16> to vector<128x128xbf16>
    %cst_115 = arith.constant dense<0.000000e+00> : vector<256x128xf32>
    %203 = tpu.matmul %200, %202, %cst_115 {dimension_numbers = #tpu.dot_dimension_numbers<[1], [0], [0], [1], [0, 0, 1, 1], [], []>} : vector<256x128xbf16>, vector<128x128xbf16>, vector<256x128xf32> -> vector<256x128xf32>
    %204 = arith.addf %198, %203 : vector<256x128xf32>
    %c9_116 = arith.constant 9 : index
    %c0_117 = arith.constant 0 : index
    %205 = vector.load %arg16[%c9_116, %c0_117] : memref<304x128xf32, #tpu.memory_space<vmem>>, vector<256x128xf32>
    %cst_118 = arith.constant 0.000000e+00 : f32
    %206 = vector.shape_cast %20 : vector<256x1xi1> to vector<256x1xi1>
    %207 = vector.broadcast %206 : vector<256x1xi1> to vector<256x128xi1>
    %208 = vector.broadcast %cst_118 : f32 to vector<256x128xf32>
    %209 = arith.select %207, %205, %208 : vector<256x128xi1>, vector<256x128xf32>
    %210 = arith.truncf %209 : vector<256x128xf32> to vector<256x128xbf16>
    %c2_119 = arith.constant 2 : index
    %c0_120 = arith.constant 0 : index
    %c0_121 = arith.constant 0 : index
    %211 = vector.load %arg8[%c2_119, %c0_120, %c0_121] : memref<9x128x128xbf16, #tpu.memory_space<vmem>>, vector<1x128x128xbf16>
    %212 = vector.shape_cast %211 : vector<1x128x128xbf16> to vector<128x128xbf16>
    %cst_122 = arith.constant dense<0.000000e+00> : vector<256x128xf32>
    %213 = tpu.matmul %210, %212, %cst_122 {dimension_numbers = #tpu.dot_dimension_numbers<[1], [0], [0], [1], [0, 0, 1, 1], [], []>} : vector<256x128xbf16>, vector<128x128xbf16>, vector<256x128xf32> -> vector<256x128xf32>
    %214 = arith.addf %204, %213 : vector<256x128xf32>
    %c23_123 = arith.constant 23 : index
    %c0_124 = arith.constant 0 : index
    %215 = vector.load %arg16[%c23_123, %c0_124] : memref<304x128xf32, #tpu.memory_space<vmem>>, vector<256x128xf32>
    %cst_125 = arith.constant 0.000000e+00 : f32
    %216 = vector.shape_cast %18 : vector<256x1xi1> to vector<256x1xi1>
    %217 = vector.broadcast %216 : vector<256x1xi1> to vector<256x128xi1>
    %218 = vector.broadcast %cst_125 : f32 to vector<256x128xf32>
    %219 = arith.select %217, %215, %218 : vector<256x128xi1>, vector<256x128xf32>
    %220 = arith.truncf %219 : vector<256x128xf32> to vector<256x128xbf16>
    %c3_126 = arith.constant 3 : index
    %c0_127 = arith.constant 0 : index
    %c0_128 = arith.constant 0 : index
    %221 = vector.load %arg8[%c3_126, %c0_127, %c0_128] : memref<9x128x128xbf16, #tpu.memory_space<vmem>>, vector<1x128x128xbf16>
    %222 = vector.shape_cast %221 : vector<1x128x128xbf16> to vector<128x128xbf16>
    %cst_129 = arith.constant dense<0.000000e+00> : vector<256x128xf32>
    %223 = tpu.matmul %220, %222, %cst_129 {dimension_numbers = #tpu.dot_dimension_numbers<[1], [0], [0], [1], [0, 0, 1, 1], [], []>} : vector<256x128xbf16>, vector<128x128xbf16>, vector<256x128xf32> -> vector<256x128xf32>
    %224 = arith.addf %214, %223 : vector<256x128xf32>
    %c24_130 = arith.constant 24 : index
    %c0_131 = arith.constant 0 : index
    %225 = vector.load %arg16[%c24_130, %c0_131] : memref<304x128xf32, #tpu.memory_space<vmem>>, vector<256x128xf32>
    %226 = arith.truncf %225 : vector<256x128xf32> to vector<256x128xbf16>
    %c4_132 = arith.constant 4 : index
    %c0_133 = arith.constant 0 : index
    %c0_134 = arith.constant 0 : index
    %227 = vector.load %arg8[%c4_132, %c0_133, %c0_134] : memref<9x128x128xbf16, #tpu.memory_space<vmem>>, vector<1x128x128xbf16>
    %228 = vector.shape_cast %227 : vector<1x128x128xbf16> to vector<128x128xbf16>
    %cst_135 = arith.constant dense<0.000000e+00> : vector<256x128xf32>
    %229 = tpu.matmul %226, %228, %cst_135 {dimension_numbers = #tpu.dot_dimension_numbers<[1], [0], [0], [1], [0, 0, 1, 1], [], []>} : vector<256x128xbf16>, vector<128x128xbf16>, vector<256x128xf32> -> vector<256x128xf32>
    %230 = arith.addf %224, %229 : vector<256x128xf32>
    %c25_136 = arith.constant 25 : index
    %c0_137 = arith.constant 0 : index
    %231 = vector.load %arg16[%c25_136, %c0_137] : memref<304x128xf32, #tpu.memory_space<vmem>>, vector<256x128xf32>
    %cst_138 = arith.constant 0.000000e+00 : f32
    %232 = vector.shape_cast %20 : vector<256x1xi1> to vector<256x1xi1>
    %233 = vector.broadcast %232 : vector<256x1xi1> to vector<256x128xi1>
    %234 = vector.broadcast %cst_138 : f32 to vector<256x128xf32>
    %235 = arith.select %233, %231, %234 : vector<256x128xi1>, vector<256x128xf32>
    %236 = arith.truncf %235 : vector<256x128xf32> to vector<256x128xbf16>
    %c5_139 = arith.constant 5 : index
    %c0_140 = arith.constant 0 : index
    %c0_141 = arith.constant 0 : index
    %237 = vector.load %arg8[%c5_139, %c0_140, %c0_141] : memref<9x128x128xbf16, #tpu.memory_space<vmem>>, vector<1x128x128xbf16>
    %238 = vector.shape_cast %237 : vector<1x128x128xbf16> to vector<128x128xbf16>
    %cst_142 = arith.constant dense<0.000000e+00> : vector<256x128xf32>
    %239 = tpu.matmul %236, %238, %cst_142 {dimension_numbers = #tpu.dot_dimension_numbers<[1], [0], [0], [1], [0, 0, 1, 1], [], []>} : vector<256x128xbf16>, vector<128x128xbf16>, vector<256x128xf32> -> vector<256x128xf32>
    %240 = arith.addf %230, %239 : vector<256x128xf32>
    %c39_143 = arith.constant 39 : index
    %c0_144 = arith.constant 0 : index
    %241 = vector.load %arg16[%c39_143, %c0_144] : memref<304x128xf32, #tpu.memory_space<vmem>>, vector<256x128xf32>
    %cst_145 = arith.constant 0.000000e+00 : f32
    %242 = vector.shape_cast %18 : vector<256x1xi1> to vector<256x1xi1>
    %243 = vector.broadcast %242 : vector<256x1xi1> to vector<256x128xi1>
    %244 = vector.broadcast %cst_145 : f32 to vector<256x128xf32>
    %245 = arith.select %243, %241, %244 : vector<256x128xi1>, vector<256x128xf32>
    %246 = arith.truncf %245 : vector<256x128xf32> to vector<256x128xbf16>
    %c6_146 = arith.constant 6 : index
    %c0_147 = arith.constant 0 : index
    %c0_148 = arith.constant 0 : index
    %247 = vector.load %arg8[%c6_146, %c0_147, %c0_148] : memref<9x128x128xbf16, #tpu.memory_space<vmem>>, vector<1x128x128xbf16>
    %248 = vector.shape_cast %247 : vector<1x128x128xbf16> to vector<128x128xbf16>
    %cst_149 = arith.constant dense<0.000000e+00> : vector<256x128xf32>
    %249 = tpu.matmul %246, %248, %cst_149 {dimension_numbers = #tpu.dot_dimension_numbers<[1], [0], [0], [1], [0, 0, 1, 1], [], []>} : vector<256x128xbf16>, vector<128x128xbf16>, vector<256x128xf32> -> vector<256x128xf32>
    %250 = arith.addf %240, %249 : vector<256x128xf32>
    %c40_150 = arith.constant 40 : index
    %c0_151 = arith.constant 0 : index
    %251 = vector.load %arg16[%c40_150, %c0_151] : memref<304x128xf32, #tpu.memory_space<vmem>>, vector<256x128xf32>
    %252 = arith.truncf %251 : vector<256x128xf32> to vector<256x128xbf16>
    %c7_152 = arith.constant 7 : index
    %c0_153 = arith.constant 0 : index
    %c0_154 = arith.constant 0 : index
    %253 = vector.load %arg8[%c7_152, %c0_153, %c0_154] : memref<9x128x128xbf16, #tpu.memory_space<vmem>>, vector<1x128x128xbf16>
    %254 = vector.shape_cast %253 : vector<1x128x128xbf16> to vector<128x128xbf16>
    %cst_155 = arith.constant dense<0.000000e+00> : vector<256x128xf32>
    %255 = tpu.matmul %252, %254, %cst_155 {dimension_numbers = #tpu.dot_dimension_numbers<[1], [0], [0], [1], [0, 0, 1, 1], [], []>} : vector<256x128xbf16>, vector<128x128xbf16>, vector<256x128xf32> -> vector<256x128xf32>
    %256 = arith.addf %250, %255 : vector<256x128xf32>
    %c41_156 = arith.constant 41 : index
    %c0_157 = arith.constant 0 : index
    %257 = vector.load %arg16[%c41_156, %c0_157] : memref<304x128xf32, #tpu.memory_space<vmem>>, vector<256x128xf32>
    %cst_158 = arith.constant 0.000000e+00 : f32
    %258 = vector.shape_cast %20 : vector<256x1xi1> to vector<256x1xi1>
    %259 = vector.broadcast %258 : vector<256x1xi1> to vector<256x128xi1>
    %260 = vector.broadcast %cst_158 : f32 to vector<256x128xf32>
    %261 = arith.select %259, %257, %260 : vector<256x128xi1>, vector<256x128xf32>
    %262 = arith.truncf %261 : vector<256x128xf32> to vector<256x128xbf16>
    %c8_159 = arith.constant 8 : index
    %c0_160 = arith.constant 0 : index
    %c0_161 = arith.constant 0 : index
    %263 = vector.load %arg8[%c8_159, %c0_160, %c0_161] : memref<9x128x128xbf16, #tpu.memory_space<vmem>>, vector<1x128x128xbf16>
    %264 = vector.shape_cast %263 : vector<1x128x128xbf16> to vector<128x128xbf16>
    %cst_162 = arith.constant dense<0.000000e+00> : vector<256x128xf32>
    %265 = tpu.matmul %262, %264, %cst_162 {dimension_numbers = #tpu.dot_dimension_numbers<[1], [0], [0], [1], [0, 0, 1, 1], [], []>} : vector<256x128xbf16>, vector<128x128xbf16>, vector<256x128xf32> -> vector<256x128xf32>
    %266 = arith.addf %256, %265 : vector<256x128xf32>
    %267 = vector.broadcast %183 : vector<1x128xf32> to vector<256x128xf32>
    %268 = arith.addf %266, %267 : vector<256x128xf32>
    %269 = arith.truncf %22 : vector<256x64xf32> to vector<256x64xbf16>
    %c0_163 = arith.constant 0 : index
    %c0_164 = arith.constant 0 : index
    %270 = vector.load %arg12[%c0_163, %c0_164] : memref<64x128xbf16, #tpu.memory_space<vmem>>, vector<64x128xbf16>
    %cst_165 = arith.constant dense<0.000000e+00> : vector<256x128xf32>
    %271 = tpu.matmul %269, %270, %cst_165 {dimension_numbers = #tpu.dot_dimension_numbers<[1], [0], [0], [1], [0, 0, 1, 1], [], []>} : vector<256x64xbf16>, vector<64x128xbf16>, vector<256x128xf32> -> vector<256x128xf32>
    %c0_166 = arith.constant 0 : index
    %c0_167 = arith.constant 0 : index
    %272 = vector.load %arg13[%c0_166, %c0_167] : memref<1x128xf32, #tpu.memory_space<vmem>>, vector<1x128xf32>
    %273 = vector.broadcast %272 : vector<1x128xf32> to vector<256x128xf32>
    %274 = arith.addf %271, %273 : vector<256x128xf32>
    %275 = arith.addf %274, %268 : vector<256x128xf32>
    %c0_168 = arith.constant 0 : index
    %c0_169 = arith.constant 0 : index
    %c0_170 = arith.constant 0 : index
    %276 = vector.load %arg14[%c0_168, %c0_169, %c0_170] : memref<1x256x128xf32, #tpu.memory_space<vmem>>, vector<1x256x128xf32>
    %277 = vector.shape_cast %276 : vector<1x256x128xf32> to vector<256x128xf32>
    %278 = vector.shape_cast %275 : vector<256x128xf32> to vector<1x256x128xf32>
    tpu.vector_store %arg14[%c0_168, %c0_169, %c0_170], %278 {strides = array<i32>} : memref<1x256x128xf32, #tpu.memory_space<vmem>>, vector<1x256x128xf32>,
    return
  }
  func.func @transform_0(%arg0: i32) -> (i32, i32, i32) {
    %c0_i32 = arith.constant 0 : i32
    %c0_i32_0 = arith.constant 0 : i32
    %c0_i32_1 = arith.constant 0 : i32
    return %arg0, %c0_i32, %c0_i32_0 : i32, i32, i32
  }
  func.func @transform_1(%arg0: i32) -> (i32, i32) {
    %c0_i32 = arith.constant 0 : i32
    %c0_i32_0 = arith.constant 0 : i32
    %c0_i32_1 = arith.constant 0 : i32
    return %c0_i32, %c0_i32_0 : i32, i32
  }
  func.func @transform_2(%arg0: i32) -> (i32, i32) {
    %c0_i32 = arith.constant 0 : i32
    %c0_i32_0 = arith.constant 0 : i32
    %c0_i32_1 = arith.constant 0 : i32
    return %c0_i32, %c0_i32_0 : i32, i32
  }
  func.func @transform_3(%arg0: i32) -> (i32, i32, i32) {
    %c0_i32 = arith.constant 0 : i32
    %c0_i32_0 = arith.constant 0 : i32
    %c0_i32_1 = arith.constant 0 : i32
    %c0_i32_2 = arith.constant 0 : i32
    return %c0_i32, %c0_i32_0, %c0_i32_1 : i32, i32, i32
  }
  func.func @transform_4(%arg0: i32) -> (i32, i32) {
    %c0_i32 = arith.constant 0 : i32
    %c0_i32_0 = arith.constant 0 : i32
    %c0_i32_1 = arith.constant 0 : i32
    return %c0_i32, %c0_i32_0 : i32, i32
  }
  func.func @transform_5(%arg0: i32) -> (i32, i32) {
    %c0_i32 = arith.constant 0 : i32
    %c0_i32_0 = arith.constant 0 : i32
    %c0_i32_1 = arith.constant 0 : i32
    return %c0_i32, %c0_i32_0 : i32, i32
  }
  func.func @transform_6(%arg0: i32) -> (i32, i32) {
    %c0_i32 = arith.constant 0 : i32
    %c0_i32_0 = arith.constant 0 : i32
    %c0_i32_1 = arith.constant 0 : i32
    return %c0_i32, %c0_i32_0 : i32, i32
  }
  func.func @transform_7(%arg0: i32) -> (i32, i32, i32) {
    %c0_i32 = arith.constant 0 : i32
    %c0_i32_0 = arith.constant 0 : i32
    %c0_i32_1 = arith.constant 0 : i32
    %c0_i32_2 = arith.constant 0 : i32
    return %c0_i32, %c0_i32_0, %c0_i32_1 : i32, i32, i32
  }
  func.func @transform_8(%arg0: i32) -> (i32, i32) {
    %c0_i32 = arith.constant 0 : i32
    %c0_i32_0 = arith.constant 0 : i32
    %c0_i32_1 = arith.constant 0 : i32
    return %c0_i32, %c0_i32_0 : i32, i32
  }
  func.func @transform_9(%arg0: i32) -> (i32, i32) {
    %c0_i32 = arith.constant 0 : i32
    %c0_i32_0 = arith.constant 0 : i32
    %c0_i32_1 = arith.constant 0 : i32
    return %c0_i32, %c0_i32_0 : i32, i32
  }
  func.func @transform_10(%arg0: i32) -> (i32, i32) {
    %c0_i32 = arith.constant 0 : i32
    %c0_i32_0 = arith.constant 0 : i32
    %c0_i32_1 = arith.constant 0 : i32
    return %c0_i32, %c0_i32_0 : i32, i32
  }
  func.func @transform_11(%arg0: i32) -> (i32, i32) {
    %c0_i32 = arith.constant 0 : i32
    %c0_i32_0 = arith.constant 0 : i32
    %c0_i32_1 = arith.constant 0 : i32
    return %c0_i32, %c0_i32_0 : i32, i32
  }
  func.func @transform_12(%arg0: i32) -> (i32, i32) {
    %c0_i32 = arith.constant 0 : i32
    %c0_i32_0 = arith.constant 0 : i32
    %c0_i32_1 = arith.constant 0 : i32
    return %c0_i32, %c0_i32_0 : i32, i32
  }
  func.func @transform_13(%arg0: i32) -> (i32, i32, i32) {
    %c0_i32 = arith.constant 0 : i32
    %c0_i32_0 = arith.constant 0 : i32
    %c0_i32_1 = arith.constant 0 : i32
    return %arg0, %c0_i32, %c0_i32_0 : i32, i32, i32
  }
}

</mosaic_0001>

<llo_original>
// kernel: tpu_custom_call.1
$region0: #{tpu_custom_call.1}
  #allocation0 [shape = 'u32[]', space=smem, size = 0x4, offset = 0x4, fixed_abs, tag = 'smem constant byte address 0x4 - core index']
  #allocation1 [shape = 'u32[144,128]{1,0:T(1,128)}', space=vmem, size = 0x12000, scoped, tag = 'internal scratch']
  #allocation2 [shape = 'f32[304,64]{1,0:T(8,128)}', space=vmem, size = 0x26000, scoped, tag = 'scratch operand']
  #allocation3 [shape = 'f32[304,128]{1,0:T(8,128)}', space=vmem, size = 0x26000, scoped, tag = 'scratch operand']
  %s0 = inlined_call_operand.vmem [shape: f32[2,256,64], index: 0, kind: input, shape index: {}]
  %s1 = inlined_call_operand.vmem [shape: f32[1,64], index: 1, kind: input, shape index: {}]
  %s2 = inlined_call_operand.vmem [shape: f32[1,64], index: 2, kind: input, shape index: {}]
  %s3 = inlined_call_operand.vmem [shape: bf16[9,64,128], index: 3, kind: input, shape index: {}]
  %s4 = inlined_call_operand.vmem [shape: f32[1,128], index: 4, kind: input, shape index: {}]
  %s5 = inlined_call_operand.vmem [shape: f32[1,128], index: 5, kind: input, shape index: {}]
  %s6 = inlined_call_operand.vmem [shape: f32[1,128], index: 6, kind: input, shape index: {}]
  %s7 = inlined_call_operand.vmem [shape: bf16[9,128,128], index: 7, kind: input, shape index: {}]
  %s8 = inlined_call_operand.vmem [shape: f32[1,128], index: 8, kind: input, shape index: {}]
  %s9 = inlined_call_operand.vmem [shape: f32[64,32], index: 9, kind: input, shape index: {}]
  %s10 = inlined_call_operand.vmem [shape: f32[128,32], index: 10, kind: input, shape index: {}]
  %s11 = inlined_call_operand.vmem [shape: bf16[64,128], index: 11, kind: input, shape index: {}]
  %s12 = inlined_call_operand.vmem [shape: f32[1,128], index: 12, kind: input, shape index: {}]
  %s13 = inlined_call_operand.hbm [shape: f32[2,256,128], index: 13, kind: output, shape index: {}]
  %s14 = sld [smem:[#allocation0]]
  $region85: #{tpu_custom_call.1} parent=0
    _
  %s16 = ssub.s32 1, %s14
  %s17 = scalar_select 0, %s16, %s14
  $region1: #{tpu_custom_call.1} parent=0
    #allocation4 [shape = 'u8[262144]{0}', space=vmem, size = 0x40000, scoped, tag = 'output window, operand 0']
    #allocation5 [shape = 's32[2]{0}', space=sflag, size = 0x8, scoped, tag = 'scoped memory for tpu_custom_call.1']
    %18 = vsyncpa [#allocation5], 0
    %s19 = scalar_lea.sflag [#allocation5], 1
    %20 = vsyncpa %s19, 0
    loop: start=0, step=1, limit=4
    $region2: #{tpu_custom_call.1} parent=1 // loop_pre_header
      _
    $region3: #{tpu_custom_call.1} parent=1 // loop_header
      %s22 = sphi 0, %s26
      %p23 = scmp.ge.s32.totalorder %s22, 4
      %s32 = sphi 0, %s34
      %s35 = sphi 0, %s32
      %s36 = sphi 0, %s35
      %s52 = sphi 0, %s36
      %s56 = sphi 0, %s56
      %s58 = sphi 0, %s56
      %s59 = sphi 0, %s58
      %s73 = sphi 0, %s59
      %s77 = sphi 0, %s77
      %s79 = sphi 0, %s77
      %s80 = sphi 0, %s79
      %s94 = sphi 0, %s80
      %s98 = sphi 0, %s98
      %s100 = sphi 0, %s98
      %s101 = sphi 0, %s100
      %s115 = sphi 0, %s101
      %s119 = sphi 0, %s119
      %s121 = sphi 0, %s119
      %s122 = sphi 0, %s121
      %s136 = sphi 0, %s122
      %s140 = sphi 0, %s140
      %s142 = sphi 0, %s140
      %s143 = sphi 0, %s142
      %s157 = sphi 0, %s143
      %s161 = sphi 0, %s161
      %s163 = sphi 0, %s161
      %s164 = sphi 0, %s163
      %s178 = sphi 0, %s164
      %s182 = sphi 0, %s182
      %s184 = sphi 0, %s182
      %s185 = sphi 0, %s184
      %s199 = sphi 0, %s185
      %s203 = sphi 0, %s203
      %s205 = sphi 0, %s203
      %s206 = sphi 0, %s205
      %s220 = sphi 0, %s206
      %s224 = sphi 0, %s224
      %s226 = sphi 0, %s224
      %s227 = sphi 0, %s226
      %s241 = sphi 0, %s227
      %s245 = sphi 0, %s245
      %s247 = sphi 0, %s245
      %s248 = sphi 0, %s247
      %s262 = sphi 0, %s248
      %s266 = sphi 0, %s266
      %s268 = sphi 0, %s266
      %s269 = sphi 0, %s268
      %s283 = sphi 0, %s269
      %s287 = sphi 0, %s287
      %s289 = sphi 0, %s287
      %s290 = sphi 0, %s289
      %s304 = sphi 0, %s290
      %s310 = sphi 0, %s312
      %s313 = sphi 0, %s310
      %s314 = sphi 0, %s313
      %s330 = sphi 0, %s314
    $region4: #{tpu_custom_call.1} parent=1 // loop_header_branch
      %25 = sbr.rel (%p23) target = $region8
    $region5: #{tpu_custom_call.1} parent=1 // loop_body
      %s27 = ssub.s32 %s22, 1
      %s28 = ssub.s32 %s22, 2
      %s29 = sadd.s32 %s22, 1
      %s30 = ssub.s32 %s22, %s29
      %p31 = scmp.eq.s32.totalorder %s30, 0
      %s33 = sadd.s32 %s32, 1
      %s34 = scalar_select %p31, %s32, %s33
      %p37 = pneg %p31
      %p38 = scmp.eq.s32.totalorder %s22, 1
      %p39 = por %p37, %p38
      %p40 = scmp.ne.s32.totalorder %s32, %s35
      %p41 = scmp.eq.s32.totalorder %s22, 0
      %p42 = por %p40, %p41
      %p43 = scmp.ne.s32.totalorder %s32, %s35
      %p44 = scmp.eq.s32.totalorder %s27, 1
      %p45 = por %p43, %p44
      %p46 = scmp.ne.s32.totalorder %s35, %s36
      %p47 = scmp.eq.s32.totalorder %s27, 0
      %p48 = por %p46, %p47
      %p49 = scmp.ne.s32.totalorder %s35, %s36
      %p50 = scmp.eq.s32.totalorder %s28, 1
      %p51 = por %p49, %p50
      %p53 = scmp.ne.s32.totalorder %s36, %s52
      %p54 = scmp.eq.s32.totalorder %s28, 0
      %p55 = por %p53, %p54
      %s57 = sadd.s32 %s56, 1
      %p60 = scmp.eq.s32.totalorder %s22, 1
      %p61 = scmp.ne.s32.totalorder %s56, %s58
      %p62 = scmp.eq.s32.totalorder %s22, 0
      %p63 = por %p61, %p62
      %p64 = scmp.ne.s32.totalorder %s56, %s58
      %p65 = scmp.eq.s32.totalorder %s27, 1
      %p66 = por %p64, %p65
      %p67 = scmp.ne.s32.totalorder %s58, %s59
      %p68 = scmp.eq.s32.totalorder %s27, 0
      %p69 = por %p67, %p68
      %p70 = scmp.ne.s32.totalorder %s58, %s59
      %p71 = scmp.eq.s32.totalorder %s28, 1
      %p72 = por %p70, %p71
      %p74 = scmp.ne.s32.totalorder %s59, %s73
      %p75 = scmp.eq.s32.totalorder %s28, 0
      %p76 = por %p74, %p75
      %s78 = sadd.s32 %s77, 1
      %p81 = scmp.eq.s32.totalorder %s22, 1
      %p82 = scmp.ne.s32.totalorder %s77, %s79
      %p83 = scmp.eq.s32.totalorder %s22, 0
      %p84 = por %p82, %p83
      %p85 = scmp.ne.s32.totalorder %s77, %s79
      %p86 = scmp.eq.s32.totalorder %s27, 1
      %p87 = por %p85, %p86
      %p88 = scmp.ne.s32.totalorder %s79, %s80
      %p89 = scmp.eq.s32.totalorder %s27, 0
      %p90 = por %p88, %p89
      %p91 = scmp.ne.s32.totalorder %s79, %s80
      %p92 = scmp.eq.s32.totalorder %s28, 1
      %p93 = por %p91, %p92
      %p95 = scmp.ne.s32.totalorder %s80, %s94
      %p96 = scmp.eq.s32.totalorder %s28, 0
      %p97 = por %p95, %p96
      %s99 = sadd.s32 %s98, 1
      %p102 = scmp.eq.s32.totalorder %s22, 1
      %p103 = scmp.ne.s32.totalorder %s98, %s100
      %p104 = scmp.eq.s32.totalorder %s22, 0
      %p105 = por %p103, %p104
      %p106 = scmp.ne.s32.totalorder %s98, %s100
      %p107 = scmp.eq.s32.totalorder %s27, 1
      %p108 = por %p106, %p107
      %p109 = scmp.ne.s32.totalorder %s100, %s101
      %p110 = scmp.eq.s32.totalorder %s27, 0
      %p111 = por %p109, %p110
      %p112 = scmp.ne.s32.totalorder %s100, %s101
      %p113 = scmp.eq.s32.totalorder %s28, 1
      %p114 = por %p112, %p113
      %p116 = scmp.ne.s32.totalorder %s101, %s115
      %p117 = scmp.eq.s32.totalorder %s28, 0
      %p118 = por %p116, %p117
      %s120 = sadd.s32 %s119, 1
      %p123 = scmp.eq.s32.totalorder %s22, 1
      %p124 = scmp.ne.s32.totalorder %s119, %s121
      %p125 = scmp.eq.s32.totalorder %s22, 0
      %p126 = por %p124, %p125
      %p127 = scmp.ne.s32.totalorder %s119, %s121
      %p128 = scmp.eq.s32.totalorder %s27, 1
      %p129 = por %p127, %p128
      %p130 = scmp.ne.s32.totalorder %s121, %s122
      %p131 = scmp.eq.s32.totalorder %s27, 0
      %p132 = por %p130, %p131
      %p133 = scmp.ne.s32.totalorder %s121, %s122
      %p134 = scmp.eq.s32.totalorder %s28, 1
      %p135 = por %p133, %p134
      %p137 = scmp.ne.s32.totalorder %s122, %s136
      %p138 = scmp.eq.s32.totalorder %s28, 0
      %p139 = por %p137, %p138
      %s141 = sadd.s32 %s140, 1
      %p144 = scmp.eq.s32.totalorder %s22, 1
      %p145 = scmp.ne.s32.totalorder %s140, %s142
      %p146 = scmp.eq.s32.totalorder %s22, 0
      %p147 = por %p145, %p146
      %p148 = scmp.ne.s32.totalorder %s140, %s142
      %p149 = scmp.eq.s32.totalorder %s27, 1
      %p150 = por %p148, %p149
      %p151 = scmp.ne.s32.totalorder %s142, %s143
      %p152 = scmp.eq.s32.totalorder %s27, 0
      %p153 = por %p151, %p152
      %p154 = scmp.ne.s32.totalorder %s142, %s143
      %p155 = scmp.eq.s32.totalorder %s28, 1
      %p156 = por %p154, %p155
      %p158 = scmp.ne.s32.totalorder %s143, %s157
      %p159 = scmp.eq.s32.totalorder %s28, 0
      %p160 = por %p158, %p159
      %s162 = sadd.s32 %s161, 1
      %p165 = scmp.eq.s32.totalorder %s22, 1
      %p166 = scmp.ne.s32.totalorder %s161, %s163
      %p167 = scmp.eq.s32.totalorder %s22, 0
      %p168 = por %p166, %p167
      %p169 = scmp.ne.s32.totalorder %s161, %s163
      %p170 = scmp.eq.s32.totalorder %s27, 1
      %p171 = por %p169, %p170
      %p172 = scmp.ne.s32.totalorder %s163, %s164
      %p173 = scmp.eq.s32.totalorder %s27, 0
      %p174 = por %p172, %p173
      %p175 = scmp.ne.s32.totalorder %s163, %s164
      %p176 = scmp.eq.s32.totalorder %s28, 1
      %p177 = por %p175, %p176
      %p179 = scmp.ne.s32.totalorder %s164, %s178
      %p180 = scmp.eq.s32.totalorder %s28, 0
      %p181 = por %p179, %p180
      %s183 = sadd.s32 %s182, 1
      %p186 = scmp.eq.s32.totalorder %s22, 1
      %p187 = scmp.ne.s32.totalorder %s182, %s184
      %p188 = scmp.eq.s32.totalorder %s22, 0
      %p189 = por %p187, %p188
      %p190 = scmp.ne.s32.totalorder %s182, %s184
      %p191 = scmp.eq.s32.totalorder %s27, 1
      %p192 = por %p190, %p191
      %p193 = scmp.ne.s32.totalorder %s184, %s185
      %p194 = scmp.eq.s32.totalorder %s27, 0
      %p195 = por %p193, %p194
      %p196 = scmp.ne.s32.totalorder %s184, %s185
      %p197 = scmp.eq.s32.totalorder %s28, 1
      %p198 = por %p196, %p197
      %p200 = scmp.ne.s32.totalorder %s185, %s199
      %p201 = scmp.eq.s32.totalorder %s28, 0
      %p202 = por %p200, %p201
      %s204 = sadd.s32 %s203, 1
      %p207 = scmp.eq.s32.totalorder %s22, 1
      %p208 = scmp.ne.s32.totalorder %s203, %s205
      %p209 = scmp.eq.s32.totalorder %s22, 0
      %p210 = por %p208, %p209
      %p211 = scmp.ne.s32.totalorder %s203, %s205
      %p212 = scmp.eq.s32.totalorder %s27, 1
      %p213 = por %p211, %p212
      %p214 = scmp.ne.s32.totalorder %s205, %s206
      %p215 = scmp.eq.s32.totalorder %s27, 0
      %p216 = por %p214, %p215
      %p217 = scmp.ne.s32.totalorder %s205, %s206
      %p218 = scmp.eq.s32.totalorder %s28, 1
      %p219 = por %p217, %p218
      %p221 = scmp.ne.s32.totalorder %s206, %s220
      %p222 = scmp.eq.s32.totalorder %s28, 0
      %p223 = por %p221, %p222
      %s225 = sadd.s32 %s224, 1
      %p228 = scmp.eq.s32.totalorder %s22, 1
      %p229 = scmp.ne.s32.totalorder %s224, %s226
      %p230 = scmp.eq.s32.totalorder %s22, 0
      %p231 = por %p229, %p230
      %p232 = scmp.ne.s32.totalorder %s224, %s226
      %p233 = scmp.eq.s32.totalorder %s27, 1
      %p234 = por %p232, %p233
      %p235 = scmp.ne.s32.totalorder %s226, %s227
      %p236 = scmp.eq.s32.totalorder %s27, 0
      %p237 = por %p235, %p236
      %p238 = scmp.ne.s32.totalorder %s226, %s227
      %p239 = scmp.eq.s32.totalorder %s28, 1
      %p240 = por %p238, %p239
      %p242 = scmp.ne.s32.totalorder %s227, %s241
      %p243 = scmp.eq.s32.totalorder %s28, 0
      %p244 = por %p242, %p243
      %s246 = sadd.s32 %s245, 1
      %p249 = scmp.eq.s32.totalorder %s22, 1
      %p250 = scmp.ne.s32.totalorder %s245, %s247
      %p251 = scmp.eq.s32.totalorder %s22, 0
      %p252 = por %p250, %p251
      %p253 = scmp.ne.s32.totalorder %s245, %s247
      %p254 = scmp.eq.s32.totalorder %s27, 1
      %p255 = por %p253, %p254
      %p256 = scmp.ne.s32.totalorder %s247, %s248
      %p257 = scmp.eq.s32.totalorder %s27, 0
      %p258 = por %p256, %p257
      %p259 = scmp.ne.s32.totalorder %s247, %s248
      %p260 = scmp.eq.s32.totalorder %s28, 1
      %p261 = por %p259, %p260
      %p263 = scmp.ne.s32.totalorder %s248, %s262
      %p264 = scmp.eq.s32.totalorder %s28, 0
      %p265 = por %p263, %p264
      %s267 = sadd.s32 %s266, 1
      %p270 = scmp.eq.s32.totalorder %s22, 1
      %p271 = scmp.ne.s32.totalorder %s266, %s268
      %p272 = scmp.eq.s32.totalorder %s22, 0
      %p273 = por %p271, %p272
      %p274 = scmp.ne.s32.totalorder %s266, %s268
      %p275 = scmp.eq.s32.totalorder %s27, 1
      %p276 = por %p274, %p275
      %p277 = scmp.ne.s32.totalorder %s268, %s269
      %p278 = scmp.eq.s32.totalorder %s27, 0
      %p279 = por %p277, %p278
      %p280 = scmp.ne.s32.totalorder %s268, %s269
      %p281 = scmp.eq.s32.totalorder %s28, 1
      %p282 = por %p280, %p281
      %p284 = scmp.ne.s32.totalorder %s269, %s283
      %p285 = scmp.eq.s32.totalorder %s28, 0
      %p286 = por %p284, %p285
      %s288 = sadd.s32 %s287, 1
      %p291 = scmp.eq.s32.totalorder %s22, 1
      %p292 = scmp.ne.s32.totalorder %s287, %s289
      %p293 = scmp.eq.s32.totalorder %s22, 0
      %p294 = por %p292, %p293
      %p295 = scmp.ne.s32.totalorder %s287, %s289
      %p296 = scmp.eq.s32.totalorder %s27, 1
      %p297 = por %p295, %p296
      %p298 = scmp.ne.s32.totalorder %s289, %s290
      %p299 = scmp.eq.s32.totalorder %s27, 0
      %p300 = por %p298, %p299
      %p301 = scmp.ne.s32.totalorder %s289, %s290
      %p302 = scmp.eq.s32.totalorder %s28, 1
      %p303 = por %p301, %p302
      %p305 = scmp.ne.s32.totalorder %s290, %s304
      %p306 = scmp.eq.s32.totalorder %s28, 0
      %p307 = por %p305, %p306
      %s308 = ssub.s32 %s22, %s29
      %p309 = scmp.eq.s32.totalorder %s308, 0
      %s311 = sadd.s32 %s310, 1
      %s312 = scalar_select %p309, %s310, %s311
      %p315 = pneg %p309
      %p316 = scmp.eq.s32.totalorder %s22, 1
      %p317 = por %p315, %p316
      %p318 = scmp.ne.s32.totalorder %s310, %s313
      %p319 = scmp.eq.s32.totalorder %s22, 0
      %p320 = por %p318, %p319
      %p321 = scmp.ne.s32.totalorder %s310, %s313
      %p322 = scmp.eq.s32.totalorder %s27, 1
      %p323 = por %p321, %p322
      %p324 = scmp.ne.s32.totalorder %s313, %s314
      %p325 = scmp.eq.s32.totalorder %s27, 0
      %p326 = por %p324, %p325
      %p327 = scmp.ne.s32.totalorder %s313, %s314
      %p328 = scmp.eq.s32.totalorder %s28, 1
      %p329 = por %p327, %p328
      %p331 = scmp.ne.s32.totalorder %s314, %s330
      %p332 = scmp.eq.s32.totalorder %s28, 0
      %p333 = por %p331, %p332
      %p334 = scmp.le.s32.totalorder 1, %s22
      %p335 = scmp.lt.s32.totalorder %s22, 3
      %p336 = pnand %p334, %p335
      %p337 = pneg %p336
      // Predicated region
      $region9: #{tpu_custom_call.1} parent=5 // pred_check
        _
      $region10: #{tpu_custom_call.1} parent=5 // pred_check_branch
        %339 = sbr.rel (%p336) target = $region12
      $region11: #{tpu_custom_call.1} parent=5 // pred_region
        %s340 = ssub.s32 %s22, 1
        // Predicated region
        $region13: #{tpu_custom_call.1} parent=11 // pred_check
          %p341 = pneg %p69
        $region14: #{tpu_custom_call.1} parent=11 // pred_check_branch
          %343 = sbr.rel (%p341) target = $region16
        $region15: #{tpu_custom_call.1} parent=11 // pred_region
          _
        $region16: #{tpu_custom_call.1} parent=11 // pred_fallthru
          _
        // Predicated region
        $region17: #{tpu_custom_call.1} parent=11 // pred_check
          %p344 = pneg %p90
        $region18: #{tpu_custom_call.1} parent=11 // pred_check_branch
          %346 = sbr.rel (%p344) target = $region20
        $region19: #{tpu_custom_call.1} parent=11 // pred_region
          _
        $region20: #{tpu_custom_call.1} parent=11 // pred_fallthru
          _
        // Predicated region
        $region21: #{tpu_custom_call.1} parent=11 // pred_check
          %p347 = pneg %p111
        $region22: #{tpu_custom_call.1} parent=11 // pred_check_branch
          %349 = sbr.rel (%p347) target = $region24
        $region23: #{tpu_custom_call.1} parent=11 // pred_region
          _
        $region24: #{tpu_custom_call.1} parent=11 // pred_fallthru
          _
        // Predicated region
        $region25: #{tpu_custom_call.1} parent=11 // pred_check
          %p350 = pneg %p132
        $region26: #{tpu_custom_call.1} parent=11 // pred_check_branch
          %352 = sbr.rel (%p350) target = $region28
        $region27: #{tpu_custom_call.1} parent=11 // pred_region
          _
        $region28: #{tpu_custom_call.1} parent=11 // pred_fallthru
          _
        // Predicated region
        $region29: #{tpu_custom_call.1} parent=11 // pred_check
          %p353 = pneg %p153
        $region30: #{tpu_custom_call.1} parent=11 // pred_check_branch
          %355 = sbr.rel (%p353) target = $region32
        $region31: #{tpu_custom_call.1} parent=11 // pred_region
          _
        $region32: #{tpu_custom_call.1} parent=11 // pred_fallthru
          _
        // Predicated region
        $region33: #{tpu_custom_call.1} parent=11 // pred_check
          %p356 = pneg %p174
        $region34: #{tpu_custom_call.1} parent=11 // pred_check_branch
          %358 = sbr.rel (%p356) target = $region36
        $region35: #{tpu_custom_call.1} parent=11 // pred_region
          _
        $region36: #{tpu_custom_call.1} parent=11 // pred_fallthru
          _
        // Predicated region
        $region37: #{tpu_custom_call.1} parent=11 // pred_check
          %p359 = pneg %p195
        $region38: #{tpu_custom_call.1} parent=11 // pred_check_branch
          %361 = sbr.rel (%p359) target = $region40
        $region39: #{tpu_custom_call.1} parent=11 // pred_region
          _
        $region40: #{tpu_custom_call.1} parent=11 // pred_fallthru
          _
        // Predicated region
        $region41: #{tpu_custom_call.1} parent=11 // pred_check
          %p362 = pneg %p216
        $region42: #{tpu_custom_call.1} parent=11 // pred_check_branch
          %364 = sbr.rel (%p362) target = $region44
        $region43: #{tpu_custom_call.1} parent=11 // pred_region
          _
        $region44: #{tpu_custom_call.1} parent=11 // pred_fallthru
          _
        // Predicated region
        $region45: #{tpu_custom_call.1} parent=11 // pred_check
          %p365 = pneg %p237
        $region46: #{tpu_custom_call.1} parent=11 // pred_check_branch
          %367 = sbr.rel (%p365) target = $region48
        $region47: #{tpu_custom_call.1} parent=11 // pred_region
          _
        $region48: #{tpu_custom_call.1} parent=11 // pred_fallthru
          _
        // Predicated region
        $region49: #{tpu_custom_call.1} parent=11 // pred_check
          %p368 = pneg %p258
        $region50: #{tpu_custom_call.1} parent=11 // pred_check_branch
          %370 = sbr.rel (%p368) target = $region52
        $region51: #{tpu_custom_call.1} parent=11 // pred_region
          _
        $region52: #{tpu_custom_call.1} parent=11 // pred_fallthru
          _
        // Predicated region
        $region53: #{tpu_custom_call.1} parent=11 // pred_check
          %p371 = pneg %p279
        $region54: #{tpu_custom_call.1} parent=11 // pred_check_branch
          %373 = sbr.rel (%p371) target = $region56
        $region55: #{tpu_custom_call.1} parent=11 // pred_region
          _
        $region56: #{tpu_custom_call.1} parent=11 // pred_fallthru
          _
        // Predicated region
        $region57: #{tpu_custom_call.1} parent=11 // pred_check
          %p374 = pneg %p300
        $region58: #{tpu_custom_call.1} parent=11 // pred_check_branch
          %376 = sbr.rel (%p374) target = $region60
        $region59: #{tpu_custom_call.1} parent=11 // pred_region
          _
        $region60: #{tpu_custom_call.1} parent=11 // pred_fallthru
          _
      $region12: #{tpu_custom_call.1} parent=5 // pred_fallthru
        _
      %p377 = scmp.lt.s32.totalorder %s22, 2
      // Predicated region
      $region61: #{tpu_custom_call.1} parent=5 // pred_check
        %p378 = pneg %p377
      $region62: #{tpu_custom_call.1} parent=5 // pred_check_branch
        %380 = sbr.rel (%p378) target = $region64
      $region63: #{tpu_custom_call.1} parent=5 // pred_region
        // Predicated region
        $region65: #{tpu_custom_call.1} parent=63 // pred_check
          %p381 = pneg %p42
        $region66: #{tpu_custom_call.1} parent=63 // pred_check_branch
          %383 = sbr.rel (%p381) target = $region68
        $region67: #{tpu_custom_call.1} parent=63 // pred_region
          %p384 = scmp.lt.s32.totalorder %s22, 1
          %s385 = scalar_select %p384, %s22, 1
          %s386 = smul.addr %s385, 32
          %s387 = smul.addr %s386, 8
          %s388 = scalar_lea.vmem %s0, %s387
        $region68: #{tpu_custom_call.1} parent=63 // pred_fallthru
          _
      $region64: #{tpu_custom_call.1} parent=5 // pred_fallthru
        _
      %p389 = scmp.le.s32.totalorder 1, %s22
      %p390 = scmp.lt.s32.totalorder %s22, 3
      %p391 = pnand %p389, %p390
      %p392 = pneg %p391
      // Predicated region
      $region69: #{tpu_custom_call.1} parent=5 // pred_check
        _
      $region70: #{tpu_custom_call.1} parent=5 // pred_check_branch
        %394 = sbr.rel (%p391) target = $region72
      $region71: #{tpu_custom_call.1} parent=5 // pred_region
        %s395 = ssub.s32 %s22, 1
        %p396 = scmp.lt.s32.totalorder %s27, 1
        %s397 = scalar_select %p396, %s27, 1
        %s398 = smul.addr %s397, 32
        %s399 = smul.addr %s398, 8
        %s400 = scalar_lea.vmem %s0, %s399
        %p401 = pneg %p48
        %p402 = pneg %p45
        %p403 = pneg %p69
        %p404 = pneg %p66
        %p405 = pneg %p90
        %p406 = pneg %p87
        %p407 = pneg %p111
        %p408 = pneg %p108
        %p409 = pneg %p132
        %p410 = pneg %p129
        %p411 = pneg %p153
        %p412 = pneg %p150
        %p413 = pneg %p174
        %p414 = pneg %p171
        %p415 = pneg %p195
        %p416 = pneg %p192
        %p417 = pneg %p216
        %p418 = pneg %p213
        %p419 = pneg %p237
        %p420 = pneg %p234
        %p421 = pneg %p258
        %p422 = pneg %p255
        %p423 = pneg %p279
        %p424 = pneg %p276
        %p425 = pneg %p300
        %p426 = pneg %p297
        %p427 = pneg %p326
        %p428 = pneg %p323
        %s429 = sand.u32 %s313, 1
        %s430 = scalar_lea.sflag [#allocation5], %s429
        %s431 = sand.u32 %s313, 1
        %s432 = smul.addr %s431, 256
        %s433 = scalar_lea.vmem [#allocation4], %s432
        %p434 = scmp.lt.s32.totalorder %s27, 1
        %s435 = scalar_select %p434, %s27, 1
        %s436 = smul.addr %s435, 32
        %s437 = smul.addr %s436, 8
        %s438 = scalar_lea.vmem %s0, %s437
        %v440 = vlaneseq
        %v441 = vshrl.u32 %v440, 7
        %v442 = vadd.s32 %v441, 8
        %v443 = vadd.s32 %v441, 16
        %v444 = vadd.s32 %v441, 24
        %v445 = vadd.s32 %v441, 32
        %v446 = vadd.s32 %v441, 40
        %v447 = vadd.s32 %v441, 48
        %v448 = vadd.s32 %v441, 56
        %v449 = vadd.s32 %v441, 64
        %v450 = vadd.s32 %v441, 72
        %v451 = vadd.s32 %v441, 80
        %v452 = vadd.s32 %v441, 88
        %v453 = vadd.s32 %v441, 96
        %v454 = vadd.s32 %v441, 104
        %v455 = vadd.s32 %v441, 112
        %v456 = vadd.s32 %v441, 120
        %v457 = vadd.s32 %v441, 128
        %v458 = vadd.s32 %v441, 136
        %v459 = vadd.s32 %v441, 144
        %v460 = vadd.s32 %v441, 152
        %v461 = vadd.s32 %v441, 160
        %v462 = vadd.s32 %v441, 168
        %v463 = vadd.s32 %v441, 176
        %v464 = vadd.s32 %v441, 184
        %v465 = vadd.s32 %v441, 192
        %v466 = vadd.s32 %v441, 200
        %v467 = vadd.s32 %v441, 208
        %v468 = vadd.s32 %v441, 216
        %v469 = vadd.s32 %v441, 224
        %v470 = vadd.s32 %v441, 232
        %v471 = vadd.s32 %v441, 240
        %v472 = vadd.s32 %v441, 248
        %vm473 = vcmp.lt.s32.totalorder %v441, 0
        %v474 = vsub.s32 0, %v441
        %v475 = vsel %vm473, %v474, %v441
        %v476 = vshrl.u32 %v475, 4
        %v477 = vand.u32 %v475, 15
        %v478 = vsub.s32 0, %v477
        %v479 = vsel %vm473, %v478, %v477
        %vm480 = vcmp.lt.s32.totalorder %v442, 0
        %v481 = vsub.s32 0, %v442
        %v482 = vsel %vm480, %v481, %v442
        %v483 = vshrl.u32 %v482, 4
        %v484 = vand.u32 %v482, 15
        %v485 = vsub.s32 0, %v484
        %v486 = vsel %vm480, %v485, %v484
        %vm487 = vcmp.lt.s32.totalorder %v443, 0
        %v488 = vsub.s32 0, %v443
        %v489 = vsel %vm487, %v488, %v443
        %v490 = vshrl.u32 %v489, 4
        %v491 = vand.u32 %v489, 15
        %v492 = vsub.s32 0, %v491
        %v493 = vsel %vm487, %v492, %v491
        %vm494 = vcmp.lt.s32.totalorder %v444, 0
        %v495 = vsub.s32 0, %v444
        %v496 = vsel %vm494, %v495, %v444
        %v497 = vshrl.u32 %v496, 4
        %v498 = vand.u32 %v496, 15
        %v499 = vsub.s32 0, %v498
        %v500 = vsel %vm494, %v499, %v498
        %vm501 = vcmp.lt.s32.totalorder %v445, 0
        %v502 = vsub.s32 0, %v445
        %v503 = vsel %vm501, %v502, %v445
        %v504 = vshrl.u32 %v503, 4
        %v505 = vand.u32 %v503, 15
        %v506 = vsub.s32 0, %v505
        %v507 = vsel %vm501, %v506, %v505
        %vm508 = vcmp.lt.s32.totalorder %v446, 0
        %v509 = vsub.s32 0, %v446
        %v510 = vsel %vm508, %v509, %v446
        %v511 = vshrl.u32 %v510, 4
        %v512 = vand.u32 %v510, 15
        %v513 = vsub.s32 0, %v512
        %v514 = vsel %vm508, %v513, %v512
        %vm515 = vcmp.lt.s32.totalorder %v447, 0
        %v516 = vsub.s32 0, %v447
        %v517 = vsel %vm515, %v516, %v447
        %v518 = vshrl.u32 %v517, 4
        %v519 = vand.u32 %v517, 15
        %v520 = vsub.s32 0, %v519
        %v521 = vsel %vm515, %v520, %v519
        %vm522 = vcmp.lt.s32.totalorder %v448, 0
        %v523 = vsub.s32 0, %v448
        %v524 = vsel %vm522, %v523, %v448
        %v525 = vshrl.u32 %v524, 4
        %v526 = vand.u32 %v524, 15
        %v527 = vsub.s32 0, %v526
        %v528 = vsel %vm522, %v527, %v526
        %vm529 = vcmp.lt.s32.totalorder %v449, 0
        %v530 = vsub.s32 0, %v449
        %v531 = vsel %vm529, %v530, %v449
        %v532 = vshrl.u32 %v531, 4
        %v533 = vand.u32 %v531, 15
        %v534 = vsub.s32 0, %v533
        %v535 = vsel %vm529, %v534, %v533
        %vm536 = vcmp.lt.s32.totalorder %v450, 0
        %v537 = vsub.s32 0, %v450
        %v538 = vsel %vm536, %v537, %v450
        %v539 = vshrl.u32 %v538, 4
        %v540 = vand.u32 %v538, 15
        %v541 = vsub.s32 0, %v540
        %v542 = vsel %vm536, %v541, %v540
        %vm543 = vcmp.lt.s32.totalorder %v451, 0
        %v544 = vsub.s32 0, %v451
        %v545 = vsel %vm543, %v544, %v451
        %v546 = vshrl.u32 %v545, 4
        %v547 = vand.u32 %v545, 15
        %v548 = vsub.s32 0, %v547
        %v549 = vsel %vm543, %v548, %v547
        %vm550 = vcmp.lt.s32.totalorder %v452, 0
        %v551 = vsub.s32 0, %v452
        %v552 = vsel %vm550, %v551, %v452
        %v553 = vshrl.u32 %v552, 4
        %v554 = vand.u32 %v552, 15
        %v555 = vsub.s32 0, %v554
        %v556 = vsel %vm550, %v555, %v554
        %vm557 = vcmp.lt.s32.totalorder %v453, 0
        %v558 = vsub.s32 0, %v453
        %v559 = vsel %vm557, %v558, %v453
        %v560 = vshrl.u32 %v559, 4
        %v561 = vand.u32 %v559, 15
        %v562 = vsub.s32 0, %v561
        %v563 = vsel %vm557, %v562, %v561
        %vm564 = vcmp.lt.s32.totalorder %v454, 0
        %v565 = vsub.s32 0, %v454
        %v566 = vsel %vm564, %v565, %v454
        %v567 = vshrl.u32 %v566, 4
        %v568 = vand.u32 %v566, 15
        %v569 = vsub.s32 0, %v568
        %v570 = vsel %vm564, %v569, %v568
        %vm571 = vcmp.lt.s32.totalorder %v455, 0
        %v572 = vsub.s32 0, %v455
        %v573 = vsel %vm571, %v572, %v455
        %v574 = vshrl.u32 %v573, 4
        %v575 = vand.u32 %v573, 15
        %v576 = vsub.s32 0, %v575
        %v577 = vsel %vm571, %v576, %v575
        %vm578 = vcmp.lt.s32.totalorder %v456, 0
        %v579 = vsub.s32 0, %v456
        %v580 = vsel %vm578, %v579, %v456
        %v581 = vshrl.u32 %v580, 4
        %v582 = vand.u32 %v580, 15
        %v583 = vsub.s32 0, %v582
        %v584 = vsel %vm578, %v583, %v582
        %vm585 = vcmp.lt.s32.totalorder %v457, 0
        %v586 = vsub.s32 0, %v457
        %v587 = vsel %vm585, %v586, %v457
        %v588 = vshrl.u32 %v587, 4
        %v589 = vand.u32 %v587, 15
        %v590 = vsub.s32 0, %v589
        %v591 = vsel %vm585, %v590, %v589
        %vm592 = vcmp.lt.s32.totalorder %v458, 0
        %v593 = vsub.s32 0, %v458
        %v594 = vsel %vm592, %v593, %v458
        %v595 = vshrl.u32 %v594, 4
        %v596 = vand.u32 %v594, 15
        %v597 = vsub.s32 0, %v596
        %v598 = vsel %vm592, %v597, %v596
        %vm599 = vcmp.lt.s32.totalorder %v459, 0
        %v600 = vsub.s32 0, %v459
        %v601 = vsel %vm599, %v600, %v459
        %v602 = vshrl.u32 %v601, 4
        %v603 = vand.u32 %v601, 15
        %v604 = vsub.s32 0, %v603
        %v605 = vsel %vm599, %v604, %v603
        %vm606 = vcmp.lt.s32.totalorder %v460, 0
        %v607 = vsub.s32 0, %v460
        %v608 = vsel %vm606, %v607, %v460
        %v609 = vshrl.u32 %v608, 4
        %v610 = vand.u32 %v608, 15
        %v611 = vsub.s32 0, %v610
        %v612 = vsel %vm606, %v611, %v610
        %vm613 = vcmp.lt.s32.totalorder %v461, 0
        %v614 = vsub.s32 0, %v461
        %v615 = vsel %vm613, %v614, %v461
        %v616 = vshrl.u32 %v615, 4
        %v617 = vand.u32 %v615, 15
        %v618 = vsub.s32 0, %v617
        %v619 = vsel %vm613, %v618, %v617
        %vm620 = vcmp.lt.s32.totalorder %v462, 0
        %v621 = vsub.s32 0, %v462
        %v622 = vsel %vm620, %v621, %v462
        %v623 = vshrl.u32 %v622, 4
        %v624 = vand.u32 %v622, 15
        %v625 = vsub.s32 0, %v624
        %v626 = vsel %vm620, %v625, %v624
        %vm627 = vcmp.lt.s32.totalorder %v463, 0
        %v628 = vsub.s32 0, %v463
        %v629 = vsel %vm627, %v628, %v463
        %v630 = vshrl.u32 %v629, 4
        %v631 = vand.u32 %v629, 15
        %v632 = vsub.s32 0, %v631
        %v633 = vsel %vm627, %v632, %v631
        %vm634 = vcmp.lt.s32.totalorder %v464, 0
        %v635 = vsub.s32 0, %v464
        %v636 = vsel %vm634, %v635, %v464
        %v637 = vshrl.u32 %v636, 4
        %v638 = vand.u32 %v636, 15
        %v639 = vsub.s32 0, %v638
        %v640 = vsel %vm634, %v639, %v638
        %vm641 = vcmp.lt.s32.totalorder %v465, 0
        %v642 = vsub.s32 0, %v465
        %v643 = vsel %vm641, %v642, %v465
        %v644 = vshrl.u32 %v643, 4
        %v645 = vand.u32 %v643, 15
        %v646 = vsub.s32 0, %v645
        %v647 = vsel %vm641, %v646, %v645
        %vm648 = vcmp.lt.s32.totalorder %v466, 0
        %v649 = vsub.s32 0, %v466
        %v650 = vsel %vm648, %v649, %v466
        %v651 = vshrl.u32 %v650, 4
        %v652 = vand.u32 %v650, 15
        %v653 = vsub.s32 0, %v652
        %v654 = vsel %vm648, %v653, %v652
        %vm655 = vcmp.lt.s32.totalorder %v467, 0
        %v656 = vsub.s32 0, %v467
        %v657 = vsel %vm655, %v656, %v467
        %v658 = vshrl.u32 %v657, 4
        %v659 = vand.u32 %v657, 15
        %v660 = vsub.s32 0, %v659
        %v661 = vsel %vm655, %v660, %v659
        %vm662 = vcmp.lt.s32.totalorder %v468, 0
        %v663 = vsub.s32 0, %v468
        %v664 = vsel %vm662, %v663, %v468
        %v665 = vshrl.u32 %v664, 4
        %v666 = vand.u32 %v664, 15
        %v667 = vsub.s32 0, %v666
        %v668 = vsel %vm662, %v667, %v666
        %vm669 = vcmp.lt.s32.totalorder %v469, 0
        %v670 = vsub.s32 0, %v469
        %v671 = vsel %vm669, %v670, %v469
        %v672 = vshrl.u32 %v671, 4
        %v673 = vand.u32 %v671, 15
        %v674 = vsub.s32 0, %v673
        %v675 = vsel %vm669, %v674, %v673
        %vm676 = vcmp.lt.s32.totalorder %v470, 0
        %v677 = vsub.s32 0, %v470
        %v678 = vsel %vm676, %v677, %v470
        %v679 = vshrl.u32 %v678, 4
        %v680 = vand.u32 %v678, 15
        %v681 = vsub.s32 0, %v680
        %v682 = vsel %vm676, %v681, %v680
        %vm683 = vcmp.lt.s32.totalorder %v471, 0
        %v684 = vsub.s32 0, %v471
        %v685 = vsel %vm683, %v684, %v471
        %v686 = vshrl.u32 %v685, 4
        %v687 = vand.u32 %v685, 15
        %v688 = vsub.s32 0, %v687
        %v689 = vsel %vm683, %v688, %v687
        %vm690 = vcmp.lt.s32.totalorder %v472, 0
        %v691 = vsub.s32 0, %v472
        %v692 = vsel %vm690, %v691, %v472
        %v693 = vshrl.u32 %v692, 4
        %v694 = vand.u32 %v692, 15
        %v695 = vsub.s32 0, %v694
        %v696 = vsel %vm690, %v695, %v694
        %vm697 = vcmp.ne.s32.totalorder %v479, 0
        %vm698 = vcmp.ne.s32.totalorder %v486, 0
        %vm699 = vcmp.ne.s32.totalorder %v493, 0
        %vm700 = vcmp.ne.s32.totalorder %v500, 0
        %vm701 = vcmp.ne.s32.totalorder %v507, 0
        %vm702 = vcmp.ne.s32.totalorder %v514, 0
        %vm703 = vcmp.ne.s32.totalorder %v521, 0
        %vm704 = vcmp.ne.s32.totalorder %v528, 0
        %vm705 = vcmp.ne.s32.totalorder %v535, 0
        %vm706 = vcmp.ne.s32.totalorder %v542, 0
        %vm707 = vcmp.ne.s32.totalorder %v549, 0
        %vm708 = vcmp.ne.s32.totalorder %v556, 0
        %vm709 = vcmp.ne.s32.totalorder %v563, 0
        %vm710 = vcmp.ne.s32.totalorder %v570, 0
        %vm711 = vcmp.ne.s32.totalorder %v577, 0
        %vm712 = vcmp.ne.s32.totalorder %v584, 0
        %vm713 = vcmp.ne.s32.totalorder %v591, 0
        %vm714 = vcmp.ne.s32.totalorder %v598, 0
        %vm715 = vcmp.ne.s32.totalorder %v605, 0
        %vm716 = vcmp.ne.s32.totalorder %v612, 0
        %vm717 = vcmp.ne.s32.totalorder %v619, 0
        %vm718 = vcmp.ne.s32.totalorder %v626, 0
        %vm719 = vcmp.ne.s32.totalorder %v633, 0
        %vm720 = vcmp.ne.s32.totalorder %v640, 0
        %vm721 = vcmp.ne.s32.totalorder %v647, 0
        %vm722 = vcmp.ne.s32.totalorder %v654, 0
        %vm723 = vcmp.ne.s32.totalorder %v661, 0
        %vm724 = vcmp.ne.s32.totalorder %v668, 0
        %vm725 = vcmp.ne.s32.totalorder %v675, 0
        %vm726 = vcmp.ne.s32.totalorder %v682, 0
        %vm727 = vcmp.ne.s32.totalorder %v689, 0
        %vm728 = vcmp.ne.s32.totalorder %v696, 0
        %vm729 = vcmp.lt.s32.totalorder %v479, 0
        %vm730 = vcmp.lt.s32.totalorder %v486, 0
        %vm731 = vcmp.lt.s32.totalorder %v493, 0
        %vm732 = vcmp.lt.s32.totalorder %v500, 0
        %vm733 = vcmp.lt.s32.totalorder %v507, 0
        %vm734 = vcmp.lt.s32.totalorder %v514, 0
        %vm735 = vcmp.lt.s32.totalorder %v521, 0
        %vm736 = vcmp.lt.s32.totalorder %v528, 0
        %vm737 = vcmp.lt.s32.totalorder %v535, 0
        %vm738 = vcmp.lt.s32.totalorder %v542, 0
        %vm739 = vcmp.lt.s32.totalorder %v549, 0
        %vm740 = vcmp.lt.s32.totalorder %v556, 0
        %vm741 = vcmp.lt.s32.totalorder %v563, 0
        %vm742 = vcmp.lt.s32.totalorder %v570, 0
        %vm743 = vcmp.lt.s32.totalorder %v577, 0
        %vm744 = vcmp.lt.s32.totalorder %v584, 0
        %vm745 = vcmp.lt.s32.totalorder %v591, 0
        %vm746 = vcmp.lt.s32.totalorder %v598, 0
        %vm747 = vcmp.lt.s32.totalorder %v605, 0
        %vm748 = vcmp.lt.s32.totalorder %v612, 0
        %vm749 = vcmp.lt.s32.totalorder %v619, 0
        %vm750 = vcmp.lt.s32.totalorder %v626, 0
        %vm751 = vcmp.lt.s32.totalorder %v633, 0
        %vm752 = vcmp.lt.s32.totalorder %v640, 0
        %vm753 = vcmp.lt.s32.totalorder %v647, 0
        %vm754 = vcmp.lt.s32.totalorder %v654, 0
        %vm755 = vcmp.lt.s32.totalorder %v661, 0
        %vm756 = vcmp.lt.s32.totalorder %v668, 0
        %vm757 = vcmp.lt.s32.totalorder %v675, 0
        %vm758 = vcmp.lt.s32.totalorder %v682, 0
        %vm759 = vcmp.lt.s32.totalorder %v689, 0
        %vm760 = vcmp.lt.s32.totalorder %v696, 0
        %vm761 = vmand %vm729, %vm697
        %vm762 = vmand %vm730, %vm698
        %vm763 = vmand %vm731, %vm699
        %vm764 = vmand %vm732, %vm700
        %vm765 = vmand %vm733, %vm701
        %vm766 = vmand %vm734, %vm702
        %vm767 = vmand %vm735, %vm703
        %vm768 = vmand %vm736, %vm704
        %vm769 = vmand %vm737, %vm705
        %vm770 = vmand %vm738, %vm706
        %vm771 = vmand %vm739, %vm707
        %vm772 = vmand %vm740, %vm708
        %vm773 = vmand %vm741, %vm709
        %vm774 = vmand %vm742, %vm710
        %vm775 = vmand %vm743, %vm711
        %vm776 = vmand %vm744, %vm712
        %vm777 = vmand %vm745, %vm713
        %vm778 = vmand %vm746, %vm714
        %vm779 = vmand %vm747, %vm715
        %vm780 = vmand %vm748, %vm716
        %vm781 = vmand %vm749, %vm717
        %vm782 = vmand %vm750, %vm718
        %vm783 = vmand %vm751, %vm719
        %vm784 = vmand %vm752, %vm720
        %vm785 = vmand %vm753, %vm721
        %vm786 = vmand %vm754, %vm722
        %vm787 = vmand %vm755, %vm723
        %vm788 = vmand %vm756, %vm724
        %vm789 = vmand %vm757, %vm725
        %vm790 = vmand %vm758, %vm726
        %vm791 = vmand %vm759, %vm727
        %vm792 = vmand %vm760, %vm728
        %v793 = vadd.s32 %v479, 16
        %v794 = vadd.s32 %v486, 16
        %v795 = vadd.s32 %v493, 16
        %v796 = vadd.s32 %v500, 16
        %v797 = vadd.s32 %v507, 16
        %v798 = vadd.s32 %v514, 16
        %v799 = vadd.s32 %v521, 16
        %v800 = vadd.s32 %v528, 16
        %v801 = vadd.s32 %v535, 16
        %v802 = vadd.s32 %v542, 16
        %v803 = vadd.s32 %v549, 16
        %v804 = vadd.s32 %v556, 16
        %v805 = vadd.s32 %v563, 16
        %v806 = vadd.s32 %v570, 16
        %v807 = vadd.s32 %v577, 16
        %v808 = vadd.s32 %v584, 16
        %v809 = vadd.s32 %v591, 16
        %v810 = vadd.s32 %v598, 16
        %v811 = vadd.s32 %v605, 16
        %v812 = vadd.s32 %v612, 16
        %v813 = vadd.s32 %v619, 16
        %v814 = vadd.s32 %v626, 16
        %v815 = vadd.s32 %v633, 16
        %v816 = vadd.s32 %v640, 16
        %v817 = vadd.s32 %v647, 16
        %v818 = vadd.s32 %v654, 16
        %v819 = vadd.s32 %v661, 16
        %v820 = vadd.s32 %v668, 16
        %v821 = vadd.s32 %v675, 16
        %v822 = vadd.s32 %v682, 16
        %v823 = vadd.s32 %v689, 16
        %v824 = vadd.s32 %v696, 16
        %v825 = vsel %vm761, %v793, %v479
        %v826 = vsel %vm762, %v794, %v486
        %v827 = vsel %vm763, %v795, %v493
        %v828 = vsel %vm764, %v796, %v500
        %v829 = vsel %vm765, %v797, %v507
        %v830 = vsel %vm766, %v798, %v514
        %v831 = vsel %vm767, %v799, %v521
        %v832 = vsel %vm768, %v800, %v528
        %v833 = vsel %vm769, %v801, %v535
        %v834 = vsel %vm770, %v802, %v542
        %v835 = vsel %vm771, %v803, %v549
        %v836 = vsel %vm772, %v804, %v556
        %v837 = vsel %vm773, %v805, %v563
        %v838 = vsel %vm774, %v806, %v570
        %v839 = vsel %vm775, %v807, %v577
        %v840 = vsel %vm776, %v808, %v584
        %v841 = vsel %vm777, %v809, %v591
        %v842 = vsel %vm778, %v810, %v598
        %v843 = vsel %vm779, %v811, %v605
        %v844 = vsel %vm780, %v812, %v612
        %v845 = vsel %vm781, %v813, %v619
        %v846 = vsel %vm782, %v814, %v626
        %v847 = vsel %vm783, %v815, %v633
        %v848 = vsel %vm784, %v816, %v640
        %v849 = vsel %vm785, %v817, %v647
        %v850 = vsel %vm786, %v818, %v654
        %v851 = vsel %vm787, %v819, %v661
        %v852 = vsel %vm788, %v820, %v668
        %v853 = vsel %vm789, %v821, %v675
        %v854 = vsel %vm790, %v822, %v682
        %v855 = vsel %vm791, %v823, %v689
        %v856 = vsel %vm792, %v824, %v696
        %vm857 = vcmp.ne.s32.totalorder %v825, 0
        %vm858 = vcmp.ne.s32.totalorder %v826, 0
        %vm859 = vcmp.ne.s32.totalorder %v827, 0
        %vm860 = vcmp.ne.s32.totalorder %v828, 0
        %vm861 = vcmp.ne.s32.totalorder %v829, 0
        %vm862 = vcmp.ne.s32.totalorder %v830, 0
        %vm863 = vcmp.ne.s32.totalorder %v831, 0
        %vm864 = vcmp.ne.s32.totalorder %v832, 0
        %vm865 = vcmp.ne.s32.totalorder %v833, 0
        %vm866 = vcmp.ne.s32.totalorder %v834, 0
        %vm867 = vcmp.ne.s32.totalorder %v835, 0
        %vm868 = vcmp.ne.s32.totalorder %v836, 0
        %vm869 = vcmp.ne.s32.totalorder %v837, 0
        %vm870 = vcmp.ne.s32.totalorder %v838, 0
        %vm871 = vcmp.ne.s32.totalorder %v839, 0
        %vm872 = vcmp.ne.s32.totalorder %v840, 0
        %vm873 = vcmp.ne.s32.totalorder %v841, 0
        %vm874 = vcmp.ne.s32.totalorder %v842, 0
        %vm875 = vcmp.ne.s32.totalorder %v843, 0
        %vm876 = vcmp.ne.s32.totalorder %v844, 0
        %vm877 = vcmp.ne.s32.totalorder %v845, 0
        %vm878 = vcmp.ne.s32.totalorder %v846, 0
        %vm879 = vcmp.ne.s32.totalorder %v847, 0
        %vm880 = vcmp.ne.s32.totalorder %v848, 0
        %vm881 = vcmp.ne.s32.totalorder %v849, 0
        %vm882 = vcmp.ne.s32.totalorder %v850, 0
        %vm883 = vcmp.ne.s32.totalorder %v851, 0
        %vm884 = vcmp.ne.s32.totalorder %v852, 0
        %vm885 = vcmp.ne.s32.totalorder %v853, 0
        %vm886 = vcmp.ne.s32.totalorder %v854, 0
        %vm887 = vcmp.ne.s32.totalorder %v855, 0
        %vm888 = vcmp.ne.s32.totalorder %v856, 0
        %vm889 = vcmp.ne.s32.totalorder %v825, 15
        %vm890 = vcmp.ne.s32.totalorder %v826, 15
        %vm891 = vcmp.ne.s32.totalorder %v827, 15
        %vm892 = vcmp.ne.s32.totalorder %v828, 15
        %vm893 = vcmp.ne.s32.totalorder %v829, 15
        %vm894 = vcmp.ne.s32.totalorder %v830, 15
        %vm895 = vcmp.ne.s32.totalorder %v831, 15
        %vm896 = vcmp.ne.s32.totalorder %v832, 15
        %vm897 = vcmp.ne.s32.totalorder %v833, 15
        %vm898 = vcmp.ne.s32.totalorder %v834, 15
        %vm899 = vcmp.ne.s32.totalorder %v835, 15
        %vm900 = vcmp.ne.s32.totalorder %v836, 15
        %vm901 = vcmp.ne.s32.totalorder %v837, 15
        %vm902 = vcmp.ne.s32.totalorder %v838, 15
        %vm903 = vcmp.ne.s32.totalorder %v839, 15
        %vm904 = vcmp.ne.s32.totalorder %v840, 15
        %vm905 = vcmp.ne.s32.totalorder %v841, 15
        %vm906 = vcmp.ne.s32.totalorder %v842, 15
        %vm907 = vcmp.ne.s32.totalorder %v843, 15
        %vm908 = vcmp.ne.s32.totalorder %v844, 15
        %vm909 = vcmp.ne.s32.totalorder %v845, 15
        %vm910 = vcmp.ne.s32.totalorder %v846, 15
        %vm911 = vcmp.ne.s32.totalorder %v847, 15
        %vm912 = vcmp.ne.s32.totalorder %v848, 15
        %vm913 = vcmp.ne.s32.totalorder %v849, 15
        %vm914 = vcmp.ne.s32.totalorder %v850, 15
        %vm915 = vcmp.ne.s32.totalorder %v851, 15
        %vm916 = vcmp.ne.s32.totalorder %v852, 15
        %vm917 = vcmp.ne.s32.totalorder %v853, 15
        %vm918 = vcmp.ne.s32.totalorder %v854, 15
        %vm919 = vcmp.ne.s32.totalorder %v855, 15
        %vm920 = vcmp.ne.s32.totalorder %v856, 15
        %v921 = vld [vmem:[%s438] sm:$0xff]
        %v922 = vld [vmem:[%s438 + $0x8] sm:$0xff]
        %v923 = vld [vmem:[%s438 + $0x10] sm:$0xff]
        %v924 = vld [vmem:[%s438 + $0x18] sm:$0xff]
        %v925 = vld [vmem:[%s438 + $0x20] sm:$0xff]
        %v926 = vld [vmem:[%s438 + $0x28] sm:$0xff]
        %v927 = vld [vmem:[%s438 + $0x30] sm:$0xff]
        %v928 = vld [vmem:[%s438 + $0x38] sm:$0xff]
        %v929 = vld [vmem:[%s438 + $0x40] sm:$0xff]
        %v930 = vld [vmem:[%s438 + $0x48] sm:$0xff]
        %v931 = vld [vmem:[%s438 + $0x50] sm:$0xff]
        %v932 = vld [vmem:[%s438 + $0x58] sm:$0xff]
        %v933 = vld [vmem:[%s438 + $0x60] sm:$0xff]
        %v934 = vld [vmem:[%s438 + $0x68] sm:$0xff]
        %v935 = vld [vmem:[%s438 + $0x70] sm:$0xff]
        %v936 = vld [vmem:[%s438 + $0x78] sm:$0xff]
        %v937 = vld [vmem:[%s438 + $0x80] sm:$0xff]
        %v938 = vld [vmem:[%s438 + $0x88] sm:$0xff]
        %v939 = vld [vmem:[%s438 + $0x90] sm:$0xff]
        %v940 = vld [vmem:[%s438 + $0x98] sm:$0xff]
        %v941 = vld [vmem:[%s438 + $0xa0] sm:$0xff]
        %v942 = vld [vmem:[%s438 + $0xa8] sm:$0xff]
        %v943 = vld [vmem:[%s438 + $0xb0] sm:$0xff]
        %v944 = vld [vmem:[%s438 + $0xb8] sm:$0xff]
        %v945 = vld [vmem:[%s438 + $0xc0] sm:$0xff]
        %v946 = vld [vmem:[%s438 + $0xc8] sm:$0xff]
        %v947 = vld [vmem:[%s438 + $0xd0] sm:$0xff]
        %v948 = vld [vmem:[%s438 + $0xd8] sm:$0xff]
        %v949 = vld [vmem:[%s438 + $0xe0] sm:$0xff]
        %v950 = vld [vmem:[%s438 + $0xe8] sm:$0xff]
        %v951 = vld [vmem:[%s438 + $0xf0] sm:$0xff]
        %v952 = vld [vmem:[%s438 + $0xf8] sm:$0xff]
        %v953 = vld [vmem:[%s1] sm:$0x1]
        %v954 = vld [vmem:[%s2] sm:$0x1]
        %v955 = vld [vmem:[%s9] sm:$0xff]
        %v956 = vld [vmem:[%s9 + $0x8] sm:$0xff]
        %v957 = vld [vmem:[%s9 + $0x10] sm:$0xff]
        %v958 = vld [vmem:[%s9 + $0x18] sm:$0xff]
        %v959 = vld [vmem:[%s9 + $0x20] sm:$0xff]
        %v960 = vld [vmem:[%s9 + $0x28] sm:$0xff]
        %v961 = vld [vmem:[%s9 + $0x30] sm:$0xff]
        %v962 = vld [vmem:[%s9 + $0x38] sm:$0xff]
        %vm963 = vcmask 523264
        %v964 = vsel %vm963, %v921, 0.0
        %v965 = vsel %vm963, %v922, 0.0
        %v966 = vadd.f32 %v964, %v965
        %v967 = vsel %vm963, %v923, 0.0
        %v968 = vadd.f32 %v966, %v967
        %v969 = vsel %vm963, %v924, 0.0
        %v970 = vadd.f32 %v968, %v969
        %v971 = vsel %vm963, %v925, 0.0
        %v972 = vadd.f32 %v970, %v971
        %v973 = vsel %vm963, %v926, 0.0
        %v974 = vadd.f32 %v972, %v973
        %v975 = vsel %vm963, %v927, 0.0
        %v976 = vadd.f32 %v974, %v975
        %v977 = vsel %vm963, %v928, 0.0
        %v978 = vadd.f32 %v976, %v977
        %v979 = vsel %vm963, %v929, 0.0
        %v980 = vadd.f32 %v978, %v979
        %v981 = vsel %vm963, %v930, 0.0
        %v982 = vadd.f32 %v980, %v981
        %v983 = vsel %vm963, %v931, 0.0
        %v984 = vadd.f32 %v982, %v983
        %v985 = vsel %vm963, %v932, 0.0
        %v986 = vadd.f32 %v984, %v985
        %v987 = vsel %vm963, %v933, 0.0
        %v988 = vadd.f32 %v986, %v987
        %v989 = vsel %vm963, %v934, 0.0
        %v990 = vadd.f32 %v988, %v989
        %v991 = vsel %vm963, %v935, 0.0
        %v992 = vadd.f32 %v990, %v991
        %v993 = vsel %vm963, %v936, 0.0
        %v994 = vadd.f32 %v992, %v993
        %v995 = vsel %vm963, %v937, 0.0
        %v996 = vadd.f32 %v994, %v995
        %v997 = vsel %vm963, %v938, 0.0
        %v998 = vadd.f32 %v996, %v997
        %v999 = vsel %vm963, %v939, 0.0
        %v1000 = vadd.f32 %v998, %v999
        %v1001 = vsel %vm963, %v940, 0.0
        %v1002 = vadd.f32 %v1000, %v1001
        %v1003 = vsel %vm963, %v941, 0.0
        %v1004 = vadd.f32 %v1002, %v1003
        %v1005 = vsel %vm963, %v942, 0.0
        %v1006 = vadd.f32 %v1004, %v1005
        %v1007 = vsel %vm963, %v943, 0.0
        %v1008 = vadd.f32 %v1006, %v1007
        %v1009 = vsel %vm963, %v944, 0.0
        %v1010 = vadd.f32 %v1008, %v1009
        %v1011 = vsel %vm963, %v945, 0.0
        %v1012 = vadd.f32 %v1010, %v1011
        %v1013 = vsel %vm963, %v946, 0.0
        %v1014 = vadd.f32 %v1012, %v1013
        %v1015 = vsel %vm963, %v947, 0.0
        %v1016 = vadd.f32 %v1014, %v1015
        %v1017 = vsel %vm963, %v948, 0.0
        %v1018 = vadd.f32 %v1016, %v1017
        %v1019 = vsel %vm963, %v949, 0.0
        %v1020 = vadd.f32 %v1018, %v1019
        %v1021 = vsel %vm963, %v950, 0.0
        %v1022 = vadd.f32 %v1020, %v1021
        %v1023 = vsel %vm963, %v951, 0.0
        %v1024 = vadd.f32 %v1022, %v1023
        %v1025 = vsel %vm963, %v952, 0.0
        %v1026 = vadd.f32 %v1024, %v1025
        %v1027 = vrot.slane %v1026, 4
        %v1028 = vadd.f32 %v1026, %v1027
        %v1029 = vrot.slane %v1028, 2
        %v1030 = vadd.f32 %v1028, %v1029
        %v1031 = vrot.slane %v1030, 1
        %v1032 = vadd.f32 %v1030, %v1031
        %v1033 = vmul.f32 %v921, %v921
        %v1034 = vmul.f32 %v922, %v922
        %v1035 = vmul.f32 %v923, %v923
        %v1036 = vmul.f32 %v924, %v924
        %v1037 = vmul.f32 %v925, %v925
        %v1038 = vmul.f32 %v926, %v926
        %v1039 = vmul.f32 %v927, %v927
        %v1040 = vmul.f32 %v928, %v928
        %v1041 = vmul.f32 %v929, %v929
        %v1042 = vmul.f32 %v930, %v930
        %v1043 = vmul.f32 %v931, %v931
        %v1044 = vmul.f32 %v932, %v932
        %v1045 = vmul.f32 %v933, %v933
        %v1046 = vmul.f32 %v934, %v934
        %v1047 = vmul.f32 %v935, %v935
        %v1048 = vmul.f32 %v936, %v936
        %v1049 = vmul.f32 %v937, %v937
        %v1050 = vmul.f32 %v938, %v938
        %v1051 = vmul.f32 %v939, %v939
        %v1052 = vmul.f32 %v940, %v940
        %v1053 = vmul.f32 %v941, %v941
        %v1054 = vmul.f32 %v942, %v942
        %v1055 = vmul.f32 %v943, %v943
        %v1056 = vmul.f32 %v944, %v944
        %v1057 = vmul.f32 %v945, %v945
        %v1058 = vmul.f32 %v946, %v946
        %v1059 = vmul.f32 %v947, %v947
        %v1060 = vmul.f32 %v948, %v948
        %v1061 = vmul.f32 %v949, %v949
        %v1062 = vmul.f32 %v950, %v950
        %v1063 = vmul.f32 %v951, %v951
        %v1064 = vmul.f32 %v952, %v952
        %v1065 = vsel %vm963, %v1033, 0.0
        %v1066 = vsel %vm963, %v1034, 0.0
        %v1067 = vadd.f32 %v1065, %v1066
        %v1068 = vsel %vm963, %v1035, 0.0
        %v1069 = vadd.f32 %v1067, %v1068
        %v1070 = vsel %vm963, %v1036, 0.0
        %v1071 = vadd.f32 %v1069, %v1070
        %v1072 = vsel %vm963, %v1037, 0.0
        %v1073 = vadd.f32 %v1071, %v1072
        %v1074 = vsel %vm963, %v1038, 0.0
        %v1075 = vadd.f32 %v1073, %v1074
        %v1076 = vsel %vm963, %v1039, 0.0
        %v1077 = vadd.f32 %v1075, %v1076
        %v1078 = vsel %vm963, %v1040, 0.0
        %v1079 = vadd.f32 %v1077, %v1078
        %v1080 = vsel %vm963, %v1041, 0.0
        %v1081 = vadd.f32 %v1079, %v1080
        %v1082 = vsel %vm963, %v1042, 0.0
        %v1083 = vadd.f32 %v1081, %v1082
        %v1084 = vsel %vm963, %v1043, 0.0
        %v1085 = vadd.f32 %v1083, %v1084
        %v1086 = vsel %vm963, %v1044, 0.0
        %v1087 = vadd.f32 %v1085, %v1086
        %v1088 = vsel %vm963, %v1045, 0.0
        %v1089 = vadd.f32 %v1087, %v1088
        %v1090 = vsel %vm963, %v1046, 0.0
        %v1091 = vadd.f32 %v1089, %v1090
        %v1092 = vsel %vm963, %v1047, 0.0
        %v1093 = vadd.f32 %v1091, %v1092
        %v1094 = vsel %vm963, %v1048, 0.0
        %v1095 = vadd.f32 %v1093, %v1094
        %v1096 = vsel %vm963, %v1049, 0.0
        %v1097 = vadd.f32 %v1095, %v1096
        %v1098 = vsel %vm963, %v1050, 0.0
        %v1099 = vadd.f32 %v1097, %v1098
        %v1100 = vsel %vm963, %v1051, 0.0
        %v1101 = vadd.f32 %v1099, %v1100
        %v1102 = vsel %vm963, %v1052, 0.0
        %v1103 = vadd.f32 %v1101, %v1102
        %v1104 = vsel %vm963, %v1053, 0.0
        %v1105 = vadd.f32 %v1103, %v1104
        %v1106 = vsel %vm963, %v1054, 0.0
        %v1107 = vadd.f32 %v1105, %v1106
        %v1108 = vsel %vm963, %v1055, 0.0
        %v1109 = vadd.f32 %v1107, %v1108
        %v1110 = vsel %vm963, %v1056, 0.0
        %v1111 = vadd.f32 %v1109, %v1110
        %v1112 = vsel %vm963, %v1057, 0.0
        %v1113 = vadd.f32 %v1111, %v1112
        %v1114 = vsel %vm963, %v1058, 0.0
        %v1115 = vadd.f32 %v1113, %v1114
        %v1116 = vsel %vm963, %v1059, 0.0
        %v1117 = vadd.f32 %v1115, %v1116
        %v1118 = vsel %vm963, %v1060, 0.0
        %v1119 = vadd.f32 %v1117, %v1118
        %v1120 = vsel %vm963, %v1061, 0.0
        %v1121 = vadd.f32 %v1119, %v1120
        %v1122 = vsel %vm963, %v1062, 0.0
        %v1123 = vadd.f32 %v1121, %v1122
        %v1124 = vsel %vm963, %v1063, 0.0
        %v1125 = vadd.f32 %v1123, %v1124
        %v1126 = vsel %vm963, %v1064, 0.0
        %v1127 = vadd.f32 %v1125, %v1126
        %v1128 = vrot.slane %v1127, 4
        %v1129 = vadd.f32 %v1127, %v1128
        %v1130 = vrot.slane %v1129, 2
        %v1131 = vadd.f32 %v1129, %v1130
        %v1132 = vrot.slane %v1131, 1
        %v1133 = vadd.f32 %v1131, %v1132
        %v1135 = vsel %vm963, %v1032, 0
        %1137 = vmatprep.subr.mxu0 0.0
        %1138 = vmatpush1.msra.mxu0 0.0
        %1139 = vmatprep.subr.mxu0 0.0
        %1140 = vmatpush1.msra.mxu0 0.0
        %1141 = vmatprep.subr.mxu0 0.0
        %1142 = vmatpush1.msra.mxu0 0.0
        %1143 = vmatprep.subr.mxu0 0.0
        %1144 = vmatpush1.msra.mxu0 0.0
        %1145 = vmatprep.subr.mxu0 0.0
        %1146 = vmatpush1.msra.mxu0 0.0
        %1147 = vmatprep.subr.mxu0 0.0
        %1148 = vmatpush1.msra.mxu0 0.0
        %1149 = vmatprep.subr.mxu0 0.0
        %1150 = vmatpush1.msra.mxu0 0.0
        %1151 = vmatprep.subr.mxu0 0.0
        %1152 = vmatpush1.msra.mxu0 0.0
        %1153 = vmatprep.subr.mxu0 0.0
        %1154 = vmatpush1.msra.mxu0 %v962
        %1155 = vmatprep.subr.mxu0 0.0
        %1156 = vmatpush1.msra.mxu0 %v961
        %1157 = vmatprep.subr.mxu0 0.0
        %1158 = vmatpush1.msra.mxu0 %v960
        %1159 = vmatprep.subr.mxu0 0.0
        %1160 = vmatpush1.msra.mxu0 %v959
        %1161 = vmatprep.subr.mxu0 0.0
        %1162 = vmatpush1.msra.mxu0 %v958
        %1163 = vmatprep.subr.mxu0 0.0
        %1164 = vmatpush1.msra.mxu0 %v957
        %1165 = vmatprep.subr.mxu0 0.0
        %1166 = vmatpush1.msra.mxu0 %v956
        %1167 = vmatprep.subr.mxu0 0.0
        %1168 = vmatpush1.msra.mxu0 %v955
        %1169 = vmatprep.subr.mxu0 0.0
        %1170 = vmatpush2.msra.mxu0 0.0
        %1171 = vmatprep.subr.mxu0 0.0
        %1172 = vmatpush2.msra.mxu0 0.0
        %1173 = vmatprep.subr.mxu0 0.0
        %1174 = vmatpush2.msra.mxu0 0.0
        %1175 = vmatprep.subr.mxu0 0.0
        %1176 = vmatpush2.msra.mxu0 0.0
        %1177 = vmatprep.subr.mxu0 0.0
        %1178 = vmatpush2.msra.mxu0 0.0
        %1179 = vmatprep.subr.mxu0 0.0
        %1180 = vmatpush2.msra.mxu0 0.0
        %1181 = vmatprep.subr.mxu0 0.0
        %1182 = vmatpush2.msra.mxu0 0.0
        %1183 = vmatprep.subr.mxu0 0.0
        %1184 = vmatpush2.msra.mxu0 0.0
        %1185 = vmatprep.subr.mxu0 0.0
        %1186 = vmatpush2.msra.mxu0 0.0
        %1187 = vmatprep.subr.mxu0 0.0
        %1188 = vmatpush2.msra.mxu0 0.0
        %1189 = vmatprep.subr.mxu0 0.0
        %1190 = vmatpush2.msra.mxu0 0.0
        %1191 = vmatprep.subr.mxu0 0.0
        %1192 = vmatpush2.msra.mxu0 0.0
        %1193 = vmatprep.subr.mxu0 0.0
        %1194 = vmatpush2.msra.mxu0 0.0
        %1195 = vmatprep.subr.mxu0 0.0
        %1196 = vmatpush2.msra.mxu0 0.0
        %1197 = vmatprep.subr.mxu0 0.0
        %1198 = vmatpush2.msra.mxu0 0.0
        %1199 = vmatprep.subr.mxu0 0.0
        %1200 = vmatpush2.msra.mxu0 0.0
        %1201 = vmatprep.mubr.f32.mxu0 0.0
        %1202 = vmatmul.mubr.f32.gmra.mxu0 %v1135
        %v1203 = vpop.f32.mrf.mxu0
        %v1204 = vadd.f32 0.0, %v1203
        %v1205 = vpop.f32.mrf.mxu0
        %1206 = vdwg.mxu0
        %v1208 = vsel %vm963, %v1133, 0
        %1210 = vmatprep.subr.mxu0 0.0
        %1211 = vmatpush1.msra.mxu0 0.0
        %1212 = vmatprep.subr.mxu0 0.0
        %1213 = vmatpush1.msra.mxu0 0.0
        %1214 = vmatprep.subr.mxu0 0.0
        %1215 = vmatpush1.msra.mxu0 0.0
        %1216 = vmatprep.subr.mxu0 0.0
        %1217 = vmatpush1.msra.mxu0 0.0
        %1218 = vmatprep.subr.mxu0 0.0
        %1219 = vmatpush1.msra.mxu0 0.0
        %1220 = vmatprep.subr.mxu0 0.0
        %1221 = vmatpush1.msra.mxu0 0.0
        %1222 = vmatprep.subr.mxu0 0.0
        %1223 = vmatpush1.msra.mxu0 0.0
        %1224 = vmatprep.subr.mxu0 0.0
        %1225 = vmatpush1.msra.mxu0 0.0
        %1226 = vmatprep.subr.mxu0 0.0
        %1227 = vmatpush1.msra.mxu0 %v962
        %1228 = vmatprep.subr.mxu0 0.0
        %1229 = vmatpush1.msra.mxu0 %v961
        %1230 = vmatprep.subr.mxu0 0.0
        %1231 = vmatpush1.msra.mxu0 %v960
        %1232 = vmatprep.subr.mxu0 0.0
        %1233 = vmatpush1.msra.mxu0 %v959
        %1234 = vmatprep.subr.mxu0 0.0
        %1235 = vmatpush1.msra.mxu0 %v958
        %1236 = vmatprep.subr.mxu0 0.0
        %1237 = vmatpush1.msra.mxu0 %v957
        %1238 = vmatprep.subr.mxu0 0.0
        %1239 = vmatpush1.msra.mxu0 %v956
        %1240 = vmatprep.subr.mxu0 0.0
        %1241 = vmatpush1.msra.mxu0 %v955
        %1242 = vmatprep.subr.mxu0 0.0
        %1243 = vmatpush2.msra.mxu0 0.0
        %1244 = vmatprep.subr.mxu0 0.0
        %1245 = vmatpush2.msra.mxu0 0.0
        %1246 = vmatprep.subr.mxu0 0.0
        %1247 = vmatpush2.msra.mxu0 0.0
        %1248 = vmatprep.subr.mxu0 0.0
        %1249 = vmatpush2.msra.mxu0 0.0
        %1250 = vmatprep.subr.mxu0 0.0
        %1251 = vmatpush2.msra.mxu0 0.0
        %1252 = vmatprep.subr.mxu0 0.0
        %1253 = vmatpush2.msra.mxu0 0.0
        %1254 = vmatprep.subr.mxu0 0.0
        %1255 = vmatpush2.msra.mxu0 0.0
        %1256 = vmatprep.subr.mxu0 0.0
        %1257 = vmatpush2.msra.mxu0 0.0
        %1258 = vmatprep.subr.mxu0 0.0
        %1259 = vmatpush2.msra.mxu0 0.0
        %1260 = vmatprep.subr.mxu0 0.0
        %1261 = vmatpush2.msra.mxu0 0.0
        %1262 = vmatprep.subr.mxu0 0.0
        %1263 = vmatpush2.msra.mxu0 0.0
        %1264 = vmatprep.subr.mxu0 0.0
        %1265 = vmatpush2.msra.mxu0 0.0
        %1266 = vmatprep.subr.mxu0 0.0
        %1267 = vmatpush2.msra.mxu0 0.0
        %1268 = vmatprep.subr.mxu0 0.0
        %1269 = vmatpush2.msra.mxu0 0.0
        %1270 = vmatprep.subr.mxu0 0.0
        %1271 = vmatpush2.msra.mxu0 0.0
        %1272 = vmatprep.subr.mxu0 0.0
        %1273 = vmatpush2.msra.mxu0 0.0
        %1274 = vmatprep.mubr.f32.mxu0 0.0
        %1275 = vmatmul.mubr.f32.gmra.mxu0 %v1208
        %v1276 = vpop.f32.mrf.mxu0
        %v1277 = vadd.f32 0.0, %v1276
        %v1278 = vpop.f32.mrf.mxu0
        %1279 = vdwg.mxu0
        %v1280 = vrcp.pop 512.0
        %v1281 = vmul.f32 %v1204, %v1280
        %v1282 = vmul.f32 %v1277, %v1280
        %v1283 = vmul.f32 %v1281, %v1281
        %v1284 = vsub.f32 %v1282, %v1283
        %v1285 = vmax.f32 %v1284, 0.0
        %v1286 = vadd.f32 %v1285, 1e-06
        %v1287 = vrsqrt.pop %v1286
        %vm1288 = vcmask 261120
        %v1290 = vsel %vm1288, %v1281, 0
        %v1293 = vsel %vm1288, %v955, 0
        %v1296 = vsel %vm1288, %v956, 0
        %v1299 = vsel %vm1288, %v957, 0
        %v1302 = vsel %vm1288, %v958, 0
        %v1305 = vsel %vm1288, %v959, 0
        %v1308 = vsel %vm1288, %v960, 0
        %v1311 = vsel %vm1288, %v961, 0
        %v1314 = vsel %vm1288, %v962, 0
        %1316 = vmatprep.subr.mxu0 0.0
        %1317 = vmatpush1.xpose.msra.mxu0 0.0
        %1318 = vmatprep.subr.mxu0 0.0
        %1319 = vmatpush1.xpose.msra.mxu0 0.0
        %1320 = vmatprep.subr.mxu0 0.0
        %1321 = vmatpush1.xpose.msra.mxu0 0.0
        %1322 = vmatprep.subr.mxu0 0.0
        %1323 = vmatpush1.xpose.msra.mxu0 0.0
        %1324 = vmatprep.subr.mxu0 0.0
        %1325 = vmatpush1.xpose.msra.mxu0 0.0
        %1326 = vmatprep.subr.mxu0 0.0
        %1327 = vmatpush1.xpose.msra.mxu0 0.0
        %1328 = vmatprep.subr.mxu0 0.0
        %1329 = vmatpush1.xpose.msra.mxu0 0.0
        %1330 = vmatprep.subr.mxu0 0.0
        %1331 = vmatpush1.xpose.msra.mxu0 0.0
        %1332 = vmatprep.subr.mxu0 0.0
        %1333 = vmatpush1.xpose.msra.mxu0 %v1314
        %1334 = vmatprep.subr.mxu0 0.0
        %1335 = vmatpush1.xpose.msra.mxu0 %v1311
        %1336 = vmatprep.subr.mxu0 0.0
        %1337 = vmatpush1.xpose.msra.mxu0 %v1308
        %1338 = vmatprep.subr.mxu0 0.0
        %1339 = vmatpush1.xpose.msra.mxu0 %v1305
        %1340 = vmatprep.subr.mxu0 0.0
        %1341 = vmatpush1.xpose.msra.mxu0 %v1302
        %1342 = vmatprep.subr.mxu0 0.0
        %1343 = vmatpush1.xpose.msra.mxu0 %v1299
        %1344 = vmatprep.subr.mxu0 0.0
        %1345 = vmatpush1.xpose.msra.mxu0 %v1296
        %1346 = vmatprep.subr.mxu0 0.0
        %1347 = vmatpush1.xpose.msra.mxu0 %v1293
        %1348 = vmatprep.subr.mxu0 0.0
        %1349 = vmatpush2.xpose.msra.mxu0 0.0
        %1350 = vmatprep.subr.mxu0 0.0
        %1351 = vmatpush2.xpose.msra.mxu0 0.0
        %1352 = vmatprep.subr.mxu0 0.0
        %1353 = vmatpush2.xpose.msra.mxu0 0.0
        %1354 = vmatprep.subr.mxu0 0.0
        %1355 = vmatpush2.xpose.msra.mxu0 0.0
        %1356 = vmatprep.subr.mxu0 0.0
        %1357 = vmatpush2.xpose.msra.mxu0 0.0
        %1358 = vmatprep.subr.mxu0 0.0
        %1359 = vmatpush2.xpose.msra.mxu0 0.0
        %1360 = vmatprep.subr.mxu0 0.0
        %1361 = vmatpush2.xpose.msra.mxu0 0.0
        %1362 = vmatprep.subr.mxu0 0.0
        %1363 = vmatpush2.xpose.msra.mxu0 0.0
        %1364 = vmatprep.subr.mxu0 0.0
        %1365 = vmatpush2.xpose.msra.mxu0 0.0
        %1366 = vmatprep.subr.mxu0 0.0
        %1367 = vmatpush2.xpose.msra.mxu0 0.0
        %1368 = vmatprep.subr.mxu0 0.0
        %1369 = vmatpush2.xpose.msra.mxu0 0.0
        %1370 = vmatprep.subr.mxu0 0.0
        %1371 = vmatpush2.xpose.msra.mxu0 0.0
        %1372 = vmatprep.subr.mxu0 0.0
        %1373 = vmatpush2.xpose.msra.mxu0 0.0
        %1374 = vmatprep.subr.mxu0 0.0
        %1375 = vmatpush2.xpose.msra.mxu0 0.0
        %1376 = vmatprep.subr.mxu0 0.0
        %1377 = vmatpush2.xpose.msra.mxu0 0.0
        %1378 = vmatprep.subr.mxu0 0.0
        %1379 = vmatpush2.xpose.msra.mxu0 0.0
        %1380 = vmatprep.mubr.f32.mxu0 0.0
        %1381 = vmatmul.mubr.f32.gmra.mxu0 %v1290
        %v1382 = vpop.f32.mrf.mxu0
        %v1383 = vadd.f32 0.0, %v1382
        %v1384 = vpop.f32.mrf.mxu0
        %1385 = vdwg.mxu0
        %v1387 = vsel %vm1288, %v1287, 0
        %1389 = vmatprep.subr.mxu0 0.0
        %1390 = vmatpush1.xpose.msra.mxu0 0.0
        %1391 = vmatprep.subr.mxu0 0.0
        %1392 = vmatpush1.xpose.msra.mxu0 0.0
        %1393 = vmatprep.subr.mxu0 0.0
        %1394 = vmatpush1.xpose.msra.mxu0 0.0
        %1395 = vmatprep.subr.mxu0 0.0
        %1396 = vmatpush1.xpose.msra.mxu0 0.0
        %1397 = vmatprep.subr.mxu0 0.0
        %1398 = vmatpush1.xpose.msra.mxu0 0.0
        %1399 = vmatprep.subr.mxu0 0.0
        %1400 = vmatpush1.xpose.msra.mxu0 0.0
        %1401 = vmatprep.subr.mxu0 0.0
        %1402 = vmatpush1.xpose.msra.mxu0 0.0
        %1403 = vmatprep.subr.mxu0 0.0
        %1404 = vmatpush1.xpose.msra.mxu0 0.0
        %1405 = vmatprep.subr.mxu0 0.0
        %1406 = vmatpush1.xpose.msra.mxu0 %v1314
        %1407 = vmatprep.subr.mxu0 0.0
        %1408 = vmatpush1.xpose.msra.mxu0 %v1311
        %1409 = vmatprep.subr.mxu0 0.0
        %1410 = vmatpush1.xpose.msra.mxu0 %v1308
        %1411 = vmatprep.subr.mxu0 0.0
        %1412 = vmatpush1.xpose.msra.mxu0 %v1305
        %1413 = vmatprep.subr.mxu0 0.0
        %1414 = vmatpush1.xpose.msra.mxu0 %v1302
        %1415 = vmatprep.subr.mxu0 0.0
        %1416 = vmatpush1.xpose.msra.mxu0 %v1299
        %1417 = vmatprep.subr.mxu0 0.0
        %1418 = vmatpush1.xpose.msra.mxu0 %v1296
        %1419 = vmatprep.subr.mxu0 0.0
        %1420 = vmatpush1.xpose.msra.mxu0 %v1293
        %1421 = vmatprep.subr.mxu0 0.0
        %1422 = vmatpush2.xpose.msra.mxu0 0.0
        %1423 = vmatprep.subr.mxu0 0.0
        %1424 = vmatpush2.xpose.msra.mxu0 0.0
        %1425 = vmatprep.subr.mxu0 0.0
        %1426 = vmatpush2.xpose.msra.mxu0 0.0
        %1427 = vmatprep.subr.mxu0 0.0
        %1428 = vmatpush2.xpose.msra.mxu0 0.0
        %1429 = vmatprep.subr.mxu0 0.0
        %1430 = vmatpush2.xpose.msra.mxu0 0.0
        %1431 = vmatprep.subr.mxu0 0.0
        %1432 = vmatpush2.xpose.msra.mxu0 0.0
        %1433 = vmatprep.subr.mxu0 0.0
        %1434 = vmatpush2.xpose.msra.mxu0 0.0
        %1435 = vmatprep.subr.mxu0 0.0
        %1436 = vmatpush2.xpose.msra.mxu0 0.0
        %1437 = vmatprep.subr.mxu0 0.0
        %1438 = vmatpush2.xpose.msra.mxu0 0.0
        %1439 = vmatprep.subr.mxu0 0.0
        %1440 = vmatpush2.xpose.msra.mxu0 0.0
        %1441 = vmatprep.subr.mxu0 0.0
        %1442 = vmatpush2.xpose.msra.mxu0 0.0
        %1443 = vmatprep.subr.mxu0 0.0
        %1444 = vmatpush2.xpose.msra.mxu0 0.0
        %1445 = vmatprep.subr.mxu0 0.0
        %1446 = vmatpush2.xpose.msra.mxu0 0.0
        %1447 = vmatprep.subr.mxu0 0.0
        %1448 = vmatpush2.xpose.msra.mxu0 0.0
        %1449 = vmatprep.subr.mxu0 0.0
        %1450 = vmatpush2.xpose.msra.mxu0 0.0
        %1451 = vmatprep.subr.mxu0 0.0
        %1452 = vmatpush2.xpose.msra.mxu0 0.0
        %1453 = vmatprep.mubr.f32.mxu0 0.0
        %1454 = vmatmul.mubr.f32.gmra.mxu0 %v1387
        %v1455 = vpop.f32.mrf.mxu0
        %v1456 = vadd.f32 0.0, %v1455
        %v1457 = vpop.f32.mrf.mxu0
        %1458 = vdwg.mxu0
        %v1459 = vlaneseq
        %v1460 = vshrl.u32 %v1459, 7
        %v1461 = vsub.s32 0, %v1460
        %v1462 = vrot.slane %v1383, %v1461
        %v1463 = vsub.f32 %v921, %v1462
        %v1464 = vsub.f32 %v922, %v1462
        %v1465 = vsub.f32 %v923, %v1462
        %v1466 = vsub.f32 %v924, %v1462
        %v1467 = vsub.f32 %v925, %v1462
        %v1468 = vsub.f32 %v926, %v1462
        %v1469 = vsub.f32 %v927, %v1462
        %v1470 = vsub.f32 %v928, %v1462
        %v1471 = vsub.f32 %v929, %v1462
        %v1472 = vsub.f32 %v930, %v1462
        %v1473 = vsub.f32 %v931, %v1462
        %v1474 = vsub.f32 %v932, %v1462
        %v1475 = vsub.f32 %v933, %v1462
        %v1476 = vsub.f32 %v934, %v1462
        %v1477 = vsub.f32 %v935, %v1462
        %v1478 = vsub.f32 %v936, %v1462
        %v1479 = vsub.f32 %v937, %v1462
        %v1480 = vsub.f32 %v938, %v1462
        %v1481 = vsub.f32 %v939, %v1462
        %v1482 = vsub.f32 %v940, %v1462
        %v1483 = vsub.f32 %v941, %v1462
        %v1484 = vsub.f32 %v942, %v1462
        %v1485 = vsub.f32 %v943, %v1462
        %v1486 = vsub.f32 %v944, %v1462
        %v1487 = vsub.f32 %v945, %v1462
        %v1488 = vsub.f32 %v946, %v1462
        %v1489 = vsub.f32 %v947, %v1462
        %v1490 = vsub.f32 %v948, %v1462
        %v1491 = vsub.f32 %v949, %v1462
        %v1492 = vsub.f32 %v950, %v1462
        %v1493 = vsub.f32 %v951, %v1462
        %v1494 = vsub.f32 %v952, %v1462
        %v1495 = vlaneseq
        %v1496 = vshrl.u32 %v1495, 7
        %v1497 = vsub.s32 0, %v1496
        %v1498 = vrot.slane %v1456, %v1497
        %v1499 = vmul.f32 %v1463, %v1498
        %v1500 = vmul.f32 %v1464, %v1498
        %v1501 = vmul.f32 %v1465, %v1498
        %v1502 = vmul.f32 %v1466, %v1498
        %v1503 = vmul.f32 %v1467, %v1498
        %v1504 = vmul.f32 %v1468, %v1498
        %v1505 = vmul.f32 %v1469, %v1498
        %v1506 = vmul.f32 %v1470, %v1498
        %v1507 = vmul.f32 %v1471, %v1498
        %v1508 = vmul.f32 %v1472, %v1498
        %v1509 = vmul.f32 %v1473, %v1498
        %v1510 = vmul.f32 %v1474, %v1498
        %v1511 = vmul.f32 %v1475, %v1498
        %v1512 = vmul.f32 %v1476, %v1498
        %v1513 = vmul.f32 %v1477, %v1498
        %v1514 = vmul.f32 %v1478, %v1498
        %v1515 = vmul.f32 %v1479, %v1498
        %v1516 = vmul.f32 %v1480, %v1498
        %v1517 = vmul.f32 %v1481, %v1498
        %v1518 = vmul.f32 %v1482, %v1498
        %v1519 = vmul.f32 %v1483, %v1498
        %v1520 = vmul.f32 %v1484, %v1498
        %v1521 = vmul.f32 %v1485, %v1498
        %v1522 = vmul.f32 %v1486, %v1498
        %v1523 = vmul.f32 %v1487, %v1498
        %v1524 = vmul.f32 %v1488, %v1498
        %v1525 = vmul.f32 %v1489, %v1498
        %v1526 = vmul.f32 %v1490, %v1498
        %v1527 = vmul.f32 %v1491, %v1498
        %v1528 = vmul.f32 %v1492, %v1498
        %v1529 = vmul.f32 %v1493, %v1498
        %v1530 = vmul.f32 %v1494, %v1498
        %v1532 = vlaneseq
        %v1533 = vshrl.u32 %v1532, 7
        %v1534 = vsub.s32 0, %v1533
        %v1535 = vrot.slane %v953, %v1534
        %v1537 = vmul.f32 %v1499, %v1535
        %v1538 = vmul.f32 %v1500, %v1535
        %v1539 = vmul.f32 %v1501, %v1535
        %v1540 = vmul.f32 %v1502, %v1535
        %v1541 = vmul.f32 %v1503, %v1535
        %v1542 = vmul.f32 %v1504, %v1535
        %v1543 = vmul.f32 %v1505, %v1535
        %v1544 = vmul.f32 %v1506, %v1535
        %v1545 = vmul.f32 %v1507, %v1535
        %v1546 = vmul.f32 %v1508, %v1535
        %v1547 = vmul.f32 %v1509, %v1535
        %v1548 = vmul.f32 %v1510, %v1535
        %v1549 = vmul.f32 %v1511, %v1535
        %v1550 = vmul.f32 %v1512, %v1535
        %v1551 = vmul.f32 %v1513, %v1535
        %v1552 = vmul.f32 %v1514, %v1535
        %v1553 = vmul.f32 %v1515, %v1535
        %v1554 = vmul.f32 %v1516, %v1535
        %v1555 = vmul.f32 %v1517, %v1535
        %v1556 = vmul.f32 %v1518, %v1535
        %v1557 = vmul.f32 %v1519, %v1535
        %v1558 = vmul.f32 %v1520, %v1535
        %v1559 = vmul.f32 %v1521, %v1535
        %v1560 = vmul.f32 %v1522, %v1535
        %v1561 = vmul.f32 %v1523, %v1535
        %v1562 = vmul.f32 %v1524, %v1535
        %v1563 = vmul.f32 %v1525, %v1535
        %v1564 = vmul.f32 %v1526, %v1535
        %v1565 = vmul.f32 %v1527, %v1535
        %v1566 = vmul.f32 %v1528, %v1535
        %v1567 = vmul.f32 %v1529, %v1535
        %v1568 = vmul.f32 %v1530, %v1535
        %v1570 = vlaneseq
        %v1571 = vshrl.u32 %v1570, 7
        %v1572 = vsub.s32 0, %v1571
        %v1573 = vrot.slane %v954, %v1572
        %v1575 = vadd.f32 %v1537, %v1573
        %v1576 = vadd.f32 %v1538, %v1573
        %v1577 = vadd.f32 %v1539, %v1573
        %v1578 = vadd.f32 %v1540, %v1573
        %v1579 = vadd.f32 %v1541, %v1573
        %v1580 = vadd.f32 %v1542, %v1573
        %v1581 = vadd.f32 %v1543, %v1573
        %v1582 = vadd.f32 %v1544, %v1573
        %v1583 = vadd.f32 %v1545, %v1573
        %v1584 = vadd.f32 %v1546, %v1573
        %v1585 = vadd.f32 %v1547, %v1573
        %v1586 = vadd.f32 %v1548, %v1573
        %v1587 = vadd.f32 %v1549, %v1573
        %v1588 = vadd.f32 %v1550, %v1573
        %v1589 = vadd.f32 %v1551, %v1573
        %v1590 = vadd.f32 %v1552, %v1573
        %v1591 = vadd.f32 %v1553, %v1573
        %v1592 = vadd.f32 %v1554, %v1573
        %v1593 = vadd.f32 %v1555, %v1573
        %v1594 = vadd.f32 %v1556, %v1573
        %v1595 = vadd.f32 %v1557, %v1573
        %v1596 = vadd.f32 %v1558, %v1573
        %v1597 = vadd.f32 %v1559, %v1573
        %v1598 = vadd.f32 %v1560, %v1573
        %v1599 = vadd.f32 %v1561, %v1573
        %v1600 = vadd.f32 %v1562, %v1573
        %v1601 = vadd.f32 %v1563, %v1573
        %v1602 = vadd.f32 %v1564, %v1573
        %v1603 = vadd.f32 %v1565, %v1573
        %v1604 = vadd.f32 %v1566, %v1573
        %v1605 = vadd.f32 %v1567, %v1573
        %v1606 = vadd.f32 %v1568, %v1573
        %v1607 = vxor.u32 %v1575, 2147483648
        %v1608 = vxor.u32 %v1576, 2147483648
        %v1609 = vxor.u32 %v1577, 2147483648
        %v1610 = vxor.u32 %v1578, 2147483648
        %v1611 = vxor.u32 %v1579, 2147483648
        %v1612 = vxor.u32 %v1580, 2147483648
        %v1613 = vxor.u32 %v1581, 2147483648
        %v1614 = vxor.u32 %v1582, 2147483648
        %v1615 = vxor.u32 %v1583, 2147483648
        %v1616 = vxor.u32 %v1584, 2147483648
        %v1617 = vxor.u32 %v1585, 2147483648
        %v1618 = vxor.u32 %v1586, 2147483648
        %v1619 = vxor.u32 %v1587, 2147483648
        %v1620 = vxor.u32 %v1588, 2147483648
        %v1621 = vxor.u32 %v1589, 2147483648
        %v1622 = vxor.u32 %v1590, 2147483648
        %v1623 = vxor.u32 %v1591, 2147483648
        %v1624 = vxor.u32 %v1592, 2147483648
        %v1625 = vxor.u32 %v1593, 2147483648
        %v1626 = vxor.u32 %v1594, 2147483648
        %v1627 = vxor.u32 %v1595, 2147483648
        %v1628 = vxor.u32 %v1596, 2147483648
        %v1629 = vxor.u32 %v1597, 2147483648
        %v1630 = vxor.u32 %v1598, 2147483648
        %v1631 = vxor.u32 %v1599, 2147483648
        %v1632 = vxor.u32 %v1600, 2147483648
        %v1633 = vxor.u32 %v1601, 2147483648
        %v1634 = vxor.u32 %v1602, 2147483648
        %v1635 = vxor.u32 %v1603, 2147483648
        %v1636 = vxor.u32 %v1604, 2147483648
        %v1637 = vxor.u32 %v1605, 2147483648
        %v1638 = vxor.u32 %v1606, 2147483648
        %v1639 = vmul.f32 %v1607, 1.442695
        %v1640 = vpow.pop %v1639
        %v1641 = vmul.f32 %v1608, 1.442695
        %v1642 = vpow.pop %v1641
        %v1643 = vmul.f32 %v1609, 1.442695
        %v1644 = vpow.pop %v1643
        %v1645 = vmul.f32 %v1610, 1.442695
        %v1646 = vpow.pop %v1645
        %v1647 = vmul.f32 %v1611, 1.442695
        %v1648 = vpow.pop %v1647
        %v1649 = vmul.f32 %v1612, 1.442695
        %v1650 = vpow.pop %v1649
        %v1651 = vmul.f32 %v1613, 1.442695
        %v1652 = vpow.pop %v1651
        %v1653 = vmul.f32 %v1614, 1.442695
        %v1654 = vpow.pop %v1653
        %v1655 = vmul.f32 %v1615, 1.442695
        %v1656 = vpow.pop %v1655
        %v1657 = vmul.f32 %v1616, 1.442695
        %v1658 = vpow.pop %v1657
        %v1659 = vmul.f32 %v1617, 1.442695
        %v1660 = vpow.pop %v1659
        %v1661 = vmul.f32 %v1618, 1.442695
        %v1662 = vpow.pop %v1661
        %v1663 = vmul.f32 %v1619, 1.442695
        %v1664 = vpow.pop %v1663
        %v1665 = vmul.f32 %v1620, 1.442695
        %v1666 = vpow.pop %v1665
        %v1667 = vmul.f32 %v1621, 1.442695
        %v1668 = vpow.pop %v1667
        %v1669 = vmul.f32 %v1622, 1.442695
        %v1670 = vpow.pop %v1669
        %v1671 = vmul.f32 %v1623, 1.442695
        %v1672 = vpow.pop %v1671
        %v1673 = vmul.f32 %v1624, 1.442695
        %v1674 = vpow.pop %v1673
        %v1675 = vmul.f32 %v1625, 1.442695
        %v1676 = vpow.pop %v1675
        %v1677 = vmul.f32 %v1626, 1.442695
        %v1678 = vpow.pop %v1677
        %v1679 = vmul.f32 %v1627, 1.442695
        %v1680 = vpow.pop %v1679
        %v1681 = vmul.f32 %v1628, 1.442695
        %v1682 = vpow.pop %v1681
        %v1683 = vmul.f32 %v1629, 1.442695
        %v1684 = vpow.pop %v1683
        %v1685 = vmul.f32 %v1630, 1.442695
        %v1686 = vpow.pop %v1685
        %v1687 = vmul.f32 %v1631, 1.442695
        %v1688 = vpow.pop %v1687
        %v1689 = vmul.f32 %v1632, 1.442695
        %v1690 = vpow.pop %v1689
        %v1691 = vmul.f32 %v1633, 1.442695
        %v1692 = vpow.pop %v1691
        %v1693 = vmul.f32 %v1634, 1.442695
        %v1694 = vpow.pop %v1693
        %v1695 = vmul.f32 %v1635, 1.442695
        %v1696 = vpow.pop %v1695
        %v1697 = vmul.f32 %v1636, 1.442695
        %v1698 = vpow.pop %v1697
        %v1699 = vmul.f32 %v1637, 1.442695
        %v1700 = vpow.pop %v1699
        %v1701 = vmul.f32 %v1638, 1.442695
        %v1702 = vpow.pop %v1701
        %v1703 = vadd.f32 %v1640, 1.0
        %v1704 = vadd.f32 %v1642, 1.0
        %v1705 = vadd.f32 %v1644, 1.0
        %v1706 = vadd.f32 %v1646, 1.0
        %v1707 = vadd.f32 %v1648, 1.0
        %v1708 = vadd.f32 %v1650, 1.0
        %v1709 = vadd.f32 %v1652, 1.0
        %v1710 = vadd.f32 %v1654, 1.0
        %v1711 = vadd.f32 %v1656, 1.0
        %v1712 = vadd.f32 %v1658, 1.0
        %v1713 = vadd.f32 %v1660, 1.0
        %v1714 = vadd.f32 %v1662, 1.0
        %v1715 = vadd.f32 %v1664, 1.0
        %v1716 = vadd.f32 %v1666, 1.0
        %v1717 = vadd.f32 %v1668, 1.0
        %v1718 = vadd.f32 %v1670, 1.0
        %v1719 = vadd.f32 %v1672, 1.0
        %v1720 = vadd.f32 %v1674, 1.0
        %v1721 = vadd.f32 %v1676, 1.0
        %v1722 = vadd.f32 %v1678, 1.0
        %v1723 = vadd.f32 %v1680, 1.0
        %v1724 = vadd.f32 %v1682, 1.0
        %v1725 = vadd.f32 %v1684, 1.0
        %v1726 = vadd.f32 %v1686, 1.0
        %v1727 = vadd.f32 %v1688, 1.0
        %v1728 = vadd.f32 %v1690, 1.0
        %v1729 = vadd.f32 %v1692, 1.0
        %v1730 = vadd.f32 %v1694, 1.0
        %v1731 = vadd.f32 %v1696, 1.0
        %v1732 = vadd.f32 %v1698, 1.0
        %v1733 = vadd.f32 %v1700, 1.0
        %v1734 = vadd.f32 %v1702, 1.0
        %v1735 = vrcp.pop %v1703
        %v1736 = vmul.f32 1.0, %v1735
        %v1737 = vrcp.pop %v1704
        %v1738 = vmul.f32 1.0, %v1737
        %v1739 = vrcp.pop %v1705
        %v1740 = vmul.f32 1.0, %v1739
        %v1741 = vrcp.pop %v1706
        %v1742 = vmul.f32 1.0, %v1741
        %v1743 = vrcp.pop %v1707
        %v1744 = vmul.f32 1.0, %v1743
        %v1745 = vrcp.pop %v1708
        %v1746 = vmul.f32 1.0, %v1745
        %v1747 = vrcp.pop %v1709
        %v1748 = vmul.f32 1.0, %v1747
        %v1749 = vrcp.pop %v1710
        %v1750 = vmul.f32 1.0, %v1749
        %v1751 = vrcp.pop %v1711
        %v1752 = vmul.f32 1.0, %v1751
        %v1753 = vrcp.pop %v1712
        %v1754 = vmul.f32 1.0, %v1753
        %v1755 = vrcp.pop %v1713
        %v1756 = vmul.f32 1.0, %v1755
        %v1757 = vrcp.pop %v1714
        %v1758 = vmul.f32 1.0, %v1757
        %v1759 = vrcp.pop %v1715
        %v1760 = vmul.f32 1.0, %v1759
        %v1761 = vrcp.pop %v1716
        %v1762 = vmul.f32 1.0, %v1761
        %v1763 = vrcp.pop %v1717
        %v1764 = vmul.f32 1.0, %v1763
        %v1765 = vrcp.pop %v1718
        %v1766 = vmul.f32 1.0, %v1765
        %v1767 = vrcp.pop %v1719
        %v1768 = vmul.f32 1.0, %v1767
        %v1769 = vrcp.pop %v1720
        %v1770 = vmul.f32 1.0, %v1769
        %v1771 = vrcp.pop %v1721
        %v1772 = vmul.f32 1.0, %v1771
        %v1773 = vrcp.pop %v1722
        %v1774 = vmul.f32 1.0, %v1773
        %v1775 = vrcp.pop %v1723
        %v1776 = vmul.f32 1.0, %v1775
        %v1777 = vrcp.pop %v1724
        %v1778 = vmul.f32 1.0, %v1777
        %v1779 = vrcp.pop %v1725
        %v1780 = vmul.f32 1.0, %v1779
        %v1781 = vrcp.pop %v1726
        %v1782 = vmul.f32 1.0, %v1781
        %v1783 = vrcp.pop %v1727
        %v1784 = vmul.f32 1.0, %v1783
        %v1785 = vrcp.pop %v1728
        %v1786 = vmul.f32 1.0, %v1785
        %v1787 = vrcp.pop %v1729
        %v1788 = vmul.f32 1.0, %v1787
        %v1789 = vrcp.pop %v1730
        %v1790 = vmul.f32 1.0, %v1789
        %v1791 = vrcp.pop %v1731
        %v1792 = vmul.f32 1.0, %v1791
        %v1793 = vrcp.pop %v1732
        %v1794 = vmul.f32 1.0, %v1793
        %v1795 = vrcp.pop %v1733
        %v1796 = vmul.f32 1.0, %v1795
        %v1797 = vrcp.pop %v1734
        %v1798 = vmul.f32 1.0, %v1797
        %v1799 = vmul.f32 %v1575, %v1736
        %v1800 = vmul.f32 %v1576, %v1738
        %v1801 = vmul.f32 %v1577, %v1740
        %v1802 = vmul.f32 %v1578, %v1742
        %v1803 = vmul.f32 %v1579, %v1744
        %v1804 = vmul.f32 %v1580, %v1746
        %v1805 = vmul.f32 %v1581, %v1748
        %v1806 = vmul.f32 %v1582, %v1750
        %v1807 = vmul.f32 %v1583, %v1752
        %v1808 = vmul.f32 %v1584, %v1754
        %v1809 = vmul.f32 %v1585, %v1756
        %v1810 = vmul.f32 %v1586, %v1758
        %v1811 = vmul.f32 %v1587, %v1760
        %v1812 = vmul.f32 %v1588, %v1762
        %v1813 = vmul.f32 %v1589, %v1764
        %v1814 = vmul.f32 %v1590, %v1766
        %v1815 = vmul.f32 %v1591, %v1768
        %v1816 = vmul.f32 %v1592, %v1770
        %v1817 = vmul.f32 %v1593, %v1772
        %v1818 = vmul.f32 %v1594, %v1774
        %v1819 = vmul.f32 %v1595, %v1776
        %v1820 = vmul.f32 %v1596, %v1778
        %v1821 = vmul.f32 %v1597, %v1780
        %v1822 = vmul.f32 %v1598, %v1782
        %v1823 = vmul.f32 %v1599, %v1784
        %v1824 = vmul.f32 %v1600, %v1786
        %v1825 = vmul.f32 %v1601, %v1788
        %v1826 = vmul.f32 %v1602, %v1790
        %v1827 = vmul.f32 %v1603, %v1792
        %v1828 = vmul.f32 %v1604, %v1794
        %v1829 = vmul.f32 %v1605, %v1796
        %v1830 = vmul.f32 %v1606, %v1798
        %v1831 = vld [vmem:[%s4] sm:$0x1]
        %1832 = vst.msk [vmem:[#allocation2] sm:$0xff] %vm963, 0.0
        %1833 = vst.msk [vmem:[#allocation2 + $0x8] sm:$0xff] %vm963, 0.0
        %1834 = vst.msk [vmem:[#allocation2 + $0x10] sm:$0xff] %vm963, 0.0
        %1835 = vst.msk [vmem:[#allocation2 + $0x118] sm:$0xff] %vm963, 0.0
        %1836 = vst.msk [vmem:[#allocation2 + $0x120] sm:$0xff] %vm963, 0.0
        %1837 = vst.msk [vmem:[#allocation2 + $0x128] sm:$0xff] %vm963, 0.0
        %1838 = vst.msk [vmem:[#allocation2 + $0x18] sm:$0xff] %vm963, %v1799
        %1839 = vst.msk [vmem:[#allocation2 + $0x20] sm:$0xff] %vm963, %v1800
        %1840 = vst.msk [vmem:[#allocation2 + $0x28] sm:$0xff] %vm963, %v1801
        %1841 = vst.msk [vmem:[#allocation2 + $0x30] sm:$0xff] %vm963, %v1802
        %1842 = vst.msk [vmem:[#allocation2 + $0x38] sm:$0xff] %vm963, %v1803
        %1843 = vst.msk [vmem:[#allocation2 + $0x40] sm:$0xff] %vm963, %v1804
        %1844 = vst.msk [vmem:[#allocation2 + $0x48] sm:$0xff] %vm963, %v1805
        %1845 = vst.msk [vmem:[#allocation2 + $0x50] sm:$0xff] %vm963, %v1806
        %1846 = vst.msk [vmem:[#allocation2 + $0x58] sm:$0xff] %vm963, %v1807
        %1847 = vst.msk [vmem:[#allocation2 + $0x60] sm:$0xff] %vm963, %v1808
        %1848 = vst.msk [vmem:[#allocation2 + $0x68] sm:$0xff] %vm963, %v1809
        %1849 = vst.msk [vmem:[#allocation2 + $0x70] sm:$0xff] %vm963, %v1810
        %1850 = vst.msk [vmem:[#allocation2 + $0x78] sm:$0xff] %vm963, %v1811
        %1851 = vst.msk [vmem:[#allocation2 + $0x80] sm:$0xff] %vm963, %v1812
        %1852 = vst.msk [vmem:[#allocation2 + $0x88] sm:$0xff] %vm963, %v1813
        %1853 = vst.msk [vmem:[#allocation2 + $0x90] sm:$0xff] %vm963, %v1814
        %1854 = vst.msk [vmem:[#allocation2 + $0x98] sm:$0xff] %vm963, %v1815
        %1855 = vst.msk [vmem:[#allocation2 + $0xa0] sm:$0xff] %vm963, %v1816
        %1856 = vst.msk [vmem:[#allocation2 + $0xa8] sm:$0xff] %vm963, %v1817
        %1857 = vst.msk [vmem:[#allocation2 + $0xb0] sm:$0xff] %vm963, %v1818
        %1858 = vst.msk [vmem:[#allocation2 + $0xb8] sm:$0xff] %vm963, %v1819
        %1859 = vst.msk [vmem:[#allocation2 + $0xc0] sm:$0xff] %vm963, %v1820
        %1860 = vst.msk [vmem:[#allocation2 + $0xc8] sm:$0xff] %vm963, %v1821
        %1861 = vst.msk [vmem:[#allocation2 + $0xd0] sm:$0xff] %vm963, %v1822
        %1862 = vst.msk [vmem:[#allocation2 + $0xd8] sm:$0xff] %vm963, %v1823
        %1863 = vst.msk [vmem:[#allocation2 + $0xe0] sm:$0xff] %vm963, %v1824
        %1864 = vst.msk [vmem:[#allocation2 + $0xe8] sm:$0xff] %vm963, %v1825
        %1865 = vst.msk [vmem:[#allocation2 + $0xf0] sm:$0xff] %vm963, %v1826
        %1866 = vst.msk [vmem:[#allocation2 + $0xf8] sm:$0xff] %vm963, %v1827
        %1867 = vst.msk [vmem:[#allocation2 + $0x100] sm:$0xff] %vm963, %v1828
        %1868 = vst.msk [vmem:[#allocation2 + $0x108] sm:$0xff] %vm963, %v1829
        %1869 = vst.msk [vmem:[#allocation2 + $0x110] sm:$0xff] %vm963, %v1830
        %v1870 = vld [vmem:[#allocation2 + $0x7] sm:$0xff]
        %v1871 = vld [vmem:[#allocation2 + $0xf] sm:$0xff]
        %v1872 = vld [vmem:[#allocation2 + $0x17] sm:$0xff]
        %v1873 = vld [vmem:[#allocation2 + $0x1f] sm:$0xff]
        %v1874 = vld [vmem:[#allocation2 + $0x27] sm:$0xff]
        %v1875 = vld [vmem:[#allocation2 + $0x2f] sm:$0xff]
        %v1876 = vld [vmem:[#allocation2 + $0x37] sm:$0xff]
        %v1877 = vld [vmem:[#allocation2 + $0x3f] sm:$0xff]
        %v1878 = vld [vmem:[#allocation2 + $0x47] sm:$0xff]
        %v1879 = vld [vmem:[#allocation2 + $0x4f] sm:$0xff]
        %v1880 = vld [vmem:[#allocation2 + $0x57] sm:$0xff]
        %v1881 = vld [vmem:[#allocation2 + $0x5f] sm:$0xff]
        %v1882 = vld [vmem:[#allocation2 + $0x67] sm:$0xff]
        %v1883 = vld [vmem:[#allocation2 + $0x6f] sm:$0xff]
        %v1884 = vld [vmem:[#allocation2 + $0x77] sm:$0xff]
        %v1885 = vld [vmem:[#allocation2 + $0x7f] sm:$0xff]
        %v1886 = vld [vmem:[#allocation2 + $0x87] sm:$0xff]
        %v1887 = vld [vmem:[#allocation2 + $0x8f] sm:$0xff]
        %v1888 = vld [vmem:[#allocation2 + $0x97] sm:$0xff]
        %v1889 = vld [vmem:[#allocation2 + $0x9f] sm:$0xff]
        %v1890 = vld [vmem:[#allocation2 + $0xa7] sm:$0xff]
        %v1891 = vld [vmem:[#allocation2 + $0xaf] sm:$0xff]
        %v1892 = vld [vmem:[#allocation2 + $0xb7] sm:$0xff]
        %v1893 = vld [vmem:[#allocation2 + $0xbf] sm:$0xff]
        %v1894 = vld [vmem:[#allocation2 + $0xc7] sm:$0xff]
        %v1895 = vld [vmem:[#allocation2 + $0xcf] sm:$0xff]
        %v1896 = vld [vmem:[#allocation2 + $0xd7] sm:$0xff]
        %v1897 = vld [vmem:[#allocation2 + $0xdf] sm:$0xff]
        %v1898 = vld [vmem:[#allocation2 + $0xe7] sm:$0xff]
        %v1899 = vld [vmem:[#allocation2 + $0xef] sm:$0xff]
        %v1900 = vld [vmem:[#allocation2 + $0xf7] sm:$0xff]
        %v1901 = vld [vmem:[#allocation2 + $0xff] sm:$0xff]
        %v1902 = vsel %vm857, 1, 0
        %v1903 = vsel %vm858, 1, 0
        %v1904 = vsel %vm859, 1, 0
        %v1905 = vsel %vm860, 1, 0
        %v1906 = vsel %vm861, 1, 0
        %v1907 = vsel %vm862, 1, 0
        %v1908 = vsel %vm863, 1, 0
        %v1909 = vsel %vm864, 1, 0
        %v1910 = vsel %vm865, 1, 0
        %v1911 = vsel %vm866, 1, 0
        %v1912 = vsel %vm867, 1, 0
        %v1913 = vsel %vm868, 1, 0
        %v1914 = vsel %vm869, 1, 0
        %v1915 = vsel %vm870, 1, 0
        %v1916 = vsel %vm871, 1, 0
        %v1917 = vsel %vm872, 1, 0
        %v1918 = vsel %vm873, 1, 0
        %v1919 = vsel %vm874, 1, 0
        %v1920 = vsel %vm875, 1, 0
        %v1921 = vsel %vm876, 1, 0
        %v1922 = vsel %vm877, 1, 0
        %v1923 = vsel %vm878, 1, 0
        %v1924 = vsel %vm879, 1, 0
        %v1925 = vsel %vm880, 1, 0
        %v1926 = vsel %vm881, 1, 0
        %v1927 = vsel %vm882, 1, 0
        %v1928 = vsel %vm883, 1, 0
        %v1929 = vsel %vm884, 1, 0
        %v1930 = vsel %vm885, 1, 0
        %v1931 = vsel %vm886, 1, 0
        %v1932 = vsel %vm887, 1, 0
        %v1933 = vsel %vm888, 1, 0
        %vm1934 = vcmp.eq.s32.totalorder %v1902, 1
        %vm1935 = vcmp.eq.s32.totalorder %v1903, 1
        %vm1936 = vcmp.eq.s32.totalorder %v1904, 1
        %vm1937 = vcmp.eq.s32.totalorder %v1905, 1
        %vm1938 = vcmp.eq.s32.totalorder %v1906, 1
        %vm1939 = vcmp.eq.s32.totalorder %v1907, 1
        %vm1940 = vcmp.eq.s32.totalorder %v1908, 1
        %vm1941 = vcmp.eq.s32.totalorder %v1909, 1
        %vm1942 = vcmp.eq.s32.totalorder %v1910, 1
        %vm1943 = vcmp.eq.s32.totalorder %v1911, 1
        %vm1944 = vcmp.eq.s32.totalorder %v1912, 1
        %vm1945 = vcmp.eq.s32.totalorder %v1913, 1
        %vm1946 = vcmp.eq.s32.totalorder %v1914, 1
        %vm1947 = vcmp.eq.s32.totalorder %v1915, 1
        %vm1948 = vcmp.eq.s32.totalorder %v1916, 1
        %vm1949 = vcmp.eq.s32.totalorder %v1917, 1
        %vm1950 = vcmp.eq.s32.totalorder %v1918, 1
        %vm1951 = vcmp.eq.s32.totalorder %v1919, 1
        %vm1952 = vcmp.eq.s32.totalorder %v1920, 1
        %vm1953 = vcmp.eq.s32.totalorder %v1921, 1
        %vm1954 = vcmp.eq.s32.totalorder %v1922, 1
        %vm1955 = vcmp.eq.s32.totalorder %v1923, 1
        %vm1956 = vcmp.eq.s32.totalorder %v1924, 1
        %vm1957 = vcmp.eq.s32.totalorder %v1925, 1
        %vm1958 = vcmp.eq.s32.totalorder %v1926, 1
        %vm1959 = vcmp.eq.s32.totalorder %v1927, 1
        %vm1960 = vcmp.eq.s32.totalorder %v1928, 1
        %vm1961 = vcmp.eq.s32.totalorder %v1929, 1
        %vm1962 = vcmp.eq.s32.totalorder %v1930, 1
        %vm1963 = vcmp.eq.s32.totalorder %v1931, 1
        %vm1964 = vcmp.eq.s32.totalorder %v1932, 1
        %vm1965 = vcmp.eq.s32.totalorder %v1933, 1
        %v1966 = vsel %vm1934, %v1870, 0.0
        %v1967 = vsel %vm1935, %v1871, 0.0
        %v1968 = vsel %vm1936, %v1872, 0.0
        %v1969 = vsel %vm1937, %v1873, 0.0
        %v1970 = vsel %vm1938, %v1874, 0.0
        %v1971 = vsel %vm1939, %v1875, 0.0
        %v1972 = vsel %vm1940, %v1876, 0.0
        %v1973 = vsel %vm1941, %v1877, 0.0
        %v1974 = vsel %vm1942, %v1878, 0.0
        %v1975 = vsel %vm1943, %v1879, 0.0
        %v1976 = vsel %vm1944, %v1880, 0.0
        %v1977 = vsel %vm1945, %v1881, 0.0
        %v1978 = vsel %vm1946, %v1882, 0.0
        %v1979 = vsel %vm1947, %v1883, 0.0
        %v1980 = vsel %vm1948, %v1884, 0.0
        %v1981 = vsel %vm1949, %v1885, 0.0
        %v1982 = vsel %vm1950, %v1886, 0.0
        %v1983 = vsel %vm1951, %v1887, 0.0
        %v1984 = vsel %vm1952, %v1888, 0.0
        %v1985 = vsel %vm1953, %v1889, 0.0
        %v1986 = vsel %vm1954, %v1890, 0.0
        %v1987 = vsel %vm1955, %v1891, 0.0
        %v1988 = vsel %vm1956, %v1892, 0.0
        %v1989 = vsel %vm1957, %v1893, 0.0
        %v1990 = vsel %vm1958, %v1894, 0.0
        %v1991 = vsel %vm1959, %v1895, 0.0
        %v1992 = vsel %vm1960, %v1896, 0.0
        %v1993 = vsel %vm1961, %v1897, 0.0
        %v1994 = vsel %vm1962, %v1898, 0.0
        %v1995 = vsel %vm1963, %v1899, 0.0
        %v1996 = vsel %vm1964, %v1900, 0.0
        %v1997 = vsel %vm1965, %v1901, 0.0
        %v1998 = vpack.c.bf16 %v1967, %v1966
        %v1999 = vpack.c.bf16 %v1969, %v1968
        %v2000 = vpack.c.bf16 %v1971, %v1970
        %v2001 = vpack.c.bf16 %v1973, %v1972
        %v2002 = vpack.c.bf16 %v1975, %v1974
        %v2003 = vpack.c.bf16 %v1977, %v1976
        %v2004 = vpack.c.bf16 %v1979, %v1978
        %v2005 = vpack.c.bf16 %v1981, %v1980
        %v2006 = vpack.c.bf16 %v1983, %v1982
        %v2007 = vpack.c.bf16 %v1985, %v1984
        %v2008 = vpack.c.bf16 %v1987, %v1986
        %v2009 = vpack.c.bf16 %v1989, %v1988
        %v2010 = vpack.c.bf16 %v1991, %v1990
        %v2011 = vpack.c.bf16 %v1993, %v1992
        %v2012 = vpack.c.bf16 %v1995, %v1994
        %v2013 = vpack.c.bf16 %v1997, %v1996
        %v2014 = vld [vmem:[%s3] sm:$0xf]
        %v2015 = vld [vmem:[%s3 + $0x4] sm:$0xf]
        %v2016 = vld [vmem:[%s3 + $0x8] sm:$0xf]
        %v2017 = vld [vmem:[%s3 + $0xc] sm:$0xf]
        %v2018 = vld [vmem:[%s3 + $0x10] sm:$0xf]
        %v2019 = vld [vmem:[%s3 + $0x14] sm:$0xf]
        %v2020 = vld [vmem:[%s3 + $0x18] sm:$0xf]
        %v2021 = vld [vmem:[%s3 + $0x1c] sm:$0xf]
        %v2022 = vld [vmem:[#allocation2 + $0x8] sm:$0xff]
        %v2023 = vld [vmem:[#allocation2 + $0x10] sm:$0xff]
        %v2024 = vld [vmem:[#allocation2 + $0x18] sm:$0xff]
        %v2025 = vld [vmem:[#allocation2 + $0x20] sm:$0xff]
        %v2026 = vld [vmem:[#allocation2 + $0x28] sm:$0xff]
        %v2027 = vld [vmem:[#allocation2 + $0x30] sm:$0xff]
        %v2028 = vld [vmem:[#allocation2 + $0x38] sm:$0xff]
        %v2029 = vld [vmem:[#allocation2 + $0x40] sm:$0xff]
        %v2030 = vld [vmem:[#allocation2 + $0x48] sm:$0xff]
        %v2031 = vld [vmem:[#allocation2 + $0x50] sm:$0xff]
        %v2032 = vld [vmem:[#allocation2 + $0x58] sm:$0xff]
        %v2033 = vld [vmem:[#allocation2 + $0x60] sm:$0xff]
        %v2034 = vld [vmem:[#allocation2 + $0x68] sm:$0xff]
        %v2035 = vld [vmem:[#allocation2 + $0x70] sm:$0xff]
        %v2036 = vld [vmem:[#allocation2 + $0x78] sm:$0xff]
        %v2037 = vld [vmem:[#allocation2 + $0x80] sm:$0xff]
        %v2038 = vld [vmem:[#allocation2 + $0x88] sm:$0xff]
        %v2039 = vld [vmem:[#allocation2 + $0x90] sm:$0xff]
        %v2040 = vld [vmem:[#allocation2 + $0x98] sm:$0xff]
        %v2041 = vld [vmem:[#allocation2 + $0xa0] sm:$0xff]
        %v2042 = vld [vmem:[#allocation2 + $0xa8] sm:$0xff]
        %v2043 = vld [vmem:[#allocation2 + $0xb0] sm:$0xff]
        %v2044 = vld [vmem:[#allocation2 + $0xb8] sm:$0xff]
        %v2045 = vld [vmem:[#allocation2 + $0xc0] sm:$0xff]
        %v2046 = vld [vmem:[#allocation2 + $0xc8] sm:$0xff]
        %v2047 = vld [vmem:[#allocation2 + $0xd0] sm:$0xff]
        %v2048 = vld [vmem:[#allocation2 + $0xd8] sm:$0xff]
        %v2049 = vld [vmem:[#allocation2 + $0xe0] sm:$0xff]
        %v2050 = vld [vmem:[#allocation2 + $0xe8] sm:$0xff]
        %v2051 = vld [vmem:[#allocation2 + $0xf0] sm:$0xff]
        %v2052 = vld [vmem:[#allocation2 + $0xf8] sm:$0xff]
        %v2053 = vld [vmem:[#allocation2 + $0x100] sm:$0xff]
        %v2054 = vpack.c.bf16 %v2023, %v2022
        %v2055 = vpack.c.bf16 %v2025, %v2024
        %v2056 = vpack.c.bf16 %v2027, %v2026
        %v2057 = vpack.c.bf16 %v2029, %v2028
        %v2058 = vpack.c.bf16 %v2031, %v2030
        %v2059 = vpack.c.bf16 %v2033, %v2032
        %v2060 = vpack.c.bf16 %v2035, %v2034
        %v2061 = vpack.c.bf16 %v2037, %v2036
        %v2062 = vpack.c.bf16 %v2039, %v2038
        %v2063 = vpack.c.bf16 %v2041, %v2040
        %v2064 = vpack.c.bf16 %v2043, %v2042
        %v2065 = vpack.c.bf16 %v2045, %v2044
        %v2066 = vpack.c.bf16 %v2047, %v2046
        %v2067 = vpack.c.bf16 %v2049, %v2048
        %v2068 = vpack.c.bf16 %v2051, %v2050
        %v2069 = vpack.c.bf16 %v2053, %v2052
        %s2070 = scalar_lea.vmem %s3, 32
        %v2071 = vld [vmem:[%s2070] sm:$0xf]
        %v2072 = vld [vmem:[%s2070 + $0x4] sm:$0xf]
        %v2073 = vld [vmem:[%s2070 + $0x8] sm:$0xf]
        %v2074 = vld [vmem:[%s2070 + $0xc] sm:$0xf]
        %v2075 = vld [vmem:[%s2070 + $0x10] sm:$0xf]
        %v2076 = vld [vmem:[%s2070 + $0x14] sm:$0xf]
        %v2077 = vld [vmem:[%s2070 + $0x18] sm:$0xf]
        %v2078 = vld [vmem:[%s2070 + $0x1c] sm:$0xf]
        %v2087 = vunpack.c.l.b16 %v2071
        %v2088 = vunpack.c.l.b16 %v2072
        %v2089 = vunpack.c.l.b16 %v2073
        %v2090 = vunpack.c.l.b16 %v2074
        %v2091 = vunpack.c.l.b16 %v2075
        %v2092 = vunpack.c.l.b16 %v2076
        %v2093 = vunpack.c.l.b16 %v2077
        %v2094 = vunpack.c.l.b16 %v2078
        %v2095 = vpack.c.b16 %v2088, %v2087
        %v2096 = vpack.c.b16 %v2090, %v2089
        %v2097 = vpack.c.b16 %v2092, %v2091
        %v2098 = vpack.c.b16 %v2094, %v2093
        %v2104 = vsel %vm963, %v2054, 0
        %v2107 = vsel %vm963, %v2055, 0
        %v2110 = vsel %vm963, %v2056, 0
        %v2113 = vsel %vm963, %v2057, 0
        %v2116 = vsel %vm963, %v2058, 0
        %v2119 = vsel %vm963, %v2059, 0
        %v2122 = vsel %vm963, %v2060, 0
        %v2125 = vsel %vm963, %v2061, 0
        %v2128 = vsel %vm963, %v2062, 0
        %v2131 = vsel %vm963, %v2063, 0
        %v2134 = vsel %vm963, %v2064, 0
        %v2137 = vsel %vm963, %v2065, 0
        %v2140 = vsel %vm963, %v2066, 0
        %v2143 = vsel %vm963, %v2067, 0
        %v2146 = vsel %vm963, %v2068, 0
        %v2149 = vsel %vm963, %v2069, 0
        %2151 = vmatprep.subr.bf16.mxu0 0
        %2152 = vmatpush1.bf16.msra.mxu0 0
        %2153 = vmatprep.subr.bf16.mxu0 0
        %2154 = vmatpush1.bf16.msra.mxu0 0
        %2155 = vmatprep.subr.bf16.mxu0 0
        %2156 = vmatpush1.bf16.msra.mxu0 0
        %2157 = vmatprep.subr.bf16.mxu0 0
        %2158 = vmatpush1.bf16.msra.mxu0 0
        %2159 = vmatprep.subr.bf16.mxu0 0
        %2160 = vmatpush1.bf16.msra.mxu0 %v2098
        %2161 = vmatprep.subr.bf16.mxu0 0
        %2162 = vmatpush1.bf16.msra.mxu0 %v2097
        %2163 = vmatprep.subr.bf16.mxu0 0
        %2164 = vmatpush1.bf16.msra.mxu0 %v2096
        %2165 = vmatprep.subr.bf16.mxu0 0
        %2166 = vmatpush1.bf16.msra.mxu0 %v2095
        %2167 = vmatprep.subr.bf16.mxu0 0
        %2168 = vmatpush2.bf16.msra.mxu0 0
        %2169 = vmatprep.subr.bf16.mxu0 0
        %2170 = vmatpush2.bf16.msra.mxu0 0
        %2171 = vmatprep.subr.bf16.mxu0 0
        %2172 = vmatpush2.bf16.msra.mxu0 0
        %2173 = vmatprep.subr.bf16.mxu0 0
        %2174 = vmatpush2.bf16.msra.mxu0 0
        %2175 = vmatprep.subr.bf16.mxu0 0
        %2176 = vmatpush2.bf16.msra.mxu0 0
        %2177 = vmatprep.subr.bf16.mxu0 0
        %2178 = vmatpush2.bf16.msra.mxu0 0
        %2179 = vmatprep.subr.bf16.mxu0 0
        %2180 = vmatpush2.bf16.msra.mxu0 0
        %2181 = vmatprep.subr.bf16.mxu0 0
        %2182 = vmatpush2.bf16.msra.mxu0 0
        %2183 = vmatprep.mubr.bf16.mxu0 0
        %2184 = vmatmul.mubr.bf16.gmra.mxu0 %v2104
        %v2185 = vpop.f32.mrf.mxu0
        %v2186 = vadd.f32 0.0, %v2185
        %v2187 = vpop.f32.mrf.mxu0
        %v2188 = vpop.f32.mrf.mxu0
        %v2189 = vadd.f32 0.0, %v2188
        %v2190 = vpop.f32.mrf.mxu0
        %2191 = vmatprep.mubr.bf16.mxu0 0
        %2192 = vmatmul.mubr.bf16.gmra.mxu0 %v2107
        %v2193 = vpop.f32.mrf.mxu0
        %v2194 = vadd.f32 0.0, %v2193
        %v2195 = vpop.f32.mrf.mxu0
        %v2196 = vpop.f32.mrf.mxu0
        %v2197 = vadd.f32 0.0, %v2196
        %v2198 = vpop.f32.mrf.mxu0
        %2199 = vmatprep.mubr.bf16.mxu0 0
        %2200 = vmatmul.mubr.bf16.gmra.mxu0 %v2110
        %v2201 = vpop.f32.mrf.mxu0
        %v2202 = vadd.f32 0.0, %v2201
        %v2203 = vpop.f32.mrf.mxu0
        %v2204 = vpop.f32.mrf.mxu0
        %v2205 = vadd.f32 0.0, %v2204
        %v2206 = vpop.f32.mrf.mxu0
        %2207 = vmatprep.mubr.bf16.mxu0 0
        %2208 = vmatmul.mubr.bf16.gmra.mxu0 %v2113
        %v2209 = vpop.f32.mrf.mxu0
        %v2210 = vadd.f32 0.0, %v2209
        %v2211 = vpop.f32.mrf.mxu0
        %v2212 = vpop.f32.mrf.mxu0
        %v2213 = vadd.f32 0.0, %v2212
        %v2214 = vpop.f32.mrf.mxu0
        %2215 = vmatprep.mubr.bf16.mxu0 0
        %2216 = vmatmul.mubr.bf16.gmra.mxu0 %v2116
        %v2217 = vpop.f32.mrf.mxu0
        %v2218 = vadd.f32 0.0, %v2217
        %v2219 = vpop.f32.mrf.mxu0
        %v2220 = vpop.f32.mrf.mxu0
        %v2221 = vadd.f32 0.0, %v2220
        %v2222 = vpop.f32.mrf.mxu0
        %2223 = vmatprep.mubr.bf16.mxu0 0
        %2224 = vmatmul.mubr.bf16.gmra.mxu0 %v2119
        %v2225 = vpop.f32.mrf.mxu0
        %v2226 = vadd.f32 0.0, %v2225
        %v2227 = vpop.f32.mrf.mxu0
        %v2228 = vpop.f32.mrf.mxu0
        %v2229 = vadd.f32 0.0, %v2228
        %v2230 = vpop.f32.mrf.mxu0
        %2231 = vmatprep.mubr.bf16.mxu0 0
        %2232 = vmatmul.mubr.bf16.gmra.mxu0 %v2122
        %v2233 = vpop.f32.mrf.mxu0
        %v2234 = vadd.f32 0.0, %v2233
        %v2235 = vpop.f32.mrf.mxu0
        %v2236 = vpop.f32.mrf.mxu0
        %v2237 = vadd.f32 0.0, %v2236
        %v2238 = vpop.f32.mrf.mxu0
        %2239 = vmatprep.mubr.bf16.mxu0 0
        %2240 = vmatmul.mubr.bf16.gmra.mxu0 %v2125
        %v2241 = vpop.f32.mrf.mxu0
        %v2242 = vadd.f32 0.0, %v2241
        %v2243 = vpop.f32.mrf.mxu0
        %v2244 = vpop.f32.mrf.mxu0
        %v2245 = vadd.f32 0.0, %v2244
        %v2246 = vpop.f32.mrf.mxu0
        %2247 = vmatprep.mubr.bf16.mxu0 0
        %2248 = vmatmul.mubr.bf16.gmra.mxu0 %v2128
        %v2249 = vpop.f32.mrf.mxu0
        %v2250 = vadd.f32 0.0, %v2249
        %v2251 = vpop.f32.mrf.mxu0
        %v2252 = vpop.f32.mrf.mxu0
        %v2253 = vadd.f32 0.0, %v2252
        %v2254 = vpop.f32.mrf.mxu0
        %2255 = vmatprep.mubr.bf16.mxu0 0
        %2256 = vmatmul.mubr.bf16.gmra.mxu0 %v2131
        %v2257 = vpop.f32.mrf.mxu0
        %v2258 = vadd.f32 0.0, %v2257
        %v2259 = vpop.f32.mrf.mxu0
        %v2260 = vpop.f32.mrf.mxu0
        %v2261 = vadd.f32 0.0, %v2260
        %v2262 = vpop.f32.mrf.mxu0
        %2263 = vmatprep.mubr.bf16.mxu0 0
        %2264 = vmatmul.mubr.bf16.gmra.mxu0 %v2134
        %v2265 = vpop.f32.mrf.mxu0
        %v2266 = vadd.f32 0.0, %v2265
        %v2267 = vpop.f32.mrf.mxu0
        %v2268 = vpop.f32.mrf.mxu0
        %v2269 = vadd.f32 0.0, %v2268
        %v2270 = vpop.f32.mrf.mxu0
        %2271 = vmatprep.mubr.bf16.mxu0 0
        %2272 = vmatmul.mubr.bf16.gmra.mxu0 %v2137
        %v2273 = vpop.f32.mrf.mxu0
        %v2274 = vadd.f32 0.0, %v2273
        %v2275 = vpop.f32.mrf.mxu0
        %v2276 = vpop.f32.mrf.mxu0
        %v2277 = vadd.f32 0.0, %v2276
        %v2278 = vpop.f32.mrf.mxu0
        %2279 = vmatprep.mubr.bf16.mxu0 0
        %2280 = vmatmul.mubr.bf16.gmra.mxu0 %v2140
        %v2281 = vpop.f32.mrf.mxu0
        %v2282 = vadd.f32 0.0, %v2281
        %v2283 = vpop.f32.mrf.mxu0
        %v2284 = vpop.f32.mrf.mxu0
        %v2285 = vadd.f32 0.0, %v2284
        %v2286 = vpop.f32.mrf.mxu0
        %2287 = vmatprep.mubr.bf16.mxu0 0
        %2288 = vmatmul.mubr.bf16.gmra.mxu0 %v2143
        %v2289 = vpop.f32.mrf.mxu0
        %v2290 = vadd.f32 0.0, %v2289
        %v2291 = vpop.f32.mrf.mxu0
        %v2292 = vpop.f32.mrf.mxu0
        %v2293 = vadd.f32 0.0, %v2292
        %v2294 = vpop.f32.mrf.mxu0
        %2295 = vmatprep.mubr.bf16.mxu0 0
        %2296 = vmatmul.mubr.bf16.gmra.mxu0 %v2146
        %v2297 = vpop.f32.mrf.mxu0
        %v2298 = vadd.f32 0.0, %v2297
        %v2299 = vpop.f32.mrf.mxu0
        %v2300 = vpop.f32.mrf.mxu0
        %v2301 = vadd.f32 0.0, %v2300
        %v2302 = vpop.f32.mrf.mxu0
        %2303 = vmatprep.mubr.bf16.mxu0 0
        %2304 = vmatmul.mubr.bf16.gmra.mxu0 %v2149
        %v2305 = vpop.f32.mrf.mxu0
        %v2306 = vadd.f32 0.0, %v2305
        %v2307 = vpop.f32.mrf.mxu0
        %v2308 = vpop.f32.mrf.mxu0
        %v2309 = vadd.f32 0.0, %v2308
        %v2310 = vpop.f32.mrf.mxu0
        %2311 = vdwg.mxu0
        %v2320 = vunpack.c.l.b16 %v2014
        %v2321 = vunpack.c.l.b16 %v2015
        %v2322 = vunpack.c.l.b16 %v2016
        %v2323 = vunpack.c.l.b16 %v2017
        %v2324 = vunpack.c.l.b16 %v2018
        %v2325 = vunpack.c.l.b16 %v2019
        %v2326 = vunpack.c.l.b16 %v2020
        %v2327 = vunpack.c.l.b16 %v2021
        %v2328 = vpack.c.b16 %v2321, %v2320
        %v2329 = vpack.c.b16 %v2323, %v2322
        %v2330 = vpack.c.b16 %v2325, %v2324
        %v2331 = vpack.c.b16 %v2327, %v2326
        %v2337 = vsel %vm963, %v1998, 0
        %v2340 = vsel %vm963, %v1999, 0
        %v2343 = vsel %vm963, %v2000, 0
        %v2346 = vsel %vm963, %v2001, 0
        %v2349 = vsel %vm963, %v2002, 0
        %v2352 = vsel %vm963, %v2003, 0
        %v2355 = vsel %vm963, %v2004, 0
        %v2358 = vsel %vm963, %v2005, 0
        %v2361 = vsel %vm963, %v2006, 0
        %v2364 = vsel %vm963, %v2007, 0
        %v2367 = vsel %vm963, %v2008, 0
        %v2370 = vsel %vm963, %v2009, 0
        %v2373 = vsel %vm963, %v2010, 0
        %v2376 = vsel %vm963, %v2011, 0
        %v2379 = vsel %vm963, %v2012, 0
        %v2382 = vsel %vm963, %v2013, 0
        %2384 = vmatprep.subr.bf16.mxu0 0
        %2385 = vmatpush1.bf16.msra.mxu0 0
        %2386 = vmatprep.subr.bf16.mxu0 0
        %2387 = vmatpush1.bf16.msra.mxu0 0
        %2388 = vmatprep.subr.bf16.mxu0 0
        %2389 = vmatpush1.bf16.msra.mxu0 0
        %2390 = vmatprep.subr.bf16.mxu0 0
        %2391 = vmatpush1.bf16.msra.mxu0 0
        %2392 = vmatprep.subr.bf16.mxu0 0
        %2393 = vmatpush1.bf16.msra.mxu0 %v2331
        %2394 = vmatprep.subr.bf16.mxu0 0
        %2395 = vmatpush1.bf16.msra.mxu0 %v2330
        %2396 = vmatprep.subr.bf16.mxu0 0
        %2397 = vmatpush1.bf16.msra.mxu0 %v2329
        %2398 = vmatprep.subr.bf16.mxu0 0
        %2399 = vmatpush1.bf16.msra.mxu0 %v2328
        %2400 = vmatprep.subr.bf16.mxu0 0
        %2401 = vmatpush2.bf16.msra.mxu0 0
        %2402 = vmatprep.subr.bf16.mxu0 0
        %2403 = vmatpush2.bf16.msra.mxu0 0
        %2404 = vmatprep.subr.bf16.mxu0 0
        %2405 = vmatpush2.bf16.msra.mxu0 0
        %2406 = vmatprep.subr.bf16.mxu0 0
        %2407 = vmatpush2.bf16.msra.mxu0 0
        %2408 = vmatprep.subr.bf16.mxu0 0
        %2409 = vmatpush2.bf16.msra.mxu0 0
        %2410 = vmatprep.subr.bf16.mxu0 0
        %2411 = vmatpush2.bf16.msra.mxu0 0
        %2412 = vmatprep.subr.bf16.mxu0 0
        %2413 = vmatpush2.bf16.msra.mxu0 0
        %2414 = vmatprep.subr.bf16.mxu0 0
        %2415 = vmatpush2.bf16.msra.mxu0 0
        %2416 = vmatprep.mubr.bf16.mxu0 0
        %2417 = vmatmul.mubr.bf16.gmra.mxu0 %v2337
        %v2418 = vpop.f32.mrf.mxu0
        %v2419 = vadd.f32 %v2186, %v2418
        %v2420 = vpop.f32.mrf.mxu0
        %v2421 = vpop.f32.mrf.mxu0
        %v2422 = vadd.f32 %v2189, %v2421
        %v2423 = vpop.f32.mrf.mxu0
        %2424 = vmatprep.mubr.bf16.mxu0 0
        %2425 = vmatmul.mubr.bf16.gmra.mxu0 %v2340
        %v2426 = vpop.f32.mrf.mxu0
        %v2427 = vadd.f32 %v2194, %v2426
        %v2428 = vpop.f32.mrf.mxu0
        %v2429 = vpop.f32.mrf.mxu0
        %v2430 = vadd.f32 %v2197, %v2429
        %v2431 = vpop.f32.mrf.mxu0
        %2432 = vmatprep.mubr.bf16.mxu0 0
        %2433 = vmatmul.mubr.bf16.gmra.mxu0 %v2343
        %v2434 = vpop.f32.mrf.mxu0
        %v2435 = vadd.f32 %v2202, %v2434
        %v2436 = vpop.f32.mrf.mxu0
        %v2437 = vpop.f32.mrf.mxu0
        %v2438 = vadd.f32 %v2205, %v2437
        %v2439 = vpop.f32.mrf.mxu0
        %2440 = vmatprep.mubr.bf16.mxu0 0
        %2441 = vmatmul.mubr.bf16.gmra.mxu0 %v2346
        %v2442 = vpop.f32.mrf.mxu0
        %v2443 = vadd.f32 %v2210, %v2442
        %v2444 = vpop.f32.mrf.mxu0
        %v2445 = vpop.f32.mrf.mxu0
        %v2446 = vadd.f32 %v2213, %v2445
        %v2447 = vpop.f32.mrf.mxu0
        %2448 = vmatprep.mubr.bf16.mxu0 0
        %2449 = vmatmul.mubr.bf16.gmra.mxu0 %v2349
        %v2450 = vpop.f32.mrf.mxu0
        %v2451 = vadd.f32 %v2218, %v2450
        %v2452 = vpop.f32.mrf.mxu0
        %v2453 = vpop.f32.mrf.mxu0
        %v2454 = vadd.f32 %v2221, %v2453
        %v2455 = vpop.f32.mrf.mxu0
        %2456 = vmatprep.mubr.bf16.mxu0 0
        %2457 = vmatmul.mubr.bf16.gmra.mxu0 %v2352
        %v2458 = vpop.f32.mrf.mxu0
        %v2459 = vadd.f32 %v2226, %v2458
        %v2460 = vpop.f32.mrf.mxu0
        %v2461 = vpop.f32.mrf.mxu0
        %v2462 = vadd.f32 %v2229, %v2461
        %v2463 = vpop.f32.mrf.mxu0
        %2464 = vmatprep.mubr.bf16.mxu0 0
        %2465 = vmatmul.mubr.bf16.gmra.mxu0 %v2355
        %v2466 = vpop.f32.mrf.mxu0
        %v2467 = vadd.f32 %v2234, %v2466
        %v2468 = vpop.f32.mrf.mxu0
        %v2469 = vpop.f32.mrf.mxu0
        %v2470 = vadd.f32 %v2237, %v2469
        %v2471 = vpop.f32.mrf.mxu0
        %2472 = vmatprep.mubr.bf16.mxu0 0
        %2473 = vmatmul.mubr.bf16.gmra.mxu0 %v2358
        %v2474 = vpop.f32.mrf.mxu0
        %v2475 = vadd.f32 %v2242, %v2474
        %v2476 = vpop.f32.mrf.mxu0
        %v2477 = vpop.f32.mrf.mxu0
        %v2478 = vadd.f32 %v2245, %v2477
        %v2479 = vpop.f32.mrf.mxu0
        %2480 = vmatprep.mubr.bf16.mxu0 0
        %2481 = vmatmul.mubr.bf16.gmra.mxu0 %v2361
        %v2482 = vpop.f32.mrf.mxu0
        %v2483 = vadd.f32 %v2250, %v2482
        %v2484 = vpop.f32.mrf.mxu0
        %v2485 = vpop.f32.mrf.mxu0
        %v2486 = vadd.f32 %v2253, %v2485
        %v2487 = vpop.f32.mrf.mxu0
        %2488 = vmatprep.mubr.bf16.mxu0 0
        %2489 = vmatmul.mubr.bf16.gmra.mxu0 %v2364
        %v2490 = vpop.f32.mrf.mxu0
        %v2491 = vadd.f32 %v2258, %v2490
        %v2492 = vpop.f32.mrf.mxu0
        %v2493 = vpop.f32.mrf.mxu0
        %v2494 = vadd.f32 %v2261, %v2493
        %v2495 = vpop.f32.mrf.mxu0
        %2496 = vmatprep.mubr.bf16.mxu0 0
        %2497 = vmatmul.mubr.bf16.gmra.mxu0 %v2367
        %v2498 = vpop.f32.mrf.mxu0
        %v2499 = vadd.f32 %v2266, %v2498
        %v2500 = vpop.f32.mrf.mxu0
        %v2501 = vpop.f32.mrf.mxu0
        %v2502 = vadd.f32 %v2269, %v2501
        %v2503 = vpop.f32.mrf.mxu0
        %2504 = vmatprep.mubr.bf16.mxu0 0
        %2505 = vmatmul.mubr.bf16.gmra.mxu0 %v2370
        %v2506 = vpop.f32.mrf.mxu0
        %v2507 = vadd.f32 %v2274, %v2506
        %v2508 = vpop.f32.mrf.mxu0
        %v2509 = vpop.f32.mrf.mxu0
        %v2510 = vadd.f32 %v2277, %v2509
        %v2511 = vpop.f32.mrf.mxu0
        %2512 = vmatprep.mubr.bf16.mxu0 0
        %2513 = vmatmul.mubr.bf16.gmra.mxu0 %v2373
        %v2514 = vpop.f32.mrf.mxu0
        %v2515 = vadd.f32 %v2282, %v2514
        %v2516 = vpop.f32.mrf.mxu0
        %v2517 = vpop.f32.mrf.mxu0
        %v2518 = vadd.f32 %v2285, %v2517
        %v2519 = vpop.f32.mrf.mxu0
        %2520 = vmatprep.mubr.bf16.mxu0 0
        %2521 = vmatmul.mubr.bf16.gmra.mxu0 %v2376
        %v2522 = vpop.f32.mrf.mxu0
        %v2523 = vadd.f32 %v2290, %v2522
        %v2524 = vpop.f32.mrf.mxu0
        %v2525 = vpop.f32.mrf.mxu0
        %v2526 = vadd.f32 %v2293, %v2525
        %v2527 = vpop.f32.mrf.mxu0
        %2528 = vmatprep.mubr.bf16.mxu0 0
        %2529 = vmatmul.mubr.bf16.gmra.mxu0 %v2379
        %v2530 = vpop.f32.mrf.mxu0
        %v2531 = vadd.f32 %v2298, %v2530
        %v2532 = vpop.f32.mrf.mxu0
        %v2533 = vpop.f32.mrf.mxu0
        %v2534 = vadd.f32 %v2301, %v2533
        %v2535 = vpop.f32.mrf.mxu0
        %2536 = vmatprep.mubr.bf16.mxu0 0
        %2537 = vmatmul.mubr.bf16.gmra.mxu0 %v2382
        %v2538 = vpop.f32.mrf.mxu0
        %v2539 = vadd.f32 %v2306, %v2538
        %v2540 = vpop.f32.mrf.mxu0
        %v2541 = vpop.f32.mrf.mxu0
        %v2542 = vadd.f32 %v2309, %v2541
        %v2543 = vpop.f32.mrf.mxu0
        %2544 = vdwg.mxu0
        %v2545 = vld [vmem:[#allocation2 + $0x9] sm:$0xff]
        %v2546 = vld [vmem:[#allocation2 + $0x11] sm:$0xff]
        %v2547 = vld [vmem:[#allocation2 + $0x19] sm:$0xff]
        %v2548 = vld [vmem:[#allocation2 + $0x21] sm:$0xff]
        %v2549 = vld [vmem:[#allocation2 + $0x29] sm:$0xff]
        %v2550 = vld [vmem:[#allocation2 + $0x31] sm:$0xff]
        %v2551 = vld [vmem:[#allocation2 + $0x39] sm:$0xff]
        %v2552 = vld [vmem:[#allocation2 + $0x41] sm:$0xff]
        %v2553 = vld [vmem:[#allocation2 + $0x49] sm:$0xff]
        %v2554 = vld [vmem:[#allocation2 + $0x51] sm:$0xff]
        %v2555 = vld [vmem:[#allocation2 + $0x59] sm:$0xff]
        %v2556 = vld [vmem:[#allocation2 + $0x61] sm:$0xff]
        %v2557 = vld [vmem:[#allocation2 + $0x69] sm:$0xff]
        %v2558 = vld [vmem:[#allocation2 + $0x71] sm:$0xff]
        %v2559 = vld [vmem:[#allocation2 + $0x79] sm:$0xff]
        %v2560 = vld [vmem:[#allocation2 + $0x81] sm:$0xff]
        %v2561 = vld [vmem:[#allocation2 + $0x89] sm:$0xff]
        %v2562 = vld [vmem:[#allocation2 + $0x91] sm:$0xff]
        %v2563 = vld [vmem:[#allocation2 + $0x99] sm:$0xff]
        %v2564 = vld [vmem:[#allocation2 + $0xa1] sm:$0xff]
        %v2565 = vld [vmem:[#allocation2 + $0xa9] sm:$0xff]
        %v2566 = vld [vmem:[#allocation2 + $0xb1] sm:$0xff]
        %v2567 = vld [vmem:[#allocation2 + $0xb9] sm:$0xff]
        %v2568 = vld [vmem:[#allocation2 + $0xc1] sm:$0xff]
        %v2569 = vld [vmem:[#allocation2 + $0xc9] sm:$0xff]
        %v2570 = vld [vmem:[#allocation2 + $0xd1] sm:$0xff]
        %v2571 = vld [vmem:[#allocation2 + $0xd9] sm:$0xff]
        %v2572 = vld [vmem:[#allocation2 + $0xe1] sm:$0xff]
        %v2573 = vld [vmem:[#allocation2 + $0xe9] sm:$0xff]
        %v2574 = vld [vmem:[#allocation2 + $0xf1] sm:$0xff]
        %v2575 = vld [vmem:[#allocation2 + $0xf9] sm:$0xff]
        %v2576 = vld [vmem:[#allocation2 + $0x101] sm:$0xff]
        %v2577 = vsel %vm889, 1, 0
        %v2578 = vsel %vm890, 1, 0
        %v2579 = vsel %vm891, 1, 0
        %v2580 = vsel %vm892, 1, 0
        %v2581 = vsel %vm893, 1, 0
        %v2582 = vsel %vm894, 1, 0
        %v2583 = vsel %vm895, 1, 0
        %v2584 = vsel %vm896, 1, 0
        %v2585 = vsel %vm897, 1, 0
        %v2586 = vsel %vm898, 1, 0
        %v2587 = vsel %vm899, 1, 0
        %v2588 = vsel %vm900, 1, 0
        %v2589 = vsel %vm901, 1, 0
        %v2590 = vsel %vm902, 1, 0
        %v2591 = vsel %vm903, 1, 0
        %v2592 = vsel %vm904, 1, 0
        %v2593 = vsel %vm905, 1, 0
        %v2594 = vsel %vm906, 1, 0
        %v2595 = vsel %vm907, 1, 0
        %v2596 = vsel %vm908, 1, 0
        %v2597 = vsel %vm909, 1, 0
        %v2598 = vsel %vm910, 1, 0
        %v2599 = vsel %vm911, 1, 0
        %v2600 = vsel %vm912, 1, 0
        %v2601 = vsel %vm913, 1, 0
        %v2602 = vsel %vm914, 1, 0
        %v2603 = vsel %vm915, 1, 0
        %v2604 = vsel %vm916, 1, 0
        %v2605 = vsel %vm917, 1, 0
        %v2606 = vsel %vm918, 1, 0
        %v2607 = vsel %vm919, 1, 0
        %v2608 = vsel %vm920, 1, 0
        %vm2609 = vcmp.eq.s32.totalorder %v2577, 1
        %vm2610 = vcmp.eq.s32.totalorder %v2578, 1
        %vm2611 = vcmp.eq.s32.totalorder %v2579, 1
        %vm2612 = vcmp.eq.s32.totalorder %v2580, 1
        %vm2613 = vcmp.eq.s32.totalorder %v2581, 1
        %vm2614 = vcmp.eq.s32.totalorder %v2582, 1
        %vm2615 = vcmp.eq.s32.totalorder %v2583, 1
        %vm2616 = vcmp.eq.s32.totalorder %v2584, 1
        %vm2617 = vcmp.eq.s32.totalorder %v2585, 1
        %vm2618 = vcmp.eq.s32.totalorder %v2586, 1
        %vm2619 = vcmp.eq.s32.totalorder %v2587, 1
        %vm2620 = vcmp.eq.s32.totalorder %v2588, 1
        %vm2621 = vcmp.eq.s32.totalorder %v2589, 1
        %vm2622 = vcmp.eq.s32.totalorder %v2590, 1
        %vm2623 = vcmp.eq.s32.totalorder %v2591, 1
        %vm2624 = vcmp.eq.s32.totalorder %v2592, 1
        %vm2625 = vcmp.eq.s32.totalorder %v2593, 1
        %vm2626 = vcmp.eq.s32.totalorder %v2594, 1
        %vm2627 = vcmp.eq.s32.totalorder %v2595, 1
        %vm2628 = vcmp.eq.s32.totalorder %v2596, 1
        %vm2629 = vcmp.eq.s32.totalorder %v2597, 1
        %vm2630 = vcmp.eq.s32.totalorder %v2598, 1
        %vm2631 = vcmp.eq.s32.totalorder %v2599, 1
        %vm2632 = vcmp.eq.s32.totalorder %v2600, 1
        %vm2633 = vcmp.eq.s32.totalorder %v2601, 1
        %vm2634 = vcmp.eq.s32.totalorder %v2602, 1
        %vm2635 = vcmp.eq.s32.totalorder %v2603, 1
        %vm2636 = vcmp.eq.s32.totalorder %v2604, 1
        %vm2637 = vcmp.eq.s32.totalorder %v2605, 1
        %vm2638 = vcmp.eq.s32.totalorder %v2606, 1
        %vm2639 = vcmp.eq.s32.totalorder %v2607, 1
        %vm2640 = vcmp.eq.s32.totalorder %v2608, 1
        %v2641 = vsel %vm2609, %v2545, 0.0
        %v2642 = vsel %vm2610, %v2546, 0.0
        %v2643 = vsel %vm2611, %v2547, 0.0
        %v2644 = vsel %vm2612, %v2548, 0.0
        %v2645 = vsel %vm2613, %v2549, 0.0
        %v2646 = vsel %vm2614, %v2550, 0.0
        %v2647 = vsel %vm2615, %v2551, 0.0
        %v2648 = vsel %vm2616, %v2552, 0.0
        %v2649 = vsel %vm2617, %v2553, 0.0
        %v2650 = vsel %vm2618, %v2554, 0.0
        %v2651 = vsel %vm2619, %v2555, 0.0
        %v2652 = vsel %vm2620, %v2556, 0.0
        %v2653 = vsel %vm2621, %v2557, 0.0
        %v2654 = vsel %vm2622, %v2558, 0.0
        %v2655 = vsel %vm2623, %v2559, 0.0
        %v2656 = vsel %vm2624, %v2560, 0.0
        %v2657 = vsel %vm2625, %v2561, 0.0
        %v2658 = vsel %vm2626, %v2562, 0.0
        %v2659 = vsel %vm2627, %v2563, 0.0
        %v2660 = vsel %vm2628, %v2564, 0.0
        %v2661 = vsel %vm2629, %v2565, 0.0
        %v2662 = vsel %vm2630, %v2566, 0.0
        %v2663 = vsel %vm2631, %v2567, 0.0
        %v2664 = vsel %vm2632, %v2568, 0.0
        %v2665 = vsel %vm2633, %v2569, 0.0
        %v2666 = vsel %vm2634, %v2570, 0.0
        %v2667 = vsel %vm2635, %v2571, 0.0
        %v2668 = vsel %vm2636, %v2572, 0.0
        %v2669 = vsel %vm2637, %v2573, 0.0
        %v2670 = vsel %vm2638, %v2574, 0.0
        %v2671 = vsel %vm2639, %v2575, 0.0
        %v2672 = vsel %vm2640, %v2576, 0.0
        %v2673 = vpack.c.bf16 %v2642, %v2641
        %v2674 = vpack.c.bf16 %v2644, %v2643
        %v2675 = vpack.c.bf16 %v2646, %v2645
        %v2676 = vpack.c.bf16 %v2648, %v2647
        %v2677 = vpack.c.bf16 %v2650, %v2649
        %v2678 = vpack.c.bf16 %v2652, %v2651
        %v2679 = vpack.c.bf16 %v2654, %v2653
        %v2680 = vpack.c.bf16 %v2656, %v2655
        %v2681 = vpack.c.bf16 %v2658, %v2657
        %v2682 = vpack.c.bf16 %v2660, %v2659
        %v2683 = vpack.c.bf16 %v2662, %v2661
        %v2684 = vpack.c.bf16 %v2664, %v2663
        %v2685 = vpack.c.bf16 %v2666, %v2665
        %v2686 = vpack.c.bf16 %v2668, %v2667
        %v2687 = vpack.c.bf16 %v2670, %v2669
        %v2688 = vpack.c.bf16 %v2672, %v2671
        %s2689 = scalar_lea.vmem %s3, 64
        %v2690 = vld [vmem:[%s2689] sm:$0xf]
        %v2691 = vld [vmem:[%s2689 + $0x4] sm:$0xf]
        %v2692 = vld [vmem:[%s2689 + $0x8] sm:$0xf]
        %v2693 = vld [vmem:[%s2689 + $0xc] sm:$0xf]
        %v2694 = vld [vmem:[%s2689 + $0x10] sm:$0xf]
        %v2695 = vld [vmem:[%s2689 + $0x14] sm:$0xf]
        %v2696 = vld [vmem:[%s2689 + $0x18] sm:$0xf]
        %v2697 = vld [vmem:[%s2689 + $0x1c] sm:$0xf]
        %v2706 = vunpack.c.l.b16 %v2690
        %v2707 = vunpack.c.l.b16 %v2691
        %v2708 = vunpack.c.l.b16 %v2692
        %v2709 = vunpack.c.l.b16 %v2693
        %v2710 = vunpack.c.l.b16 %v2694
        %v2711 = vunpack.c.l.b16 %v2695
        %v2712 = vunpack.c.l.b16 %v2696
        %v2713 = vunpack.c.l.b16 %v2697
        %v2714 = vpack.c.b16 %v2707, %v2706
        %v2715 = vpack.c.b16 %v2709, %v2708
        %v2716 = vpack.c.b16 %v2711, %v2710
        %v2717 = vpack.c.b16 %v2713, %v2712
        %v2723 = vsel %vm963, %v2673, 0
        %v2726 = vsel %vm963, %v2674, 0
        %v2729 = vsel %vm963, %v2675, 0
        %v2732 = vsel %vm963, %v2676, 0
        %v2735 = vsel %vm963, %v2677, 0
        %v2738 = vsel %vm963, %v2678, 0
        %v2741 = vsel %vm963, %v2679, 0
        %v2744 = vsel %vm963, %v2680, 0
        %v2747 = vsel %vm963, %v2681, 0
        %v2750 = vsel %vm963, %v2682, 0
        %v2753 = vsel %vm963, %v2683, 0
        %v2756 = vsel %vm963, %v2684, 0
        %v2759 = vsel %vm963, %v2685, 0
        %v2762 = vsel %vm963, %v2686, 0
        %v2765 = vsel %vm963, %v2687, 0
        %v2768 = vsel %vm963, %v2688, 0
        %2770 = vmatprep.subr.bf16.mxu0 0
        %2771 = vmatpush1.bf16.msra.mxu0 0
        %2772 = vmatprep.subr.bf16.mxu0 0
        %2773 = vmatpush1.bf16.msra.mxu0 0
        %2774 = vmatprep.subr.bf16.mxu0 0
        %2775 = vmatpush1.bf16.msra.mxu0 0
        %2776 = vmatprep.subr.bf16.mxu0 0
        %2777 = vmatpush1.bf16.msra.mxu0 0
        %2778 = vmatprep.subr.bf16.mxu0 0
        %2779 = vmatpush1.bf16.msra.mxu0 %v2717
        %2780 = vmatprep.subr.bf16.mxu0 0
        %2781 = vmatpush1.bf16.msra.mxu0 %v2716
        %2782 = vmatprep.subr.bf16.mxu0 0
        %2783 = vmatpush1.bf16.msra.mxu0 %v2715
        %2784 = vmatprep.subr.bf16.mxu0 0
        %2785 = vmatpush1.bf16.msra.mxu0 %v2714
        %2786 = vmatprep.subr.bf16.mxu0 0
        %2787 = vmatpush2.bf16.msra.mxu0 0
        %2788 = vmatprep.subr.bf16.mxu0 0
        %2789 = vmatpush2.bf16.msra.mxu0 0
        %2790 = vmatprep.subr.bf16.mxu0 0
        %2791 = vmatpush2.bf16.msra.mxu0 0
        %2792 = vmatprep.subr.bf16.mxu0 0
        %2793 = vmatpush2.bf16.msra.mxu0 0
        %2794 = vmatprep.subr.bf16.mxu0 0
        %2795 = vmatpush2.bf16.msra.mxu0 0
        %2796 = vmatprep.subr.bf16.mxu0 0
        %2797 = vmatpush2.bf16.msra.mxu0 0
        %2798 = vmatprep.subr.bf16.mxu0 0
        %2799 = vmatpush2.bf16.msra.mxu0 0
        %2800 = vmatprep.subr.bf16.mxu0 0
        %2801 = vmatpush2.bf16.msra.mxu0 0
        %2802 = vmatprep.mubr.bf16.mxu0 0
        %2803 = vmatmul.mubr.bf16.gmra.mxu0 %v2723
        %v2804 = vpop.f32.mrf.mxu0
        %v2805 = vadd.f32 0.0, %v2804
        %v2806 = vpop.f32.mrf.mxu0
        %v2807 = vpop.f32.mrf.mxu0
        %v2808 = vadd.f32 0.0, %v2807
        %v2809 = vpop.f32.mrf.mxu0
        %2810 = vmatprep.mubr.bf16.mxu0 0
        %2811 = vmatmul.mubr.bf16.gmra.mxu0 %v2726
        %v2812 = vpop.f32.mrf.mxu0
        %v2813 = vadd.f32 0.0, %v2812
        %v2814 = vpop.f32.mrf.mxu0
        %v2815 = vpop.f32.mrf.mxu0
        %v2816 = vadd.f32 0.0, %v2815
        %v2817 = vpop.f32.mrf.mxu0
        %2818 = vmatprep.mubr.bf16.mxu0 0
        %2819 = vmatmul.mubr.bf16.gmra.mxu0 %v2729
        %v2820 = vpop.f32.mrf.mxu0
        %v2821 = vadd.f32 0.0, %v2820
        %v2822 = vpop.f32.mrf.mxu0
        %v2823 = vpop.f32.mrf.mxu0
        %v2824 = vadd.f32 0.0, %v2823
        %v2825 = vpop.f32.mrf.mxu0
        %2826 = vmatprep.mubr.bf16.mxu0 0
        %2827 = vmatmul.mubr.bf16.gmra.mxu0 %v2732
        %v2828 = vpop.f32.mrf.mxu0
        %v2829 = vadd.f32 0.0, %v2828
        %v2830 = vpop.f32.mrf.mxu0
        %v2831 = vpop.f32.mrf.mxu0
        %v2832 = vadd.f32 0.0, %v2831
        %v2833 = vpop.f32.mrf.mxu0
        %2834 = vmatprep.mubr.bf16.mxu0 0
        %2835 = vmatmul.mubr.bf16.gmra.mxu0 %v2735
        %v2836 = vpop.f32.mrf.mxu0
        %v2837 = vadd.f32 0.0, %v2836
        %v2838 = vpop.f32.mrf.mxu0
        %v2839 = vpop.f32.mrf.mxu0
        %v2840 = vadd.f32 0.0, %v2839
        %v2841 = vpop.f32.mrf.mxu0
        %2842 = vmatprep.mubr.bf16.mxu0 0
        %2843 = vmatmul.mubr.bf16.gmra.mxu0 %v2738
        %v2844 = vpop.f32.mrf.mxu0
        %v2845 = vadd.f32 0.0, %v2844
        %v2846 = vpop.f32.mrf.mxu0
        %v2847 = vpop.f32.mrf.mxu0
        %v2848 = vadd.f32 0.0, %v2847
        %v2849 = vpop.f32.mrf.mxu0
        %2850 = vmatprep.mubr.bf16.mxu0 0
        %2851 = vmatmul.mubr.bf16.gmra.mxu0 %v2741
        %v2852 = vpop.f32.mrf.mxu0
        %v2853 = vadd.f32 0.0, %v2852
        %v2854 = vpop.f32.mrf.mxu0
        %v2855 = vpop.f32.mrf.mxu0
        %v2856 = vadd.f32 0.0, %v2855
        %v2857 = vpop.f32.mrf.mxu0
        %2858 = vmatprep.mubr.bf16.mxu0 0
        %2859 = vmatmul.mubr.bf16.gmra.mxu0 %v2744
        %v2860 = vpop.f32.mrf.mxu0
        %v2861 = vadd.f32 0.0, %v2860
        %v2862 = vpop.f32.mrf.mxu0
        %v2863 = vpop.f32.mrf.mxu0
        %v2864 = vadd.f32 0.0, %v2863
        %v2865 = vpop.f32.mrf.mxu0
        %2866 = vmatprep.mubr.bf16.mxu0 0
        %2867 = vmatmul.mubr.bf16.gmra.mxu0 %v2747
        %v2868 = vpop.f32.mrf.mxu0
        %v2869 = vadd.f32 0.0, %v2868
        %v2870 = vpop.f32.mrf.mxu0
        %v2871 = vpop.f32.mrf.mxu0
        %v2872 = vadd.f32 0.0, %v2871
        %v2873 = vpop.f32.mrf.mxu0
        %2874 = vmatprep.mubr.bf16.mxu0 0
        %2875 = vmatmul.mubr.bf16.gmra.mxu0 %v2750
        %v2876 = vpop.f32.mrf.mxu0
        %v2877 = vadd.f32 0.0, %v2876
        %v2878 = vpop.f32.mrf.mxu0
        %v2879 = vpop.f32.mrf.mxu0
        %v2880 = vadd.f32 0.0, %v2879
        %v2881 = vpop.f32.mrf.mxu0
        %2882 = vmatprep.mubr.bf16.mxu0 0
        %2883 = vmatmul.mubr.bf16.gmra.mxu0 %v2753
        %v2884 = vpop.f32.mrf.mxu0
        %v2885 = vadd.f32 0.0, %v2884
        %v2886 = vpop.f32.mrf.mxu0
        %v2887 = vpop.f32.mrf.mxu0
        %v2888 = vadd.f32 0.0, %v2887
        %v2889 = vpop.f32.mrf.mxu0
        %2890 = vmatprep.mubr.bf16.mxu0 0
        %2891 = vmatmul.mubr.bf16.gmra.mxu0 %v2756
        %v2892 = vpop.f32.mrf.mxu0
        %v2893 = vadd.f32 0.0, %v2892
        %v2894 = vpop.f32.mrf.mxu0
        %v2895 = vpop.f32.mrf.mxu0
        %v2896 = vadd.f32 0.0, %v2895
        %v2897 = vpop.f32.mrf.mxu0
        %2898 = vmatprep.mubr.bf16.mxu0 0
        %2899 = vmatmul.mubr.bf16.gmra.mxu0 %v2759
        %v2900 = vpop.f32.mrf.mxu0
        %v2901 = vadd.f32 0.0, %v2900
        %v2902 = vpop.f32.mrf.mxu0
        %v2903 = vpop.f32.mrf.mxu0
        %v2904 = vadd.f32 0.0, %v2903
        %v2905 = vpop.f32.mrf.mxu0
        %2906 = vmatprep.mubr.bf16.mxu0 0
        %2907 = vmatmul.mubr.bf16.gmra.mxu0 %v2762
        %v2908 = vpop.f32.mrf.mxu0
        %v2909 = vadd.f32 0.0, %v2908
        %v2910 = vpop.f32.mrf.mxu0
        %v2911 = vpop.f32.mrf.mxu0
        %v2912 = vadd.f32 0.0, %v2911
        %v2913 = vpop.f32.mrf.mxu0
        %2914 = vmatprep.mubr.bf16.mxu0 0
        %2915 = vmatmul.mubr.bf16.gmra.mxu0 %v2765
        %v2916 = vpop.f32.mrf.mxu0
        %v2917 = vadd.f32 0.0, %v2916
        %v2918 = vpop.f32.mrf.mxu0
        %v2919 = vpop.f32.mrf.mxu0
        %v2920 = vadd.f32 0.0, %v2919
        %v2921 = vpop.f32.mrf.mxu0
        %2922 = vmatprep.mubr.bf16.mxu0 0
        %2923 = vmatmul.mubr.bf16.gmra.mxu0 %v2768
        %v2924 = vpop.f32.mrf.mxu0
        %v2925 = vadd.f32 0.0, %v2924
        %v2926 = vpop.f32.mrf.mxu0
        %v2927 = vpop.f32.mrf.mxu0
        %v2928 = vadd.f32 0.0, %v2927
        %v2929 = vpop.f32.mrf.mxu0
        %2930 = vdwg.mxu0
        %v2931 = vadd.f32 %v2419, %v2805
        %v2932 = vadd.f32 %v2422, %v2808
        %v2933 = vadd.f32 %v2427, %v2813
        %v2934 = vadd.f32 %v2430, %v2816
        %v2935 = vadd.f32 %v2435, %v2821
        %v2936 = vadd.f32 %v2438, %v2824
        %v2937 = vadd.f32 %v2443, %v2829
        %v2938 = vadd.f32 %v2446, %v2832
        %v2939 = vadd.f32 %v2451, %v2837
        %v2940 = vadd.f32 %v2454, %v2840
        %v2941 = vadd.f32 %v2459, %v2845
        %v2942 = vadd.f32 %v2462, %v2848
        %v2943 = vadd.f32 %v2467, %v2853
        %v2944 = vadd.f32 %v2470, %v2856
        %v2945 = vadd.f32 %v2475, %v2861
        %v2946 = vadd.f32 %v2478, %v2864
        %v2947 = vadd.f32 %v2483, %v2869
        %v2948 = vadd.f32 %v2486, %v2872
        %v2949 = vadd.f32 %v2491, %v2877
        %v2950 = vadd.f32 %v2494, %v2880
        %v2951 = vadd.f32 %v2499, %v2885
        %v2952 = vadd.f32 %v2502, %v2888
        %v2953 = vadd.f32 %v2507, %v2893
        %v2954 = vadd.f32 %v2510, %v2896
        %v2955 = vadd.f32 %v2515, %v2901
        %v2956 = vadd.f32 %v2518, %v2904
        %v2957 = vadd.f32 %v2523, %v2909
        %v2958 = vadd.f32 %v2526, %v2912
        %v2959 = vadd.f32 %v2531, %v2917
        %v2960 = vadd.f32 %v2534, %v2920
        %v2961 = vadd.f32 %v2539, %v2925
        %v2962 = vadd.f32 %v2542, %v2928
        %v2963 = vld [vmem:[#allocation2 + $0x17] sm:$0xff]
        %v2964 = vld [vmem:[#allocation2 + $0x1f] sm:$0xff]
        %v2965 = vld [vmem:[#allocation2 + $0x27] sm:$0xff]
        %v2966 = vld [vmem:[#allocation2 + $0x2f] sm:$0xff]
        %v2967 = vld [vmem:[#allocation2 + $0x37] sm:$0xff]
        %v2968 = vld [vmem:[#allocation2 + $0x3f] sm:$0xff]
        %v2969 = vld [vmem:[#allocation2 + $0x47] sm:$0xff]
        %v2970 = vld [vmem:[#allocation2 + $0x4f] sm:$0xff]
        %v2971 = vld [vmem:[#allocation2 + $0x57] sm:$0xff]
        %v2972 = vld [vmem:[#allocation2 + $0x5f] sm:$0xff]
        %v2973 = vld [vmem:[#allocation2 + $0x67] sm:$0xff]
        %v2974 = vld [vmem:[#allocation2 + $0x6f] sm:$0xff]
        %v2975 = vld [vmem:[#allocation2 + $0x77] sm:$0xff]
        %v2976 = vld [vmem:[#allocation2 + $0x7f] sm:$0xff]
        %v2977 = vld [vmem:[#allocation2 + $0x87] sm:$0xff]
        %v2978 = vld [vmem:[#allocation2 + $0x8f] sm:$0xff]
        %v2979 = vld [vmem:[#allocation2 + $0x97] sm:$0xff]
        %v2980 = vld [vmem:[#allocation2 + $0x9f] sm:$0xff]
        %v2981 = vld [vmem:[#allocation2 + $0xa7] sm:$0xff]
        %v2982 = vld [vmem:[#allocation2 + $0xaf] sm:$0xff]
        %v2983 = vld [vmem:[#allocation2 + $0xb7] sm:$0xff]
        %v2984 = vld [vmem:[#allocation2 + $0xbf] sm:$0xff]
        %v2985 = vld [vmem:[#allocation2 + $0xc7] sm:$0xff]
        %v2986 = vld [vmem:[#allocation2 + $0xcf] sm:$0xff]
        %v2987 = vld [vmem:[#allocation2 + $0xd7] sm:$0xff]
        %v2988 = vld [vmem:[#allocation2 + $0xdf] sm:$0xff]
        %v2989 = vld [vmem:[#allocation2 + $0xe7] sm:$0xff]
        %v2990 = vld [vmem:[#allocation2 + $0xef] sm:$0xff]
        %v2991 = vld [vmem:[#allocation2 + $0xf7] sm:$0xff]
        %v2992 = vld [vmem:[#allocation2 + $0xff] sm:$0xff]
        %v2993 = vld [vmem:[#allocation2 + $0x107] sm:$0xff]
        %v2994 = vld [vmem:[#allocation2 + $0x10f] sm:$0xff]
        %v2995 = vsel %vm1934, %v2963, 0.0
        %v2996 = vsel %vm1935, %v2964, 0.0
        %v2997 = vsel %vm1936, %v2965, 0.0
        %v2998 = vsel %vm1937, %v2966, 0.0
        %v2999 = vsel %vm1938, %v2967, 0.0
        %v3000 = vsel %vm1939, %v2968, 0.0
        %v3001 = vsel %vm1940, %v2969, 0.0
        %v3002 = vsel %vm1941, %v2970, 0.0
        %v3003 = vsel %vm1942, %v2971, 0.0
        %v3004 = vsel %vm1943, %v2972, 0.0
        %v3005 = vsel %vm1944, %v2973, 0.0
        %v3006 = vsel %vm1945, %v2974, 0.0
        %v3007 = vsel %vm1946, %v2975, 0.0
        %v3008 = vsel %vm1947, %v2976, 0.0
        %v3009 = vsel %vm1948, %v2977, 0.0
        %v3010 = vsel %vm1949, %v2978, 0.0
        %v3011 = vsel %vm1950, %v2979, 0.0
        %v3012 = vsel %vm1951, %v2980, 0.0
        %v3013 = vsel %vm1952, %v2981, 0.0
        %v3014 = vsel %vm1953, %v2982, 0.0
        %v3015 = vsel %vm1954, %v2983, 0.0
        %v3016 = vsel %vm1955, %v2984, 0.0
        %v3017 = vsel %vm1956, %v2985, 0.0
        %v3018 = vsel %vm1957, %v2986, 0.0
        %v3019 = vsel %vm1958, %v2987, 0.0
        %v3020 = vsel %vm1959, %v2988, 0.0
        %v3021 = vsel %vm1960, %v2989, 0.0
        %v3022 = vsel %vm1961, %v2990, 0.0
        %v3023 = vsel %vm1962, %v2991, 0.0
        %v3024 = vsel %vm1963, %v2992, 0.0
        %v3025 = vsel %vm1964, %v2993, 0.0
        %v3026 = vsel %vm1965, %v2994, 0.0
        %v3027 = vpack.c.bf16 %v2996, %v2995
        %v3028 = vpack.c.bf16 %v2998, %v2997
        %v3029 = vpack.c.bf16 %v3000, %v2999
        %v3030 = vpack.c.bf16 %v3002, %v3001
        %v3031 = vpack.c.bf16 %v3004, %v3003
        %v3032 = vpack.c.bf16 %v3006, %v3005
        %v3033 = vpack.c.bf16 %v3008, %v3007
        %v3034 = vpack.c.bf16 %v3010, %v3009
        %v3035 = vpack.c.bf16 %v3012, %v3011
        %v3036 = vpack.c.bf16 %v3014, %v3013
        %v3037 = vpack.c.bf16 %v3016, %v3015
        %v3038 = vpack.c.bf16 %v3018, %v3017
        %v3039 = vpack.c.bf16 %v3020, %v3019
        %v3040 = vpack.c.bf16 %v3022, %v3021
        %v3041 = vpack.c.bf16 %v3024, %v3023
        %v3042 = vpack.c.bf16 %v3026, %v3025
        %s3043 = scalar_lea.vmem %s3, 96
        %v3044 = vld [vmem:[%s3043] sm:$0xf]
        %v3045 = vld [vmem:[%s3043 + $0x4] sm:$0xf]
        %v3046 = vld [vmem:[%s3043 + $0x8] sm:$0xf]
        %v3047 = vld [vmem:[%s3043 + $0xc] sm:$0xf]
        %v3048 = vld [vmem:[%s3043 + $0x10] sm:$0xf]
        %v3049 = vld [vmem:[%s3043 + $0x14] sm:$0xf]
        %v3050 = vld [vmem:[%s3043 + $0x18] sm:$0xf]
        %v3051 = vld [vmem:[%s3043 + $0x1c] sm:$0xf]
        %v3060 = vunpack.c.l.b16 %v3044
        %v3061 = vunpack.c.l.b16 %v3045
        %v3062 = vunpack.c.l.b16 %v3046
        %v3063 = vunpack.c.l.b16 %v3047
        %v3064 = vunpack.c.l.b16 %v3048
        %v3065 = vunpack.c.l.b16 %v3049
        %v3066 = vunpack.c.l.b16 %v3050
        %v3067 = vunpack.c.l.b16 %v3051
        %v3068 = vpack.c.b16 %v3061, %v3060
        %v3069 = vpack.c.b16 %v3063, %v3062
        %v3070 = vpack.c.b16 %v3065, %v3064
        %v3071 = vpack.c.b16 %v3067, %v3066
        %v3077 = vsel %vm963, %v3027, 0
        %v3080 = vsel %vm963, %v3028, 0
        %v3083 = vsel %vm963, %v3029, 0
        %v3086 = vsel %vm963, %v3030, 0
        %v3089 = vsel %vm963, %v3031, 0
        %v3092 = vsel %vm963, %v3032, 0
        %v3095 = vsel %vm963, %v3033, 0
        %v3098 = vsel %vm963, %v3034, 0
        %v3101 = vsel %vm963, %v3035, 0
        %v3104 = vsel %vm963, %v3036, 0
        %v3107 = vsel %vm963, %v3037, 0
        %v3110 = vsel %vm963, %v3038, 0
        %v3113 = vsel %vm963, %v3039, 0
        %v3116 = vsel %vm963, %v3040, 0
        %v3119 = vsel %vm963, %v3041, 0
        %v3122 = vsel %vm963, %v3042, 0
        %3124 = vmatprep.subr.bf16.mxu0 0
        %3125 = vmatpush1.bf16.msra.mxu0 0
        %3126 = vmatprep.subr.bf16.mxu0 0
        %3127 = vmatpush1.bf16.msra.mxu0 0
        %3128 = vmatprep.subr.bf16.mxu0 0
        %3129 = vmatpush1.bf16.msra.mxu0 0
        %3130 = vmatprep.subr.bf16.mxu0 0
        %3131 = vmatpush1.bf16.msra.mxu0 0
        %3132 = vmatprep.subr.bf16.mxu0 0
        %3133 = vmatpush1.bf16.msra.mxu0 %v3071
        %3134 = vmatprep.subr.bf16.mxu0 0
        %3135 = vmatpush1.bf16.msra.mxu0 %v3070
        %3136 = vmatprep.subr.bf16.mxu0 0
        %3137 = vmatpush1.bf16.msra.mxu0 %v3069
        %3138 = vmatprep.subr.bf16.mxu0 0
        %3139 = vmatpush1.bf16.msra.mxu0 %v3068
        %3140 = vmatprep.subr.bf16.mxu0 0
        %3141 = vmatpush2.bf16.msra.mxu0 0
        %3142 = vmatprep.subr.bf16.mxu0 0
        %3143 = vmatpush2.bf16.msra.mxu0 0
        %3144 = vmatprep.subr.bf16.mxu0 0
        %3145 = vmatpush2.bf16.msra.mxu0 0
        %3146 = vmatprep.subr.bf16.mxu0 0
        %3147 = vmatpush2.bf16.msra.mxu0 0
        %3148 = vmatprep.subr.bf16.mxu0 0
        %3149 = vmatpush2.bf16.msra.mxu0 0
        %3150 = vmatprep.subr.bf16.mxu0 0
        %3151 = vmatpush2.bf16.msra.mxu0 0
        %3152 = vmatprep.subr.bf16.mxu0 0
        %3153 = vmatpush2.bf16.msra.mxu0 0
        %3154 = vmatprep.subr.bf16.mxu0 0
        %3155 = vmatpush2.bf16.msra.mxu0 0
        %3156 = vmatprep.mubr.bf16.mxu0 0
        %3157 = vmatmul.mubr.bf16.gmra.mxu0 %v3077
        %v3158 = vpop.f32.mrf.mxu0
        %v3159 = vadd.f32 0.0, %v3158
        %v3160 = vpop.f32.mrf.mxu0
        %v3161 = vpop.f32.mrf.mxu0
        %v3162 = vadd.f32 0.0, %v3161
        %v3163 = vpop.f32.mrf.mxu0
        %3164 = vmatprep.mubr.bf16.mxu0 0
        %3165 = vmatmul.mubr.bf16.gmra.mxu0 %v3080
        %v3166 = vpop.f32.mrf.mxu0
        %v3167 = vadd.f32 0.0, %v3166
        %v3168 = vpop.f32.mrf.mxu0
        %v3169 = vpop.f32.mrf.mxu0
        %v3170 = vadd.f32 0.0, %v3169
        %v3171 = vpop.f32.mrf.mxu0
        %3172 = vmatprep.mubr.bf16.mxu0 0
        %3173 = vmatmul.mubr.bf16.gmra.mxu0 %v3083
        %v3174 = vpop.f32.mrf.mxu0
        %v3175 = vadd.f32 0.0, %v3174
        %v3176 = vpop.f32.mrf.mxu0
        %v3177 = vpop.f32.mrf.mxu0
        %v3178 = vadd.f32 0.0, %v3177
        %v3179 = vpop.f32.mrf.mxu0
        %3180 = vmatprep.mubr.bf16.mxu0 0
        %3181 = vmatmul.mubr.bf16.gmra.mxu0 %v3086
        %v3182 = vpop.f32.mrf.mxu0
        %v3183 = vadd.f32 0.0, %v3182
        %v3184 = vpop.f32.mrf.mxu0
        %v3185 = vpop.f32.mrf.mxu0
        %v3186 = vadd.f32 0.0, %v3185
        %v3187 = vpop.f32.mrf.mxu0
        %3188 = vmatprep.mubr.bf16.mxu0 0
        %3189 = vmatmul.mubr.bf16.gmra.mxu0 %v3089
        %v3190 = vpop.f32.mrf.mxu0
        %v3191 = vadd.f32 0.0, %v3190
        %v3192 = vpop.f32.mrf.mxu0
        %v3193 = vpop.f32.mrf.mxu0
        %v3194 = vadd.f32 0.0, %v3193
        %v3195 = vpop.f32.mrf.mxu0
        %3196 = vmatprep.mubr.bf16.mxu0 0
        %3197 = vmatmul.mubr.bf16.gmra.mxu0 %v3092
        %v3198 = vpop.f32.mrf.mxu0
        %v3199 = vadd.f32 0.0, %v3198
        %v3200 = vpop.f32.mrf.mxu0
        %v3201 = vpop.f32.mrf.mxu0
        %v3202 = vadd.f32 0.0, %v3201
        %v3203 = vpop.f32.mrf.mxu0
        %3204 = vmatprep.mubr.bf16.mxu0 0
        %3205 = vmatmul.mubr.bf16.gmra.mxu0 %v3095
        %v3206 = vpop.f32.mrf.mxu0
        %v3207 = vadd.f32 0.0, %v3206
        %v3208 = vpop.f32.mrf.mxu0
        %v3209 = vpop.f32.mrf.mxu0
        %v3210 = vadd.f32 0.0, %v3209
        %v3211 = vpop.f32.mrf.mxu0
        %3212 = vmatprep.mubr.bf16.mxu0 0
        %3213 = vmatmul.mubr.bf16.gmra.mxu0 %v3098
        %v3214 = vpop.f32.mrf.mxu0
        %v3215 = vadd.f32 0.0, %v3214
        %v3216 = vpop.f32.mrf.mxu0
        %v3217 = vpop.f32.mrf.mxu0
        %v3218 = vadd.f32 0.0, %v3217
        %v3219 = vpop.f32.mrf.mxu0
        %3220 = vmatprep.mubr.bf16.mxu0 0
        %3221 = vmatmul.mubr.bf16.gmra.mxu0 %v3101
        %v3222 = vpop.f32.mrf.mxu0
        %v3223 = vadd.f32 0.0, %v3222
        %v3224 = vpop.f32.mrf.mxu0
        %v3225 = vpop.f32.mrf.mxu0
        %v3226 = vadd.f32 0.0, %v3225
        %v3227 = vpop.f32.mrf.mxu0
        %3228 = vmatprep.mubr.bf16.mxu0 0
        %3229 = vmatmul.mubr.bf16.gmra.mxu0 %v3104
        %v3230 = vpop.f32.mrf.mxu0
        %v3231 = vadd.f32 0.0, %v3230
        %v3232 = vpop.f32.mrf.mxu0
        %v3233 = vpop.f32.mrf.mxu0
        %v3234 = vadd.f32 0.0, %v3233
        %v3235 = vpop.f32.mrf.mxu0
        %3236 = vmatprep.mubr.bf16.mxu0 0
        %3237 = vmatmul.mubr.bf16.gmra.mxu0 %v3107
        %v3238 = vpop.f32.mrf.mxu0
        %v3239 = vadd.f32 0.0, %v3238
        %v3240 = vpop.f32.mrf.mxu0
        %v3241 = vpop.f32.mrf.mxu0
        %v3242 = vadd.f32 0.0, %v3241
        %v3243 = vpop.f32.mrf.mxu0
        %3244 = vmatprep.mubr.bf16.mxu0 0
        %3245 = vmatmul.mubr.bf16.gmra.mxu0 %v3110
        %v3246 = vpop.f32.mrf.mxu0
        %v3247 = vadd.f32 0.0, %v3246
        %v3248 = vpop.f32.mrf.mxu0
        %v3249 = vpop.f32.mrf.mxu0
        %v3250 = vadd.f32 0.0, %v3249
        %v3251 = vpop.f32.mrf.mxu0
        %3252 = vmatprep.mubr.bf16.mxu0 0
        %3253 = vmatmul.mubr.bf16.gmra.mxu0 %v3113
        %v3254 = vpop.f32.mrf.mxu0
        %v3255 = vadd.f32 0.0, %v3254
        %v3256 = vpop.f32.mrf.mxu0
        %v3257 = vpop.f32.mrf.mxu0
        %v3258 = vadd.f32 0.0, %v3257
        %v3259 = vpop.f32.mrf.mxu0
        %3260 = vmatprep.mubr.bf16.mxu0 0
        %3261 = vmatmul.mubr.bf16.gmra.mxu0 %v3116
        %v3262 = vpop.f32.mrf.mxu0
        %v3263 = vadd.f32 0.0, %v3262
        %v3264 = vpop.f32.mrf.mxu0
        %v3265 = vpop.f32.mrf.mxu0
        %v3266 = vadd.f32 0.0, %v3265
        %v3267 = vpop.f32.mrf.mxu0
        %3268 = vmatprep.mubr.bf16.mxu0 0
        %3269 = vmatmul.mubr.bf16.gmra.mxu0 %v3119
        %v3270 = vpop.f32.mrf.mxu0
        %v3271 = vadd.f32 0.0, %v3270
        %v3272 = vpop.f32.mrf.mxu0
        %v3273 = vpop.f32.mrf.mxu0
        %v3274 = vadd.f32 0.0, %v3273
        %v3275 = vpop.f32.mrf.mxu0
        %3276 = vmatprep.mubr.bf16.mxu0 0
        %3277 = vmatmul.mubr.bf16.gmra.mxu0 %v3122
        %v3278 = vpop.f32.mrf.mxu0
        %v3279 = vadd.f32 0.0, %v3278
        %v3280 = vpop.f32.mrf.mxu0
        %v3281 = vpop.f32.mrf.mxu0
        %v3282 = vadd.f32 0.0, %v3281
        %v3283 = vpop.f32.mrf.mxu0
        %3284 = vdwg.mxu0
        %v3285 = vadd.f32 %v2931, %v3159
        %v3286 = vadd.f32 %v2932, %v3162
        %v3287 = vadd.f32 %v2933, %v3167
        %v3288 = vadd.f32 %v2934, %v3170
        %v3289 = vadd.f32 %v2935, %v3175
        %v3290 = vadd.f32 %v2936, %v3178
        %v3291 = vadd.f32 %v2937, %v3183
        %v3292 = vadd.f32 %v2938, %v3186
        %v3293 = vadd.f32 %v2939, %v3191
        %v3294 = vadd.f32 %v2940, %v3194
        %v3295 = vadd.f32 %v2941, %v3199
        %v3296 = vadd.f32 %v2942, %v3202
        %v3297 = vadd.f32 %v2943, %v3207
        %v3298 = vadd.f32 %v2944, %v3210
        %v3299 = vadd.f32 %v2945, %v3215
        %v3300 = vadd.f32 %v2946, %v3218
        %v3301 = vadd.f32 %v2947, %v3223
        %v3302 = vadd.f32 %v2948, %v3226
        %v3303 = vadd.f32 %v2949, %v3231
        %v3304 = vadd.f32 %v2950, %v3234
        %v3305 = vadd.f32 %v2951, %v3239
        %v3306 = vadd.f32 %v2952, %v3242
        %v3307 = vadd.f32 %v2953, %v3247
        %v3308 = vadd.f32 %v2954, %v3250
        %v3309 = vadd.f32 %v2955, %v3255
        %v3310 = vadd.f32 %v2956, %v3258
        %v3311 = vadd.f32 %v2957, %v3263
        %v3312 = vadd.f32 %v2958, %v3266
        %v3313 = vadd.f32 %v2959, %v3271
        %v3314 = vadd.f32 %v2960, %v3274
        %v3315 = vadd.f32 %v2961, %v3279
        %v3316 = vadd.f32 %v2962, %v3282
        %v3317 = vld [vmem:[#allocation2 + $0x18] sm:$0xff]
        %v3318 = vld [vmem:[#allocation2 + $0x20] sm:$0xff]
        %v3319 = vld [vmem:[#allocation2 + $0x28] sm:$0xff]
        %v3320 = vld [vmem:[#allocation2 + $0x30] sm:$0xff]
        %v3321 = vld [vmem:[#allocation2 + $0x38] sm:$0xff]
        %v3322 = vld [vmem:[#allocation2 + $0x40] sm:$0xff]
        %v3323 = vld [vmem:[#allocation2 + $0x48] sm:$0xff]
        %v3324 = vld [vmem:[#allocation2 + $0x50] sm:$0xff]
        %v3325 = vld [vmem:[#allocation2 + $0x58] sm:$0xff]
        %v3326 = vld [vmem:[#allocation2 + $0x60] sm:$0xff]
        %v3327 = vld [vmem:[#allocation2 + $0x68] sm:$0xff]
        %v3328 = vld [vmem:[#allocation2 + $0x70] sm:$0xff]
        %v3329 = vld [vmem:[#allocation2 + $0x78] sm:$0xff]
        %v3330 = vld [vmem:[#allocation2 + $0x80] sm:$0xff]
        %v3331 = vld [vmem:[#allocation2 + $0x88] sm:$0xff]
        %v3332 = vld [vmem:[#allocation2 + $0x90] sm:$0xff]
        %v3333 = vld [vmem:[#allocation2 + $0x98] sm:$0xff]
        %v3334 = vld [vmem:[#allocation2 + $0xa0] sm:$0xff]
        %v3335 = vld [vmem:[#allocation2 + $0xa8] sm:$0xff]
        %v3336 = vld [vmem:[#allocation2 + $0xb0] sm:$0xff]
        %v3337 = vld [vmem:[#allocation2 + $0xb8] sm:$0xff]
        %v3338 = vld [vmem:[#allocation2 + $0xc0] sm:$0xff]
        %v3339 = vld [vmem:[#allocation2 + $0xc8] sm:$0xff]
        %v3340 = vld [vmem:[#allocation2 + $0xd0] sm:$0xff]
        %v3341 = vld [vmem:[#allocation2 + $0xd8] sm:$0xff]
        %v3342 = vld [vmem:[#allocation2 + $0xe0] sm:$0xff]
        %v3343 = vld [vmem:[#allocation2 + $0xe8] sm:$0xff]
        %v3344 = vld [vmem:[#allocation2 + $0xf0] sm:$0xff]
        %v3345 = vld [vmem:[#allocation2 + $0xf8] sm:$0xff]
        %v3346 = vld [vmem:[#allocation2 + $0x100] sm:$0xff]
        %v3347 = vld [vmem:[#allocation2 + $0x108] sm:$0xff]
        %v3348 = vld [vmem:[#allocation2 + $0x110] sm:$0xff]
        %v3349 = vpack.c.bf16 %v3318, %v3317
        %v3350 = vpack.c.bf16 %v3320, %v3319
        %v3351 = vpack.c.bf16 %v3322, %v3321
        %v3352 = vpack.c.bf16 %v3324, %v3323
        %v3353 = vpack.c.bf16 %v3326, %v3325
        %v3354 = vpack.c.bf16 %v3328, %v3327
        %v3355 = vpack.c.bf16 %v3330, %v3329
        %v3356 = vpack.c.bf16 %v3332, %v3331
        %v3357 = vpack.c.bf16 %v3334, %v3333
        %v3358 = vpack.c.bf16 %v3336, %v3335
        %v3359 = vpack.c.bf16 %v3338, %v3337
        %v3360 = vpack.c.bf16 %v3340, %v3339
        %v3361 = vpack.c.bf16 %v3342, %v3341
        %v3362 = vpack.c.bf16 %v3344, %v3343
        %v3363 = vpack.c.bf16 %v3346, %v3345
        %v3364 = vpack.c.bf16 %v3348, %v3347
        %s3365 = scalar_lea.vmem %s3, 128
        %v3366 = vld [vmem:[%s3365] sm:$0xf]
        %v3367 = vld [vmem:[%s3365 + $0x4] sm:$0xf]
        %v3368 = vld [vmem:[%s3365 + $0x8] sm:$0xf]
        %v3369 = vld [vmem:[%s3365 + $0xc] sm:$0xf]
        %v3370 = vld [vmem:[%s3365 + $0x10] sm:$0xf]
        %v3371 = vld [vmem:[%s3365 + $0x14] sm:$0xf]
        %v3372 = vld [vmem:[%s3365 + $0x18] sm:$0xf]
        %v3373 = vld [vmem:[%s3365 + $0x1c] sm:$0xf]
        %v3382 = vunpack.c.l.b16 %v3366
        %v3383 = vunpack.c.l.b16 %v3367
        %v3384 = vunpack.c.l.b16 %v3368
        %v3385 = vunpack.c.l.b16 %v3369
        %v3386 = vunpack.c.l.b16 %v3370
        %v3387 = vunpack.c.l.b16 %v3371
        %v3388 = vunpack.c.l.b16 %v3372
        %v3389 = vunpack.c.l.b16 %v3373
        %v3390 = vpack.c.b16 %v3383, %v3382
        %v3391 = vpack.c.b16 %v3385, %v3384
        %v3392 = vpack.c.b16 %v3387, %v3386
        %v3393 = vpack.c.b16 %v3389, %v3388
        %v3399 = vsel %vm963, %v3349, 0
        %v3402 = vsel %vm963, %v3350, 0
        %v3405 = vsel %vm963, %v3351, 0
        %v3408 = vsel %vm963, %v3352, 0
        %v3411 = vsel %vm963, %v3353, 0
        %v3414 = vsel %vm963, %v3354, 0
        %v3417 = vsel %vm963, %v3355, 0
        %v3420 = vsel %vm963, %v3356, 0
        %v3423 = vsel %vm963, %v3357, 0
        %v3426 = vsel %vm963, %v3358, 0
        %v3429 = vsel %vm963, %v3359, 0
        %v3432 = vsel %vm963, %v3360, 0
        %v3435 = vsel %vm963, %v3361, 0
        %v3438 = vsel %vm963, %v3362, 0
        %v3441 = vsel %vm963, %v3363, 0
        %v3444 = vsel %vm963, %v3364, 0
        %3446 = vmatprep.subr.bf16.mxu0 0
        %3447 = vmatpush1.bf16.msra.mxu0 0
        %3448 = vmatprep.subr.bf16.mxu0 0
        %3449 = vmatpush1.bf16.msra.mxu0 0
        %3450 = vmatprep.subr.bf16.mxu0 0
        %3451 = vmatpush1.bf16.msra.mxu0 0
        %3452 = vmatprep.subr.bf16.mxu0 0
        %3453 = vmatpush1.bf16.msra.mxu0 0
        %3454 = vmatprep.subr.bf16.mxu0 0
        %3455 = vmatpush1.bf16.msra.mxu0 %v3393
        %3456 = vmatprep.subr.bf16.mxu0 0
        %3457 = vmatpush1.bf16.msra.mxu0 %v3392
        %3458 = vmatprep.subr.bf16.mxu0 0
        %3459 = vmatpush1.bf16.msra.mxu0 %v3391
        %3460 = vmatprep.subr.bf16.mxu0 0
        %3461 = vmatpush1.bf16.msra.mxu0 %v3390
        %3462 = vmatprep.subr.bf16.mxu0 0
        %3463 = vmatpush2.bf16.msra.mxu0 0
        %3464 = vmatprep.subr.bf16.mxu0 0
        %3465 = vmatpush2.bf16.msra.mxu0 0
        %3466 = vmatprep.subr.bf16.mxu0 0
        %3467 = vmatpush2.bf16.msra.mxu0 0
        %3468 = vmatprep.subr.bf16.mxu0 0
        %3469 = vmatpush2.bf16.msra.mxu0 0
        %3470 = vmatprep.subr.bf16.mxu0 0
        %3471 = vmatpush2.bf16.msra.mxu0 0
        %3472 = vmatprep.subr.bf16.mxu0 0
        %3473 = vmatpush2.bf16.msra.mxu0 0
        %3474 = vmatprep.subr.bf16.mxu0 0
        %3475 = vmatpush2.bf16.msra.mxu0 0
        %3476 = vmatprep.subr.bf16.mxu0 0
        %3477 = vmatpush2.bf16.msra.mxu0 0
        %3478 = vmatprep.mubr.bf16.mxu0 0
        %3479 = vmatmul.mubr.bf16.gmra.mxu0 %v3399
        %v3480 = vpop.f32.mrf.mxu0
        %v3481 = vadd.f32 0.0, %v3480
        %v3482 = vpop.f32.mrf.mxu0
        %v3483 = vpop.f32.mrf.mxu0
        %v3484 = vadd.f32 0.0, %v3483
        %v3485 = vpop.f32.mrf.mxu0
        %3486 = vmatprep.mubr.bf16.mxu0 0
        %3487 = vmatmul.mubr.bf16.gmra.mxu0 %v3402
        %v3488 = vpop.f32.mrf.mxu0
        %v3489 = vadd.f32 0.0, %v3488
        %v3490 = vpop.f32.mrf.mxu0
        %v3491 = vpop.f32.mrf.mxu0
        %v3492 = vadd.f32 0.0, %v3491
        %v3493 = vpop.f32.mrf.mxu0
        %3494 = vmatprep.mubr.bf16.mxu0 0
        %3495 = vmatmul.mubr.bf16.gmra.mxu0 %v3405
        %v3496 = vpop.f32.mrf.mxu0
        %v3497 = vadd.f32 0.0, %v3496
        %v3498 = vpop.f32.mrf.mxu0
        %v3499 = vpop.f32.mrf.mxu0
        %v3500 = vadd.f32 0.0, %v3499
        %v3501 = vpop.f32.mrf.mxu0
        %3502 = vmatprep.mubr.bf16.mxu0 0
        %3503 = vmatmul.mubr.bf16.gmra.mxu0 %v3408
        %v3504 = vpop.f32.mrf.mxu0
        %v3505 = vadd.f32 0.0, %v3504
        %v3506 = vpop.f32.mrf.mxu0
        %v3507 = vpop.f32.mrf.mxu0
        %v3508 = vadd.f32 0.0, %v3507
        %v3509 = vpop.f32.mrf.mxu0
        %3510 = vmatprep.mubr.bf16.mxu0 0
        %3511 = vmatmul.mubr.bf16.gmra.mxu0 %v3411
        %v3512 = vpop.f32.mrf.mxu0
        %v3513 = vadd.f32 0.0, %v3512
        %v3514 = vpop.f32.mrf.mxu0
        %v3515 = vpop.f32.mrf.mxu0
        %v3516 = vadd.f32 0.0, %v3515
        %v3517 = vpop.f32.mrf.mxu0
        %3518 = vmatprep.mubr.bf16.mxu0 0
        %3519 = vmatmul.mubr.bf16.gmra.mxu0 %v3414
        %v3520 = vpop.f32.mrf.mxu0
        %v3521 = vadd.f32 0.0, %v3520
        %v3522 = vpop.f32.mrf.mxu0
        %v3523 = vpop.f32.mrf.mxu0
        %v3524 = vadd.f32 0.0, %v3523
        %v3525 = vpop.f32.mrf.mxu0
        %3526 = vmatprep.mubr.bf16.mxu0 0
        %3527 = vmatmul.mubr.bf16.gmra.mxu0 %v3417
        %v3528 = vpop.f32.mrf.mxu0
        %v3529 = vadd.f32 0.0, %v3528
        %v3530 = vpop.f32.mrf.mxu0
        %v3531 = vpop.f32.mrf.mxu0
        %v3532 = vadd.f32 0.0, %v3531
        %v3533 = vpop.f32.mrf.mxu0
        %3534 = vmatprep.mubr.bf16.mxu0 0
        %3535 = vmatmul.mubr.bf16.gmra.mxu0 %v3420
        %v3536 = vpop.f32.mrf.mxu0
        %v3537 = vadd.f32 0.0, %v3536
        %v3538 = vpop.f32.mrf.mxu0
        %v3539 = vpop.f32.mrf.mxu0
        %v3540 = vadd.f32 0.0, %v3539
        %v3541 = vpop.f32.mrf.mxu0
        %3542 = vmatprep.mubr.bf16.mxu0 0
        %3543 = vmatmul.mubr.bf16.gmra.mxu0 %v3423
        %v3544 = vpop.f32.mrf.mxu0
        %v3545 = vadd.f32 0.0, %v3544
        %v3546 = vpop.f32.mrf.mxu0
        %v3547 = vpop.f32.mrf.mxu0
        %v3548 = vadd.f32 0.0, %v3547
        %v3549 = vpop.f32.mrf.mxu0
        %3550 = vmatprep.mubr.bf16.mxu0 0
        %3551 = vmatmul.mubr.bf16.gmra.mxu0 %v3426
        %v3552 = vpop.f32.mrf.mxu0
        %v3553 = vadd.f32 0.0, %v3552
        %v3554 = vpop.f32.mrf.mxu0
        %v3555 = vpop.f32.mrf.mxu0
        %v3556 = vadd.f32 0.0, %v3555
        %v3557 = vpop.f32.mrf.mxu0
        %3558 = vmatprep.mubr.bf16.mxu0 0
        %3559 = vmatmul.mubr.bf16.gmra.mxu0 %v3429
        %v3560 = vpop.f32.mrf.mxu0
        %v3561 = vadd.f32 0.0, %v3560
        %v3562 = vpop.f32.mrf.mxu0
        %v3563 = vpop.f32.mrf.mxu0
        %v3564 = vadd.f32 0.0, %v3563
        %v3565 = vpop.f32.mrf.mxu0
        %3566 = vmatprep.mubr.bf16.mxu0 0
        %3567 = vmatmul.mubr.bf16.gmra.mxu0 %v3432
        %v3568 = vpop.f32.mrf.mxu0
        %v3569 = vadd.f32 0.0, %v3568
        %v3570 = vpop.f32.mrf.mxu0
        %v3571 = vpop.f32.mrf.mxu0
        %v3572 = vadd.f32 0.0, %v3571
        %v3573 = vpop.f32.mrf.mxu0
        %3574 = vmatprep.mubr.bf16.mxu0 0
        %3575 = vmatmul.mubr.bf16.gmra.mxu0 %v3435
        %v3576 = vpop.f32.mrf.mxu0
        %v3577 = vadd.f32 0.0, %v3576
        %v3578 = vpop.f32.mrf.mxu0
        %v3579 = vpop.f32.mrf.mxu0
        %v3580 = vadd.f32 0.0, %v3579
        %v3581 = vpop.f32.mrf.mxu0
        %3582 = vmatprep.mubr.bf16.mxu0 0
        %3583 = vmatmul.mubr.bf16.gmra.mxu0 %v3438
        %v3584 = vpop.f32.mrf.mxu0
        %v3585 = vadd.f32 0.0, %v3584
        %v3586 = vpop.f32.mrf.mxu0
        %v3587 = vpop.f32.mrf.mxu0
        %v3588 = vadd.f32 0.0, %v3587
        %v3589 = vpop.f32.mrf.mxu0
        %3590 = vmatprep.mubr.bf16.mxu0 0
        %3591 = vmatmul.mubr.bf16.gmra.mxu0 %v3441
        %v3592 = vpop.f32.mrf.mxu0
        %v3593 = vadd.f32 0.0, %v3592
        %v3594 = vpop.f32.mrf.mxu0
        %v3595 = vpop.f32.mrf.mxu0
        %v3596 = vadd.f32 0.0, %v3595
        %v3597 = vpop.f32.mrf.mxu0
        %3598 = vmatprep.mubr.bf16.mxu0 0
        %3599 = vmatmul.mubr.bf16.gmra.mxu0 %v3444
        %v3600 = vpop.f32.mrf.mxu0
        %v3601 = vadd.f32 0.0, %v3600
        %v3602 = vpop.f32.mrf.mxu0
        %v3603 = vpop.f32.mrf.mxu0
        %v3604 = vadd.f32 0.0, %v3603
        %v3605 = vpop.f32.mrf.mxu0
        %3606 = vdwg.mxu0
        %v3607 = vadd.f32 %v3285, %v3481
        %v3608 = vadd.f32 %v3286, %v3484
        %v3609 = vadd.f32 %v3287, %v3489
        %v3610 = vadd.f32 %v3288, %v3492
        %v3611 = vadd.f32 %v3289, %v3497
        %v3612 = vadd.f32 %v3290, %v3500
        %v3613 = vadd.f32 %v3291, %v3505
        %v3614 = vadd.f32 %v3292, %v3508
        %v3615 = vadd.f32 %v3293, %v3513
        %v3616 = vadd.f32 %v3294, %v3516
        %v3617 = vadd.f32 %v3295, %v3521
        %v3618 = vadd.f32 %v3296, %v3524
        %v3619 = vadd.f32 %v3297, %v3529
        %v3620 = vadd.f32 %v3298, %v3532
        %v3621 = vadd.f32 %v3299, %v3537
        %v3622 = vadd.f32 %v3300, %v3540
        %v3623 = vadd.f32 %v3301, %v3545
        %v3624 = vadd.f32 %v3302, %v3548
        %v3625 = vadd.f32 %v3303, %v3553
        %v3626 = vadd.f32 %v3304, %v3556
        %v3627 = vadd.f32 %v3305, %v3561
        %v3628 = vadd.f32 %v3306, %v3564
        %v3629 = vadd.f32 %v3307, %v3569
        %v3630 = vadd.f32 %v3308, %v3572
        %v3631 = vadd.f32 %v3309, %v3577
        %v3632 = vadd.f32 %v3310, %v3580
        %v3633 = vadd.f32 %v3311, %v3585
        %v3634 = vadd.f32 %v3312, %v3588
        %v3635 = vadd.f32 %v3313, %v3593
        %v3636 = vadd.f32 %v3314, %v3596
        %v3637 = vadd.f32 %v3315, %v3601
        %v3638 = vadd.f32 %v3316, %v3604
        %v3639 = vld [vmem:[#allocation2 + $0x19] sm:$0xff]
        %v3640 = vld [vmem:[#allocation2 + $0x21] sm:$0xff]
        %v3641 = vld [vmem:[#allocation2 + $0x29] sm:$0xff]
        %v3642 = vld [vmem:[#allocation2 + $0x31] sm:$0xff]
        %v3643 = vld [vmem:[#allocation2 + $0x39] sm:$0xff]
        %v3644 = vld [vmem:[#allocation2 + $0x41] sm:$0xff]
        %v3645 = vld [vmem:[#allocation2 + $0x49] sm:$0xff]
        %v3646 = vld [vmem:[#allocation2 + $0x51] sm:$0xff]
        %v3647 = vld [vmem:[#allocation2 + $0x59] sm:$0xff]
        %v3648 = vld [vmem:[#allocation2 + $0x61] sm:$0xff]
        %v3649 = vld [vmem:[#allocation2 + $0x69] sm:$0xff]
        %v3650 = vld [vmem:[#allocation2 + $0x71] sm:$0xff]
        %v3651 = vld [vmem:[#allocation2 + $0x79] sm:$0xff]
        %v3652 = vld [vmem:[#allocation2 + $0x81] sm:$0xff]
        %v3653 = vld [vmem:[#allocation2 + $0x89] sm:$0xff]
        %v3654 = vld [vmem:[#allocation2 + $0x91] sm:$0xff]
        %v3655 = vld [vmem:[#allocation2 + $0x99] sm:$0xff]
        %v3656 = vld [vmem:[#allocation2 + $0xa1] sm:$0xff]
        %v3657 = vld [vmem:[#allocation2 + $0xa9] sm:$0xff]
        %v3658 = vld [vmem:[#allocation2 + $0xb1] sm:$0xff]
        %v3659 = vld [vmem:[#allocation2 + $0xb9] sm:$0xff]
        %v3660 = vld [vmem:[#allocation2 + $0xc1] sm:$0xff]
        %v3661 = vld [vmem:[#allocation2 + $0xc9] sm:$0xff]
        %v3662 = vld [vmem:[#allocation2 + $0xd1] sm:$0xff]
        %v3663 = vld [vmem:[#allocation2 + $0xd9] sm:$0xff]
        %v3664 = vld [vmem:[#allocation2 + $0xe1] sm:$0xff]
        %v3665 = vld [vmem:[#allocation2 + $0xe9] sm:$0xff]
        %v3666 = vld [vmem:[#allocation2 + $0xf1] sm:$0xff]
        %v3667 = vld [vmem:[#allocation2 + $0xf9] sm:$0xff]
        %v3668 = vld [vmem:[#allocation2 + $0x101] sm:$0xff]
        %v3669 = vld [vmem:[#allocation2 + $0x109] sm:$0xff]
        %v3670 = vld [vmem:[#allocation2 + $0x111] sm:$0xff]
        %v3671 = vsel %vm2609, %v3639, 0.0
        %v3672 = vsel %vm2610, %v3640, 0.0
        %v3673 = vsel %vm2611, %v3641, 0.0
        %v3674 = vsel %vm2612, %v3642, 0.0
        %v3675 = vsel %vm2613, %v3643, 0.0
        %v3676 = vsel %vm2614, %v3644, 0.0
        %v3677 = vsel %vm2615, %v3645, 0.0
        %v3678 = vsel %vm2616, %v3646, 0.0
        %v3679 = vsel %vm2617, %v3647, 0.0
        %v3680 = vsel %vm2618, %v3648, 0.0
        %v3681 = vsel %vm2619, %v3649, 0.0
        %v3682 = vsel %vm2620, %v3650, 0.0
        %v3683 = vsel %vm2621, %v3651, 0.0
        %v3684 = vsel %vm2622, %v3652, 0.0
        %v3685 = vsel %vm2623, %v3653, 0.0
        %v3686 = vsel %vm2624, %v3654, 0.0
        %v3687 = vsel %vm2625, %v3655, 0.0
        %v3688 = vsel %vm2626, %v3656, 0.0
        %v3689 = vsel %vm2627, %v3657, 0.0
        %v3690 = vsel %vm2628, %v3658, 0.0
        %v3691 = vsel %vm2629, %v3659, 0.0
        %v3692 = vsel %vm2630, %v3660, 0.0
        %v3693 = vsel %vm2631, %v3661, 0.0
        %v3694 = vsel %vm2632, %v3662, 0.0
        %v3695 = vsel %vm2633, %v3663, 0.0
        %v3696 = vsel %vm2634, %v3664, 0.0
        %v3697 = vsel %vm2635, %v3665, 0.0
        %v3698 = vsel %vm2636, %v3666, 0.0
        %v3699 = vsel %vm2637, %v3667, 0.0
        %v3700 = vsel %vm2638, %v3668, 0.0
        %v3701 = vsel %vm2639, %v3669, 0.0
        %v3702 = vsel %vm2640, %v3670, 0.0
        %v3703 = vpack.c.bf16 %v3672, %v3671
        %v3704 = vpack.c.bf16 %v3674, %v3673
        %v3705 = vpack.c.bf16 %v3676, %v3675
        %v3706 = vpack.c.bf16 %v3678, %v3677
        %v3707 = vpack.c.bf16 %v3680, %v3679
        %v3708 = vpack.c.bf16 %v3682, %v3681
        %v3709 = vpack.c.bf16 %v3684, %v3683
        %v3710 = vpack.c.bf16 %v3686, %v3685
        %v3711 = vpack.c.bf16 %v3688, %v3687
        %v3712 = vpack.c.bf16 %v3690, %v3689
        %v3713 = vpack.c.bf16 %v3692, %v3691
        %v3714 = vpack.c.bf16 %v3694, %v3693
        %v3715 = vpack.c.bf16 %v3696, %v3695
        %v3716 = vpack.c.bf16 %v3698, %v3697
        %v3717 = vpack.c.bf16 %v3700, %v3699
        %v3718 = vpack.c.bf16 %v3702, %v3701
        %s3719 = scalar_lea.vmem %s3, 160
        %v3720 = vld [vmem:[%s3719] sm:$0xf]
        %v3721 = vld [vmem:[%s3719 + $0x4] sm:$0xf]
        %v3722 = vld [vmem:[%s3719 + $0x8] sm:$0xf]
        %v3723 = vld [vmem:[%s3719 + $0xc] sm:$0xf]
        %v3724 = vld [vmem:[%s3719 + $0x10] sm:$0xf]
        %v3725 = vld [vmem:[%s3719 + $0x14] sm:$0xf]
        %v3726 = vld [vmem:[%s3719 + $0x18] sm:$0xf]
        %v3727 = vld [vmem:[%s3719 + $0x1c] sm:$0xf]
        %v3736 = vunpack.c.l.b16 %v3720
        %v3737 = vunpack.c.l.b16 %v3721
        %v3738 = vunpack.c.l.b16 %v3722
        %v3739 = vunpack.c.l.b16 %v3723
        %v3740 = vunpack.c.l.b16 %v3724
        %v3741 = vunpack.c.l.b16 %v3725
        %v3742 = vunpack.c.l.b16 %v3726
        %v3743 = vunpack.c.l.b16 %v3727
        %v3744 = vpack.c.b16 %v3737, %v3736
        %v3745 = vpack.c.b16 %v3739, %v3738
        %v3746 = vpack.c.b16 %v3741, %v3740
        %v3747 = vpack.c.b16 %v3743, %v3742
        %v3753 = vsel %vm963, %v3703, 0
        %v3756 = vsel %vm963, %v3704, 0
        %v3759 = vsel %vm963, %v3705, 0
        %v3762 = vsel %vm963, %v3706, 0
        %v3765 = vsel %vm963, %v3707, 0
        %v3768 = vsel %vm963, %v3708, 0
        %v3771 = vsel %vm963, %v3709, 0
        %v3774 = vsel %vm963, %v3710, 0
        %v3777 = vsel %vm963, %v3711, 0
        %v3780 = vsel %vm963, %v3712, 0
        %v3783 = vsel %vm963, %v3713, 0
        %v3786 = vsel %vm963, %v3714, 0
        %v3789 = vsel %vm963, %v3715, 0
        %v3792 = vsel %vm963, %v3716, 0
        %v3795 = vsel %vm963, %v3717, 0
        %v3798 = vsel %vm963, %v3718, 0
        %3800 = vmatprep.subr.bf16.mxu0 0
        %3801 = vmatpush1.bf16.msra.mxu0 0
        %3802 = vmatprep.subr.bf16.mxu0 0
        %3803 = vmatpush1.bf16.msra.mxu0 0
        %3804 = vmatprep.subr.bf16.mxu0 0
        %3805 = vmatpush1.bf16.msra.mxu0 0
        %3806 = vmatprep.subr.bf16.mxu0 0
        %3807 = vmatpush1.bf16.msra.mxu0 0
        %3808 = vmatprep.subr.bf16.mxu0 0
        %3809 = vmatpush1.bf16.msra.mxu0 %v3747
        %3810 = vmatprep.subr.bf16.mxu0 0
        %3811 = vmatpush1.bf16.msra.mxu0 %v3746
        %3812 = vmatprep.subr.bf16.mxu0 0
        %3813 = vmatpush1.bf16.msra.mxu0 %v3745
        %3814 = vmatprep.subr.bf16.mxu0 0
        %3815 = vmatpush1.bf16.msra.mxu0 %v3744
        %3816 = vmatprep.subr.bf16.mxu0 0
        %3817 = vmatpush2.bf16.msra.mxu0 0
        %3818 = vmatprep.subr.bf16.mxu0 0
        %3819 = vmatpush2.bf16.msra.mxu0 0
        %3820 = vmatprep.subr.bf16.mxu0 0
        %3821 = vmatpush2.bf16.msra.mxu0 0
        %3822 = vmatprep.subr.bf16.mxu0 0
        %3823 = vmatpush2.bf16.msra.mxu0 0
        %3824 = vmatprep.subr.bf16.mxu0 0
        %3825 = vmatpush2.bf16.msra.mxu0 0
        %3826 = vmatprep.subr.bf16.mxu0 0
        %3827 = vmatpush2.bf16.msra.mxu0 0
        %3828 = vmatprep.subr.bf16.mxu0 0
        %3829 = vmatpush2.bf16.msra.mxu0 0
        %3830 = vmatprep.subr.bf16.mxu0 0
        %3831 = vmatpush2.bf16.msra.mxu0 0
        %3832 = vmatprep.mubr.bf16.mxu0 0
        %3833 = vmatmul.mubr.bf16.gmra.mxu0 %v3753
        %v3834 = vpop.f32.mrf.mxu0
        %v3835 = vadd.f32 0.0, %v3834
        %v3836 = vpop.f32.mrf.mxu0
        %v3837 = vpop.f32.mrf.mxu0
        %v3838 = vadd.f32 0.0, %v3837
        %v3839 = vpop.f32.mrf.mxu0
        %3840 = vmatprep.mubr.bf16.mxu0 0
        %3841 = vmatmul.mubr.bf16.gmra.mxu0 %v3756
        %v3842 = vpop.f32.mrf.mxu0
        %v3843 = vadd.f32 0.0, %v3842
        %v3844 = vpop.f32.mrf.mxu0
        %v3845 = vpop.f32.mrf.mxu0
        %v3846 = vadd.f32 0.0, %v3845
        %v3847 = vpop.f32.mrf.mxu0
        %3848 = vmatprep.mubr.bf16.mxu0 0
        %3849 = vmatmul.mubr.bf16.gmra.mxu0 %v3759
        %v3850 = vpop.f32.mrf.mxu0
        %v3851 = vadd.f32 0.0, %v3850
        %v3852 = vpop.f32.mrf.mxu0
        %v3853 = vpop.f32.mrf.mxu0
        %v3854 = vadd.f32 0.0, %v3853
        %v3855 = vpop.f32.mrf.mxu0
        %3856 = vmatprep.mubr.bf16.mxu0 0
        %3857 = vmatmul.mubr.bf16.gmra.mxu0 %v3762
        %v3858 = vpop.f32.mrf.mxu0
        %v3859 = vadd.f32 0.0, %v3858
        %v3860 = vpop.f32.mrf.mxu0
        %v3861 = vpop.f32.mrf.mxu0
        %v3862 = vadd.f32 0.0, %v3861
        %v3863 = vpop.f32.mrf.mxu0
        %3864 = vmatprep.mubr.bf16.mxu0 0
        %3865 = vmatmul.mubr.bf16.gmra.mxu0 %v3765
        %v3866 = vpop.f32.mrf.mxu0
        %v3867 = vadd.f32 0.0, %v3866
        %v3868 = vpop.f32.mrf.mxu0
        %v3869 = vpop.f32.mrf.mxu0
        %v3870 = vadd.f32 0.0, %v3869
        %v3871 = vpop.f32.mrf.mxu0
        %3872 = vmatprep.mubr.bf16.mxu0 0
        %3873 = vmatmul.mubr.bf16.gmra.mxu0 %v3768
        %v3874 = vpop.f32.mrf.mxu0
        %v3875 = vadd.f32 0.0, %v3874
        %v3876 = vpop.f32.mrf.mxu0
        %v3877 = vpop.f32.mrf.mxu0
        %v3878 = vadd.f32 0.0, %v3877
        %v3879 = vpop.f32.mrf.mxu0
        %3880 = vmatprep.mubr.bf16.mxu0 0
        %3881 = vmatmul.mubr.bf16.gmra.mxu0 %v3771
        %v3882 = vpop.f32.mrf.mxu0
        %v3883 = vadd.f32 0.0, %v3882
        %v3884 = vpop.f32.mrf.mxu0
        %v3885 = vpop.f32.mrf.mxu0
        %v3886 = vadd.f32 0.0, %v3885
        %v3887 = vpop.f32.mrf.mxu0
        %3888 = vmatprep.mubr.bf16.mxu0 0
        %3889 = vmatmul.mubr.bf16.gmra.mxu0 %v3774
        %v3890 = vpop.f32.mrf.mxu0
        %v3891 = vadd.f32 0.0, %v3890
        %v3892 = vpop.f32.mrf.mxu0
        %v3893 = vpop.f32.mrf.mxu0
        %v3894 = vadd.f32 0.0, %v3893
        %v3895 = vpop.f32.mrf.mxu0
        %3896 = vmatprep.mubr.bf16.mxu0 0
        %3897 = vmatmul.mubr.bf16.gmra.mxu0 %v3777
        %v3898 = vpop.f32.mrf.mxu0
        %v3899 = vadd.f32 0.0, %v3898
        %v3900 = vpop.f32.mrf.mxu0
        %v3901 = vpop.f32.mrf.mxu0
        %v3902 = vadd.f32 0.0, %v3901
        %v3903 = vpop.f32.mrf.mxu0
        %3904 = vmatprep.mubr.bf16.mxu0 0
        %3905 = vmatmul.mubr.bf16.gmra.mxu0 %v3780
        %v3906 = vpop.f32.mrf.mxu0
        %v3907 = vadd.f32 0.0, %v3906
        %v3908 = vpop.f32.mrf.mxu0
        %v3909 = vpop.f32.mrf.mxu0
        %v3910 = vadd.f32 0.0, %v3909
        %v3911 = vpop.f32.mrf.mxu0
        %3912 = vmatprep.mubr.bf16.mxu0 0
        %3913 = vmatmul.mubr.bf16.gmra.mxu0 %v3783
        %v3914 = vpop.f32.mrf.mxu0
        %v3915 = vadd.f32 0.0, %v3914
        %v3916 = vpop.f32.mrf.mxu0
        %v3917 = vpop.f32.mrf.mxu0
        %v3918 = vadd.f32 0.0, %v3917
        %v3919 = vpop.f32.mrf.mxu0
        %3920 = vmatprep.mubr.bf16.mxu0 0
        %3921 = vmatmul.mubr.bf16.gmra.mxu0 %v3786
        %v3922 = vpop.f32.mrf.mxu0
        %v3923 = vadd.f32 0.0, %v3922
        %v3924 = vpop.f32.mrf.mxu0
        %v3925 = vpop.f32.mrf.mxu0
        %v3926 = vadd.f32 0.0, %v3925
        %v3927 = vpop.f32.mrf.mxu0
        %3928 = vmatprep.mubr.bf16.mxu0 0
        %3929 = vmatmul.mubr.bf16.gmra.mxu0 %v3789
        %v3930 = vpop.f32.mrf.mxu0
        %v3931 = vadd.f32 0.0, %v3930
        %v3932 = vpop.f32.mrf.mxu0
        %v3933 = vpop.f32.mrf.mxu0
        %v3934 = vadd.f32 0.0, %v3933
        %v3935 = vpop.f32.mrf.mxu0
        %3936 = vmatprep.mubr.bf16.mxu0 0
        %3937 = vmatmul.mubr.bf16.gmra.mxu0 %v3792
        %v3938 = vpop.f32.mrf.mxu0
        %v3939 = vadd.f32 0.0, %v3938
        %v3940 = vpop.f32.mrf.mxu0
        %v3941 = vpop.f32.mrf.mxu0
        %v3942 = vadd.f32 0.0, %v3941
        %v3943 = vpop.f32.mrf.mxu0
        %3944 = vmatprep.mubr.bf16.mxu0 0
        %3945 = vmatmul.mubr.bf16.gmra.mxu0 %v3795
        %v3946 = vpop.f32.mrf.mxu0
        %v3947 = vadd.f32 0.0, %v3946
        %v3948 = vpop.f32.mrf.mxu0
        %v3949 = vpop.f32.mrf.mxu0
        %v3950 = vadd.f32 0.0, %v3949
        %v3951 = vpop.f32.mrf.mxu0
        %3952 = vmatprep.mubr.bf16.mxu0 0
        %3953 = vmatmul.mubr.bf16.gmra.mxu0 %v3798
        %v3954 = vpop.f32.mrf.mxu0
        %v3955 = vadd.f32 0.0, %v3954
        %v3956 = vpop.f32.mrf.mxu0
        %v3957 = vpop.f32.mrf.mxu0
        %v3958 = vadd.f32 0.0, %v3957
        %v3959 = vpop.f32.mrf.mxu0
        %3960 = vdwg.mxu0
        %v3961 = vadd.f32 %v3607, %v3835
        %v3962 = vadd.f32 %v3608, %v3838
        %v3963 = vadd.f32 %v3609, %v3843
        %v3964 = vadd.f32 %v3610, %v3846
        %v3965 = vadd.f32 %v3611, %v3851
        %v3966 = vadd.f32 %v3612, %v3854
        %v3967 = vadd.f32 %v3613, %v3859
        %v3968 = vadd.f32 %v3614, %v3862
        %v3969 = vadd.f32 %v3615, %v3867
        %v3970 = vadd.f32 %v3616, %v3870
        %v3971 = vadd.f32 %v3617, %v3875
        %v3972 = vadd.f32 %v3618, %v3878
        %v3973 = vadd.f32 %v3619, %v3883
        %v3974 = vadd.f32 %v3620, %v3886
        %v3975 = vadd.f32 %v3621, %v3891
        %v3976 = vadd.f32 %v3622, %v3894
        %v3977 = vadd.f32 %v3623, %v3899
        %v3978 = vadd.f32 %v3624, %v3902
        %v3979 = vadd.f32 %v3625, %v3907
        %v3980 = vadd.f32 %v3626, %v3910
        %v3981 = vadd.f32 %v3627, %v3915
        %v3982 = vadd.f32 %v3628, %v3918
        %v3983 = vadd.f32 %v3629, %v3923
        %v3984 = vadd.f32 %v3630, %v3926
        %v3985 = vadd.f32 %v3631, %v3931
        %v3986 = vadd.f32 %v3632, %v3934
        %v3987 = vadd.f32 %v3633, %v3939
        %v3988 = vadd.f32 %v3634, %v3942
        %v3989 = vadd.f32 %v3635, %v3947
        %v3990 = vadd.f32 %v3636, %v3950
        %v3991 = vadd.f32 %v3637, %v3955
        %v3992 = vadd.f32 %v3638, %v3958
        %v3993 = vld [vmem:[#allocation2 + $0x27] sm:$0xff]
        %v3994 = vld [vmem:[#allocation2 + $0x2f] sm:$0xff]
        %v3995 = vld [vmem:[#allocation2 + $0x37] sm:$0xff]
        %v3996 = vld [vmem:[#allocation2 + $0x3f] sm:$0xff]
        %v3997 = vld [vmem:[#allocation2 + $0x47] sm:$0xff]
        %v3998 = vld [vmem:[#allocation2 + $0x4f] sm:$0xff]
        %v3999 = vld [vmem:[#allocation2 + $0x57] sm:$0xff]
        %v4000 = vld [vmem:[#allocation2 + $0x5f] sm:$0xff]
        %v4001 = vld [vmem:[#allocation2 + $0x67] sm:$0xff]
        %v4002 = vld [vmem:[#allocation2 + $0x6f] sm:$0xff]
        %v4003 = vld [vmem:[#allocation2 + $0x77] sm:$0xff]
        %v4004 = vld [vmem:[#allocation2 + $0x7f] sm:$0xff]
        %v4005 = vld [vmem:[#allocation2 + $0x87] sm:$0xff]
        %v4006 = vld [vmem:[#allocation2 + $0x8f] sm:$0xff]
        %v4007 = vld [vmem:[#allocation2 + $0x97] sm:$0xff]
        %v4008 = vld [vmem:[#allocation2 + $0x9f] sm:$0xff]
        %v4009 = vld [vmem:[#allocation2 + $0xa7] sm:$0xff]
        %v4010 = vld [vmem:[#allocation2 + $0xaf] sm:$0xff]
        %v4011 = vld [vmem:[#allocation2 + $0xb7] sm:$0xff]
        %v4012 = vld [vmem:[#allocation2 + $0xbf] sm:$0xff]
        %v4013 = vld [vmem:[#allocation2 + $0xc7] sm:$0xff]
        %v4014 = vld [vmem:[#allocation2 + $0xcf] sm:$0xff]
        %v4015 = vld [vmem:[#allocation2 + $0xd7] sm:$0xff]
        %v4016 = vld [vmem:[#allocation2 + $0xdf] sm:$0xff]
        %v4017 = vld [vmem:[#allocation2 + $0xe7] sm:$0xff]
        %v4018 = vld [vmem:[#allocation2 + $0xef] sm:$0xff]
        %v4019 = vld [vmem:[#allocation2 + $0xf7] sm:$0xff]
        %v4020 = vld [vmem:[#allocation2 + $0xff] sm:$0xff]
        %v4021 = vld [vmem:[#allocation2 + $0x107] sm:$0xff]
        %v4022 = vld [vmem:[#allocation2 + $0x10f] sm:$0xff]
        %v4023 = vld [vmem:[#allocation2 + $0x117] sm:$0xff]
        %v4024 = vld [vmem:[#allocation2 + $0x11f] sm:$0xff]
        %v4025 = vsel %vm1934, %v3993, 0.0
        %v4026 = vsel %vm1935, %v3994, 0.0
        %v4027 = vsel %vm1936, %v3995, 0.0
        %v4028 = vsel %vm1937, %v3996, 0.0
        %v4029 = vsel %vm1938, %v3997, 0.0
        %v4030 = vsel %vm1939, %v3998, 0.0
        %v4031 = vsel %vm1940, %v3999, 0.0
        %v4032 = vsel %vm1941, %v4000, 0.0
        %v4033 = vsel %vm1942, %v4001, 0.0
        %v4034 = vsel %vm1943, %v4002, 0.0
        %v4035 = vsel %vm1944, %v4003, 0.0
        %v4036 = vsel %vm1945, %v4004, 0.0
        %v4037 = vsel %vm1946, %v4005, 0.0
        %v4038 = vsel %vm1947, %v4006, 0.0
        %v4039 = vsel %vm1948, %v4007, 0.0
        %v4040 = vsel %vm1949, %v4008, 0.0
        %v4041 = vsel %vm1950, %v4009, 0.0
        %v4042 = vsel %vm1951, %v4010, 0.0
        %v4043 = vsel %vm1952, %v4011, 0.0
        %v4044 = vsel %vm1953, %v4012, 0.0
        %v4045 = vsel %vm1954, %v4013, 0.0
        %v4046 = vsel %vm1955, %v4014, 0.0
        %v4047 = vsel %vm1956, %v4015, 0.0
        %v4048 = vsel %vm1957, %v4016, 0.0
        %v4049 = vsel %vm1958, %v4017, 0.0
        %v4050 = vsel %vm1959, %v4018, 0.0
        %v4051 = vsel %vm1960, %v4019, 0.0
        %v4052 = vsel %vm1961, %v4020, 0.0
        %v4053 = vsel %vm1962, %v4021, 0.0
        %v4054 = vsel %vm1963, %v4022, 0.0
        %v4055 = vsel %vm1964, %v4023, 0.0
        %v4056 = vsel %vm1965, %v4024, 0.0
        %v4057 = vpack.c.bf16 %v4026, %v4025
        %v4058 = vpack.c.bf16 %v4028, %v4027
        %v4059 = vpack.c.bf16 %v4030, %v4029
        %v4060 = vpack.c.bf16 %v4032, %v4031
        %v4061 = vpack.c.bf16 %v4034, %v4033
        %v4062 = vpack.c.bf16 %v4036, %v4035
        %v4063 = vpack.c.bf16 %v4038, %v4037
        %v4064 = vpack.c.bf16 %v4040, %v4039
        %v4065 = vpack.c.bf16 %v4042, %v4041
        %v4066 = vpack.c.bf16 %v4044, %v4043
        %v4067 = vpack.c.bf16 %v4046, %v4045
        %v4068 = vpack.c.bf16 %v4048, %v4047
        %v4069 = vpack.c.bf16 %v4050, %v4049
        %v4070 = vpack.c.bf16 %v4052, %v4051
        %v4071 = vpack.c.bf16 %v4054, %v4053
        %v4072 = vpack.c.bf16 %v4056, %v4055
        %s4073 = scalar_lea.vmem %s3, 192
        %v4074 = vld [vmem:[%s4073] sm:$0xf]
        %v4075 = vld [vmem:[%s4073 + $0x4] sm:$0xf]
        %v4076 = vld [vmem:[%s4073 + $0x8] sm:$0xf]
        %v4077 = vld [vmem:[%s4073 + $0xc] sm:$0xf]
        %v4078 = vld [vmem:[%s4073 + $0x10] sm:$0xf]
        %v4079 = vld [vmem:[%s4073 + $0x14] sm:$0xf]
        %v4080 = vld [vmem:[%s4073 + $0x18] sm:$0xf]
        %v4081 = vld [vmem:[%s4073 + $0x1c] sm:$0xf]
        %v4090 = vunpack.c.l.b16 %v4074
        %v4091 = vunpack.c.l.b16 %v4075
        %v4092 = vunpack.c.l.b16 %v4076
        %v4093 = vunpack.c.l.b16 %v4077
        %v4094 = vunpack.c.l.b16 %v4078
        %v4095 = vunpack.c.l.b16 %v4079
        %v4096 = vunpack.c.l.b16 %v4080
        %v4097 = vunpack.c.l.b16 %v4081
        %v4098 = vpack.c.b16 %v4091, %v4090
        %v4099 = vpack.c.b16 %v4093, %v4092
        %v4100 = vpack.c.b16 %v4095, %v4094
        %v4101 = vpack.c.b16 %v4097, %v4096
        %v4107 = vsel %vm963, %v4057, 0
        %v4110 = vsel %vm963, %v4058, 0
        %v4113 = vsel %vm963, %v4059, 0
        %v4116 = vsel %vm963, %v4060, 0
        %v4119 = vsel %vm963, %v4061, 0
        %v4122 = vsel %vm963, %v4062, 0
        %v4125 = vsel %vm963, %v4063, 0
        %v4128 = vsel %vm963, %v4064, 0
        %v4131 = vsel %vm963, %v4065, 0
        %v4134 = vsel %vm963, %v4066, 0
        %v4137 = vsel %vm963, %v4067, 0
        %v4140 = vsel %vm963, %v4068, 0
        %v4143 = vsel %vm963, %v4069, 0
        %v4146 = vsel %vm963, %v4070, 0
        %v4149 = vsel %vm963, %v4071, 0
        %v4152 = vsel %vm963, %v4072, 0
        %4154 = vmatprep.subr.bf16.mxu0 0
        %4155 = vmatpush1.bf16.msra.mxu0 0
        %4156 = vmatprep.subr.bf16.mxu0 0
        %4157 = vmatpush1.bf16.msra.mxu0 0
        %4158 = vmatprep.subr.bf16.mxu0 0
        %4159 = vmatpush1.bf16.msra.mxu0 0
        %4160 = vmatprep.subr.bf16.mxu0 0
        %4161 = vmatpush1.bf16.msra.mxu0 0
        %4162 = vmatprep.subr.bf16.mxu0 0
        %4163 = vmatpush1.bf16.msra.mxu0 %v4101
        %4164 = vmatprep.subr.bf16.mxu0 0
        %4165 = vmatpush1.bf16.msra.mxu0 %v4100
        %4166 = vmatprep.subr.bf16.mxu0 0
        %4167 = vmatpush1.bf16.msra.mxu0 %v4099
        %4168 = vmatprep.subr.bf16.mxu0 0
        %4169 = vmatpush1.bf16.msra.mxu0 %v4098
        %4170 = vmatprep.subr.bf16.mxu0 0
        %4171 = vmatpush2.bf16.msra.mxu0 0
        %4172 = vmatprep.subr.bf16.mxu0 0
        %4173 = vmatpush2.bf16.msra.mxu0 0
        %4174 = vmatprep.subr.bf16.mxu0 0
        %4175 = vmatpush2.bf16.msra.mxu0 0
        %4176 = vmatprep.subr.bf16.mxu0 0
        %4177 = vmatpush2.bf16.msra.mxu0 0
        %4178 = vmatprep.subr.bf16.mxu0 0
        %4179 = vmatpush2.bf16.msra.mxu0 0
        %4180 = vmatprep.subr.bf16.mxu0 0
        %4181 = vmatpush2.bf16.msra.mxu0 0
        %4182 = vmatprep.subr.bf16.mxu0 0
        %4183 = vmatpush2.bf16.msra.mxu0 0
        %4184 = vmatprep.subr.bf16.mxu0 0
        %4185 = vmatpush2.bf16.msra.mxu0 0
        %4186 = vmatprep.mubr.bf16.mxu0 0
        %4187 = vmatmul.mubr.bf16.gmra.mxu0 %v4107
        %v4188 = vpop.f32.mrf.mxu0
        %v4189 = vadd.f32 0.0, %v4188
        %v4190 = vpop.f32.mrf.mxu0
        %v4191 = vpop.f32.mrf.mxu0
        %v4192 = vadd.f32 0.0, %v4191
        %v4193 = vpop.f32.mrf.mxu0
        %4194 = vmatprep.mubr.bf16.mxu0 0
        %4195 = vmatmul.mubr.bf16.gmra.mxu0 %v4110
        %v4196 = vpop.f32.mrf.mxu0
        %v4197 = vadd.f32 0.0, %v4196
        %v4198 = vpop.f32.mrf.mxu0
        %v4199 = vpop.f32.mrf.mxu0
        %v4200 = vadd.f32 0.0, %v4199
        %v4201 = vpop.f32.mrf.mxu0
        %4202 = vmatprep.mubr.bf16.mxu0 0
        %4203 = vmatmul.mubr.bf16.gmra.mxu0 %v4113
        %v4204 = vpop.f32.mrf.mxu0
        %v4205 = vadd.f32 0.0, %v4204
        %v4206 = vpop.f32.mrf.mxu0
        %v4207 = vpop.f32.mrf.mxu0
        %v4208 = vadd.f32 0.0, %v4207
        %v4209 = vpop.f32.mrf.mxu0
        %4210 = vmatprep.mubr.bf16.mxu0 0
        %4211 = vmatmul.mubr.bf16.gmra.mxu0 %v4116
        %v4212 = vpop.f32.mrf.mxu0
        %v4213 = vadd.f32 0.0, %v4212
        %v4214 = vpop.f32.mrf.mxu0
        %v4215 = vpop.f32.mrf.mxu0
        %v4216 = vadd.f32 0.0, %v4215
        %v4217 = vpop.f32.mrf.mxu0
        %4218 = vmatprep.mubr.bf16.mxu0 0
        %4219 = vmatmul.mubr.bf16.gmra.mxu0 %v4119
        %v4220 = vpop.f32.mrf.mxu0
        %v4221 = vadd.f32 0.0, %v4220
        %v4222 = vpop.f32.mrf.mxu0
        %v4223 = vpop.f32.mrf.mxu0
        %v4224 = vadd.f32 0.0, %v4223
        %v4225 = vpop.f32.mrf.mxu0
        %4226 = vmatprep.mubr.bf16.mxu0 0
        %4227 = vmatmul.mubr.bf16.gmra.mxu0 %v4122
        %v4228 = vpop.f32.mrf.mxu0
        %v4229 = vadd.f32 0.0, %v4228
        %v4230 = vpop.f32.mrf.mxu0
        %v4231 = vpop.f32.mrf.mxu0
        %v4232 = vadd.f32 0.0, %v4231
        %v4233 = vpop.f32.mrf.mxu0
        %4234 = vmatprep.mubr.bf16.mxu0 0
        %4235 = vmatmul.mubr.bf16.gmra.mxu0 %v4125
        %v4236 = vpop.f32.mrf.mxu0
        %v4237 = vadd.f32 0.0, %v4236
        %v4238 = vpop.f32.mrf.mxu0
        %v4239 = vpop.f32.mrf.mxu0
        %v4240 = vadd.f32 0.0, %v4239
        %v4241 = vpop.f32.mrf.mxu0
        %4242 = vmatprep.mubr.bf16.mxu0 0
        %4243 = vmatmul.mubr.bf16.gmra.mxu0 %v4128
        %v4244 = vpop.f32.mrf.mxu0
        %v4245 = vadd.f32 0.0, %v4244
        %v4246 = vpop.f32.mrf.mxu0
        %v4247 = vpop.f32.mrf.mxu0
        %v4248 = vadd.f32 0.0, %v4247
        %v4249 = vpop.f32.mrf.mxu0
        %4250 = vmatprep.mubr.bf16.mxu0 0
        %4251 = vmatmul.mubr.bf16.gmra.mxu0 %v4131
        %v4252 = vpop.f32.mrf.mxu0
        %v4253 = vadd.f32 0.0, %v4252
        %v4254 = vpop.f32.mrf.mxu0
        %v4255 = vpop.f32.mrf.mxu0
        %v4256 = vadd.f32 0.0, %v4255
        %v4257 = vpop.f32.mrf.mxu0
        %4258 = vmatprep.mubr.bf16.mxu0 0
        %4259 = vmatmul.mubr.bf16.gmra.mxu0 %v4134
        %v4260 = vpop.f32.mrf.mxu0
        %v4261 = vadd.f32 0.0, %v4260
        %v4262 = vpop.f32.mrf.mxu0
        %v4263 = vpop.f32.mrf.mxu0
        %v4264 = vadd.f32 0.0, %v4263
        %v4265 = vpop.f32.mrf.mxu0
        %4266 = vmatprep.mubr.bf16.mxu0 0
        %4267 = vmatmul.mubr.bf16.gmra.mxu0 %v4137
        %v4268 = vpop.f32.mrf.mxu0
        %v4269 = vadd.f32 0.0, %v4268
        %v4270 = vpop.f32.mrf.mxu0
        %v4271 = vpop.f32.mrf.mxu0
        %v4272 = vadd.f32 0.0, %v4271
        %v4273 = vpop.f32.mrf.mxu0
        %4274 = vmatprep.mubr.bf16.mxu0 0
        %4275 = vmatmul.mubr.bf16.gmra.mxu0 %v4140
        %v4276 = vpop.f32.mrf.mxu0
        %v4277 = vadd.f32 0.0, %v4276
        %v4278 = vpop.f32.mrf.mxu0
        %v4279 = vpop.f32.mrf.mxu0
        %v4280 = vadd.f32 0.0, %v4279
        %v4281 = vpop.f32.mrf.mxu0
        %4282 = vmatprep.mubr.bf16.mxu0 0
        %4283 = vmatmul.mubr.bf16.gmra.mxu0 %v4143
        %v4284 = vpop.f32.mrf.mxu0
        %v4285 = vadd.f32 0.0, %v4284
        %v4286 = vpop.f32.mrf.mxu0
        %v4287 = vpop.f32.mrf.mxu0
        %v4288 = vadd.f32 0.0, %v4287
        %v4289 = vpop.f32.mrf.mxu0
        %4290 = vmatprep.mubr.bf16.mxu0 0
        %4291 = vmatmul.mubr.bf16.gmra.mxu0 %v4146
        %v4292 = vpop.f32.mrf.mxu0
        %v4293 = vadd.f32 0.0, %v4292
        %v4294 = vpop.f32.mrf.mxu0
        %v4295 = vpop.f32.mrf.mxu0
        %v4296 = vadd.f32 0.0, %v4295
        %v4297 = vpop.f32.mrf.mxu0
        %4298 = vmatprep.mubr.bf16.mxu0 0
        %4299 = vmatmul.mubr.bf16.gmra.mxu0 %v4149
        %v4300 = vpop.f32.mrf.mxu0
        %v4301 = vadd.f32 0.0, %v4300
        %v4302 = vpop.f32.mrf.mxu0
        %v4303 = vpop.f32.mrf.mxu0
        %v4304 = vadd.f32 0.0, %v4303
        %v4305 = vpop.f32.mrf.mxu0
        %4306 = vmatprep.mubr.bf16.mxu0 0
        %4307 = vmatmul.mubr.bf16.gmra.mxu0 %v4152
        %v4308 = vpop.f32.mrf.mxu0
        %v4309 = vadd.f32 0.0, %v4308
        %v4310 = vpop.f32.mrf.mxu0
        %v4311 = vpop.f32.mrf.mxu0
        %v4312 = vadd.f32 0.0, %v4311
        %v4313 = vpop.f32.mrf.mxu0
        %4314 = vdwg.mxu0
        %v4315 = vadd.f32 %v3961, %v4189
        %v4316 = vadd.f32 %v3962, %v4192
        %v4317 = vadd.f32 %v3963, %v4197
        %v4318 = vadd.f32 %v3964, %v4200
        %v4319 = vadd.f32 %v3965, %v4205
        %v4320 = vadd.f32 %v3966, %v4208
        %v4321 = vadd.f32 %v3967, %v4213
        %v4322 = vadd.f32 %v3968, %v4216
        %v4323 = vadd.f32 %v3969, %v4221
        %v4324 = vadd.f32 %v3970, %v4224
        %v4325 = vadd.f32 %v3971, %v4229
        %v4326 = vadd.f32 %v3972, %v4232
        %v4327 = vadd.f32 %v3973, %v4237
        %v4328 = vadd.f32 %v3974, %v4240
        %v4329 = vadd.f32 %v3975, %v4245
        %v4330 = vadd.f32 %v3976, %v4248
        %v4331 = vadd.f32 %v3977, %v4253
        %v4332 = vadd.f32 %v3978, %v4256
        %v4333 = vadd.f32 %v3979, %v4261
        %v4334 = vadd.f32 %v3980, %v4264
        %v4335 = vadd.f32 %v3981, %v4269
        %v4336 = vadd.f32 %v3982, %v4272
        %v4337 = vadd.f32 %v3983, %v4277
        %v4338 = vadd.f32 %v3984, %v4280
        %v4339 = vadd.f32 %v3985, %v4285
        %v4340 = vadd.f32 %v3986, %v4288
        %v4341 = vadd.f32 %v3987, %v4293
        %v4342 = vadd.f32 %v3988, %v4296
        %v4343 = vadd.f32 %v3989, %v4301
        %v4344 = vadd.f32 %v3990, %v4304
        %v4345 = vadd.f32 %v3991, %v4309
        %v4346 = vadd.f32 %v3992, %v4312
        %v4347 = vld [vmem:[#allocation2 + $0x28] sm:$0xff]
        %v4348 = vld [vmem:[#allocation2 + $0x30] sm:$0xff]
        %v4349 = vld [vmem:[#allocation2 + $0x38] sm:$0xff]
        %v4350 = vld [vmem:[#allocation2 + $0x40] sm:$0xff]
        %v4351 = vld [vmem:[#allocation2 + $0x48] sm:$0xff]
        %v4352 = vld [vmem:[#allocation2 + $0x50] sm:$0xff]
        %v4353 = vld [vmem:[#allocation2 + $0x58] sm:$0xff]
        %v4354 = vld [vmem:[#allocation2 + $0x60] sm:$0xff]
        %v4355 = vld [vmem:[#allocation2 + $0x68] sm:$0xff]
        %v4356 = vld [vmem:[#allocation2 + $0x70] sm:$0xff]
        %v4357 = vld [vmem:[#allocation2 + $0x78] sm:$0xff]
        %v4358 = vld [vmem:[#allocation2 + $0x80] sm:$0xff]
        %v4359 = vld [vmem:[#allocation2 + $0x88] sm:$0xff]
        %v4360 = vld [vmem:[#allocation2 + $0x90] sm:$0xff]
        %v4361 = vld [vmem:[#allocation2 + $0x98] sm:$0xff]
        %v4362 = vld [vmem:[#allocation2 + $0xa0] sm:$0xff]
        %v4363 = vld [vmem:[#allocation2 + $0xa8] sm:$0xff]
        %v4364 = vld [vmem:[#allocation2 + $0xb0] sm:$0xff]
        %v4365 = vld [vmem:[#allocation2 + $0xb8] sm:$0xff]
        %v4366 = vld [vmem:[#allocation2 + $0xc0] sm:$0xff]
        %v4367 = vld [vmem:[#allocation2 + $0xc8] sm:$0xff]
        %v4368 = vld [vmem:[#allocation2 + $0xd0] sm:$0xff]
        %v4369 = vld [vmem:[#allocation2 + $0xd8] sm:$0xff]
        %v4370 = vld [vmem:[#allocation2 + $0xe0] sm:$0xff]
        %v4371 = vld [vmem:[#allocation2 + $0xe8] sm:$0xff]
        %v4372 = vld [vmem:[#allocation2 + $0xf0] sm:$0xff]
        %v4373 = vld [vmem:[#allocation2 + $0xf8] sm:$0xff]
        %v4374 = vld [vmem:[#allocation2 + $0x100] sm:$0xff]
        %v4375 = vld [vmem:[#allocation2 + $0x108] sm:$0xff]
        %v4376 = vld [vmem:[#allocation2 + $0x110] sm:$0xff]
        %v4377 = vld [vmem:[#allocation2 + $0x118] sm:$0xff]
        %v4378 = vld [vmem:[#allocation2 + $0x120] sm:$0xff]
        %v4379 = vpack.c.bf16 %v4348, %v4347
        %v4380 = vpack.c.bf16 %v4350, %v4349
        %v4381 = vpack.c.bf16 %v4352, %v4351
        %v4382 = vpack.c.bf16 %v4354, %v4353
        %v4383 = vpack.c.bf16 %v4356, %v4355
        %v4384 = vpack.c.bf16 %v4358, %v4357
        %v4385 = vpack.c.bf16 %v4360, %v4359
        %v4386 = vpack.c.bf16 %v4362, %v4361
        %v4387 = vpack.c.bf16 %v4364, %v4363
        %v4388 = vpack.c.bf16 %v4366, %v4365
        %v4389 = vpack.c.bf16 %v4368, %v4367
        %v4390 = vpack.c.bf16 %v4370, %v4369
        %v4391 = vpack.c.bf16 %v4372, %v4371
        %v4392 = vpack.c.bf16 %v4374, %v4373
        %v4393 = vpack.c.bf16 %v4376, %v4375
        %v4394 = vpack.c.bf16 %v4378, %v4377
        %s4395 = scalar_lea.vmem %s3, 224
        %v4396 = vld [vmem:[%s4395] sm:$0xf]
        %v4397 = vld [vmem:[%s4395 + $0x4] sm:$0xf]
        %v4398 = vld [vmem:[%s4395 + $0x8] sm:$0xf]
        %v4399 = vld [vmem:[%s4395 + $0xc] sm:$0xf]
        %v4400 = vld [vmem:[%s4395 + $0x10] sm:$0xf]
        %v4401 = vld [vmem:[%s4395 + $0x14] sm:$0xf]
        %v4402 = vld [vmem:[%s4395 + $0x18] sm:$0xf]
        %v4403 = vld [vmem:[%s4395 + $0x1c] sm:$0xf]
        %v4412 = vunpack.c.l.b16 %v4396
        %v4413 = vunpack.c.l.b16 %v4397
        %v4414 = vunpack.c.l.b16 %v4398
        %v4415 = vunpack.c.l.b16 %v4399
        %v4416 = vunpack.c.l.b16 %v4400
        %v4417 = vunpack.c.l.b16 %v4401
        %v4418 = vunpack.c.l.b16 %v4402
        %v4419 = vunpack.c.l.b16 %v4403
        %v4420 = vpack.c.b16 %v4413, %v4412
        %v4421 = vpack.c.b16 %v4415, %v4414
        %v4422 = vpack.c.b16 %v4417, %v4416
        %v4423 = vpack.c.b16 %v4419, %v4418
        %v4429 = vsel %vm963, %v4379, 0
        %v4432 = vsel %vm963, %v4380, 0
        %v4435 = vsel %vm963, %v4381, 0
        %v4438 = vsel %vm963, %v4382, 0
        %v4441 = vsel %vm963, %v4383, 0
        %v4444 = vsel %vm963, %v4384, 0
        %v4447 = vsel %vm963, %v4385, 0
        %v4450 = vsel %vm963, %v4386, 0
        %v4453 = vsel %vm963, %v4387, 0
        %v4456 = vsel %vm963, %v4388, 0
        %v4459 = vsel %vm963, %v4389, 0
        %v4462 = vsel %vm963, %v4390, 0
        %v4465 = vsel %vm963, %v4391, 0
        %v4468 = vsel %vm963, %v4392, 0
        %v4471 = vsel %vm963, %v4393, 0
        %v4474 = vsel %vm963, %v4394, 0
        %4476 = vmatprep.subr.bf16.mxu0 0
        %4477 = vmatpush1.bf16.msra.mxu0 0
        %4478 = vmatprep.subr.bf16.mxu0 0
        %4479 = vmatpush1.bf16.msra.mxu0 0
        %4480 = vmatprep.subr.bf16.mxu0 0
        %4481 = vmatpush1.bf16.msra.mxu0 0
        %4482 = vmatprep.subr.bf16.mxu0 0
        %4483 = vmatpush1.bf16.msra.mxu0 0
        %4484 = vmatprep.subr.bf16.mxu0 0
        %4485 = vmatpush1.bf16.msra.mxu0 %v4423
        %4486 = vmatprep.subr.bf16.mxu0 0
        %4487 = vmatpush1.bf16.msra.mxu0 %v4422
        %4488 = vmatprep.subr.bf16.mxu0 0
        %4489 = vmatpush1.bf16.msra.mxu0 %v4421
        %4490 = vmatprep.subr.bf16.mxu0 0
        %4491 = vmatpush1.bf16.msra.mxu0 %v4420
        %4492 = vmatprep.subr.bf16.mxu0 0
        %4493 = vmatpush2.bf16.msra.mxu0 0
        %4494 = vmatprep.subr.bf16.mxu0 0
        %4495 = vmatpush2.bf16.msra.mxu0 0
        %4496 = vmatprep.subr.bf16.mxu0 0
        %4497 = vmatpush2.bf16.msra.mxu0 0
        %4498 = vmatprep.subr.bf16.mxu0 0
        %4499 = vmatpush2.bf16.msra.mxu0 0
        %4500 = vmatprep.subr.bf16.mxu0 0
        %4501 = vmatpush2.bf16.msra.mxu0 0
        %4502 = vmatprep.subr.bf16.mxu0 0
        %4503 = vmatpush2.bf16.msra.mxu0 0
        %4504 = vmatprep.subr.bf16.mxu0 0
        %4505 = vmatpush2.bf16.msra.mxu0 0
        %4506 = vmatprep.subr.bf16.mxu0 0
        %4507 = vmatpush2.bf16.msra.mxu0 0
        %4508 = vmatprep.mubr.bf16.mxu0 0
        %4509 = vmatmul.mubr.bf16.gmra.mxu0 %v4429
        %v4510 = vpop.f32.mrf.mxu0
        %v4511 = vadd.f32 0.0, %v4510
        %v4512 = vpop.f32.mrf.mxu0
        %v4513 = vpop.f32.mrf.mxu0
        %v4514 = vadd.f32 0.0, %v4513
        %v4515 = vpop.f32.mrf.mxu0
        %4516 = vmatprep.mubr.bf16.mxu0 0
        %4517 = vmatmul.mubr.bf16.gmra.mxu0 %v4432
        %v4518 = vpop.f32.mrf.mxu0
        %v4519 = vadd.f32 0.0, %v4518
        %v4520 = vpop.f32.mrf.mxu0
        %v4521 = vpop.f32.mrf.mxu0
        %v4522 = vadd.f32 0.0, %v4521
        %v4523 = vpop.f32.mrf.mxu0
        %4524 = vmatprep.mubr.bf16.mxu0 0
        %4525 = vmatmul.mubr.bf16.gmra.mxu0 %v4435
        %v4526 = vpop.f32.mrf.mxu0
        %v4527 = vadd.f32 0.0, %v4526
        %v4528 = vpop.f32.mrf.mxu0
        %v4529 = vpop.f32.mrf.mxu0
        %v4530 = vadd.f32 0.0, %v4529
        %v4531 = vpop.f32.mrf.mxu0
        %4532 = vmatprep.mubr.bf16.mxu0 0
        %4533 = vmatmul.mubr.bf16.gmra.mxu0 %v4438
        %v4534 = vpop.f32.mrf.mxu0
        %v4535 = vadd.f32 0.0, %v4534
        %v4536 = vpop.f32.mrf.mxu0
        %v4537 = vpop.f32.mrf.mxu0
        %v4538 = vadd.f32 0.0, %v4537
        %v4539 = vpop.f32.mrf.mxu0
        %4540 = vmatprep.mubr.bf16.mxu0 0
        %4541 = vmatmul.mubr.bf16.gmra.mxu0 %v4441
        %v4542 = vpop.f32.mrf.mxu0
        %v4543 = vadd.f32 0.0, %v4542
        %v4544 = vpop.f32.mrf.mxu0
        %v4545 = vpop.f32.mrf.mxu0
        %v4546 = vadd.f32 0.0, %v4545
        %v4547 = vpop.f32.mrf.mxu0
        %4548 = vmatprep.mubr.bf16.mxu0 0
        %4549 = vmatmul.mubr.bf16.gmra.mxu0 %v4444
        %v4550 = vpop.f32.mrf.mxu0
        %v4551 = vadd.f32 0.0, %v4550
        %v4552 = vpop.f32.mrf.mxu0
        %v4553 = vpop.f32.mrf.mxu0
        %v4554 = vadd.f32 0.0, %v4553
        %v4555 = vpop.f32.mrf.mxu0
        %4556 = vmatprep.mubr.bf16.mxu0 0
        %4557 = vmatmul.mubr.bf16.gmra.mxu0 %v4447
        %v4558 = vpop.f32.mrf.mxu0
        %v4559 = vadd.f32 0.0, %v4558
        %v4560 = vpop.f32.mrf.mxu0
        %v4561 = vpop.f32.mrf.mxu0
        %v4562 = vadd.f32 0.0, %v4561
        %v4563 = vpop.f32.mrf.mxu0
        %4564 = vmatprep.mubr.bf16.mxu0 0
        %4565 = vmatmul.mubr.bf16.gmra.mxu0 %v4450
        %v4566 = vpop.f32.mrf.mxu0
        %v4567 = vadd.f32 0.0, %v4566
        %v4568 = vpop.f32.mrf.mxu0
        %v4569 = vpop.f32.mrf.mxu0
        %v4570 = vadd.f32 0.0, %v4569
        %v4571 = vpop.f32.mrf.mxu0
        %4572 = vmatprep.mubr.bf16.mxu0 0
        %4573 = vmatmul.mubr.bf16.gmra.mxu0 %v4453
        %v4574 = vpop.f32.mrf.mxu0
        %v4575 = vadd.f32 0.0, %v4574
        %v4576 = vpop.f32.mrf.mxu0
        %v4577 = vpop.f32.mrf.mxu0
        %v4578 = vadd.f32 0.0, %v4577
        %v4579 = vpop.f32.mrf.mxu0
        %4580 = vmatprep.mubr.bf16.mxu0 0
        %4581 = vmatmul.mubr.bf16.gmra.mxu0 %v4456
        %v4582 = vpop.f32.mrf.mxu0
        %v4583 = vadd.f32 0.0, %v4582
        %v4584 = vpop.f32.mrf.mxu0
        %v4585 = vpop.f32.mrf.mxu0
        %v4586 = vadd.f32 0.0, %v4585
        %v4587 = vpop.f32.mrf.mxu0
        %4588 = vmatprep.mubr.bf16.mxu0 0
        %4589 = vmatmul.mubr.bf16.gmra.mxu0 %v4459
        %v4590 = vpop.f32.mrf.mxu0
        %v4591 = vadd.f32 0.0, %v4590
        %v4592 = vpop.f32.mrf.mxu0
        %v4593 = vpop.f32.mrf.mxu0
        %v4594 = vadd.f32 0.0, %v4593
        %v4595 = vpop.f32.mrf.mxu0
        %4596 = vmatprep.mubr.bf16.mxu0 0
        %4597 = vmatmul.mubr.bf16.gmra.mxu0 %v4462
        %v4598 = vpop.f32.mrf.mxu0
        %v4599 = vadd.f32 0.0, %v4598
        %v4600 = vpop.f32.mrf.mxu0
        %v4601 = vpop.f32.mrf.mxu0
        %v4602 = vadd.f32 0.0, %v4601
        %v4603 = vpop.f32.mrf.mxu0
        %4604 = vmatprep.mubr.bf16.mxu0 0
        %4605 = vmatmul.mubr.bf16.gmra.mxu0 %v4465
        %v4606 = vpop.f32.mrf.mxu0
        %v4607 = vadd.f32 0.0, %v4606
        %v4608 = vpop.f32.mrf.mxu0
        %v4609 = vpop.f32.mrf.mxu0
        %v4610 = vadd.f32 0.0, %v4609
        %v4611 = vpop.f32.mrf.mxu0
        %4612 = vmatprep.mubr.bf16.mxu0 0
        %4613 = vmatmul.mubr.bf16.gmra.mxu0 %v4468
        %v4614 = vpop.f32.mrf.mxu0
        %v4615 = vadd.f32 0.0, %v4614
        %v4616 = vpop.f32.mrf.mxu0
        %v4617 = vpop.f32.mrf.mxu0
        %v4618 = vadd.f32 0.0, %v4617
        %v4619 = vpop.f32.mrf.mxu0
        %4620 = vmatprep.mubr.bf16.mxu0 0
        %4621 = vmatmul.mubr.bf16.gmra.mxu0 %v4471
        %v4622 = vpop.f32.mrf.mxu0
        %v4623 = vadd.f32 0.0, %v4622
        %v4624 = vpop.f32.mrf.mxu0
        %v4625 = vpop.f32.mrf.mxu0
        %v4626 = vadd.f32 0.0, %v4625
        %v4627 = vpop.f32.mrf.mxu0
        %4628 = vmatprep.mubr.bf16.mxu0 0
        %4629 = vmatmul.mubr.bf16.gmra.mxu0 %v4474
        %v4630 = vpop.f32.mrf.mxu0
        %v4631 = vadd.f32 0.0, %v4630
        %v4632 = vpop.f32.mrf.mxu0
        %v4633 = vpop.f32.mrf.mxu0
        %v4634 = vadd.f32 0.0, %v4633
        %v4635 = vpop.f32.mrf.mxu0
        %4636 = vdwg.mxu0
        %v4637 = vadd.f32 %v4315, %v4511
        %v4638 = vadd.f32 %v4316, %v4514
        %v4639 = vadd.f32 %v4317, %v4519
        %v4640 = vadd.f32 %v4318, %v4522
        %v4641 = vadd.f32 %v4319, %v4527
        %v4642 = vadd.f32 %v4320, %v4530
        %v4643 = vadd.f32 %v4321, %v4535
        %v4644 = vadd.f32 %v4322, %v4538
        %v4645 = vadd.f32 %v4323, %v4543
        %v4646 = vadd.f32 %v4324, %v4546
        %v4647 = vadd.f32 %v4325, %v4551
        %v4648 = vadd.f32 %v4326, %v4554
        %v4649 = vadd.f32 %v4327, %v4559
        %v4650 = vadd.f32 %v4328, %v4562
        %v4651 = vadd.f32 %v4329, %v4567
        %v4652 = vadd.f32 %v4330, %v4570
        %v4653 = vadd.f32 %v4331, %v4575
        %v4654 = vadd.f32 %v4332, %v4578
        %v4655 = vadd.f32 %v4333, %v4583
        %v4656 = vadd.f32 %v4334, %v4586
        %v4657 = vadd.f32 %v4335, %v4591
        %v4658 = vadd.f32 %v4336, %v4594
        %v4659 = vadd.f32 %v4337, %v4599
        %v4660 = vadd.f32 %v4338, %v4602
        %v4661 = vadd.f32 %v4339, %v4607
        %v4662 = vadd.f32 %v4340, %v4610
        %v4663 = vadd.f32 %v4341, %v4615
        %v4664 = vadd.f32 %v4342, %v4618
        %v4665 = vadd.f32 %v4343, %v4623
        %v4666 = vadd.f32 %v4344, %v4626
        %v4667 = vadd.f32 %v4345, %v4631
        %v4668 = vadd.f32 %v4346, %v4634
        %v4669 = vld [vmem:[#allocation2 + $0x29] sm:$0xff]
        %v4670 = vld [vmem:[#allocation2 + $0x31] sm:$0xff]
        %v4671 = vld [vmem:[#allocation2 + $0x39] sm:$0xff]
        %v4672 = vld [vmem:[#allocation2 + $0x41] sm:$0xff]
        %v4673 = vld [vmem:[#allocation2 + $0x49] sm:$0xff]
        %v4674 = vld [vmem:[#allocation2 + $0x51] sm:$0xff]
        %v4675 = vld [vmem:[#allocation2 + $0x59] sm:$0xff]
        %v4676 = vld [vmem:[#allocation2 + $0x61] sm:$0xff]
        %v4677 = vld [vmem:[#allocation2 + $0x69] sm:$0xff]
        %v4678 = vld [vmem:[#allocation2 + $0x71] sm:$0xff]
        %v4679 = vld [vmem:[#allocation2 + $0x79] sm:$0xff]
        %v4680 = vld [vmem:[#allocation2 + $0x81] sm:$0xff]
        %v4681 = vld [vmem:[#allocation2 + $0x89] sm:$0xff]
        %v4682 = vld [vmem:[#allocation2 + $0x91] sm:$0xff]
        %v4683 = vld [vmem:[#allocation2 + $0x99] sm:$0xff]
        %v4684 = vld [vmem:[#allocation2 + $0xa1] sm:$0xff]
        %v4685 = vld [vmem:[#allocation2 + $0xa9] sm:$0xff]
        %v4686 = vld [vmem:[#allocation2 + $0xb1] sm:$0xff]
        %v4687 = vld [vmem:[#allocation2 + $0xb9] sm:$0xff]
        %v4688 = vld [vmem:[#allocation2 + $0xc1] sm:$0xff]
        %v4689 = vld [vmem:[#allocation2 + $0xc9] sm:$0xff]
        %v4690 = vld [vmem:[#allocation2 + $0xd1] sm:$0xff]
        %v4691 = vld [vmem:[#allocation2 + $0xd9] sm:$0xff]
        %v4692 = vld [vmem:[#allocation2 + $0xe1] sm:$0xff]
        %v4693 = vld [vmem:[#allocation2 + $0xe9] sm:$0xff]
        %v4694 = vld [vmem:[#allocation2 + $0xf1] sm:$0xff]
        %v4695 = vld [vmem:[#allocation2 + $0xf9] sm:$0xff]
        %v4696 = vld [vmem:[#allocation2 + $0x101] sm:$0xff]
        %v4697 = vld [vmem:[#allocation2 + $0x109] sm:$0xff]
        %v4698 = vld [vmem:[#allocation2 + $0x111] sm:$0xff]
        %v4699 = vld [vmem:[#allocation2 + $0x119] sm:$0xff]
        %v4700 = vld [vmem:[#allocation2 + $0x121] sm:$0xff]
        %v4701 = vsel %vm2609, %v4669, 0.0
        %v4702 = vsel %vm2610, %v4670, 0.0
        %v4703 = vsel %vm2611, %v4671, 0.0
        %v4704 = vsel %vm2612, %v4672, 0.0
        %v4705 = vsel %vm2613, %v4673, 0.0
        %v4706 = vsel %vm2614, %v4674, 0.0
        %v4707 = vsel %vm2615, %v4675, 0.0
        %v4708 = vsel %vm2616, %v4676, 0.0
        %v4709 = vsel %vm2617, %v4677, 0.0
        %v4710 = vsel %vm2618, %v4678, 0.0
        %v4711 = vsel %vm2619, %v4679, 0.0
        %v4712 = vsel %vm2620, %v4680, 0.0
        %v4713 = vsel %vm2621, %v4681, 0.0
        %v4714 = vsel %vm2622, %v4682, 0.0
        %v4715 = vsel %vm2623, %v4683, 0.0
        %v4716 = vsel %vm2624, %v4684, 0.0
        %v4717 = vsel %vm2625, %v4685, 0.0
        %v4718 = vsel %vm2626, %v4686, 0.0
        %v4719 = vsel %vm2627, %v4687, 0.0
        %v4720 = vsel %vm2628, %v4688, 0.0
        %v4721 = vsel %vm2629, %v4689, 0.0
        %v4722 = vsel %vm2630, %v4690, 0.0
        %v4723 = vsel %vm2631, %v4691, 0.0
        %v4724 = vsel %vm2632, %v4692, 0.0
        %v4725 = vsel %vm2633, %v4693, 0.0
        %v4726 = vsel %vm2634, %v4694, 0.0
        %v4727 = vsel %vm2635, %v4695, 0.0
        %v4728 = vsel %vm2636, %v4696, 0.0
        %v4729 = vsel %vm2637, %v4697, 0.0
        %v4730 = vsel %vm2638, %v4698, 0.0
        %v4731 = vsel %vm2639, %v4699, 0.0
        %v4732 = vsel %vm2640, %v4700, 0.0
        %v4733 = vpack.c.bf16 %v4702, %v4701
        %v4734 = vpack.c.bf16 %v4704, %v4703
        %v4735 = vpack.c.bf16 %v4706, %v4705
        %v4736 = vpack.c.bf16 %v4708, %v4707
        %v4737 = vpack.c.bf16 %v4710, %v4709
        %v4738 = vpack.c.bf16 %v4712, %v4711
        %v4739 = vpack.c.bf16 %v4714, %v4713
        %v4740 = vpack.c.bf16 %v4716, %v4715
        %v4741 = vpack.c.bf16 %v4718, %v4717
        %v4742 = vpack.c.bf16 %v4720, %v4719
        %v4743 = vpack.c.bf16 %v4722, %v4721
        %v4744 = vpack.c.bf16 %v4724, %v4723
        %v4745 = vpack.c.bf16 %v4726, %v4725
        %v4746 = vpack.c.bf16 %v4728, %v4727
        %v4747 = vpack.c.bf16 %v4730, %v4729
        %v4748 = vpack.c.bf16 %v4732, %v4731
        %s4749 = scalar_lea.vmem %s3, 256
        %v4750 = vld [vmem:[%s4749] sm:$0xf]
        %v4751 = vld [vmem:[%s4749 + $0x4] sm:$0xf]
        %v4752 = vld [vmem:[%s4749 + $0x8] sm:$0xf]
        %v4753 = vld [vmem:[%s4749 + $0xc] sm:$0xf]
        %v4754 = vld [vmem:[%s4749 + $0x10] sm:$0xf]
        %v4755 = vld [vmem:[%s4749 + $0x14] sm:$0xf]
        %v4756 = vld [vmem:[%s4749 + $0x18] sm:$0xf]
        %v4757 = vld [vmem:[%s4749 + $0x1c] sm:$0xf]
        %v4766 = vunpack.c.l.b16 %v4750
        %v4767 = vunpack.c.l.b16 %v4751
        %v4768 = vunpack.c.l.b16 %v4752
        %v4769 = vunpack.c.l.b16 %v4753
        %v4770 = vunpack.c.l.b16 %v4754
        %v4771 = vunpack.c.l.b16 %v4755
        %v4772 = vunpack.c.l.b16 %v4756
        %v4773 = vunpack.c.l.b16 %v4757
        %v4774 = vpack.c.b16 %v4767, %v4766
        %v4775 = vpack.c.b16 %v4769, %v4768
        %v4776 = vpack.c.b16 %v4771, %v4770
        %v4777 = vpack.c.b16 %v4773, %v4772
        %v4783 = vsel %vm963, %v4733, 0
        %v4786 = vsel %vm963, %v4734, 0
        %v4789 = vsel %vm963, %v4735, 0
        %v4792 = vsel %vm963, %v4736, 0
        %v4795 = vsel %vm963, %v4737, 0
        %v4798 = vsel %vm963, %v4738, 0
        %v4801 = vsel %vm963, %v4739, 0
        %v4804 = vsel %vm963, %v4740, 0
        %v4807 = vsel %vm963, %v4741, 0
        %v4810 = vsel %vm963, %v4742, 0
        %v4813 = vsel %vm963, %v4743, 0
        %v4816 = vsel %vm963, %v4744, 0
        %v4819 = vsel %vm963, %v4745, 0
        %v4822 = vsel %vm963, %v4746, 0
        %v4825 = vsel %vm963, %v4747, 0
        %v4828 = vsel %vm963, %v4748, 0
        %4830 = vmatprep.subr.bf16.mxu0 0
        %4831 = vmatpush1.bf16.msra.mxu0 0
        %4832 = vmatprep.subr.bf16.mxu0 0
        %4833 = vmatpush1.bf16.msra.mxu0 0
        %4834 = vmatprep.subr.bf16.mxu0 0
        %4835 = vmatpush1.bf16.msra.mxu0 0
        %4836 = vmatprep.subr.bf16.mxu0 0
        %4837 = vmatpush1.bf16.msra.mxu0 0
        %4838 = vmatprep.subr.bf16.mxu0 0
        %4839 = vmatpush1.bf16.msra.mxu0 %v4777
        %4840 = vmatprep.subr.bf16.mxu0 0
        %4841 = vmatpush1.bf16.msra.mxu0 %v4776
        %4842 = vmatprep.subr.bf16.mxu0 0
        %4843 = vmatpush1.bf16.msra.mxu0 %v4775
        %4844 = vmatprep.subr.bf16.mxu0 0
        %4845 = vmatpush1.bf16.msra.mxu0 %v4774
        %4846 = vmatprep.subr.bf16.mxu0 0
        %4847 = vmatpush2.bf16.msra.mxu0 0
        %4848 = vmatprep.subr.bf16.mxu0 0
        %4849 = vmatpush2.bf16.msra.mxu0 0
        %4850 = vmatprep.subr.bf16.mxu0 0
        %4851 = vmatpush2.bf16.msra.mxu0 0
        %4852 = vmatprep.subr.bf16.mxu0 0
        %4853 = vmatpush2.bf16.msra.mxu0 0
        %4854 = vmatprep.subr.bf16.mxu0 0
        %4855 = vmatpush2.bf16.msra.mxu0 0
        %4856 = vmatprep.subr.bf16.mxu0 0
        %4857 = vmatpush2.bf16.msra.mxu0 0
        %4858 = vmatprep.subr.bf16.mxu0 0
        %4859 = vmatpush2.bf16.msra.mxu0 0
        %4860 = vmatprep.subr.bf16.mxu0 0
        %4861 = vmatpush2.bf16.msra.mxu0 0
        %4862 = vmatprep.mubr.bf16.mxu0 0
        %4863 = vmatmul.mubr.bf16.gmra.mxu0 %v4783
        %v4864 = vpop.f32.mrf.mxu0
        %v4865 = vadd.f32 0.0, %v4864
        %v4866 = vpop.f32.mrf.mxu0
        %v4867 = vpop.f32.mrf.mxu0
        %v4868 = vadd.f32 0.0, %v4867
        %v4869 = vpop.f32.mrf.mxu0
        %4870 = vmatprep.mubr.bf16.mxu0 0
        %4871 = vmatmul.mubr.bf16.gmra.mxu0 %v4786
        %v4872 = vpop.f32.mrf.mxu0
        %v4873 = vadd.f32 0.0, %v4872
        %v4874 = vpop.f32.mrf.mxu0
        %v4875 = vpop.f32.mrf.mxu0
        %v4876 = vadd.f32 0.0, %v4875
        %v4877 = vpop.f32.mrf.mxu0
        %4878 = vmatprep.mubr.bf16.mxu0 0
        %4879 = vmatmul.mubr.bf16.gmra.mxu0 %v4789
        %v4880 = vpop.f32.mrf.mxu0
        %v4881 = vadd.f32 0.0, %v4880
        %v4882 = vpop.f32.mrf.mxu0
        %v4883 = vpop.f32.mrf.mxu0
        %v4884 = vadd.f32 0.0, %v4883
        %v4885 = vpop.f32.mrf.mxu0
        %4886 = vmatprep.mubr.bf16.mxu0 0
        %4887 = vmatmul.mubr.bf16.gmra.mxu0 %v4792
        %v4888 = vpop.f32.mrf.mxu0
        %v4889 = vadd.f32 0.0, %v4888
        %v4890 = vpop.f32.mrf.mxu0
        %v4891 = vpop.f32.mrf.mxu0
        %v4892 = vadd.f32 0.0, %v4891
        %v4893 = vpop.f32.mrf.mxu0
        %4894 = vmatprep.mubr.bf16.mxu0 0
        %4895 = vmatmul.mubr.bf16.gmra.mxu0 %v4795
        %v4896 = vpop.f32.mrf.mxu0
        %v4897 = vadd.f32 0.0, %v4896
        %v4898 = vpop.f32.mrf.mxu0
        %v4899 = vpop.f32.mrf.mxu0
        %v4900 = vadd.f32 0.0, %v4899
        %v4901 = vpop.f32.mrf.mxu0
        %4902 = vmatprep.mubr.bf16.mxu0 0
        %4903 = vmatmul.mubr.bf16.gmra.mxu0 %v4798
        %v4904 = vpop.f32.mrf.mxu0
        %v4905 = vadd.f32 0.0, %v4904
        %v4906 = vpop.f32.mrf.mxu0
        %v4907 = vpop.f32.mrf.mxu0
        %v4908 = vadd.f32 0.0, %v4907
        %v4909 = vpop.f32.mrf.mxu0
        %4910 = vmatprep.mubr.bf16.mxu0 0
        %4911 = vmatmul.mubr.bf16.gmra.mxu0 %v4801
        %v4912 = vpop.f32.mrf.mxu0
        %v4913 = vadd.f32 0.0, %v4912
        %v4914 = vpop.f32.mrf.mxu0
        %v4915 = vpop.f32.mrf.mxu0
        %v4916 = vadd.f32 0.0, %v4915
        %v4917 = vpop.f32.mrf.mxu0
        %4918 = vmatprep.mubr.bf16.mxu0 0
        %4919 = vmatmul.mubr.bf16.gmra.mxu0 %v4804
        %v4920 = vpop.f32.mrf.mxu0
        %v4921 = vadd.f32 0.0, %v4920
        %v4922 = vpop.f32.mrf.mxu0
        %v4923 = vpop.f32.mrf.mxu0
        %v4924 = vadd.f32 0.0, %v4923
        %v4925 = vpop.f32.mrf.mxu0
        %4926 = vmatprep.mubr.bf16.mxu0 0
        %4927 = vmatmul.mubr.bf16.gmra.mxu0 %v4807
        %v4928 = vpop.f32.mrf.mxu0
        %v4929 = vadd.f32 0.0, %v4928
        %v4930 = vpop.f32.mrf.mxu0
        %v4931 = vpop.f32.mrf.mxu0
        %v4932 = vadd.f32 0.0, %v4931
        %v4933 = vpop.f32.mrf.mxu0
        %4934 = vmatprep.mubr.bf16.mxu0 0
        %4935 = vmatmul.mubr.bf16.gmra.mxu0 %v4810
        %v4936 = vpop.f32.mrf.mxu0
        %v4937 = vadd.f32 0.0, %v4936
        %v4938 = vpop.f32.mrf.mxu0
        %v4939 = vpop.f32.mrf.mxu0
        %v4940 = vadd.f32 0.0, %v4939
        %v4941 = vpop.f32.mrf.mxu0
        %4942 = vmatprep.mubr.bf16.mxu0 0
        %4943 = vmatmul.mubr.bf16.gmra.mxu0 %v4813
        %v4944 = vpop.f32.mrf.mxu0
        %v4945 = vadd.f32 0.0, %v4944
        %v4946 = vpop.f32.mrf.mxu0
        %v4947 = vpop.f32.mrf.mxu0
        %v4948 = vadd.f32 0.0, %v4947
        %v4949 = vpop.f32.mrf.mxu0
        %4950 = vmatprep.mubr.bf16.mxu0 0
        %4951 = vmatmul.mubr.bf16.gmra.mxu0 %v4816
        %v4952 = vpop.f32.mrf.mxu0
        %v4953 = vadd.f32 0.0, %v4952
        %v4954 = vpop.f32.mrf.mxu0
        %v4955 = vpop.f32.mrf.mxu0
        %v4956 = vadd.f32 0.0, %v4955
        %v4957 = vpop.f32.mrf.mxu0
        %4958 = vmatprep.mubr.bf16.mxu0 0
        %4959 = vmatmul.mubr.bf16.gmra.mxu0 %v4819
        %v4960 = vpop.f32.mrf.mxu0
        %v4961 = vadd.f32 0.0, %v4960
        %v4962 = vpop.f32.mrf.mxu0
        %v4963 = vpop.f32.mrf.mxu0
        %v4964 = vadd.f32 0.0, %v4963
        %v4965 = vpop.f32.mrf.mxu0
        %4966 = vmatprep.mubr.bf16.mxu0 0
        %4967 = vmatmul.mubr.bf16.gmra.mxu0 %v4822
        %v4968 = vpop.f32.mrf.mxu0
        %v4969 = vadd.f32 0.0, %v4968
        %v4970 = vpop.f32.mrf.mxu0
        %v4971 = vpop.f32.mrf.mxu0
        %v4972 = vadd.f32 0.0, %v4971
        %v4973 = vpop.f32.mrf.mxu0
        %4974 = vmatprep.mubr.bf16.mxu0 0
        %4975 = vmatmul.mubr.bf16.gmra.mxu0 %v4825
        %v4976 = vpop.f32.mrf.mxu0
        %v4977 = vadd.f32 0.0, %v4976
        %v4978 = vpop.f32.mrf.mxu0
        %v4979 = vpop.f32.mrf.mxu0
        %v4980 = vadd.f32 0.0, %v4979
        %v4981 = vpop.f32.mrf.mxu0
        %4982 = vmatprep.mubr.bf16.mxu0 0
        %4983 = vmatmul.mubr.bf16.gmra.mxu0 %v4828
        %v4984 = vpop.f32.mrf.mxu0
        %v4985 = vadd.f32 0.0, %v4984
        %v4986 = vpop.f32.mrf.mxu0
        %v4987 = vpop.f32.mrf.mxu0
        %v4988 = vadd.f32 0.0, %v4987
        %v4989 = vpop.f32.mrf.mxu0
        %4990 = vdwg.mxu0
        %v4991 = vadd.f32 %v4637, %v4865
        %v4992 = vadd.f32 %v4638, %v4868
        %v4993 = vadd.f32 %v4639, %v4873
        %v4994 = vadd.f32 %v4640, %v4876
        %v4995 = vadd.f32 %v4641, %v4881
        %v4996 = vadd.f32 %v4642, %v4884
        %v4997 = vadd.f32 %v4643, %v4889
        %v4998 = vadd.f32 %v4644, %v4892
        %v4999 = vadd.f32 %v4645, %v4897
        %v5000 = vadd.f32 %v4646, %v4900
        %v5001 = vadd.f32 %v4647, %v4905
        %v5002 = vadd.f32 %v4648, %v4908
        %v5003 = vadd.f32 %v4649, %v4913
        %v5004 = vadd.f32 %v4650, %v4916
        %v5005 = vadd.f32 %v4651, %v4921
        %v5006 = vadd.f32 %v4652, %v4924
        %v5007 = vadd.f32 %v4653, %v4929
        %v5008 = vadd.f32 %v4654, %v4932
        %v5009 = vadd.f32 %v4655, %v4937
        %v5010 = vadd.f32 %v4656, %v4940
        %v5011 = vadd.f32 %v4657, %v4945
        %v5012 = vadd.f32 %v4658, %v4948
        %v5013 = vadd.f32 %v4659, %v4953
        %v5014 = vadd.f32 %v4660, %v4956
        %v5015 = vadd.f32 %v4661, %v4961
        %v5016 = vadd.f32 %v4662, %v4964
        %v5017 = vadd.f32 %v4663, %v4969
        %v5018 = vadd.f32 %v4664, %v4972
        %v5019 = vadd.f32 %v4665, %v4977
        %v5020 = vadd.f32 %v4666, %v4980
        %v5021 = vadd.f32 %v4667, %v4985
        %v5022 = vadd.f32 %v4668, %v4988
        %v5024 = vlaneseq
        %v5025 = vshrl.u32 %v5024, 7
        %v5026 = vsub.s32 0, %v5025
        %v5027 = vrot.slane %v1831, %v5026
        %v5029 = vadd.f32 %v4991, %v5027
        %v5030 = vadd.f32 %v4992, %v5027
        %v5031 = vadd.f32 %v4993, %v5027
        %v5032 = vadd.f32 %v4994, %v5027
        %v5033 = vadd.f32 %v4995, %v5027
        %v5034 = vadd.f32 %v4996, %v5027
        %v5035 = vadd.f32 %v4997, %v5027
        %v5036 = vadd.f32 %v4998, %v5027
        %v5037 = vadd.f32 %v4999, %v5027
        %v5038 = vadd.f32 %v5000, %v5027
        %v5039 = vadd.f32 %v5001, %v5027
        %v5040 = vadd.f32 %v5002, %v5027
        %v5041 = vadd.f32 %v5003, %v5027
        %v5042 = vadd.f32 %v5004, %v5027
        %v5043 = vadd.f32 %v5005, %v5027
        %v5044 = vadd.f32 %v5006, %v5027
        %v5045 = vadd.f32 %v5007, %v5027
        %v5046 = vadd.f32 %v5008, %v5027
        %v5047 = vadd.f32 %v5009, %v5027
        %v5048 = vadd.f32 %v5010, %v5027
        %v5049 = vadd.f32 %v5011, %v5027
        %v5050 = vadd.f32 %v5012, %v5027
        %v5051 = vadd.f32 %v5013, %v5027
        %v5052 = vadd.f32 %v5014, %v5027
        %v5053 = vadd.f32 %v5015, %v5027
        %v5054 = vadd.f32 %v5016, %v5027
        %v5055 = vadd.f32 %v5017, %v5027
        %v5056 = vadd.f32 %v5018, %v5027
        %v5057 = vadd.f32 %v5019, %v5027
        %v5058 = vadd.f32 %v5020, %v5027
        %v5059 = vadd.f32 %v5021, %v5027
        %v5060 = vadd.f32 %v5022, %v5027
        %v5061 = vld [vmem:[%s5] sm:$0x1]
        %v5062 = vld [vmem:[%s6] sm:$0x1]
        %v5063 = vld [vmem:[%s10] sm:$0xff]
        %v5064 = vld [vmem:[%s10 + $0x8] sm:$0xff]
        %v5065 = vld [vmem:[%s10 + $0x10] sm:$0xff]
        %v5066 = vld [vmem:[%s10 + $0x18] sm:$0xff]
        %v5067 = vld [vmem:[%s10 + $0x20] sm:$0xff]
        %v5068 = vld [vmem:[%s10 + $0x28] sm:$0xff]
        %v5069 = vld [vmem:[%s10 + $0x30] sm:$0xff]
        %v5070 = vld [vmem:[%s10 + $0x38] sm:$0xff]
        %v5071 = vld [vmem:[%s10 + $0x40] sm:$0xff]
        %v5072 = vld [vmem:[%s10 + $0x48] sm:$0xff]
        %v5073 = vld [vmem:[%s10 + $0x50] sm:$0xff]
        %v5074 = vld [vmem:[%s10 + $0x58] sm:$0xff]
        %v5075 = vld [vmem:[%s10 + $0x60] sm:$0xff]
        %v5076 = vld [vmem:[%s10 + $0x68] sm:$0xff]
        %v5077 = vld [vmem:[%s10 + $0x70] sm:$0xff]
        %v5078 = vld [vmem:[%s10 + $0x78] sm:$0xff]
        %v5079 = vadd.f32 %v5029, %v5030
        %v5080 = vadd.f32 %v5079, %v5031
        %v5081 = vadd.f32 %v5080, %v5032
        %v5082 = vadd.f32 %v5081, %v5033
        %v5083 = vadd.f32 %v5082, %v5034
        %v5084 = vadd.f32 %v5083, %v5035
        %v5085 = vadd.f32 %v5084, %v5036
        %v5086 = vadd.f32 %v5085, %v5037
        %v5087 = vadd.f32 %v5086, %v5038
        %v5088 = vadd.f32 %v5087, %v5039
        %v5089 = vadd.f32 %v5088, %v5040
        %v5090 = vadd.f32 %v5089, %v5041
        %v5091 = vadd.f32 %v5090, %v5042
        %v5092 = vadd.f32 %v5091, %v5043
        %v5093 = vadd.f32 %v5092, %v5044
        %v5094 = vadd.f32 %v5093, %v5045
        %v5095 = vadd.f32 %v5094, %v5046
        %v5096 = vadd.f32 %v5095, %v5047
        %v5097 = vadd.f32 %v5096, %v5048
        %v5098 = vadd.f32 %v5097, %v5049
        %v5099 = vadd.f32 %v5098, %v5050
        %v5100 = vadd.f32 %v5099, %v5051
        %v5101 = vadd.f32 %v5100, %v5052
        %v5102 = vadd.f32 %v5101, %v5053
        %v5103 = vadd.f32 %v5102, %v5054
        %v5104 = vadd.f32 %v5103, %v5055
        %v5105 = vadd.f32 %v5104, %v5056
        %v5106 = vadd.f32 %v5105, %v5057
        %v5107 = vadd.f32 %v5106, %v5058
        %v5108 = vadd.f32 %v5107, %v5059
        %v5109 = vadd.f32 %v5108, %v5060
        %v5110 = vrot.slane %v5109, 4
        %v5111 = vadd.f32 %v5109, %v5110
        %v5112 = vrot.slane %v5111, 2
        %v5113 = vadd.f32 %v5111, %v5112
        %v5114 = vrot.slane %v5113, 1
        %v5115 = vadd.f32 %v5113, %v5114
        %v5116 = vmul.f32 %v5029, %v5029
        %v5117 = vmul.f32 %v5030, %v5030
        %v5118 = vmul.f32 %v5031, %v5031
        %v5119 = vmul.f32 %v5032, %v5032
        %v5120 = vmul.f32 %v5033, %v5033
        %v5121 = vmul.f32 %v5034, %v5034
        %v5122 = vmul.f32 %v5035, %v5035
        %v5123 = vmul.f32 %v5036, %v5036
        %v5124 = vmul.f32 %v5037, %v5037
        %v5125 = vmul.f32 %v5038, %v5038
        %v5126 = vmul.f32 %v5039, %v5039
        %v5127 = vmul.f32 %v5040, %v5040
        %v5128 = vmul.f32 %v5041, %v5041
        %v5129 = vmul.f32 %v5042, %v5042
        %v5130 = vmul.f32 %v5043, %v5043
        %v5131 = vmul.f32 %v5044, %v5044
        %v5132 = vmul.f32 %v5045, %v5045
        %v5133 = vmul.f32 %v5046, %v5046
        %v5134 = vmul.f32 %v5047, %v5047
        %v5135 = vmul.f32 %v5048, %v5048
        %v5136 = vmul.f32 %v5049, %v5049
        %v5137 = vmul.f32 %v5050, %v5050
        %v5138 = vmul.f32 %v5051, %v5051
        %v5139 = vmul.f32 %v5052, %v5052
        %v5140 = vmul.f32 %v5053, %v5053
        %v5141 = vmul.f32 %v5054, %v5054
        %v5142 = vmul.f32 %v5055, %v5055
        %v5143 = vmul.f32 %v5056, %v5056
        %v5144 = vmul.f32 %v5057, %v5057
        %v5145 = vmul.f32 %v5058, %v5058
        %v5146 = vmul.f32 %v5059, %v5059
        %v5147 = vmul.f32 %v5060, %v5060
        %v5148 = vadd.f32 %v5116, %v5117
        %v5149 = vadd.f32 %v5148, %v5118
        %v5150 = vadd.f32 %v5149, %v5119
        %v5151 = vadd.f32 %v5150, %v5120
        %v5152 = vadd.f32 %v5151, %v5121
        %v5153 = vadd.f32 %v5152, %v5122
        %v5154 = vadd.f32 %v5153, %v5123
        %v5155 = vadd.f32 %v5154, %v5124
        %v5156 = vadd.f32 %v5155, %v5125
        %v5157 = vadd.f32 %v5156, %v5126
        %v5158 = vadd.f32 %v5157, %v5127
        %v5159 = vadd.f32 %v5158, %v5128
        %v5160 = vadd.f32 %v5159, %v5129
        %v5161 = vadd.f32 %v5160, %v5130
        %v5162 = vadd.f32 %v5161, %v5131
        %v5163 = vadd.f32 %v5162, %v5132
        %v5164 = vadd.f32 %v5163, %v5133
        %v5165 = vadd.f32 %v5164, %v5134
        %v5166 = vadd.f32 %v5165, %v5135
        %v5167 = vadd.f32 %v5166, %v5136
        %v5168 = vadd.f32 %v5167, %v5137
        %v5169 = vadd.f32 %v5168, %v5138
        %v5170 = vadd.f32 %v5169, %v5139
        %v5171 = vadd.f32 %v5170, %v5140
        %v5172 = vadd.f32 %v5171, %v5141
        %v5173 = vadd.f32 %v5172, %v5142
        %v5174 = vadd.f32 %v5173, %v5143
        %v5175 = vadd.f32 %v5174, %v5144
        %v5176 = vadd.f32 %v5175, %v5145
        %v5177 = vadd.f32 %v5176, %v5146
        %v5178 = vadd.f32 %v5177, %v5147
        %v5179 = vrot.slane %v5178, 4
        %v5180 = vadd.f32 %v5178, %v5179
        %v5181 = vrot.slane %v5180, 2
        %v5182 = vadd.f32 %v5180, %v5181
        %v5183 = vrot.slane %v5182, 1
        %v5184 = vadd.f32 %v5182, %v5183
        %5185 = vmatprep.subr.mxu0 0.0
        %5186 = vmatpush1.msra.mxu0 %v5078
        %5187 = vmatprep.subr.mxu0 0.0
        %5188 = vmatpush1.msra.mxu0 %v5077
        %5189 = vmatprep.subr.mxu0 0.0
        %5190 = vmatpush1.msra.mxu0 %v5076
        %5191 = vmatprep.subr.mxu0 0.0
        %5192 = vmatpush1.msra.mxu0 %v5075
        %5193 = vmatprep.subr.mxu0 0.0
        %5194 = vmatpush1.msra.mxu0 %v5074
        %5195 = vmatprep.subr.mxu0 0.0
        %5196 = vmatpush1.msra.mxu0 %v5073
        %5197 = vmatprep.subr.mxu0 0.0
        %5198 = vmatpush1.msra.mxu0 %v5072
        %5199 = vmatprep.subr.mxu0 0.0
        %5200 = vmatpush1.msra.mxu0 %v5071
        %5201 = vmatprep.subr.mxu0 0.0
        %5202 = vmatpush1.msra.mxu0 %v5070
        %5203 = vmatprep.subr.mxu0 0.0
        %5204 = vmatpush1.msra.mxu0 %v5069
        %5205 = vmatprep.subr.mxu0 0.0
        %5206 = vmatpush1.msra.mxu0 %v5068
        %5207 = vmatprep.subr.mxu0 0.0
        %5208 = vmatpush1.msra.mxu0 %v5067
        %5209 = vmatprep.subr.mxu0 0.0
        %5210 = vmatpush1.msra.mxu0 %v5066
        %5211 = vmatprep.subr.mxu0 0.0
        %5212 = vmatpush1.msra.mxu0 %v5065
        %5213 = vmatprep.subr.mxu0 0.0
        %5214 = vmatpush1.msra.mxu0 %v5064
        %5215 = vmatprep.subr.mxu0 0.0
        %5216 = vmatpush1.msra.mxu0 %v5063
        %5217 = vmatprep.subr.mxu0 0.0
        %5218 = vmatpush2.msra.mxu0 0.0
        %5219 = vmatprep.subr.mxu0 0.0
        %5220 = vmatpush2.msra.mxu0 0.0
        %5221 = vmatprep.subr.mxu0 0.0
        %5222 = vmatpush2.msra.mxu0 0.0
        %5223 = vmatprep.subr.mxu0 0.0
        %5224 = vmatpush2.msra.mxu0 0.0
        %5225 = vmatprep.subr.mxu0 0.0
        %5226 = vmatpush2.msra.mxu0 0.0
        %5227 = vmatprep.subr.mxu0 0.0
        %5228 = vmatpush2.msra.mxu0 0.0
        %5229 = vmatprep.subr.mxu0 0.0
        %5230 = vmatpush2.msra.mxu0 0.0
        %5231 = vmatprep.subr.mxu0 0.0
        %5232 = vmatpush2.msra.mxu0 0.0
        %5233 = vmatprep.subr.mxu0 0.0
        %5234 = vmatpush2.msra.mxu0 0.0
        %5235 = vmatprep.subr.mxu0 0.0
        %5236 = vmatpush2.msra.mxu0 0.0
        %5237 = vmatprep.subr.mxu0 0.0
        %5238 = vmatpush2.msra.mxu0 0.0
        %5239 = vmatprep.subr.mxu0 0.0
        %5240 = vmatpush2.msra.mxu0 0.0
        %5241 = vmatprep.subr.mxu0 0.0
        %5242 = vmatpush2.msra.mxu0 0.0
        %5243 = vmatprep.subr.mxu0 0.0
        %5244 = vmatpush2.msra.mxu0 0.0
        %5245 = vmatprep.subr.mxu0 0.0
        %5246 = vmatpush2.msra.mxu0 0.0
        %5247 = vmatprep.subr.mxu0 0.0
        %5248 = vmatpush2.msra.mxu0 0.0
        %5249 = vmatprep.mubr.f32.mxu0 0.0
        %5250 = vmatmul.mubr.f32.gmra.mxu0 %v5115
        %v5251 = vpop.f32.mrf.mxu0
        %v5252 = vadd.f32 0.0, %v5251
        %v5253 = vpop.f32.mrf.mxu0
        %5254 = vdwg.mxu0
        %5255 = vmatprep.subr.mxu0 0.0
        %5256 = vmatpush1.msra.mxu0 %v5078
        %5257 = vmatprep.subr.mxu0 0.0
        %5258 = vmatpush1.msra.mxu0 %v5077
        %5259 = vmatprep.subr.mxu0 0.0
        %5260 = vmatpush1.msra.mxu0 %v5076
        %5261 = vmatprep.subr.mxu0 0.0
        %5262 = vmatpush1.msra.mxu0 %v5075
        %5263 = vmatprep.subr.mxu0 0.0
        %5264 = vmatpush1.msra.mxu0 %v5074
        %5265 = vmatprep.subr.mxu0 0.0
        %5266 = vmatpush1.msra.mxu0 %v5073
        %5267 = vmatprep.subr.mxu0 0.0
        %5268 = vmatpush1.msra.mxu0 %v5072
        %5269 = vmatprep.subr.mxu0 0.0
        %5270 = vmatpush1.msra.mxu0 %v5071
        %5271 = vmatprep.subr.mxu0 0.0
        %5272 = vmatpush1.msra.mxu0 %v5070
        %5273 = vmatprep.subr.mxu0 0.0
        %5274 = vmatpush1.msra.mxu0 %v5069
        %5275 = vmatprep.subr.mxu0 0.0
        %5276 = vmatpush1.msra.mxu0 %v5068
        %5277 = vmatprep.subr.mxu0 0.0
        %5278 = vmatpush1.msra.mxu0 %v5067
        %5279 = vmatprep.subr.mxu0 0.0
        %5280 = vmatpush1.msra.mxu0 %v5066
        %5281 = vmatprep.subr.mxu0 0.0
        %5282 = vmatpush1.msra.mxu0 %v5065
        %5283 = vmatprep.subr.mxu0 0.0
        %5284 = vmatpush1.msra.mxu0 %v5064
        %5285 = vmatprep.subr.mxu0 0.0
        %5286 = vmatpush1.msra.mxu0 %v5063
        %5287 = vmatprep.subr.mxu0 0.0
        %5288 = vmatpush2.msra.mxu0 0.0
        %5289 = vmatprep.subr.mxu0 0.0
        %5290 = vmatpush2.msra.mxu0 0.0
        %5291 = vmatprep.subr.mxu0 0.0
        %5292 = vmatpush2.msra.mxu0 0.0
        %5293 = vmatprep.subr.mxu0 0.0
        %5294 = vmatpush2.msra.mxu0 0.0
        %5295 = vmatprep.subr.mxu0 0.0
        %5296 = vmatpush2.msra.mxu0 0.0
        %5297 = vmatprep.subr.mxu0 0.0
        %5298 = vmatpush2.msra.mxu0 0.0
        %5299 = vmatprep.subr.mxu0 0.0
        %5300 = vmatpush2.msra.mxu0 0.0
        %5301 = vmatprep.subr.mxu0 0.0
        %5302 = vmatpush2.msra.mxu0 0.0
        %5303 = vmatprep.subr.mxu0 0.0
        %5304 = vmatpush2.msra.mxu0 0.0
        %5305 = vmatprep.subr.mxu0 0.0
        %5306 = vmatpush2.msra.mxu0 0.0
        %5307 = vmatprep.subr.mxu0 0.0
        %5308 = vmatpush2.msra.mxu0 0.0
        %5309 = vmatprep.subr.mxu0 0.0
        %5310 = vmatpush2.msra.mxu0 0.0
        %5311 = vmatprep.subr.mxu0 0.0
        %5312 = vmatpush2.msra.mxu0 0.0
        %5313 = vmatprep.subr.mxu0 0.0
        %5314 = vmatpush2.msra.mxu0 0.0
        %5315 = vmatprep.subr.mxu0 0.0
        %5316 = vmatpush2.msra.mxu0 0.0
        %5317 = vmatprep.subr.mxu0 0.0
        %5318 = vmatpush2.msra.mxu0 0.0
        %5319 = vmatprep.mubr.f32.mxu0 0.0
        %5320 = vmatmul.mubr.f32.gmra.mxu0 %v5184
        %v5321 = vpop.f32.mrf.mxu0
        %v5322 = vadd.f32 0.0, %v5321
        %v5323 = vpop.f32.mrf.mxu0
        %5324 = vdwg.mxu0
        %v5325 = vrcp.pop 1024.0
        %v5326 = vmul.f32 %v5252, %v5325
        %v5327 = vmul.f32 %v5322, %v5325
        %v5328 = vmul.f32 %v5326, %v5326
        %v5329 = vsub.f32 %v5327, %v5328
        %v5330 = vmax.f32 %v5329, 0.0
        %v5331 = vadd.f32 %v5330, 1e-06
        %v5332 = vrsqrt.pop %v5331
        %v5334 = vsel %vm1288, %v5326, 0
        %v5337 = vsel %vm1288, %v5063, 0
        %v5340 = vsel %vm1288, %v5064, 0
        %v5343 = vsel %vm1288, %v5065, 0
        %v5346 = vsel %vm1288, %v5066, 0
        %v5349 = vsel %vm1288, %v5067, 0
        %v5352 = vsel %vm1288, %v5068, 0
        %v5355 = vsel %vm1288, %v5069, 0
        %v5358 = vsel %vm1288, %v5070, 0
        %v5361 = vsel %vm1288, %v5071, 0
        %v5364 = vsel %vm1288, %v5072, 0
        %v5367 = vsel %vm1288, %v5073, 0
        %v5370 = vsel %vm1288, %v5074, 0
        %v5373 = vsel %vm1288, %v5075, 0
        %v5376 = vsel %vm1288, %v5076, 0
        %v5379 = vsel %vm1288, %v5077, 0
        %v5382 = vsel %vm1288, %v5078, 0
        %5384 = vmatprep.subr.mxu0 0.0
        %5385 = vmatpush1.xpose.msra.mxu0 %v5382
        %5386 = vmatprep.subr.mxu0 0.0
        %5387 = vmatpush1.xpose.msra.mxu0 %v5379
        %5388 = vmatprep.subr.mxu0 0.0
        %5389 = vmatpush1.xpose.msra.mxu0 %v5376
        %5390 = vmatprep.subr.mxu0 0.0
        %5391 = vmatpush1.xpose.msra.mxu0 %v5373
        %5392 = vmatprep.subr.mxu0 0.0
        %5393 = vmatpush1.xpose.msra.mxu0 %v5370
        %5394 = vmatprep.subr.mxu0 0.0
        %5395 = vmatpush1.xpose.msra.mxu0 %v5367
        %5396 = vmatprep.subr.mxu0 0.0
        %5397 = vmatpush1.xpose.msra.mxu0 %v5364
        %5398 = vmatprep.subr.mxu0 0.0
        %5399 = vmatpush1.xpose.msra.mxu0 %v5361
        %5400 = vmatprep.subr.mxu0 0.0
        %5401 = vmatpush1.xpose.msra.mxu0 %v5358
        %5402 = vmatprep.subr.mxu0 0.0
        %5403 = vmatpush1.xpose.msra.mxu0 %v5355
        %5404 = vmatprep.subr.mxu0 0.0
        %5405 = vmatpush1.xpose.msra.mxu0 %v5352
        %5406 = vmatprep.subr.mxu0 0.0
        %5407 = vmatpush1.xpose.msra.mxu0 %v5349
        %5408 = vmatprep.subr.mxu0 0.0
        %5409 = vmatpush1.xpose.msra.mxu0 %v5346
        %5410 = vmatprep.subr.mxu0 0.0
        %5411 = vmatpush1.xpose.msra.mxu0 %v5343
        %5412 = vmatprep.subr.mxu0 0.0
        %5413 = vmatpush1.xpose.msra.mxu0 %v5340
        %5414 = vmatprep.subr.mxu0 0.0
        %5415 = vmatpush1.xpose.msra.mxu0 %v5337
        %5416 = vmatprep.subr.mxu0 0.0
        %5417 = vmatpush2.xpose.msra.mxu0 0.0
        %5418 = vmatprep.subr.mxu0 0.0
        %5419 = vmatpush2.xpose.msra.mxu0 0.0
        %5420 = vmatprep.subr.mxu0 0.0
        %5421 = vmatpush2.xpose.msra.mxu0 0.0
        %5422 = vmatprep.subr.mxu0 0.0
        %5423 = vmatpush2.xpose.msra.mxu0 0.0
        %5424 = vmatprep.subr.mxu0 0.0
        %5425 = vmatpush2.xpose.msra.mxu0 0.0
        %5426 = vmatprep.subr.mxu0 0.0
        %5427 = vmatpush2.xpose.msra.mxu0 0.0
        %5428 = vmatprep.subr.mxu0 0.0
        %5429 = vmatpush2.xpose.msra.mxu0 0.0
        %5430 = vmatprep.subr.mxu0 0.0
        %5431 = vmatpush2.xpose.msra.mxu0 0.0
        %5432 = vmatprep.subr.mxu0 0.0
        %5433 = vmatpush2.xpose.msra.mxu0 0.0
        %5434 = vmatprep.subr.mxu0 0.0
        %5435 = vmatpush2.xpose.msra.mxu0 0.0
        %5436 = vmatprep.subr.mxu0 0.0
        %5437 = vmatpush2.xpose.msra.mxu0 0.0
        %5438 = vmatprep.subr.mxu0 0.0
        %5439 = vmatpush2.xpose.msra.mxu0 0.0
        %5440 = vmatprep.subr.mxu0 0.0
        %5441 = vmatpush2.xpose.msra.mxu0 0.0
        %5442 = vmatprep.subr.mxu0 0.0
        %5443 = vmatpush2.xpose.msra.mxu0 0.0
        %5444 = vmatprep.subr.mxu0 0.0
        %5445 = vmatpush2.xpose.msra.mxu0 0.0
        %5446 = vmatprep.subr.mxu0 0.0
        %5447 = vmatpush2.xpose.msra.mxu0 0.0
        %5448 = vmatprep.mubr.f32.mxu0 0.0
        %5449 = vmatmul.mubr.f32.gmra.mxu0 %v5334
        %v5450 = vpop.f32.mrf.mxu0
        %v5451 = vadd.f32 0.0, %v5450
        %v5452 = vpop.f32.mrf.mxu0
        %5453 = vdwg.mxu0
        %v5455 = vsel %vm1288, %v5332, 0
        %5457 = vmatprep.subr.mxu0 0.0
        %5458 = vmatpush1.xpose.msra.mxu0 %v5382
        %5459 = vmatprep.subr.mxu0 0.0
        %5460 = vmatpush1.xpose.msra.mxu0 %v5379
        %5461 = vmatprep.subr.mxu0 0.0
        %5462 = vmatpush1.xpose.msra.mxu0 %v5376
        %5463 = vmatprep.subr.mxu0 0.0
        %5464 = vmatpush1.xpose.msra.mxu0 %v5373
        %5465 = vmatprep.subr.mxu0 0.0
        %5466 = vmatpush1.xpose.msra.mxu0 %v5370
        %5467 = vmatprep.subr.mxu0 0.0
        %5468 = vmatpush1.xpose.msra.mxu0 %v5367
        %5469 = vmatprep.subr.mxu0 0.0
        %5470 = vmatpush1.xpose.msra.mxu0 %v5364
        %5471 = vmatprep.subr.mxu0 0.0
        %5472 = vmatpush1.xpose.msra.mxu0 %v5361
        %5473 = vmatprep.subr.mxu0 0.0
        %5474 = vmatpush1.xpose.msra.mxu0 %v5358
        %5475 = vmatprep.subr.mxu0 0.0
        %5476 = vmatpush1.xpose.msra.mxu0 %v5355
        %5477 = vmatprep.subr.mxu0 0.0
        %5478 = vmatpush1.xpose.msra.mxu0 %v5352
        %5479 = vmatprep.subr.mxu0 0.0
        %5480 = vmatpush1.xpose.msra.mxu0 %v5349
        %5481 = vmatprep.subr.mxu0 0.0
        %5482 = vmatpush1.xpose.msra.mxu0 %v5346
        %5483 = vmatprep.subr.mxu0 0.0
        %5484 = vmatpush1.xpose.msra.mxu0 %v5343
        %5485 = vmatprep.subr.mxu0 0.0
        %5486 = vmatpush1.xpose.msra.mxu0 %v5340
        %5487 = vmatprep.subr.mxu0 0.0
        %5488 = vmatpush1.xpose.msra.mxu0 %v5337
        %5489 = vmatprep.subr.mxu0 0.0
        %5490 = vmatpush2.xpose.msra.mxu0 0.0
        %5491 = vmatprep.subr.mxu0 0.0
        %5492 = vmatpush2.xpose.msra.mxu0 0.0
        %5493 = vmatprep.subr.mxu0 0.0
        %5494 = vmatpush2.xpose.msra.mxu0 0.0
        %5495 = vmatprep.subr.mxu0 0.0
        %5496 = vmatpush2.xpose.msra.mxu0 0.0
        %5497 = vmatprep.subr.mxu0 0.0
        %5498 = vmatpush2.xpose.msra.mxu0 0.0
        %5499 = vmatprep.subr.mxu0 0.0
        %5500 = vmatpush2.xpose.msra.mxu0 0.0
        %5501 = vmatprep.subr.mxu0 0.0
        %5502 = vmatpush2.xpose.msra.mxu0 0.0
        %5503 = vmatprep.subr.mxu0 0.0
        %5504 = vmatpush2.xpose.msra.mxu0 0.0
        %5505 = vmatprep.subr.mxu0 0.0
        %5506 = vmatpush2.xpose.msra.mxu0 0.0
        %5507 = vmatprep.subr.mxu0 0.0
        %5508 = vmatpush2.xpose.msra.mxu0 0.0
        %5509 = vmatprep.subr.mxu0 0.0
        %5510 = vmatpush2.xpose.msra.mxu0 0.0
        %5511 = vmatprep.subr.mxu0 0.0
        %5512 = vmatpush2.xpose.msra.mxu0 0.0
        %5513 = vmatprep.subr.mxu0 0.0
        %5514 = vmatpush2.xpose.msra.mxu0 0.0
        %5515 = vmatprep.subr.mxu0 0.0
        %5516 = vmatpush2.xpose.msra.mxu0 0.0
        %5517 = vmatprep.subr.mxu0 0.0
        %5518 = vmatpush2.xpose.msra.mxu0 0.0
        %5519 = vmatprep.subr.mxu0 0.0
        %5520 = vmatpush2.xpose.msra.mxu0 0.0
        %5521 = vmatprep.mubr.f32.mxu0 0.0
        %5522 = vmatmul.mubr.f32.gmra.mxu0 %v5455
        %v5523 = vpop.f32.mrf.mxu0
        %v5524 = vadd.f32 0.0, %v5523
        %v5525 = vpop.f32.mrf.mxu0
        %5526 = vdwg.mxu0
        %v5527 = vlaneseq
        %v5528 = vshrl.u32 %v5527, 7
        %v5529 = vsub.s32 0, %v5528
        %v5530 = vrot.slane %v5451, %v5529
        %v5531 = vsub.f32 %v5029, %v5530
        %v5532 = vsub.f32 %v5030, %v5530
        %v5533 = vsub.f32 %v5031, %v5530
        %v5534 = vsub.f32 %v5032, %v5530
        %v5535 = vsub.f32 %v5033, %v5530
        %v5536 = vsub.f32 %v5034, %v5530
        %v5537 = vsub.f32 %v5035, %v5530
        %v5538 = vsub.f32 %v5036, %v5530
        %v5539 = vsub.f32 %v5037, %v5530
        %v5540 = vsub.f32 %v5038, %v5530
        %v5541 = vsub.f32 %v5039, %v5530
        %v5542 = vsub.f32 %v5040, %v5530
        %v5543 = vsub.f32 %v5041, %v5530
        %v5544 = vsub.f32 %v5042, %v5530
        %v5545 = vsub.f32 %v5043, %v5530
        %v5546 = vsub.f32 %v5044, %v5530
        %v5547 = vsub.f32 %v5045, %v5530
        %v5548 = vsub.f32 %v5046, %v5530
        %v5549 = vsub.f32 %v5047, %v5530
        %v5550 = vsub.f32 %v5048, %v5530
        %v5551 = vsub.f32 %v5049, %v5530
        %v5552 = vsub.f32 %v5050, %v5530
        %v5553 = vsub.f32 %v5051, %v5530
        %v5554 = vsub.f32 %v5052, %v5530
        %v5555 = vsub.f32 %v5053, %v5530
        %v5556 = vsub.f32 %v5054, %v5530
        %v5557 = vsub.f32 %v5055, %v5530
        %v5558 = vsub.f32 %v5056, %v5530
        %v5559 = vsub.f32 %v5057, %v5530
        %v5560 = vsub.f32 %v5058, %v5530
        %v5561 = vsub.f32 %v5059, %v5530
        %v5562 = vsub.f32 %v5060, %v5530
        %v5563 = vlaneseq
        %v5564 = vshrl.u32 %v5563, 7
        %v5565 = vsub.s32 0, %v5564
        %v5566 = vrot.slane %v5524, %v5565
        %v5567 = vmul.f32 %v5531, %v5566
        %v5568 = vmul.f32 %v5532, %v5566
        %v5569 = vmul.f32 %v5533, %v5566
        %v5570 = vmul.f32 %v5534, %v5566
        %v5571 = vmul.f32 %v5535, %v5566
        %v5572 = vmul.f32 %v5536, %v5566
        %v5573 = vmul.f32 %v5537, %v5566
        %v5574 = vmul.f32 %v5538, %v5566
        %v5575 = vmul.f32 %v5539, %v5566
        %v5576 = vmul.f32 %v5540, %v5566
        %v5577 = vmul.f32 %v5541, %v5566
        %v5578 = vmul.f32 %v5542, %v5566
        %v5579 = vmul.f32 %v5543, %v5566
        %v5580 = vmul.f32 %v5544, %v5566
        %v5581 = vmul.f32 %v5545, %v5566
        %v5582 = vmul.f32 %v5546, %v5566
        %v5583 = vmul.f32 %v5547, %v5566
        %v5584 = vmul.f32 %v5548, %v5566
        %v5585 = vmul.f32 %v5549, %v5566
        %v5586 = vmul.f32 %v5550, %v5566
        %v5587 = vmul.f32 %v5551, %v5566
        %v5588 = vmul.f32 %v5552, %v5566
        %v5589 = vmul.f32 %v5553, %v5566
        %v5590 = vmul.f32 %v5554, %v5566
        %v5591 = vmul.f32 %v5555, %v5566
        %v5592 = vmul.f32 %v5556, %v5566
        %v5593 = vmul.f32 %v5557, %v5566
        %v5594 = vmul.f32 %v5558, %v5566
        %v5595 = vmul.f32 %v5559, %v5566
        %v5596 = vmul.f32 %v5560, %v5566
        %v5597 = vmul.f32 %v5561, %v5566
        %v5598 = vmul.f32 %v5562, %v5566
        %v5600 = vlaneseq
        %v5601 = vshrl.u32 %v5600, 7
        %v5602 = vsub.s32 0, %v5601
        %v5603 = vrot.slane %v5061, %v5602
        %v5605 = vmul.f32 %v5567, %v5603
        %v5606 = vmul.f32 %v5568, %v5603
        %v5607 = vmul.f32 %v5569, %v5603
        %v5608 = vmul.f32 %v5570, %v5603
        %v5609 = vmul.f32 %v5571, %v5603
        %v5610 = vmul.f32 %v5572, %v5603
        %v5611 = vmul.f32 %v5573, %v5603
        %v5612 = vmul.f32 %v5574, %v5603
        %v5613 = vmul.f32 %v5575, %v5603
        %v5614 = vmul.f32 %v5576, %v5603
        %v5615 = vmul.f32 %v5577, %v5603
        %v5616 = vmul.f32 %v5578, %v5603
        %v5617 = vmul.f32 %v5579, %v5603
        %v5618 = vmul.f32 %v5580, %v5603
        %v5619 = vmul.f32 %v5581, %v5603
        %v5620 = vmul.f32 %v5582, %v5603
        %v5621 = vmul.f32 %v5583, %v5603
        %v5622 = vmul.f32 %v5584, %v5603
        %v5623 = vmul.f32 %v5585, %v5603
        %v5624 = vmul.f32 %v5586, %v5603
        %v5625 = vmul.f32 %v5587, %v5603
        %v5626 = vmul.f32 %v5588, %v5603
        %v5627 = vmul.f32 %v5589, %v5603
        %v5628 = vmul.f32 %v5590, %v5603
        %v5629 = vmul.f32 %v5591, %v5603
        %v5630 = vmul.f32 %v5592, %v5603
        %v5631 = vmul.f32 %v5593, %v5603
        %v5632 = vmul.f32 %v5594, %v5603
        %v5633 = vmul.f32 %v5595, %v5603
        %v5634 = vmul.f32 %v5596, %v5603
        %v5635 = vmul.f32 %v5597, %v5603
        %v5636 = vmul.f32 %v5598, %v5603
        %v5638 = vlaneseq
        %v5639 = vshrl.u32 %v5638, 7
        %v5640 = vsub.s32 0, %v5639
        %v5641 = vrot.slane %v5062, %v5640
        %v5643 = vadd.f32 %v5605, %v5641
        %v5644 = vadd.f32 %v5606, %v5641
        %v5645 = vadd.f32 %v5607, %v5641
        %v5646 = vadd.f32 %v5608, %v5641
        %v5647 = vadd.f32 %v5609, %v5641
        %v5648 = vadd.f32 %v5610, %v5641
        %v5649 = vadd.f32 %v5611, %v5641
        %v5650 = vadd.f32 %v5612, %v5641
        %v5651 = vadd.f32 %v5613, %v5641
        %v5652 = vadd.f32 %v5614, %v5641
        %v5653 = vadd.f32 %v5615, %v5641
        %v5654 = vadd.f32 %v5616, %v5641
        %v5655 = vadd.f32 %v5617, %v5641
        %v5656 = vadd.f32 %v5618, %v5641
        %v5657 = vadd.f32 %v5619, %v5641
        %v5658 = vadd.f32 %v5620, %v5641
        %v5659 = vadd.f32 %v5621, %v5641
        %v5660 = vadd.f32 %v5622, %v5641
        %v5661 = vadd.f32 %v5623, %v5641
        %v5662 = vadd.f32 %v5624, %v5641
        %v5663 = vadd.f32 %v5625, %v5641
        %v5664 = vadd.f32 %v5626, %v5641
        %v5665 = vadd.f32 %v5627, %v5641
        %v5666 = vadd.f32 %v5628, %v5641
        %v5667 = vadd.f32 %v5629, %v5641
        %v5668 = vadd.f32 %v5630, %v5641
        %v5669 = vadd.f32 %v5631, %v5641
        %v5670 = vadd.f32 %v5632, %v5641
        %v5671 = vadd.f32 %v5633, %v5641
        %v5672 = vadd.f32 %v5634, %v5641
        %v5673 = vadd.f32 %v5635, %v5641
        %v5674 = vadd.f32 %v5636, %v5641
        %v5675 = vxor.u32 %v5643, 2147483648
        %v5676 = vxor.u32 %v5644, 2147483648
        %v5677 = vxor.u32 %v5645, 2147483648
        %v5678 = vxor.u32 %v5646, 2147483648
        %v5679 = vxor.u32 %v5647, 2147483648
        %v5680 = vxor.u32 %v5648, 2147483648
        %v5681 = vxor.u32 %v5649, 2147483648
        %v5682 = vxor.u32 %v5650, 2147483648
        %v5683 = vxor.u32 %v5651, 2147483648
        %v5684 = vxor.u32 %v5652, 2147483648
        %v5685 = vxor.u32 %v5653, 2147483648
        %v5686 = vxor.u32 %v5654, 2147483648
        %v5687 = vxor.u32 %v5655, 2147483648
        %v5688 = vxor.u32 %v5656, 2147483648
        %v5689 = vxor.u32 %v5657, 2147483648
        %v5690 = vxor.u32 %v5658, 2147483648
        %v5691 = vxor.u32 %v5659, 2147483648
        %v5692 = vxor.u32 %v5660, 2147483648
        %v5693 = vxor.u32 %v5661, 2147483648
        %v5694 = vxor.u32 %v5662, 2147483648
        %v5695 = vxor.u32 %v5663, 2147483648
        %v5696 = vxor.u32 %v5664, 2147483648
        %v5697 = vxor.u32 %v5665, 2147483648
        %v5698 = vxor.u32 %v5666, 2147483648
        %v5699 = vxor.u32 %v5667, 2147483648
        %v5700 = vxor.u32 %v5668, 2147483648
        %v5701 = vxor.u32 %v5669, 2147483648
        %v5702 = vxor.u32 %v5670, 2147483648
        %v5703 = vxor.u32 %v5671, 2147483648
        %v5704 = vxor.u32 %v5672, 2147483648
        %v5705 = vxor.u32 %v5673, 2147483648
        %v5706 = vxor.u32 %v5674, 2147483648
        %v5707 = vmul.f32 %v5675, 1.442695
        %v5708 = vpow.pop %v5707
        %v5709 = vmul.f32 %v5676, 1.442695
        %v5710 = vpow.pop %v5709
        %v5711 = vmul.f32 %v5677, 1.442695
        %v5712 = vpow.pop %v5711
        %v5713 = vmul.f32 %v5678, 1.442695
        %v5714 = vpow.pop %v5713
        %v5715 = vmul.f32 %v5679, 1.442695
        %v5716 = vpow.pop %v5715
        %v5717 = vmul.f32 %v5680, 1.442695
        %v5718 = vpow.pop %v5717
        %v5719 = vmul.f32 %v5681, 1.442695
        %v5720 = vpow.pop %v5719
        %v5721 = vmul.f32 %v5682, 1.442695
        %v5722 = vpow.pop %v5721
        %v5723 = vmul.f32 %v5683, 1.442695
        %v5724 = vpow.pop %v5723
        %v5725 = vmul.f32 %v5684, 1.442695
        %v5726 = vpow.pop %v5725
        %v5727 = vmul.f32 %v5685, 1.442695
        %v5728 = vpow.pop %v5727
        %v5729 = vmul.f32 %v5686, 1.442695
        %v5730 = vpow.pop %v5729
        %v5731 = vmul.f32 %v5687, 1.442695
        %v5732 = vpow.pop %v5731
        %v5733 = vmul.f32 %v5688, 1.442695
        %v5734 = vpow.pop %v5733
        %v5735 = vmul.f32 %v5689, 1.442695
        %v5736 = vpow.pop %v5735
        %v5737 = vmul.f32 %v5690, 1.442695
        %v5738 = vpow.pop %v5737
        %v5739 = vmul.f32 %v5691, 1.442695
        %v5740 = vpow.pop %v5739
        %v5741 = vmul.f32 %v5692, 1.442695
        %v5742 = vpow.pop %v5741
        %v5743 = vmul.f32 %v5693, 1.442695
        %v5744 = vpow.pop %v5743
        %v5745 = vmul.f32 %v5694, 1.442695
        %v5746 = vpow.pop %v5745
        %v5747 = vmul.f32 %v5695, 1.442695
        %v5748 = vpow.pop %v5747
        %v5749 = vmul.f32 %v5696, 1.442695
        %v5750 = vpow.pop %v5749
        %v5751 = vmul.f32 %v5697, 1.442695
        %v5752 = vpow.pop %v5751
        %v5753 = vmul.f32 %v5698, 1.442695
        %v5754 = vpow.pop %v5753
        %v5755 = vmul.f32 %v5699, 1.442695
        %v5756 = vpow.pop %v5755
        %v5757 = vmul.f32 %v5700, 1.442695
        %v5758 = vpow.pop %v5757
        %v5759 = vmul.f32 %v5701, 1.442695
        %v5760 = vpow.pop %v5759
        %v5761 = vmul.f32 %v5702, 1.442695
        %v5762 = vpow.pop %v5761
        %v5763 = vmul.f32 %v5703, 1.442695
        %v5764 = vpow.pop %v5763
        %v5765 = vmul.f32 %v5704, 1.442695
        %v5766 = vpow.pop %v5765
        %v5767 = vmul.f32 %v5705, 1.442695
        %v5768 = vpow.pop %v5767
        %v5769 = vmul.f32 %v5706, 1.442695
        %v5770 = vpow.pop %v5769
        %v5771 = vadd.f32 %v5708, 1.0
        %v5772 = vadd.f32 %v5710, 1.0
        %v5773 = vadd.f32 %v5712, 1.0
        %v5774 = vadd.f32 %v5714, 1.0
        %v5775 = vadd.f32 %v5716, 1.0
        %v5776 = vadd.f32 %v5718, 1.0
        %v5777 = vadd.f32 %v5720, 1.0
        %v5778 = vadd.f32 %v5722, 1.0
        %v5779 = vadd.f32 %v5724, 1.0
        %v5780 = vadd.f32 %v5726, 1.0
        %v5781 = vadd.f32 %v5728, 1.0
        %v5782 = vadd.f32 %v5730, 1.0
        %v5783 = vadd.f32 %v5732, 1.0
        %v5784 = vadd.f32 %v5734, 1.0
        %v5785 = vadd.f32 %v5736, 1.0
        %v5786 = vadd.f32 %v5738, 1.0
        %v5787 = vadd.f32 %v5740, 1.0
        %v5788 = vadd.f32 %v5742, 1.0
        %v5789 = vadd.f32 %v5744, 1.0
        %v5790 = vadd.f32 %v5746, 1.0
        %v5791 = vadd.f32 %v5748, 1.0
        %v5792 = vadd.f32 %v5750, 1.0
        %v5793 = vadd.f32 %v5752, 1.0
        %v5794 = vadd.f32 %v5754, 1.0
        %v5795 = vadd.f32 %v5756, 1.0
        %v5796 = vadd.f32 %v5758, 1.0
        %v5797 = vadd.f32 %v5760, 1.0
        %v5798 = vadd.f32 %v5762, 1.0
        %v5799 = vadd.f32 %v5764, 1.0
        %v5800 = vadd.f32 %v5766, 1.0
        %v5801 = vadd.f32 %v5768, 1.0
        %v5802 = vadd.f32 %v5770, 1.0
        %v5803 = vrcp.pop %v5771
        %v5804 = vmul.f32 1.0, %v5803
        %v5805 = vrcp.pop %v5772
        %v5806 = vmul.f32 1.0, %v5805
        %v5807 = vrcp.pop %v5773
        %v5808 = vmul.f32 1.0, %v5807
        %v5809 = vrcp.pop %v5774
        %v5810 = vmul.f32 1.0, %v5809
        %v5811 = vrcp.pop %v5775
        %v5812 = vmul.f32 1.0, %v5811
        %v5813 = vrcp.pop %v5776
        %v5814 = vmul.f32 1.0, %v5813
        %v5815 = vrcp.pop %v5777
        %v5816 = vmul.f32 1.0, %v5815
        %v5817 = vrcp.pop %v5778
        %v5818 = vmul.f32 1.0, %v5817
        %v5819 = vrcp.pop %v5779
        %v5820 = vmul.f32 1.0, %v5819
        %v5821 = vrcp.pop %v5780
        %v5822 = vmul.f32 1.0, %v5821
        %v5823 = vrcp.pop %v5781
        %v5824 = vmul.f32 1.0, %v5823
        %v5825 = vrcp.pop %v5782
        %v5826 = vmul.f32 1.0, %v5825
        %v5827 = vrcp.pop %v5783
        %v5828 = vmul.f32 1.0, %v5827
        %v5829 = vrcp.pop %v5784
        %v5830 = vmul.f32 1.0, %v5829
        %v5831 = vrcp.pop %v5785
        %v5832 = vmul.f32 1.0, %v5831
        %v5833 = vrcp.pop %v5786
        %v5834 = vmul.f32 1.0, %v5833
        %v5835 = vrcp.pop %v5787
        %v5836 = vmul.f32 1.0, %v5835
        %v5837 = vrcp.pop %v5788
        %v5838 = vmul.f32 1.0, %v5837
        %v5839 = vrcp.pop %v5789
        %v5840 = vmul.f32 1.0, %v5839
        %v5841 = vrcp.pop %v5790
        %v5842 = vmul.f32 1.0, %v5841
        %v5843 = vrcp.pop %v5791
        %v5844 = vmul.f32 1.0, %v5843
        %v5845 = vrcp.pop %v5792
        %v5846 = vmul.f32 1.0, %v5845
        %v5847 = vrcp.pop %v5793
        %v5848 = vmul.f32 1.0, %v5847
        %v5849 = vrcp.pop %v5794
        %v5850 = vmul.f32 1.0, %v5849
        %v5851 = vrcp.pop %v5795
        %v5852 = vmul.f32 1.0, %v5851
        %v5853 = vrcp.pop %v5796
        %v5854 = vmul.f32 1.0, %v5853
        %v5855 = vrcp.pop %v5797
        %v5856 = vmul.f32 1.0, %v5855
        %v5857 = vrcp.pop %v5798
        %v5858 = vmul.f32 1.0, %v5857
        %v5859 = vrcp.pop %v5799
        %v5860 = vmul.f32 1.0, %v5859
        %v5861 = vrcp.pop %v5800
        %v5862 = vmul.f32 1.0, %v5861
        %v5863 = vrcp.pop %v5801
        %v5864 = vmul.f32 1.0, %v5863
        %v5865 = vrcp.pop %v5802
        %v5866 = vmul.f32 1.0, %v5865
        %v5867 = vmul.f32 %v5643, %v5804
        %v5868 = vmul.f32 %v5644, %v5806
        %v5869 = vmul.f32 %v5645, %v5808
        %v5870 = vmul.f32 %v5646, %v5810
        %v5871 = vmul.f32 %v5647, %v5812
        %v5872 = vmul.f32 %v5648, %v5814
        %v5873 = vmul.f32 %v5649, %v5816
        %v5874 = vmul.f32 %v5650, %v5818
        %v5875 = vmul.f32 %v5651, %v5820
        %v5876 = vmul.f32 %v5652, %v5822
        %v5877 = vmul.f32 %v5653, %v5824
        %v5878 = vmul.f32 %v5654, %v5826
        %v5879 = vmul.f32 %v5655, %v5828
        %v5880 = vmul.f32 %v5656, %v5830
        %v5881 = vmul.f32 %v5657, %v5832
        %v5882 = vmul.f32 %v5658, %v5834
        %v5883 = vmul.f32 %v5659, %v5836
        %v5884 = vmul.f32 %v5660, %v5838
        %v5885 = vmul.f32 %v5661, %v5840
        %v5886 = vmul.f32 %v5662, %v5842
        %v5887 = vmul.f32 %v5663, %v5844
        %v5888 = vmul.f32 %v5664, %v5846
        %v5889 = vmul.f32 %v5665, %v5848
        %v5890 = vmul.f32 %v5666, %v5850
        %v5891 = vmul.f32 %v5667, %v5852
        %v5892 = vmul.f32 %v5668, %v5854
        %v5893 = vmul.f32 %v5669, %v5856
        %v5894 = vmul.f32 %v5670, %v5858
        %v5895 = vmul.f32 %v5671, %v5860
        %v5896 = vmul.f32 %v5672, %v5862
        %v5897 = vmul.f32 %v5673, %v5864
        %v5898 = vmul.f32 %v5674, %v5866
        %v5899 = vld [vmem:[%s8] sm:$0x1]
        %5900 = vst [vmem:[#allocation3] sm:$0xff] 0.0
        %5901 = vst [vmem:[#allocation3 + $0x8] sm:$0xff] 0.0
        %5902 = vst [vmem:[#allocation3 + $0x10] sm:$0xff] 0.0
        %5903 = vst [vmem:[#allocation3 + $0x118] sm:$0xff] 0.0
        %5904 = vst [vmem:[#allocation3 + $0x120] sm:$0xff] 0.0
        %5905 = vst [vmem:[#allocation3 + $0x128] sm:$0xff] 0.0
        %5906 = vst [vmem:[#allocation3 + $0x18] sm:$0xff] %v5867
        %5907 = vst [vmem:[#allocation3 + $0x20] sm:$0xff] %v5868
        %5908 = vst [vmem:[#allocation3 + $0x28] sm:$0xff] %v5869
        %5909 = vst [vmem:[#allocation3 + $0x30] sm:$0xff] %v5870
        %5910 = vst [vmem:[#allocation3 + $0x38] sm:$0xff] %v5871
        %5911 = vst [vmem:[#allocation3 + $0x40] sm:$0xff] %v5872
        %5912 = vst [vmem:[#allocation3 + $0x48] sm:$0xff] %v5873
        %5913 = vst [vmem:[#allocation3 + $0x50] sm:$0xff] %v5874
        %5914 = vst [vmem:[#allocation3 + $0x58] sm:$0xff] %v5875
        %5915 = vst [vmem:[#allocation3 + $0x60] sm:$0xff] %v5876
        %5916 = vst [vmem:[#allocation3 + $0x68] sm:$0xff] %v5877
        %5917 = vst [vmem:[#allocation3 + $0x70] sm:$0xff] %v5878
        %5918 = vst [vmem:[#allocation3 + $0x78] sm:$0xff] %v5879
        %5919 = vst [vmem:[#allocation3 + $0x80] sm:$0xff] %v5880
        %5920 = vst [vmem:[#allocation3 + $0x88] sm:$0xff] %v5881
        %5921 = vst [vmem:[#allocation3 + $0x90] sm:$0xff] %v5882
        %5922 = vst [vmem:[#allocation3 + $0x98] sm:$0xff] %v5883
        %5923 = vst [vmem:[#allocation3 + $0xa0] sm:$0xff] %v5884
        %5924 = vst [vmem:[#allocation3 + $0xa8] sm:$0xff] %v5885
        %5925 = vst [vmem:[#allocation3 + $0xb0] sm:$0xff] %v5886
        %5926 = vst [vmem:[#allocation3 + $0xb8] sm:$0xff] %v5887
        %5927 = vst [vmem:[#allocation3 + $0xc0] sm:$0xff] %v5888
        %5928 = vst [vmem:[#allocation3 + $0xc8] sm:$0xff] %v5889
        %5929 = vst [vmem:[#allocation3 + $0xd0] sm:$0xff] %v5890
        %5930 = vst [vmem:[#allocation3 + $0xd8] sm:$0xff] %v5891
        %5931 = vst [vmem:[#allocation3 + $0xe0] sm:$0xff] %v5892
        %5932 = vst [vmem:[#allocation3 + $0xe8] sm:$0xff] %v5893
        %5933 = vst [vmem:[#allocation3 + $0xf0] sm:$0xff] %v5894
        %5934 = vst [vmem:[#allocation3 + $0xf8] sm:$0xff] %v5895
        %5935 = vst [vmem:[#allocation3 + $0x100] sm:$0xff] %v5896
        %5936 = vst [vmem:[#allocation3 + $0x108] sm:$0xff] %v5897
        %5937 = vst [vmem:[#allocation3 + $0x110] sm:$0xff] %v5898
        %v5938 = vld [vmem:[#allocation3 + $0x7] sm:$0xff]
        %v5939 = vld [vmem:[#allocation3 + $0xf] sm:$0xff]
        %v5940 = vld [vmem:[#allocation3 + $0x17] sm:$0xff]
        %v5941 = vld [vmem:[#allocation3 + $0x1f] sm:$0xff]
        %v5942 = vld [vmem:[#allocation3 + $0x27] sm:$0xff]
        %v5943 = vld [vmem:[#allocation3 + $0x2f] sm:$0xff]
        %v5944 = vld [vmem:[#allocation3 + $0x37] sm:$0xff]
        %v5945 = vld [vmem:[#allocation3 + $0x3f] sm:$0xff]
        %v5946 = vld [vmem:[#allocation3 + $0x47] sm:$0xff]
        %v5947 = vld [vmem:[#allocation3 + $0x4f] sm:$0xff]
        %v5948 = vld [vmem:[#allocation3 + $0x57] sm:$0xff]
        %v5949 = vld [vmem:[#allocation3 + $0x5f] sm:$0xff]
        %v5950 = vld [vmem:[#allocation3 + $0x67] sm:$0xff]
        %v5951 = vld [vmem:[#allocation3 + $0x6f] sm:$0xff]
        %v5952 = vld [vmem:[#allocation3 + $0x77] sm:$0xff]
        %v5953 = vld [vmem:[#allocation3 + $0x7f] sm:$0xff]
        %v5954 = vld [vmem:[#allocation3 + $0x87] sm:$0xff]
        %v5955 = vld [vmem:[#allocation3 + $0x8f] sm:$0xff]
        %v5956 = vld [vmem:[#allocation3 + $0x97] sm:$0xff]
        %v5957 = vld [vmem:[#allocation3 + $0x9f] sm:$0xff]
        %v5958 = vld [vmem:[#allocation3 + $0xa7] sm:$0xff]
        %v5959 = vld [vmem:[#allocation3 + $0xaf] sm:$0xff]
        %v5960 = vld [vmem:[#allocation3 + $0xb7] sm:$0xff]
        %v5961 = vld [vmem:[#allocation3 + $0xbf] sm:$0xff]
        %v5962 = vld [vmem:[#allocation3 + $0xc7] sm:$0xff]
        %v5963 = vld [vmem:[#allocation3 + $0xcf] sm:$0xff]
        %v5964 = vld [vmem:[#allocation3 + $0xd7] sm:$0xff]
        %v5965 = vld [vmem:[#allocation3 + $0xdf] sm:$0xff]
        %v5966 = vld [vmem:[#allocation3 + $0xe7] sm:$0xff]
        %v5967 = vld [vmem:[#allocation3 + $0xef] sm:$0xff]
        %v5968 = vld [vmem:[#allocation3 + $0xf7] sm:$0xff]
        %v5969 = vld [vmem:[#allocation3 + $0xff] sm:$0xff]
        %v5970 = vsel %vm1934, %v5938, 0.0
        %v5971 = vsel %vm1935, %v5939, 0.0
        %v5972 = vsel %vm1936, %v5940, 0.0
        %v5973 = vsel %vm1937, %v5941, 0.0
        %v5974 = vsel %vm1938, %v5942, 0.0
        %v5975 = vsel %vm1939, %v5943, 0.0
        %v5976 = vsel %vm1940, %v5944, 0.0
        %v5977 = vsel %vm1941, %v5945, 0.0
        %v5978 = vsel %vm1942, %v5946, 0.0
        %v5979 = vsel %vm1943, %v5947, 0.0
        %v5980 = vsel %vm1944, %v5948, 0.0
        %v5981 = vsel %vm1945, %v5949, 0.0
        %v5982 = vsel %vm1946, %v5950, 0.0
        %v5983 = vsel %vm1947, %v5951, 0.0
        %v5984 = vsel %vm1948, %v5952, 0.0
        %v5985 = vsel %vm1949, %v5953, 0.0
        %v5986 = vsel %vm1950, %v5954, 0.0
        %v5987 = vsel %vm1951, %v5955, 0.0
        %v5988 = vsel %vm1952, %v5956, 0.0
        %v5989 = vsel %vm1953, %v5957, 0.0
        %v5990 = vsel %vm1954, %v5958, 0.0
        %v5991 = vsel %vm1955, %v5959, 0.0
        %v5992 = vsel %vm1956, %v5960, 0.0
        %v5993 = vsel %vm1957, %v5961, 0.0
        %v5994 = vsel %vm1958, %v5962, 0.0
        %v5995 = vsel %vm1959, %v5963, 0.0
        %v5996 = vsel %vm1960, %v5964, 0.0
        %v5997 = vsel %vm1961, %v5965, 0.0
        %v5998 = vsel %vm1962, %v5966, 0.0
        %v5999 = vsel %vm1963, %v5967, 0.0
        %v6000 = vsel %vm1964, %v5968, 0.0
        %v6001 = vsel %vm1965, %v5969, 0.0
        %v6002 = vpack.c.bf16 %v5971, %v5970
        %v6003 = vpack.c.bf16 %v5973, %v5972
        %v6004 = vpack.c.bf16 %v5975, %v5974
        %v6005 = vpack.c.bf16 %v5977, %v5976
        %v6006 = vpack.c.bf16 %v5979, %v5978
        %v6007 = vpack.c.bf16 %v5981, %v5980
        %v6008 = vpack.c.bf16 %v5983, %v5982
        %v6009 = vpack.c.bf16 %v5985, %v5984
        %v6010 = vpack.c.bf16 %v5987, %v5986
        %v6011 = vpack.c.bf16 %v5989, %v5988
        %v6012 = vpack.c.bf16 %v5991, %v5990
        %v6013 = vpack.c.bf16 %v5993, %v5992
        %v6014 = vpack.c.bf16 %v5995, %v5994
        %v6015 = vpack.c.bf16 %v5997, %v5996
        %v6016 = vpack.c.bf16 %v5999, %v5998
        %v6017 = vpack.c.bf16 %v6001, %v6000
        %v6018 = vld [vmem:[%s7] sm:$0xf]
        %v6019 = vld [vmem:[%s7 + $0x4] sm:$0xf]
        %v6020 = vld [vmem:[%s7 + $0x8] sm:$0xf]
        %v6021 = vld [vmem:[%s7 + $0xc] sm:$0xf]
        %v6022 = vld [vmem:[%s7 + $0x10] sm:$0xf]
        %v6023 = vld [vmem:[%s7 + $0x14] sm:$0xf]
        %v6024 = vld [vmem:[%s7 + $0x18] sm:$0xf]
        %v6025 = vld [vmem:[%s7 + $0x1c] sm:$0xf]
        %v6026 = vld [vmem:[%s7 + $0x20] sm:$0xf]
        %v6027 = vld [vmem:[%s7 + $0x24] sm:$0xf]
        %v6028 = vld [vmem:[%s7 + $0x28] sm:$0xf]
        %v6029 = vld [vmem:[%s7 + $0x2c] sm:$0xf]
        %v6030 = vld [vmem:[%s7 + $0x30] sm:$0xf]
        %v6031 = vld [vmem:[%s7 + $0x34] sm:$0xf]
        %v6032 = vld [vmem:[%s7 + $0x38] sm:$0xf]
        %v6033 = vld [vmem:[%s7 + $0x3c] sm:$0xf]
        %v6034 = vld [vmem:[#allocation3 + $0x8] sm:$0xff]
        %v6035 = vld [vmem:[#allocation3 + $0x10] sm:$0xff]
        %v6036 = vld [vmem:[#allocation3 + $0x18] sm:$0xff]
        %v6037 = vld [vmem:[#allocation3 + $0x20] sm:$0xff]
        %v6038 = vld [vmem:[#allocation3 + $0x28] sm:$0xff]
        %v6039 = vld [vmem:[#allocation3 + $0x30] sm:$0xff]
        %v6040 = vld [vmem:[#allocation3 + $0x38] sm:$0xff]
        %v6041 = vld [vmem:[#allocation3 + $0x40] sm:$0xff]
        %v6042 = vld [vmem:[#allocation3 + $0x48] sm:$0xff]
        %v6043 = vld [vmem:[#allocation3 + $0x50] sm:$0xff]
        %v6044 = vld [vmem:[#allocation3 + $0x58] sm:$0xff]
        %v6045 = vld [vmem:[#allocation3 + $0x60] sm:$0xff]
        %v6046 = vld [vmem:[#allocation3 + $0x68] sm:$0xff]
        %v6047 = vld [vmem:[#allocation3 + $0x70] sm:$0xff]
        %v6048 = vld [vmem:[#allocation3 + $0x78] sm:$0xff]
        %v6049 = vld [vmem:[#allocation3 + $0x80] sm:$0xff]
        %v6050 = vld [vmem:[#allocation3 + $0x88] sm:$0xff]
        %v6051 = vld [vmem:[#allocation3 + $0x90] sm:$0xff]
        %v6052 = vld [vmem:[#allocation3 + $0x98] sm:$0xff]
        %v6053 = vld [vmem:[#allocation3 + $0xa0] sm:$0xff]
        %v6054 = vld [vmem:[#allocation3 + $0xa8] sm:$0xff]
        %v6055 = vld [vmem:[#allocation3 + $0xb0] sm:$0xff]
        %v6056 = vld [vmem:[#allocation3 + $0xb8] sm:$0xff]
        %v6057 = vld [vmem:[#allocation3 + $0xc0] sm:$0xff]
        %v6058 = vld [vmem:[#allocation3 + $0xc8] sm:$0xff]
        %v6059 = vld [vmem:[#allocation3 + $0xd0] sm:$0xff]
        %v6060 = vld [vmem:[#allocation3 + $0xd8] sm:$0xff]
        %v6061 = vld [vmem:[#allocation3 + $0xe0] sm:$0xff]
        %v6062 = vld [vmem:[#allocation3 + $0xe8] sm:$0xff]
        %v6063 = vld [vmem:[#allocation3 + $0xf0] sm:$0xff]
        %v6064 = vld [vmem:[#allocation3 + $0xf8] sm:$0xff]
        %v6065 = vld [vmem:[#allocation3 + $0x100] sm:$0xff]
        %v6066 = vpack.c.bf16 %v6035, %v6034
        %v6067 = vpack.c.bf16 %v6037, %v6036
        %v6068 = vpack.c.bf16 %v6039, %v6038
        %v6069 = vpack.c.bf16 %v6041, %v6040
        %v6070 = vpack.c.bf16 %v6043, %v6042
        %v6071 = vpack.c.bf16 %v6045, %v6044
        %v6072 = vpack.c.bf16 %v6047, %v6046
        %v6073 = vpack.c.bf16 %v6049, %v6048
        %v6074 = vpack.c.bf16 %v6051, %v6050
        %v6075 = vpack.c.bf16 %v6053, %v6052
        %v6076 = vpack.c.bf16 %v6055, %v6054
        %v6077 = vpack.c.bf16 %v6057, %v6056
        %v6078 = vpack.c.bf16 %v6059, %v6058
        %v6079 = vpack.c.bf16 %v6061, %v6060
        %v6080 = vpack.c.bf16 %v6063, %v6062
        %v6081 = vpack.c.bf16 %v6065, %v6064
        %s6082 = scalar_lea.vmem %s7, 64
        %v6083 = vld [vmem:[%s6082] sm:$0xf]
        %v6084 = vld [vmem:[%s6082 + $0x4] sm:$0xf]
        %v6085 = vld [vmem:[%s6082 + $0x8] sm:$0xf]
        %v6086 = vld [vmem:[%s6082 + $0xc] sm:$0xf]
        %v6087 = vld [vmem:[%s6082 + $0x10] sm:$0xf]
        %v6088 = vld [vmem:[%s6082 + $0x14] sm:$0xf]
        %v6089 = vld [vmem:[%s6082 + $0x18] sm:$0xf]
        %v6090 = vld [vmem:[%s6082 + $0x1c] sm:$0xf]
        %v6091 = vld [vmem:[%s6082 + $0x20] sm:$0xf]
        %v6092 = vld [vmem:[%s6082 + $0x24] sm:$0xf]
        %v6093 = vld [vmem:[%s6082 + $0x28] sm:$0xf]
        %v6094 = vld [vmem:[%s6082 + $0x2c] sm:$0xf]
        %v6095 = vld [vmem:[%s6082 + $0x30] sm:$0xf]
        %v6096 = vld [vmem:[%s6082 + $0x34] sm:$0xf]
        %v6097 = vld [vmem:[%s6082 + $0x38] sm:$0xf]
        %v6098 = vld [vmem:[%s6082 + $0x3c] sm:$0xf]
        %v6115 = vunpack.c.l.b16 %v6083
        %v6116 = vunpack.c.l.b16 %v6084
        %v6117 = vunpack.c.l.b16 %v6085
        %v6118 = vunpack.c.l.b16 %v6086
        %v6119 = vunpack.c.l.b16 %v6087
        %v6120 = vunpack.c.l.b16 %v6088
        %v6121 = vunpack.c.l.b16 %v6089
        %v6122 = vunpack.c.l.b16 %v6090
        %v6123 = vunpack.c.l.b16 %v6091
        %v6124 = vunpack.c.l.b16 %v6092
        %v6125 = vunpack.c.l.b16 %v6093
        %v6126 = vunpack.c.l.b16 %v6094
        %v6127 = vunpack.c.l.b16 %v6095
        %v6128 = vunpack.c.l.b16 %v6096
        %v6129 = vunpack.c.l.b16 %v6097
        %v6130 = vunpack.c.l.b16 %v6098
        %v6131 = vpack.c.b16 %v6116, %v6115
        %v6132 = vpack.c.b16 %v6118, %v6117
        %v6133 = vpack.c.b16 %v6120, %v6119
        %v6134 = vpack.c.b16 %v6122, %v6121
        %v6135 = vpack.c.b16 %v6124, %v6123
        %v6136 = vpack.c.b16 %v6126, %v6125
        %v6137 = vpack.c.b16 %v6128, %v6127
        %v6138 = vpack.c.b16 %v6130, %v6129
        %6147 = vmatprep.subr.bf16.mxu0 0
        %6148 = vmatpush1.bf16.msra.mxu0 %v6138
        %6149 = vmatprep.subr.bf16.mxu0 0
        %6150 = vmatpush1.bf16.msra.mxu0 %v6137
        %6151 = vmatprep.subr.bf16.mxu0 0
        %6152 = vmatpush1.bf16.msra.mxu0 %v6136
        %6153 = vmatprep.subr.bf16.mxu0 0
        %6154 = vmatpush1.bf16.msra.mxu0 %v6135
        %6155 = vmatprep.subr.bf16.mxu0 0
        %6156 = vmatpush1.bf16.msra.mxu0 %v6134
        %6157 = vmatprep.subr.bf16.mxu0 0
        %6158 = vmatpush1.bf16.msra.mxu0 %v6133
        %6159 = vmatprep.subr.bf16.mxu0 0
        %6160 = vmatpush1.bf16.msra.mxu0 %v6132
        %6161 = vmatprep.subr.bf16.mxu0 0
        %6162 = vmatpush1.bf16.msra.mxu0 %v6131
        %6163 = vmatprep.subr.bf16.mxu0 0
        %6164 = vmatpush2.bf16.msra.mxu0 0
        %6165 = vmatprep.subr.bf16.mxu0 0
        %6166 = vmatpush2.bf16.msra.mxu0 0
        %6167 = vmatprep.subr.bf16.mxu0 0
        %6168 = vmatpush2.bf16.msra.mxu0 0
        %6169 = vmatprep.subr.bf16.mxu0 0
        %6170 = vmatpush2.bf16.msra.mxu0 0
        %6171 = vmatprep.subr.bf16.mxu0 0
        %6172 = vmatpush2.bf16.msra.mxu0 0
        %6173 = vmatprep.subr.bf16.mxu0 0
        %6174 = vmatpush2.bf16.msra.mxu0 0
        %6175 = vmatprep.subr.bf16.mxu0 0
        %6176 = vmatpush2.bf16.msra.mxu0 0
        %6177 = vmatprep.subr.bf16.mxu0 0
        %6178 = vmatpush2.bf16.msra.mxu0 0
        %6179 = vmatprep.mubr.bf16.mxu0 0
        %6180 = vmatmul.mubr.bf16.gmra.mxu0 %v6066
        %v6181 = vpop.f32.mrf.mxu0
        %v6182 = vadd.f32 0.0, %v6181
        %v6183 = vpop.f32.mrf.mxu0
        %v6184 = vpop.f32.mrf.mxu0
        %v6185 = vadd.f32 0.0, %v6184
        %v6186 = vpop.f32.mrf.mxu0
        %6187 = vmatprep.mubr.bf16.mxu0 0
        %6188 = vmatmul.mubr.bf16.gmra.mxu0 %v6067
        %v6189 = vpop.f32.mrf.mxu0
        %v6190 = vadd.f32 0.0, %v6189
        %v6191 = vpop.f32.mrf.mxu0
        %v6192 = vpop.f32.mrf.mxu0
        %v6193 = vadd.f32 0.0, %v6192
        %v6194 = vpop.f32.mrf.mxu0
        %6195 = vmatprep.mubr.bf16.mxu0 0
        %6196 = vmatmul.mubr.bf16.gmra.mxu0 %v6068
        %v6197 = vpop.f32.mrf.mxu0
        %v6198 = vadd.f32 0.0, %v6197
        %v6199 = vpop.f32.mrf.mxu0
        %v6200 = vpop.f32.mrf.mxu0
        %v6201 = vadd.f32 0.0, %v6200
        %v6202 = vpop.f32.mrf.mxu0
        %6203 = vmatprep.mubr.bf16.mxu0 0
        %6204 = vmatmul.mubr.bf16.gmra.mxu0 %v6069
        %v6205 = vpop.f32.mrf.mxu0
        %v6206 = vadd.f32 0.0, %v6205
        %v6207 = vpop.f32.mrf.mxu0
        %v6208 = vpop.f32.mrf.mxu0
        %v6209 = vadd.f32 0.0, %v6208
        %v6210 = vpop.f32.mrf.mxu0
        %6211 = vmatprep.mubr.bf16.mxu0 0
        %6212 = vmatmul.mubr.bf16.gmra.mxu0 %v6070
        %v6213 = vpop.f32.mrf.mxu0
        %v6214 = vadd.f32 0.0, %v6213
        %v6215 = vpop.f32.mrf.mxu0
        %v6216 = vpop.f32.mrf.mxu0
        %v6217 = vadd.f32 0.0, %v6216
        %v6218 = vpop.f32.mrf.mxu0
        %6219 = vmatprep.mubr.bf16.mxu0 0
        %6220 = vmatmul.mubr.bf16.gmra.mxu0 %v6071
        %v6221 = vpop.f32.mrf.mxu0
        %v6222 = vadd.f32 0.0, %v6221
        %v6223 = vpop.f32.mrf.mxu0
        %v6224 = vpop.f32.mrf.mxu0
        %v6225 = vadd.f32 0.0, %v6224
        %v6226 = vpop.f32.mrf.mxu0
        %6227 = vmatprep.mubr.bf16.mxu0 0
        %6228 = vmatmul.mubr.bf16.gmra.mxu0 %v6072
        %v6229 = vpop.f32.mrf.mxu0
        %v6230 = vadd.f32 0.0, %v6229
        %v6231 = vpop.f32.mrf.mxu0
        %v6232 = vpop.f32.mrf.mxu0
        %v6233 = vadd.f32 0.0, %v6232
        %v6234 = vpop.f32.mrf.mxu0
        %6235 = vmatprep.mubr.bf16.mxu0 0
        %6236 = vmatmul.mubr.bf16.gmra.mxu0 %v6073
        %v6237 = vpop.f32.mrf.mxu0
        %v6238 = vadd.f32 0.0, %v6237
        %v6239 = vpop.f32.mrf.mxu0
        %v6240 = vpop.f32.mrf.mxu0
        %v6241 = vadd.f32 0.0, %v6240
        %v6242 = vpop.f32.mrf.mxu0
        %6243 = vmatprep.mubr.bf16.mxu0 0
        %6244 = vmatmul.mubr.bf16.gmra.mxu0 %v6074
        %v6245 = vpop.f32.mrf.mxu0
        %v6246 = vadd.f32 0.0, %v6245
        %v6247 = vpop.f32.mrf.mxu0
        %v6248 = vpop.f32.mrf.mxu0
        %v6249 = vadd.f32 0.0, %v6248
        %v6250 = vpop.f32.mrf.mxu0
        %6251 = vmatprep.mubr.bf16.mxu0 0
        %6252 = vmatmul.mubr.bf16.gmra.mxu0 %v6075
        %v6253 = vpop.f32.mrf.mxu0
        %v6254 = vadd.f32 0.0, %v6253
        %v6255 = vpop.f32.mrf.mxu0
        %v6256 = vpop.f32.mrf.mxu0
        %v6257 = vadd.f32 0.0, %v6256
        %v6258 = vpop.f32.mrf.mxu0
        %6259 = vmatprep.mubr.bf16.mxu0 0
        %6260 = vmatmul.mubr.bf16.gmra.mxu0 %v6076
        %v6261 = vpop.f32.mrf.mxu0
        %v6262 = vadd.f32 0.0, %v6261
        %v6263 = vpop.f32.mrf.mxu0
        %v6264 = vpop.f32.mrf.mxu0
        %v6265 = vadd.f32 0.0, %v6264
        %v6266 = vpop.f32.mrf.mxu0
        %6267 = vmatprep.mubr.bf16.mxu0 0
        %6268 = vmatmul.mubr.bf16.gmra.mxu0 %v6077
        %v6269 = vpop.f32.mrf.mxu0
        %v6270 = vadd.f32 0.0, %v6269
        %v6271 = vpop.f32.mrf.mxu0
        %v6272 = vpop.f32.mrf.mxu0
        %v6273 = vadd.f32 0.0, %v6272
        %v6274 = vpop.f32.mrf.mxu0
        %6275 = vmatprep.mubr.bf16.mxu0 0
        %6276 = vmatmul.mubr.bf16.gmra.mxu0 %v6078
        %v6277 = vpop.f32.mrf.mxu0
        %v6278 = vadd.f32 0.0, %v6277
        %v6279 = vpop.f32.mrf.mxu0
        %v6280 = vpop.f32.mrf.mxu0
        %v6281 = vadd.f32 0.0, %v6280
        %v6282 = vpop.f32.mrf.mxu0
        %6283 = vmatprep.mubr.bf16.mxu0 0
        %6284 = vmatmul.mubr.bf16.gmra.mxu0 %v6079
        %v6285 = vpop.f32.mrf.mxu0
        %v6286 = vadd.f32 0.0, %v6285
        %v6287 = vpop.f32.mrf.mxu0
        %v6288 = vpop.f32.mrf.mxu0
        %v6289 = vadd.f32 0.0, %v6288
        %v6290 = vpop.f32.mrf.mxu0
        %6291 = vmatprep.mubr.bf16.mxu0 0
        %6292 = vmatmul.mubr.bf16.gmra.mxu0 %v6080
        %v6293 = vpop.f32.mrf.mxu0
        %v6294 = vadd.f32 0.0, %v6293
        %v6295 = vpop.f32.mrf.mxu0
        %v6296 = vpop.f32.mrf.mxu0
        %v6297 = vadd.f32 0.0, %v6296
        %v6298 = vpop.f32.mrf.mxu0
        %6299 = vmatprep.mubr.bf16.mxu0 0
        %6300 = vmatmul.mubr.bf16.gmra.mxu0 %v6081
        %v6301 = vpop.f32.mrf.mxu0
        %v6302 = vadd.f32 0.0, %v6301
        %v6303 = vpop.f32.mrf.mxu0
        %v6304 = vpop.f32.mrf.mxu0
        %v6305 = vadd.f32 0.0, %v6304
        %v6306 = vpop.f32.mrf.mxu0
        %6307 = vdwg.mxu0
        %v6324 = vunpack.c.l.b16 %v6018
        %v6325 = vunpack.c.l.b16 %v6019
        %v6326 = vunpack.c.l.b16 %v6020
        %v6327 = vunpack.c.l.b16 %v6021
        %v6328 = vunpack.c.l.b16 %v6022
        %v6329 = vunpack.c.l.b16 %v6023
        %v6330 = vunpack.c.l.b16 %v6024
        %v6331 = vunpack.c.l.b16 %v6025
        %v6332 = vunpack.c.l.b16 %v6026
        %v6333 = vunpack.c.l.b16 %v6027
        %v6334 = vunpack.c.l.b16 %v6028
        %v6335 = vunpack.c.l.b16 %v6029
        %v6336 = vunpack.c.l.b16 %v6030
        %v6337 = vunpack.c.l.b16 %v6031
        %v6338 = vunpack.c.l.b16 %v6032
        %v6339 = vunpack.c.l.b16 %v6033
        %v6340 = vpack.c.b16 %v6325, %v6324
        %v6341 = vpack.c.b16 %v6327, %v6326
        %v6342 = vpack.c.b16 %v6329, %v6328
        %v6343 = vpack.c.b16 %v6331, %v6330
        %v6344 = vpack.c.b16 %v6333, %v6332
        %v6345 = vpack.c.b16 %v6335, %v6334
        %v6346 = vpack.c.b16 %v6337, %v6336
        %v6347 = vpack.c.b16 %v6339, %v6338
        %6356 = vmatprep.subr.bf16.mxu0 0
        %6357 = vmatpush1.bf16.msra.mxu0 %v6347
        %6358 = vmatprep.subr.bf16.mxu0 0
        %6359 = vmatpush1.bf16.msra.mxu0 %v6346
        %6360 = vmatprep.subr.bf16.mxu0 0
        %6361 = vmatpush1.bf16.msra.mxu0 %v6345
        %6362 = vmatprep.subr.bf16.mxu0 0
        %6363 = vmatpush1.bf16.msra.mxu0 %v6344
        %6364 = vmatprep.subr.bf16.mxu0 0
        %6365 = vmatpush1.bf16.msra.mxu0 %v6343
        %6366 = vmatprep.subr.bf16.mxu0 0
        %6367 = vmatpush1.bf16.msra.mxu0 %v6342
        %6368 = vmatprep.subr.bf16.mxu0 0
        %6369 = vmatpush1.bf16.msra.mxu0 %v6341
        %6370 = vmatprep.subr.bf16.mxu0 0
        %6371 = vmatpush1.bf16.msra.mxu0 %v6340
        %6372 = vmatprep.subr.bf16.mxu0 0
        %6373 = vmatpush2.bf16.msra.mxu0 0
        %6374 = vmatprep.subr.bf16.mxu0 0
        %6375 = vmatpush2.bf16.msra.mxu0 0
        %6376 = vmatprep.subr.bf16.mxu0 0
        %6377 = vmatpush2.bf16.msra.mxu0 0
        %6378 = vmatprep.subr.bf16.mxu0 0
        %6379 = vmatpush2.bf16.msra.mxu0 0
        %6380 = vmatprep.subr.bf16.mxu0 0
        %6381 = vmatpush2.bf16.msra.mxu0 0
        %6382 = vmatprep.subr.bf16.mxu0 0
        %6383 = vmatpush2.bf16.msra.mxu0 0
        %6384 = vmatprep.subr.bf16.mxu0 0
        %6385 = vmatpush2.bf16.msra.mxu0 0
        %6386 = vmatprep.subr.bf16.mxu0 0
        %6387 = vmatpush2.bf16.msra.mxu0 0
        %6388 = vmatprep.mubr.bf16.mxu0 0
        %6389 = vmatmul.mubr.bf16.gmra.mxu0 %v6002
        %v6390 = vpop.f32.mrf.mxu0
        %v6391 = vadd.f32 %v6182, %v6390
        %v6392 = vpop.f32.mrf.mxu0
        %v6393 = vpop.f32.mrf.mxu0
        %v6394 = vadd.f32 %v6185, %v6393
        %v6395 = vpop.f32.mrf.mxu0
        %6396 = vmatprep.mubr.bf16.mxu0 0
        %6397 = vmatmul.mubr.bf16.gmra.mxu0 %v6003
        %v6398 = vpop.f32.mrf.mxu0
        %v6399 = vadd.f32 %v6190, %v6398
        %v6400 = vpop.f32.mrf.mxu0
        %v6401 = vpop.f32.mrf.mxu0
        %v6402 = vadd.f32 %v6193, %v6401
        %v6403 = vpop.f32.mrf.mxu0
        %6404 = vmatprep.mubr.bf16.mxu0 0
        %6405 = vmatmul.mubr.bf16.gmra.mxu0 %v6004
        %v6406 = vpop.f32.mrf.mxu0
        %v6407 = vadd.f32 %v6198, %v6406
        %v6408 = vpop.f32.mrf.mxu0
        %v6409 = vpop.f32.mrf.mxu0
        %v6410 = vadd.f32 %v6201, %v6409
        %v6411 = vpop.f32.mrf.mxu0
        %6412 = vmatprep.mubr.bf16.mxu0 0
        %6413 = vmatmul.mubr.bf16.gmra.mxu0 %v6005
        %v6414 = vpop.f32.mrf.mxu0
        %v6415 = vadd.f32 %v6206, %v6414
        %v6416 = vpop.f32.mrf.mxu0
        %v6417 = vpop.f32.mrf.mxu0
        %v6418 = vadd.f32 %v6209, %v6417
        %v6419 = vpop.f32.mrf.mxu0
        %6420 = vmatprep.mubr.bf16.mxu0 0
        %6421 = vmatmul.mubr.bf16.gmra.mxu0 %v6006
        %v6422 = vpop.f32.mrf.mxu0
        %v6423 = vadd.f32 %v6214, %v6422
        %v6424 = vpop.f32.mrf.mxu0
        %v6425 = vpop.f32.mrf.mxu0
        %v6426 = vadd.f32 %v6217, %v6425
        %v6427 = vpop.f32.mrf.mxu0
        %6428 = vmatprep.mubr.bf16.mxu0 0
        %6429 = vmatmul.mubr.bf16.gmra.mxu0 %v6007
        %v6430 = vpop.f32.mrf.mxu0
        %v6431 = vadd.f32 %v6222, %v6430
        %v6432 = vpop.f32.mrf.mxu0
        %v6433 = vpop.f32.mrf.mxu0
        %v6434 = vadd.f32 %v6225, %v6433
        %v6435 = vpop.f32.mrf.mxu0
        %6436 = vmatprep.mubr.bf16.mxu0 0
        %6437 = vmatmul.mubr.bf16.gmra.mxu0 %v6008
        %v6438 = vpop.f32.mrf.mxu0
        %v6439 = vadd.f32 %v6230, %v6438
        %v6440 = vpop.f32.mrf.mxu0
        %v6441 = vpop.f32.mrf.mxu0
        %v6442 = vadd.f32 %v6233, %v6441
        %v6443 = vpop.f32.mrf.mxu0
        %6444 = vmatprep.mubr.bf16.mxu0 0
        %6445 = vmatmul.mubr.bf16.gmra.mxu0 %v6009
        %v6446 = vpop.f32.mrf.mxu0
        %v6447 = vadd.f32 %v6238, %v6446
        %v6448 = vpop.f32.mrf.mxu0
        %v6449 = vpop.f32.mrf.mxu0
        %v6450 = vadd.f32 %v6241, %v6449
        %v6451 = vpop.f32.mrf.mxu0
        %6452 = vmatprep.mubr.bf16.mxu0 0
        %6453 = vmatmul.mubr.bf16.gmra.mxu0 %v6010
        %v6454 = vpop.f32.mrf.mxu0
        %v6455 = vadd.f32 %v6246, %v6454
        %v6456 = vpop.f32.mrf.mxu0
        %v6457 = vpop.f32.mrf.mxu0
        %v6458 = vadd.f32 %v6249, %v6457
        %v6459 = vpop.f32.mrf.mxu0
        %6460 = vmatprep.mubr.bf16.mxu0 0
        %6461 = vmatmul.mubr.bf16.gmra.mxu0 %v6011
        %v6462 = vpop.f32.mrf.mxu0
        %v6463 = vadd.f32 %v6254, %v6462
        %v6464 = vpop.f32.mrf.mxu0
        %v6465 = vpop.f32.mrf.mxu0
        %v6466 = vadd.f32 %v6257, %v6465
        %v6467 = vpop.f32.mrf.mxu0
        %6468 = vmatprep.mubr.bf16.mxu0 0
        %6469 = vmatmul.mubr.bf16.gmra.mxu0 %v6012
        %v6470 = vpop.f32.mrf.mxu0
        %v6471 = vadd.f32 %v6262, %v6470
        %v6472 = vpop.f32.mrf.mxu0
        %v6473 = vpop.f32.mrf.mxu0
        %v6474 = vadd.f32 %v6265, %v6473
        %v6475 = vpop.f32.mrf.mxu0
        %6476 = vmatprep.mubr.bf16.mxu0 0
        %6477 = vmatmul.mubr.bf16.gmra.mxu0 %v6013
        %v6478 = vpop.f32.mrf.mxu0
        %v6479 = vadd.f32 %v6270, %v6478
        %v6480 = vpop.f32.mrf.mxu0
        %v6481 = vpop.f32.mrf.mxu0
        %v6482 = vadd.f32 %v6273, %v6481
        %v6483 = vpop.f32.mrf.mxu0
        %6484 = vmatprep.mubr.bf16.mxu0 0
        %6485 = vmatmul.mubr.bf16.gmra.mxu0 %v6014
        %v6486 = vpop.f32.mrf.mxu0
        %v6487 = vadd.f32 %v6278, %v6486
        %v6488 = vpop.f32.mrf.mxu0
        %v6489 = vpop.f32.mrf.mxu0
        %v6490 = vadd.f32 %v6281, %v6489
        %v6491 = vpop.f32.mrf.mxu0
        %6492 = vmatprep.mubr.bf16.mxu0 0
        %6493 = vmatmul.mubr.bf16.gmra.mxu0 %v6015
        %v6494 = vpop.f32.mrf.mxu0
        %v6495 = vadd.f32 %v6286, %v6494
        %v6496 = vpop.f32.mrf.mxu0
        %v6497 = vpop.f32.mrf.mxu0
        %v6498 = vadd.f32 %v6289, %v6497
        %v6499 = vpop.f32.mrf.mxu0
        %6500 = vmatprep.mubr.bf16.mxu0 0
        %6501 = vmatmul.mubr.bf16.gmra.mxu0 %v6016
        %v6502 = vpop.f32.mrf.mxu0
        %v6503 = vadd.f32 %v6294, %v6502
        %v6504 = vpop.f32.mrf.mxu0
        %v6505 = vpop.f32.mrf.mxu0
        %v6506 = vadd.f32 %v6297, %v6505
        %v6507 = vpop.f32.mrf.mxu0
        %6508 = vmatprep.mubr.bf16.mxu0 0
        %6509 = vmatmul.mubr.bf16.gmra.mxu0 %v6017
        %v6510 = vpop.f32.mrf.mxu0
        %v6511 = vadd.f32 %v6302, %v6510
        %v6512 = vpop.f32.mrf.mxu0
        %v6513 = vpop.f32.mrf.mxu0
        %v6514 = vadd.f32 %v6305, %v6513
        %v6515 = vpop.f32.mrf.mxu0
        %6516 = vdwg.mxu0
        %v6517 = vld [vmem:[#allocation3 + $0x9] sm:$0xff]
        %v6518 = vld [vmem:[#allocation3 + $0x11] sm:$0xff]
        %v6519 = vld [vmem:[#allocation3 + $0x19] sm:$0xff]
        %v6520 = vld [vmem:[#allocation3 + $0x21] sm:$0xff]
        %v6521 = vld [vmem:[#allocation3 + $0x29] sm:$0xff]
        %v6522 = vld [vmem:[#allocation3 + $0x31] sm:$0xff]
        %v6523 = vld [vmem:[#allocation3 + $0x39] sm:$0xff]
        %v6524 = vld [vmem:[#allocation3 + $0x41] sm:$0xff]
        %v6525 = vld [vmem:[#allocation3 + $0x49] sm:$0xff]
        %v6526 = vld [vmem:[#allocation3 + $0x51] sm:$0xff]
        %v6527 = vld [vmem:[#allocation3 + $0x59] sm:$0xff]
        %v6528 = vld [vmem:[#allocation3 + $0x61] sm:$0xff]
        %v6529 = vld [vmem:[#allocation3 + $0x69] sm:$0xff]
        %v6530 = vld [vmem:[#allocation3 + $0x71] sm:$0xff]
        %v6531 = vld [vmem:[#allocation3 + $0x79] sm:$0xff]
        %v6532 = vld [vmem:[#allocation3 + $0x81] sm:$0xff]
        %v6533 = vld [vmem:[#allocation3 + $0x89] sm:$0xff]
        %v6534 = vld [vmem:[#allocation3 + $0x91] sm:$0xff]
        %v6535 = vld [vmem:[#allocation3 + $0x99] sm:$0xff]
        %v6536 = vld [vmem:[#allocation3 + $0xa1] sm:$0xff]
        %v6537 = vld [vmem:[#allocation3 + $0xa9] sm:$0xff]
        %v6538 = vld [vmem:[#allocation3 + $0xb1] sm:$0xff]
        %v6539 = vld [vmem:[#allocation3 + $0xb9] sm:$0xff]
        %v6540 = vld [vmem:[#allocation3 + $0xc1] sm:$0xff]
        %v6541 = vld [vmem:[#allocation3 + $0xc9] sm:$0xff]
        %v6542 = vld [vmem:[#allocation3 + $0xd1] sm:$0xff]
        %v6543 = vld [vmem:[#allocation3 + $0xd9] sm:$0xff]
        %v6544 = vld [vmem:[#allocation3 + $0xe1] sm:$0xff]
        %v6545 = vld [vmem:[#allocation3 + $0xe9] sm:$0xff]
        %v6546 = vld [vmem:[#allocation3 + $0xf1] sm:$0xff]
        %v6547 = vld [vmem:[#allocation3 + $0xf9] sm:$0xff]
        %v6548 = vld [vmem:[#allocation3 + $0x101] sm:$0xff]
        %v6549 = vsel %vm2609, %v6517, 0.0
        %v6550 = vsel %vm2610, %v6518, 0.0
        %v6551 = vsel %vm2611, %v6519, 0.0
        %v6552 = vsel %vm2612, %v6520, 0.0
        %v6553 = vsel %vm2613, %v6521, 0.0
        %v6554 = vsel %vm2614, %v6522, 0.0
        %v6555 = vsel %vm2615, %v6523, 0.0
        %v6556 = vsel %vm2616, %v6524, 0.0
        %v6557 = vsel %vm2617, %v6525, 0.0
        %v6558 = vsel %vm2618, %v6526, 0.0
        %v6559 = vsel %vm2619, %v6527, 0.0
        %v6560 = vsel %vm2620, %v6528, 0.0
        %v6561 = vsel %vm2621, %v6529, 0.0
        %v6562 = vsel %vm2622, %v6530, 0.0
        %v6563 = vsel %vm2623, %v6531, 0.0
        %v6564 = vsel %vm2624, %v6532, 0.0
        %v6565 = vsel %vm2625, %v6533, 0.0
        %v6566 = vsel %vm2626, %v6534, 0.0
        %v6567 = vsel %vm2627, %v6535, 0.0
        %v6568 = vsel %vm2628, %v6536, 0.0
        %v6569 = vsel %vm2629, %v6537, 0.0
        %v6570 = vsel %vm2630, %v6538, 0.0
        %v6571 = vsel %vm2631, %v6539, 0.0
        %v6572 = vsel %vm2632, %v6540, 0.0
        %v6573 = vsel %vm2633, %v6541, 0.0
        %v6574 = vsel %vm2634, %v6542, 0.0
        %v6575 = vsel %vm2635, %v6543, 0.0
        %v6576 = vsel %vm2636, %v6544, 0.0
        %v6577 = vsel %vm2637, %v6545, 0.0
        %v6578 = vsel %vm2638, %v6546, 0.0
        %v6579 = vsel %vm2639, %v6547, 0.0
        %v6580 = vsel %vm2640, %v6548, 0.0
        %v6581 = vpack.c.bf16 %v6550, %v6549
        %v6582 = vpack.c.bf16 %v6552, %v6551
        %v6583 = vpack.c.bf16 %v6554, %v6553
        %v6584 = vpack.c.bf16 %v6556, %v6555
        %v6585 = vpack.c.bf16 %v6558, %v6557
        %v6586 = vpack.c.bf16 %v6560, %v6559
        %v6587 = vpack.c.bf16 %v6562, %v6561
        %v6588 = vpack.c.bf16 %v6564, %v6563
        %v6589 = vpack.c.bf16 %v6566, %v6565
        %v6590 = vpack.c.bf16 %v6568, %v6567
        %v6591 = vpack.c.bf16 %v6570, %v6569
        %v6592 = vpack.c.bf16 %v6572, %v6571
        %v6593 = vpack.c.bf16 %v6574, %v6573
        %v6594 = vpack.c.bf16 %v6576, %v6575
        %v6595 = vpack.c.bf16 %v6578, %v6577
        %v6596 = vpack.c.bf16 %v6580, %v6579
        %s6597 = scalar_lea.vmem %s7, 128
        %v6598 = vld [vmem:[%s6597] sm:$0xf]
        %v6599 = vld [vmem:[%s6597 + $0x4] sm:$0xf]
        %v6600 = vld [vmem:[%s6597 + $0x8] sm:$0xf]
        %v6601 = vld [vmem:[%s6597 + $0xc] sm:$0xf]
        %v6602 = vld [vmem:[%s6597 + $0x10] sm:$0xf]
        %v6603 = vld [vmem:[%s6597 + $0x14] sm:$0xf]
        %v6604 = vld [vmem:[%s6597 + $0x18] sm:$0xf]
        %v6605 = vld [vmem:[%s6597 + $0x1c] sm:$0xf]
        %v6606 = vld [vmem:[%s6597 + $0x20] sm:$0xf]
        %v6607 = vld [vmem:[%s6597 + $0x24] sm:$0xf]
        %v6608 = vld [vmem:[%s6597 + $0x28] sm:$0xf]
        %v6609 = vld [vmem:[%s6597 + $0x2c] sm:$0xf]
        %v6610 = vld [vmem:[%s6597 + $0x30] sm:$0xf]
        %v6611 = vld [vmem:[%s6597 + $0x34] sm:$0xf]
        %v6612 = vld [vmem:[%s6597 + $0x38] sm:$0xf]
        %v6613 = vld [vmem:[%s6597 + $0x3c] sm:$0xf]
        %v6630 = vunpack.c.l.b16 %v6598
        %v6631 = vunpack.c.l.b16 %v6599
        %v6632 = vunpack.c.l.b16 %v6600
        %v6633 = vunpack.c.l.b16 %v6601
        %v6634 = vunpack.c.l.b16 %v6602
        %v6635 = vunpack.c.l.b16 %v6603
        %v6636 = vunpack.c.l.b16 %v6604
        %v6637 = vunpack.c.l.b16 %v6605
        %v6638 = vunpack.c.l.b16 %v6606
        %v6639 = vunpack.c.l.b16 %v6607
        %v6640 = vunpack.c.l.b16 %v6608
        %v6641 = vunpack.c.l.b16 %v6609
        %v6642 = vunpack.c.l.b16 %v6610
        %v6643 = vunpack.c.l.b16 %v6611
        %v6644 = vunpack.c.l.b16 %v6612
        %v6645 = vunpack.c.l.b16 %v6613
        %v6646 = vpack.c.b16 %v6631, %v6630
        %v6647 = vpack.c.b16 %v6633, %v6632
        %v6648 = vpack.c.b16 %v6635, %v6634
        %v6649 = vpack.c.b16 %v6637, %v6636
        %v6650 = vpack.c.b16 %v6639, %v6638
        %v6651 = vpack.c.b16 %v6641, %v6640
        %v6652 = vpack.c.b16 %v6643, %v6642
        %v6653 = vpack.c.b16 %v6645, %v6644
        %6662 = vmatprep.subr.bf16.mxu0 0
        %6663 = vmatpush1.bf16.msra.mxu0 %v6653
        %6664 = vmatprep.subr.bf16.mxu0 0
        %6665 = vmatpush1.bf16.msra.mxu0 %v6652
        %6666 = vmatprep.subr.bf16.mxu0 0
        %6667 = vmatpush1.bf16.msra.mxu0 %v6651
        %6668 = vmatprep.subr.bf16.mxu0 0
        %6669 = vmatpush1.bf16.msra.mxu0 %v6650
        %6670 = vmatprep.subr.bf16.mxu0 0
        %6671 = vmatpush1.bf16.msra.mxu0 %v6649
        %6672 = vmatprep.subr.bf16.mxu0 0
        %6673 = vmatpush1.bf16.msra.mxu0 %v6648
        %6674 = vmatprep.subr.bf16.mxu0 0
        %6675 = vmatpush1.bf16.msra.mxu0 %v6647
        %6676 = vmatprep.subr.bf16.mxu0 0
        %6677 = vmatpush1.bf16.msra.mxu0 %v6646
        %6678 = vmatprep.subr.bf16.mxu0 0
        %6679 = vmatpush2.bf16.msra.mxu0 0
        %6680 = vmatprep.subr.bf16.mxu0 0
        %6681 = vmatpush2.bf16.msra.mxu0 0
        %6682 = vmatprep.subr.bf16.mxu0 0
        %6683 = vmatpush2.bf16.msra.mxu0 0
        %6684 = vmatprep.subr.bf16.mxu0 0
        %6685 = vmatpush2.bf16.msra.mxu0 0
        %6686 = vmatprep.subr.bf16.mxu0 0
        %6687 = vmatpush2.bf16.msra.mxu0 0
        %6688 = vmatprep.subr.bf16.mxu0 0
        %6689 = vmatpush2.bf16.msra.mxu0 0
        %6690 = vmatprep.subr.bf16.mxu0 0
        %6691 = vmatpush2.bf16.msra.mxu0 0
        %6692 = vmatprep.subr.bf16.mxu0 0
        %6693 = vmatpush2.bf16.msra.mxu0 0
        %6694 = vmatprep.mubr.bf16.mxu0 0
        %6695 = vmatmul.mubr.bf16.gmra.mxu0 %v6581
        %v6696 = vpop.f32.mrf.mxu0
        %v6697 = vadd.f32 0.0, %v6696
        %v6698 = vpop.f32.mrf.mxu0
        %v6699 = vpop.f32.mrf.mxu0
        %v6700 = vadd.f32 0.0, %v6699
        %v6701 = vpop.f32.mrf.mxu0
        %6702 = vmatprep.mubr.bf16.mxu0 0
        %6703 = vmatmul.mubr.bf16.gmra.mxu0 %v6582
        %v6704 = vpop.f32.mrf.mxu0
        %v6705 = vadd.f32 0.0, %v6704
        %v6706 = vpop.f32.mrf.mxu0
        %v6707 = vpop.f32.mrf.mxu0
        %v6708 = vadd.f32 0.0, %v6707
        %v6709 = vpop.f32.mrf.mxu0
        %6710 = vmatprep.mubr.bf16.mxu0 0
        %6711 = vmatmul.mubr.bf16.gmra.mxu0 %v6583
        %v6712 = vpop.f32.mrf.mxu0
        %v6713 = vadd.f32 0.0, %v6712
        %v6714 = vpop.f32.mrf.mxu0
        %v6715 = vpop.f32.mrf.mxu0
        %v6716 = vadd.f32 0.0, %v6715
        %v6717 = vpop.f32.mrf.mxu0
        %6718 = vmatprep.mubr.bf16.mxu0 0
        %6719 = vmatmul.mubr.bf16.gmra.mxu0 %v6584
        %v6720 = vpop.f32.mrf.mxu0
        %v6721 = vadd.f32 0.0, %v6720
        %v6722 = vpop.f32.mrf.mxu0
        %v6723 = vpop.f32.mrf.mxu0
        %v6724 = vadd.f32 0.0, %v6723
        %v6725 = vpop.f32.mrf.mxu0
        %6726 = vmatprep.mubr.bf16.mxu0 0
        %6727 = vmatmul.mubr.bf16.gmra.mxu0 %v6585
        %v6728 = vpop.f32.mrf.mxu0
        %v6729 = vadd.f32 0.0, %v6728
        %v6730 = vpop.f32.mrf.mxu0
        %v6731 = vpop.f32.mrf.mxu0
        %v6732 = vadd.f32 0.0, %v6731
        %v6733 = vpop.f32.mrf.mxu0
        %6734 = vmatprep.mubr.bf16.mxu0 0
        %6735 = vmatmul.mubr.bf16.gmra.mxu0 %v6586
        %v6736 = vpop.f32.mrf.mxu0
        %v6737 = vadd.f32 0.0, %v6736
        %v6738 = vpop.f32.mrf.mxu0
        %v6739 = vpop.f32.mrf.mxu0
        %v6740 = vadd.f32 0.0, %v6739
        %v6741 = vpop.f32.mrf.mxu0
        %6742 = vmatprep.mubr.bf16.mxu0 0
        %6743 = vmatmul.mubr.bf16.gmra.mxu0 %v6587
        %v6744 = vpop.f32.mrf.mxu0
        %v6745 = vadd.f32 0.0, %v6744
        %v6746 = vpop.f32.mrf.mxu0
        %v6747 = vpop.f32.mrf.mxu0
        %v6748 = vadd.f32 0.0, %v6747
        %v6749 = vpop.f32.mrf.mxu0
        %6750 = vmatprep.mubr.bf16.mxu0 0
        %6751 = vmatmul.mubr.bf16.gmra.mxu0 %v6588
        %v6752 = vpop.f32.mrf.mxu0
        %v6753 = vadd.f32 0.0, %v6752
        %v6754 = vpop.f32.mrf.mxu0
        %v6755 = vpop.f32.mrf.mxu0
        %v6756 = vadd.f32 0.0, %v6755
        %v6757 = vpop.f32.mrf.mxu0
        %6758 = vmatprep.mubr.bf16.mxu0 0
        %6759 = vmatmul.mubr.bf16.gmra.mxu0 %v6589
        %v6760 = vpop.f32.mrf.mxu0
        %v6761 = vadd.f32 0.0, %v6760
        %v6762 = vpop.f32.mrf.mxu0
        %v6763 = vpop.f32.mrf.mxu0
        %v6764 = vadd.f32 0.0, %v6763
        %v6765 = vpop.f32.mrf.mxu0
        %6766 = vmatprep.mubr.bf16.mxu0 0
        %6767 = vmatmul.mubr.bf16.gmra.mxu0 %v6590
        %v6768 = vpop.f32.mrf.mxu0
        %v6769 = vadd.f32 0.0, %v6768
        %v6770 = vpop.f32.mrf.mxu0
        %v6771 = vpop.f32.mrf.mxu0
        %v6772 = vadd.f32 0.0, %v6771
        %v6773 = vpop.f32.mrf.mxu0
        %6774 = vmatprep.mubr.bf16.mxu0 0
        %6775 = vmatmul.mubr.bf16.gmra.mxu0 %v6591
        %v6776 = vpop.f32.mrf.mxu0
        %v6777 = vadd.f32 0.0, %v6776
        %v6778 = vpop.f32.mrf.mxu0
        %v6779 = vpop.f32.mrf.mxu0
        %v6780 = vadd.f32 0.0, %v6779
        %v6781 = vpop.f32.mrf.mxu0
        %6782 = vmatprep.mubr.bf16.mxu0 0
        %6783 = vmatmul.mubr.bf16.gmra.mxu0 %v6592
        %v6784 = vpop.f32.mrf.mxu0
        %v6785 = vadd.f32 0.0, %v6784
        %v6786 = vpop.f32.mrf.mxu0
        %v6787 = vpop.f32.mrf.mxu0
        %v6788 = vadd.f32 0.0, %v6787
        %v6789 = vpop.f32.mrf.mxu0
        %6790 = vmatprep.mubr.bf16.mxu0 0
        %6791 = vmatmul.mubr.bf16.gmra.mxu0 %v6593
        %v6792 = vpop.f32.mrf.mxu0
        %v6793 = vadd.f32 0.0, %v6792
        %v6794 = vpop.f32.mrf.mxu0
        %v6795 = vpop.f32.mrf.mxu0
        %v6796 = vadd.f32 0.0, %v6795
        %v6797 = vpop.f32.mrf.mxu0
        %6798 = vmatprep.mubr.bf16.mxu0 0
        %6799 = vmatmul.mubr.bf16.gmra.mxu0 %v6594
        %v6800 = vpop.f32.mrf.mxu0
        %v6801 = vadd.f32 0.0, %v6800
        %v6802 = vpop.f32.mrf.mxu0
        %v6803 = vpop.f32.mrf.mxu0
        %v6804 = vadd.f32 0.0, %v6803
        %v6805 = vpop.f32.mrf.mxu0
        %6806 = vmatprep.mubr.bf16.mxu0 0
        %6807 = vmatmul.mubr.bf16.gmra.mxu0 %v6595
        %v6808 = vpop.f32.mrf.mxu0
        %v6809 = vadd.f32 0.0, %v6808
        %v6810 = vpop.f32.mrf.mxu0
        %v6811 = vpop.f32.mrf.mxu0
        %v6812 = vadd.f32 0.0, %v6811
        %v6813 = vpop.f32.mrf.mxu0
        %6814 = vmatprep.mubr.bf16.mxu0 0
        %6815 = vmatmul.mubr.bf16.gmra.mxu0 %v6596
        %v6816 = vpop.f32.mrf.mxu0
        %v6817 = vadd.f32 0.0, %v6816
        %v6818 = vpop.f32.mrf.mxu0
        %v6819 = vpop.f32.mrf.mxu0
        %v6820 = vadd.f32 0.0, %v6819
        %v6821 = vpop.f32.mrf.mxu0
        %6822 = vdwg.mxu0
        %v6823 = vadd.f32 %v6391, %v6697
        %v6824 = vadd.f32 %v6394, %v6700
        %v6825 = vadd.f32 %v6399, %v6705
        %v6826 = vadd.f32 %v6402, %v6708
        %v6827 = vadd.f32 %v6407, %v6713
        %v6828 = vadd.f32 %v6410, %v6716
        %v6829 = vadd.f32 %v6415, %v6721
        %v6830 = vadd.f32 %v6418, %v6724
        %v6831 = vadd.f32 %v6423, %v6729
        %v6832 = vadd.f32 %v6426, %v6732
        %v6833 = vadd.f32 %v6431, %v6737
        %v6834 = vadd.f32 %v6434, %v6740
        %v6835 = vadd.f32 %v6439, %v6745
        %v6836 = vadd.f32 %v6442, %v6748
        %v6837 = vadd.f32 %v6447, %v6753
        %v6838 = vadd.f32 %v6450, %v6756
        %v6839 = vadd.f32 %v6455, %v6761
        %v6840 = vadd.f32 %v6458, %v6764
        %v6841 = vadd.f32 %v6463, %v6769
        %v6842 = vadd.f32 %v6466, %v6772
        %v6843 = vadd.f32 %v6471, %v6777
        %v6844 = vadd.f32 %v6474, %v6780
        %v6845 = vadd.f32 %v6479, %v6785
        %v6846 = vadd.f32 %v6482, %v6788
        %v6847 = vadd.f32 %v6487, %v6793
        %v6848 = vadd.f32 %v6490, %v6796
        %v6849 = vadd.f32 %v6495, %v6801
        %v6850 = vadd.f32 %v6498, %v6804
        %v6851 = vadd.f32 %v6503, %v6809
        %v6852 = vadd.f32 %v6506, %v6812
        %v6853 = vadd.f32 %v6511, %v6817
        %v6854 = vadd.f32 %v6514, %v6820
        %v6855 = vld [vmem:[#allocation3 + $0x17] sm:$0xff]
        %v6856 = vld [vmem:[#allocation3 + $0x1f] sm:$0xff]
        %v6857 = vld [vmem:[#allocation3 + $0x27] sm:$0xff]
        %v6858 = vld [vmem:[#allocation3 + $0x2f] sm:$0xff]
        %v6859 = vld [vmem:[#allocation3 + $0x37] sm:$0xff]
        %v6860 = vld [vmem:[#allocation3 + $0x3f] sm:$0xff]
        %v6861 = vld [vmem:[#allocation3 + $0x47] sm:$0xff]
        %v6862 = vld [vmem:[#allocation3 + $0x4f] sm:$0xff]
        %v6863 = vld [vmem:[#allocation3 + $0x57] sm:$0xff]
        %v6864 = vld [vmem:[#allocation3 + $0x5f] sm:$0xff]
        %v6865 = vld [vmem:[#allocation3 + $0x67] sm:$0xff]
        %v6866 = vld [vmem:[#allocation3 + $0x6f] sm:$0xff]
        %v6867 = vld [vmem:[#allocation3 + $0x77] sm:$0xff]
        %v6868 = vld [vmem:[#allocation3 + $0x7f] sm:$0xff]
        %v6869 = vld [vmem:[#allocation3 + $0x87] sm:$0xff]
        %v6870 = vld [vmem:[#allocation3 + $0x8f] sm:$0xff]
        %v6871 = vld [vmem:[#allocation3 + $0x97] sm:$0xff]
        %v6872 = vld [vmem:[#allocation3 + $0x9f] sm:$0xff]
        %v6873 = vld [vmem:[#allocation3 + $0xa7] sm:$0xff]
        %v6874 = vld [vmem:[#allocation3 + $0xaf] sm:$0xff]
        %v6875 = vld [vmem:[#allocation3 + $0xb7] sm:$0xff]
        %v6876 = vld [vmem:[#allocation3 + $0xbf] sm:$0xff]
        %v6877 = vld [vmem:[#allocation3 + $0xc7] sm:$0xff]
        %v6878 = vld [vmem:[#allocation3 + $0xcf] sm:$0xff]
        %v6879 = vld [vmem:[#allocation3 + $0xd7] sm:$0xff]
        %v6880 = vld [vmem:[#allocation3 + $0xdf] sm:$0xff]
        %v6881 = vld [vmem:[#allocation3 + $0xe7] sm:$0xff]
        %v6882 = vld [vmem:[#allocation3 + $0xef] sm:$0xff]
        %v6883 = vld [vmem:[#allocation3 + $0xf7] sm:$0xff]
        %v6884 = vld [vmem:[#allocation3 + $0xff] sm:$0xff]
        %v6885 = vld [vmem:[#allocation3 + $0x107] sm:$0xff]
        %v6886 = vld [vmem:[#allocation3 + $0x10f] sm:$0xff]
        %v6887 = vsel %vm1934, %v6855, 0.0
        %v6888 = vsel %vm1935, %v6856, 0.0
        %v6889 = vsel %vm1936, %v6857, 0.0
        %v6890 = vsel %vm1937, %v6858, 0.0
        %v6891 = vsel %vm1938, %v6859, 0.0
        %v6892 = vsel %vm1939, %v6860, 0.0
        %v6893 = vsel %vm1940, %v6861, 0.0
        %v6894 = vsel %vm1941, %v6862, 0.0
        %v6895 = vsel %vm1942, %v6863, 0.0
        %v6896 = vsel %vm1943, %v6864, 0.0
        %v6897 = vsel %vm1944, %v6865, 0.0
        %v6898 = vsel %vm1945, %v6866, 0.0
        %v6899 = vsel %vm1946, %v6867, 0.0
        %v6900 = vsel %vm1947, %v6868, 0.0
        %v6901 = vsel %vm1948, %v6869, 0.0
        %v6902 = vsel %vm1949, %v6870, 0.0
        %v6903 = vsel %vm1950, %v6871, 0.0
        %v6904 = vsel %vm1951, %v6872, 0.0
        %v6905 = vsel %vm1952, %v6873, 0.0
        %v6906 = vsel %vm1953, %v6874, 0.0
        %v6907 = vsel %vm1954, %v6875, 0.0
        %v6908 = vsel %vm1955, %v6876, 0.0
        %v6909 = vsel %vm1956, %v6877, 0.0
        %v6910 = vsel %vm1957, %v6878, 0.0
        %v6911 = vsel %vm1958, %v6879, 0.0
        %v6912 = vsel %vm1959, %v6880, 0.0
        %v6913 = vsel %vm1960, %v6881, 0.0
        %v6914 = vsel %vm1961, %v6882, 0.0
        %v6915 = vsel %vm1962, %v6883, 0.0
        %v6916 = vsel %vm1963, %v6884, 0.0
        %v6917 = vsel %vm1964, %v6885, 0.0
        %v6918 = vsel %vm1965, %v6886, 0.0
        %v6919 = vpack.c.bf16 %v6888, %v6887
        %v6920 = vpack.c.bf16 %v6890, %v6889
        %v6921 = vpack.c.bf16 %v6892, %v6891
        %v6922 = vpack.c.bf16 %v6894, %v6893
        %v6923 = vpack.c.bf16 %v6896, %v6895
        %v6924 = vpack.c.bf16 %v6898, %v6897
        %v6925 = vpack.c.bf16 %v6900, %v6899
        %v6926 = vpack.c.bf16 %v6902, %v6901
        %v6927 = vpack.c.bf16 %v6904, %v6903
        %v6928 = vpack.c.bf16 %v6906, %v6905
        %v6929 = vpack.c.bf16 %v6908, %v6907
        %v6930 = vpack.c.bf16 %v6910, %v6909
        %v6931 = vpack.c.bf16 %v6912, %v6911
        %v6932 = vpack.c.bf16 %v6914, %v6913
        %v6933 = vpack.c.bf16 %v6916, %v6915
        %v6934 = vpack.c.bf16 %v6918, %v6917
        %s6935 = scalar_lea.vmem %s7, 192
        %v6936 = vld [vmem:[%s6935] sm:$0xf]
        %v6937 = vld [vmem:[%s6935 + $0x4] sm:$0xf]
        %v6938 = vld [vmem:[%s6935 + $0x8] sm:$0xf]
        %v6939 = vld [vmem:[%s6935 + $0xc] sm:$0xf]
        %v6940 = vld [vmem:[%s6935 + $0x10] sm:$0xf]
        %v6941 = vld [vmem:[%s6935 + $0x14] sm:$0xf]
        %v6942 = vld [vmem:[%s6935 + $0x18] sm:$0xf]
        %v6943 = vld [vmem:[%s6935 + $0x1c] sm:$0xf]
        %v6944 = vld [vmem:[%s6935 + $0x20] sm:$0xf]
        %v6945 = vld [vmem:[%s6935 + $0x24] sm:$0xf]
        %v6946 = vld [vmem:[%s6935 + $0x28] sm:$0xf]
        %v6947 = vld [vmem:[%s6935 + $0x2c] sm:$0xf]
        %v6948 = vld [vmem:[%s6935 + $0x30] sm:$0xf]
        %v6949 = vld [vmem:[%s6935 + $0x34] sm:$0xf]
        %v6950 = vld [vmem:[%s6935 + $0x38] sm:$0xf]
        %v6951 = vld [vmem:[%s6935 + $0x3c] sm:$0xf]
        %v6968 = vunpack.c.l.b16 %v6936
        %v6969 = vunpack.c.l.b16 %v6937
        %v6970 = vunpack.c.l.b16 %v6938
        %v6971 = vunpack.c.l.b16 %v6939
        %v6972 = vunpack.c.l.b16 %v6940
        %v6973 = vunpack.c.l.b16 %v6941
        %v6974 = vunpack.c.l.b16 %v6942
        %v6975 = vunpack.c.l.b16 %v6943
        %v6976 = vunpack.c.l.b16 %v6944
        %v6977 = vunpack.c.l.b16 %v6945
        %v6978 = vunpack.c.l.b16 %v6946
        %v6979 = vunpack.c.l.b16 %v6947
        %v6980 = vunpack.c.l.b16 %v6948
        %v6981 = vunpack.c.l.b16 %v6949
        %v6982 = vunpack.c.l.b16 %v6950
        %v6983 = vunpack.c.l.b16 %v6951
        %v6984 = vpack.c.b16 %v6969, %v6968
        %v6985 = vpack.c.b16 %v6971, %v6970
        %v6986 = vpack.c.b16 %v6973, %v6972
        %v6987 = vpack.c.b16 %v6975, %v6974
        %v6988 = vpack.c.b16 %v6977, %v6976
        %v6989 = vpack.c.b16 %v6979, %v6978
        %v6990 = vpack.c.b16 %v6981, %v6980
        %v6991 = vpack.c.b16 %v6983, %v6982
        %7000 = vmatprep.subr.bf16.mxu0 0
        %7001 = vmatpush1.bf16.msra.mxu0 %v6991
        %7002 = vmatprep.subr.bf16.mxu0 0
        %7003 = vmatpush1.bf16.msra.mxu0 %v6990
        %7004 = vmatprep.subr.bf16.mxu0 0
        %7005 = vmatpush1.bf16.msra.mxu0 %v6989
        %7006 = vmatprep.subr.bf16.mxu0 0
        %7007 = vmatpush1.bf16.msra.mxu0 %v6988
        %7008 = vmatprep.subr.bf16.mxu0 0
        %7009 = vmatpush1.bf16.msra.mxu0 %v6987
        %7010 = vmatprep.subr.bf16.mxu0 0
        %7011 = vmatpush1.bf16.msra.mxu0 %v6986
        %7012 = vmatprep.subr.bf16.mxu0 0
        %7013 = vmatpush1.bf16.msra.mxu0 %v6985
        %7014 = vmatprep.subr.bf16.mxu0 0
        %7015 = vmatpush1.bf16.msra.mxu0 %v6984
        %7016 = vmatprep.subr.bf16.mxu0 0
        %7017 = vmatpush2.bf16.msra.mxu0 0
        %7018 = vmatprep.subr.bf16.mxu0 0
        %7019 = vmatpush2.bf16.msra.mxu0 0
        %7020 = vmatprep.subr.bf16.mxu0 0
        %7021 = vmatpush2.bf16.msra.mxu0 0
        %7022 = vmatprep.subr.bf16.mxu0 0
        %7023 = vmatpush2.bf16.msra.mxu0 0
        %7024 = vmatprep.subr.bf16.mxu0 0
        %7025 = vmatpush2.bf16.msra.mxu0 0
        %7026 = vmatprep.subr.bf16.mxu0 0
        %7027 = vmatpush2.bf16.msra.mxu0 0
        %7028 = vmatprep.subr.bf16.mxu0 0
        %7029 = vmatpush2.bf16.msra.mxu0 0
        %7030 = vmatprep.subr.bf16.mxu0 0
        %7031 = vmatpush2.bf16.msra.mxu0 0
        %7032 = vmatprep.mubr.bf16.mxu0 0
        %7033 = vmatmul.mubr.bf16.gmra.mxu0 %v6919
        %v7034 = vpop.f32.mrf.mxu0
        %v7035 = vadd.f32 0.0, %v7034
        %v7036 = vpop.f32.mrf.mxu0
        %v7037 = vpop.f32.mrf.mxu0
        %v7038 = vadd.f32 0.0, %v7037
        %v7039 = vpop.f32.mrf.mxu0
        %7040 = vmatprep.mubr.bf16.mxu0 0
        %7041 = vmatmul.mubr.bf16.gmra.mxu0 %v6920
        %v7042 = vpop.f32.mrf.mxu0
        %v7043 = vadd.f32 0.0, %v7042
        %v7044 = vpop.f32.mrf.mxu0
        %v7045 = vpop.f32.mrf.mxu0
        %v7046 = vadd.f32 0.0, %v7045
        %v7047 = vpop.f32.mrf.mxu0
        %7048 = vmatprep.mubr.bf16.mxu0 0
        %7049 = vmatmul.mubr.bf16.gmra.mxu0 %v6921
        %v7050 = vpop.f32.mrf.mxu0
        %v7051 = vadd.f32 0.0, %v7050
        %v7052 = vpop.f32.mrf.mxu0
        %v7053 = vpop.f32.mrf.mxu0
        %v7054 = vadd.f32 0.0, %v7053
        %v7055 = vpop.f32.mrf.mxu0
        %7056 = vmatprep.mubr.bf16.mxu0 0
        %7057 = vmatmul.mubr.bf16.gmra.mxu0 %v6922
        %v7058 = vpop.f32.mrf.mxu0
        %v7059 = vadd.f32 0.0, %v7058
        %v7060 = vpop.f32.mrf.mxu0
        %v7061 = vpop.f32.mrf.mxu0
        %v7062 = vadd.f32 0.0, %v7061
        %v7063 = vpop.f32.mrf.mxu0
        %7064 = vmatprep.mubr.bf16.mxu0 0
        %7065 = vmatmul.mubr.bf16.gmra.mxu0 %v6923
        %v7066 = vpop.f32.mrf.mxu0
        %v7067 = vadd.f32 0.0, %v7066
        %v7068 = vpop.f32.mrf.mxu0
        %v7069 = vpop.f32.mrf.mxu0
        %v7070 = vadd.f32 0.0, %v7069
        %v7071 = vpop.f32.mrf.mxu0
        %7072 = vmatprep.mubr.bf16.mxu0 0
        %7073 = vmatmul.mubr.bf16.gmra.mxu0 %v6924
        %v7074 = vpop.f32.mrf.mxu0
        %v7075 = vadd.f32 0.0, %v7074
        %v7076 = vpop.f32.mrf.mxu0
        %v7077 = vpop.f32.mrf.mxu0
        %v7078 = vadd.f32 0.0, %v7077
        %v7079 = vpop.f32.mrf.mxu0
        %7080 = vmatprep.mubr.bf16.mxu0 0
        %7081 = vmatmul.mubr.bf16.gmra.mxu0 %v6925
        %v7082 = vpop.f32.mrf.mxu0
        %v7083 = vadd.f32 0.0, %v7082
        %v7084 = vpop.f32.mrf.mxu0
        %v7085 = vpop.f32.mrf.mxu0
        %v7086 = vadd.f32 0.0, %v7085
        %v7087 = vpop.f32.mrf.mxu0
        %7088 = vmatprep.mubr.bf16.mxu0 0
        %7089 = vmatmul.mubr.bf16.gmra.mxu0 %v6926
        %v7090 = vpop.f32.mrf.mxu0
        %v7091 = vadd.f32 0.0, %v7090
        %v7092 = vpop.f32.mrf.mxu0
        %v7093 = vpop.f32.mrf.mxu0
        %v7094 = vadd.f32 0.0, %v7093
        %v7095 = vpop.f32.mrf.mxu0
        %7096 = vmatprep.mubr.bf16.mxu0 0
        %7097 = vmatmul.mubr.bf16.gmra.mxu0 %v6927
        %v7098 = vpop.f32.mrf.mxu0
        %v7099 = vadd.f32 0.0, %v7098
        %v7100 = vpop.f32.mrf.mxu0
        %v7101 = vpop.f32.mrf.mxu0
        %v7102 = vadd.f32 0.0, %v7101
        %v7103 = vpop.f32.mrf.mxu0
        %7104 = vmatprep.mubr.bf16.mxu0 0
        %7105 = vmatmul.mubr.bf16.gmra.mxu0 %v6928
        %v7106 = vpop.f32.mrf.mxu0
        %v7107 = vadd.f32 0.0, %v7106
        %v7108 = vpop.f32.mrf.mxu0
        %v7109 = vpop.f32.mrf.mxu0
        %v7110 = vadd.f32 0.0, %v7109
        %v7111 = vpop.f32.mrf.mxu0
        %7112 = vmatprep.mubr.bf16.mxu0 0
        %7113 = vmatmul.mubr.bf16.gmra.mxu0 %v6929
        %v7114 = vpop.f32.mrf.mxu0
        %v7115 = vadd.f32 0.0, %v7114
        %v7116 = vpop.f32.mrf.mxu0
        %v7117 = vpop.f32.mrf.mxu0
        %v7118 = vadd.f32 0.0, %v7117
        %v7119 = vpop.f32.mrf.mxu0
        %7120 = vmatprep.mubr.bf16.mxu0 0
        %7121 = vmatmul.mubr.bf16.gmra.mxu0 %v6930
        %v7122 = vpop.f32.mrf.mxu0
        %v7123 = vadd.f32 0.0, %v7122
        %v7124 = vpop.f32.mrf.mxu0
        %v7125 = vpop.f32.mrf.mxu0
        %v7126 = vadd.f32 0.0, %v7125
        %v7127 = vpop.f32.mrf.mxu0
        %7128 = vmatprep.mubr.bf16.mxu0 0
        %7129 = vmatmul.mubr.bf16.gmra.mxu0 %v6931
        %v7130 = vpop.f32.mrf.mxu0
        %v7131 = vadd.f32 0.0, %v7130
        %v7132 = vpop.f32.mrf.mxu0
        %v7133 = vpop.f32.mrf.mxu0
        %v7134 = vadd.f32 0.0, %v7133
        %v7135 = vpop.f32.mrf.mxu0
        %7136 = vmatprep.mubr.bf16.mxu0 0
        %7137 = vmatmul.mubr.bf16.gmra.mxu0 %v6932
        %v7138 = vpop.f32.mrf.mxu0
        %v7139 = vadd.f32 0.0, %v7138
        %v7140 = vpop.f32.mrf.mxu0
        %v7141 = vpop.f32.mrf.mxu0
        %v7142 = vadd.f32 0.0, %v7141
        %v7143 = vpop.f32.mrf.mxu0
        %7144 = vmatprep.mubr.bf16.mxu0 0
        %7145 = vmatmul.mubr.bf16.gmra.mxu0 %v6933
        %v7146 = vpop.f32.mrf.mxu0
        %v7147 = vadd.f32 0.0, %v7146
        %v7148 = vpop.f32.mrf.mxu0
        %v7149 = vpop.f32.mrf.mxu0
        %v7150 = vadd.f32 0.0, %v7149
        %v7151 = vpop.f32.mrf.mxu0
        %7152 = vmatprep.mubr.bf16.mxu0 0
        %7153 = vmatmul.mubr.bf16.gmra.mxu0 %v6934
        %v7154 = vpop.f32.mrf.mxu0
        %v7155 = vadd.f32 0.0, %v7154
        %v7156 = vpop.f32.mrf.mxu0
        %v7157 = vpop.f32.mrf.mxu0
        %v7158 = vadd.f32 0.0, %v7157
        %v7159 = vpop.f32.mrf.mxu0
        %7160 = vdwg.mxu0
        %v7161 = vadd.f32 %v6823, %v7035
        %v7162 = vadd.f32 %v6824, %v7038
        %v7163 = vadd.f32 %v6825, %v7043
        %v7164 = vadd.f32 %v6826, %v7046
        %v7165 = vadd.f32 %v6827, %v7051
        %v7166 = vadd.f32 %v6828, %v7054
        %v7167 = vadd.f32 %v6829, %v7059
        %v7168 = vadd.f32 %v6830, %v7062
        %v7169 = vadd.f32 %v6831, %v7067
        %v7170 = vadd.f32 %v6832, %v7070
        %v7171 = vadd.f32 %v6833, %v7075
        %v7172 = vadd.f32 %v6834, %v7078
        %v7173 = vadd.f32 %v6835, %v7083
        %v7174 = vadd.f32 %v6836, %v7086
        %v7175 = vadd.f32 %v6837, %v7091
        %v7176 = vadd.f32 %v6838, %v7094
        %v7177 = vadd.f32 %v6839, %v7099
        %v7178 = vadd.f32 %v6840, %v7102
        %v7179 = vadd.f32 %v6841, %v7107
        %v7180 = vadd.f32 %v6842, %v7110
        %v7181 = vadd.f32 %v6843, %v7115
        %v7182 = vadd.f32 %v6844, %v7118
        %v7183 = vadd.f32 %v6845, %v7123
        %v7184 = vadd.f32 %v6846, %v7126
        %v7185 = vadd.f32 %v6847, %v7131
        %v7186 = vadd.f32 %v6848, %v7134
        %v7187 = vadd.f32 %v6849, %v7139
        %v7188 = vadd.f32 %v6850, %v7142
        %v7189 = vadd.f32 %v6851, %v7147
        %v7190 = vadd.f32 %v6852, %v7150
        %v7191 = vadd.f32 %v6853, %v7155
        %v7192 = vadd.f32 %v6854, %v7158
        %v7193 = vld [vmem:[#allocation3 + $0x18] sm:$0xff]
        %v7194 = vld [vmem:[#allocation3 + $0x20] sm:$0xff]
        %v7195 = vld [vmem:[#allocation3 + $0x28] sm:$0xff]
        %v7196 = vld [vmem:[#allocation3 + $0x30] sm:$0xff]
        %v7197 = vld [vmem:[#allocation3 + $0x38] sm:$0xff]
        %v7198 = vld [vmem:[#allocation3 + $0x40] sm:$0xff]
        %v7199 = vld [vmem:[#allocation3 + $0x48] sm:$0xff]
        %v7200 = vld [vmem:[#allocation3 + $0x50] sm:$0xff]
        %v7201 = vld [vmem:[#allocation3 + $0x58] sm:$0xff]
        %v7202 = vld [vmem:[#allocation3 + $0x60] sm:$0xff]
        %v7203 = vld [vmem:[#allocation3 + $0x68] sm:$0xff]
        %v7204 = vld [vmem:[#allocation3 + $0x70] sm:$0xff]
        %v7205 = vld [vmem:[#allocation3 + $0x78] sm:$0xff]
        %v7206 = vld [vmem:[#allocation3 + $0x80] sm:$0xff]
        %v7207 = vld [vmem:[#allocation3 + $0x88] sm:$0xff]
        %v7208 = vld [vmem:[#allocation3 + $0x90] sm:$0xff]
        %v7209 = vld [vmem:[#allocation3 + $0x98] sm:$0xff]
        %v7210 = vld [vmem:[#allocation3 + $0xa0] sm:$0xff]
        %v7211 = vld [vmem:[#allocation3 + $0xa8] sm:$0xff]
        %v7212 = vld [vmem:[#allocation3 + $0xb0] sm:$0xff]
        %v7213 = vld [vmem:[#allocation3 + $0xb8] sm:$0xff]
        %v7214 = vld [vmem:[#allocation3 + $0xc0] sm:$0xff]
        %v7215 = vld [vmem:[#allocation3 + $0xc8] sm:$0xff]
        %v7216 = vld [vmem:[#allocation3 + $0xd0] sm:$0xff]
        %v7217 = vld [vmem:[#allocation3 + $0xd8] sm:$0xff]
        %v7218 = vld [vmem:[#allocation3 + $0xe0] sm:$0xff]
        %v7219 = vld [vmem:[#allocation3 + $0xe8] sm:$0xff]
        %v7220 = vld [vmem:[#allocation3 + $0xf0] sm:$0xff]
        %v7221 = vld [vmem:[#allocation3 + $0xf8] sm:$0xff]
        %v7222 = vld [vmem:[#allocation3 + $0x100] sm:$0xff]
        %v7223 = vld [vmem:[#allocation3 + $0x108] sm:$0xff]
        %v7224 = vld [vmem:[#allocation3 + $0x110] sm:$0xff]
        %v7225 = vpack.c.bf16 %v7194, %v7193
        %v7226 = vpack.c.bf16 %v7196, %v7195
        %v7227 = vpack.c.bf16 %v7198, %v7197
        %v7228 = vpack.c.bf16 %v7200, %v7199
        %v7229 = vpack.c.bf16 %v7202, %v7201
        %v7230 = vpack.c.bf16 %v7204, %v7203
        %v7231 = vpack.c.bf16 %v7206, %v7205
        %v7232 = vpack.c.bf16 %v7208, %v7207
        %v7233 = vpack.c.bf16 %v7210, %v7209
        %v7234 = vpack.c.bf16 %v7212, %v7211
        %v7235 = vpack.c.bf16 %v7214, %v7213
        %v7236 = vpack.c.bf16 %v7216, %v7215
        %v7237 = vpack.c.bf16 %v7218, %v7217
        %v7238 = vpack.c.bf16 %v7220, %v7219
        %v7239 = vpack.c.bf16 %v7222, %v7221
        %v7240 = vpack.c.bf16 %v7224, %v7223
        %s7241 = scalar_lea.vmem %s7, 256
        %v7242 = vld [vmem:[%s7241] sm:$0xf]
        %v7243 = vld [vmem:[%s7241 + $0x4] sm:$0xf]
        %v7244 = vld [vmem:[%s7241 + $0x8] sm:$0xf]
        %v7245 = vld [vmem:[%s7241 + $0xc] sm:$0xf]
        %v7246 = vld [vmem:[%s7241 + $0x10] sm:$0xf]
        %v7247 = vld [vmem:[%s7241 + $0x14] sm:$0xf]
        %v7248 = vld [vmem:[%s7241 + $0x18] sm:$0xf]
        %v7249 = vld [vmem:[%s7241 + $0x1c] sm:$0xf]
        %v7250 = vld [vmem:[%s7241 + $0x20] sm:$0xf]
        %v7251 = vld [vmem:[%s7241 + $0x24] sm:$0xf]
        %v7252 = vld [vmem:[%s7241 + $0x28] sm:$0xf]
        %v7253 = vld [vmem:[%s7241 + $0x2c] sm:$0xf]
        %v7254 = vld [vmem:[%s7241 + $0x30] sm:$0xf]
        %v7255 = vld [vmem:[%s7241 + $0x34] sm:$0xf]
        %v7256 = vld [vmem:[%s7241 + $0x38] sm:$0xf]
        %v7257 = vld [vmem:[%s7241 + $0x3c] sm:$0xf]
        %v7274 = vunpack.c.l.b16 %v7242
        %v7275 = vunpack.c.l.b16 %v7243
        %v7276 = vunpack.c.l.b16 %v7244
        %v7277 = vunpack.c.l.b16 %v7245
        %v7278 = vunpack.c.l.b16 %v7246
        %v7279 = vunpack.c.l.b16 %v7247
        %v7280 = vunpack.c.l.b16 %v7248
        %v7281 = vunpack.c.l.b16 %v7249
        %v7282 = vunpack.c.l.b16 %v7250
        %v7283 = vunpack.c.l.b16 %v7251
        %v7284 = vunpack.c.l.b16 %v7252
        %v7285 = vunpack.c.l.b16 %v7253
        %v7286 = vunpack.c.l.b16 %v7254
        %v7287 = vunpack.c.l.b16 %v7255
        %v7288 = vunpack.c.l.b16 %v7256
        %v7289 = vunpack.c.l.b16 %v7257
        %v7290 = vpack.c.b16 %v7275, %v7274
        %v7291 = vpack.c.b16 %v7277, %v7276
        %v7292 = vpack.c.b16 %v7279, %v7278
        %v7293 = vpack.c.b16 %v7281, %v7280
        %v7294 = vpack.c.b16 %v7283, %v7282
        %v7295 = vpack.c.b16 %v7285, %v7284
        %v7296 = vpack.c.b16 %v7287, %v7286
        %v7297 = vpack.c.b16 %v7289, %v7288
        %7306 = vmatprep.subr.bf16.mxu0 0
        %7307 = vmatpush1.bf16.msra.mxu0 %v7297
        %7308 = vmatprep.subr.bf16.mxu0 0
        %7309 = vmatpush1.bf16.msra.mxu0 %v7296
        %7310 = vmatprep.subr.bf16.mxu0 0
        %7311 = vmatpush1.bf16.msra.mxu0 %v7295
        %7312 = vmatprep.subr.bf16.mxu0 0
        %7313 = vmatpush1.bf16.msra.mxu0 %v7294
        %7314 = vmatprep.subr.bf16.mxu0 0
        %7315 = vmatpush1.bf16.msra.mxu0 %v7293
        %7316 = vmatprep.subr.bf16.mxu0 0
        %7317 = vmatpush1.bf16.msra.mxu0 %v7292
        %7318 = vmatprep.subr.bf16.mxu0 0
        %7319 = vmatpush1.bf16.msra.mxu0 %v7291
        %7320 = vmatprep.subr.bf16.mxu0 0
        %7321 = vmatpush1.bf16.msra.mxu0 %v7290
        %7322 = vmatprep.subr.bf16.mxu0 0
        %7323 = vmatpush2.bf16.msra.mxu0 0
        %7324 = vmatprep.subr.bf16.mxu0 0
        %7325 = vmatpush2.bf16.msra.mxu0 0
        %7326 = vmatprep.subr.bf16.mxu0 0
        %7327 = vmatpush2.bf16.msra.mxu0 0
        %7328 = vmatprep.subr.bf16.mxu0 0
        %7329 = vmatpush2.bf16.msra.mxu0 0
        %7330 = vmatprep.subr.bf16.mxu0 0
        %7331 = vmatpush2.bf16.msra.mxu0 0
        %7332 = vmatprep.subr.bf16.mxu0 0
        %7333 = vmatpush2.bf16.msra.mxu0 0
        %7334 = vmatprep.subr.bf16.mxu0 0
        %7335 = vmatpush2.bf16.msra.mxu0 0
        %7336 = vmatprep.subr.bf16.mxu0 0
        %7337 = vmatpush2.bf16.msra.mxu0 0
        %7338 = vmatprep.mubr.bf16.mxu0 0
        %7339 = vmatmul.mubr.bf16.gmra.mxu0 %v7225
        %v7340 = vpop.f32.mrf.mxu0
        %v7341 = vadd.f32 0.0, %v7340
        %v7342 = vpop.f32.mrf.mxu0
        %v7343 = vpop.f32.mrf.mxu0
        %v7344 = vadd.f32 0.0, %v7343
        %v7345 = vpop.f32.mrf.mxu0
        %7346 = vmatprep.mubr.bf16.mxu0 0
        %7347 = vmatmul.mubr.bf16.gmra.mxu0 %v7226
        %v7348 = vpop.f32.mrf.mxu0
        %v7349 = vadd.f32 0.0, %v7348
        %v7350 = vpop.f32.mrf.mxu0
        %v7351 = vpop.f32.mrf.mxu0
        %v7352 = vadd.f32 0.0, %v7351
        %v7353 = vpop.f32.mrf.mxu0
        %7354 = vmatprep.mubr.bf16.mxu0 0
        %7355 = vmatmul.mubr.bf16.gmra.mxu0 %v7227
        %v7356 = vpop.f32.mrf.mxu0
        %v7357 = vadd.f32 0.0, %v7356
        %v7358 = vpop.f32.mrf.mxu0
        %v7359 = vpop.f32.mrf.mxu0
        %v7360 = vadd.f32 0.0, %v7359
        %v7361 = vpop.f32.mrf.mxu0
        %7362 = vmatprep.mubr.bf16.mxu0 0
        %7363 = vmatmul.mubr.bf16.gmra.mxu0 %v7228
        %v7364 = vpop.f32.mrf.mxu0
        %v7365 = vadd.f32 0.0, %v7364
        %v7366 = vpop.f32.mrf.mxu0
        %v7367 = vpop.f32.mrf.mxu0
        %v7368 = vadd.f32 0.0, %v7367
        %v7369 = vpop.f32.mrf.mxu0
        %7370 = vmatprep.mubr.bf16.mxu0 0
        %7371 = vmatmul.mubr.bf16.gmra.mxu0 %v7229
        %v7372 = vpop.f32.mrf.mxu0
        %v7373 = vadd.f32 0.0, %v7372
        %v7374 = vpop.f32.mrf.mxu0
        %v7375 = vpop.f32.mrf.mxu0
        %v7376 = vadd.f32 0.0, %v7375
        %v7377 = vpop.f32.mrf.mxu0
        %7378 = vmatprep.mubr.bf16.mxu0 0
        %7379 = vmatmul.mubr.bf16.gmra.mxu0 %v7230
        %v7380 = vpop.f32.mrf.mxu0
        %v7381 = vadd.f32 0.0, %v7380
        %v7382 = vpop.f32.mrf.mxu0
        %v7383 = vpop.f32.mrf.mxu0
        %v7384 = vadd.f32 0.0, %v7383
        %v7385 = vpop.f32.mrf.mxu0
        %7386 = vmatprep.mubr.bf16.mxu0 0
        %7387 = vmatmul.mubr.bf16.gmra.mxu0 %v7231
        %v7388 = vpop.f32.mrf.mxu0
        %v7389 = vadd.f32 0.0, %v7388
        %v7390 = vpop.f32.mrf.mxu0
        %v7391 = vpop.f32.mrf.mxu0
        %v7392 = vadd.f32 0.0, %v7391
        %v7393 = vpop.f32.mrf.mxu0
        %7394 = vmatprep.mubr.bf16.mxu0 0
        %7395 = vmatmul.mubr.bf16.gmra.mxu0 %v7232
        %v7396 = vpop.f32.mrf.mxu0
        %v7397 = vadd.f32 0.0, %v7396
        %v7398 = vpop.f32.mrf.mxu0
        %v7399 = vpop.f32.mrf.mxu0
        %v7400 = vadd.f32 0.0, %v7399
        %v7401 = vpop.f32.mrf.mxu0
        %7402 = vmatprep.mubr.bf16.mxu0 0
        %7403 = vmatmul.mubr.bf16.gmra.mxu0 %v7233
        %v7404 = vpop.f32.mrf.mxu0
        %v7405 = vadd.f32 0.0, %v7404
        %v7406 = vpop.f32.mrf.mxu0
        %v7407 = vpop.f32.mrf.mxu0
        %v7408 = vadd.f32 0.0, %v7407
        %v7409 = vpop.f32.mrf.mxu0
        %7410 = vmatprep.mubr.bf16.mxu0 0
        %7411 = vmatmul.mubr.bf16.gmra.mxu0 %v7234
        %v7412 = vpop.f32.mrf.mxu0
        %v7413 = vadd.f32 0.0, %v7412
        %v7414 = vpop.f32.mrf.mxu0
        %v7415 = vpop.f32.mrf.mxu0
        %v7416 = vadd.f32 0.0, %v7415
        %v7417 = vpop.f32.mrf.mxu0
        %7418 = vmatprep.mubr.bf16.mxu0 0
        %7419 = vmatmul.mubr.bf16.gmra.mxu0 %v7235
        %v7420 = vpop.f32.mrf.mxu0
        %v7421 = vadd.f32 0.0, %v7420
        %v7422 = vpop.f32.mrf.mxu0
        %v7423 = vpop.f32.mrf.mxu0
        %v7424 = vadd.f32 0.0, %v7423
        %v7425 = vpop.f32.mrf.mxu0
        %7426 = vmatprep.mubr.bf16.mxu0 0
        %7427 = vmatmul.mubr.bf16.gmra.mxu0 %v7236
        %v7428 = vpop.f32.mrf.mxu0
        %v7429 = vadd.f32 0.0, %v7428
        %v7430 = vpop.f32.mrf.mxu0
        %v7431 = vpop.f32.mrf.mxu0
        %v7432 = vadd.f32 0.0, %v7431
        %v7433 = vpop.f32.mrf.mxu0
        %7434 = vmatprep.mubr.bf16.mxu0 0
        %7435 = vmatmul.mubr.bf16.gmra.mxu0 %v7237
        %v7436 = vpop.f32.mrf.mxu0
        %v7437 = vadd.f32 0.0, %v7436
        %v7438 = vpop.f32.mrf.mxu0
        %v7439 = vpop.f32.mrf.mxu0
        %v7440 = vadd.f32 0.0, %v7439
        %v7441 = vpop.f32.mrf.mxu0
        %7442 = vmatprep.mubr.bf16.mxu0 0
        %7443 = vmatmul.mubr.bf16.gmra.mxu0 %v7238
        %v7444 = vpop.f32.mrf.mxu0
        %v7445 = vadd.f32 0.0, %v7444
        %v7446 = vpop.f32.mrf.mxu0
        %v7447 = vpop.f32.mrf.mxu0
        %v7448 = vadd.f32 0.0, %v7447
        %v7449 = vpop.f32.mrf.mxu0
        %7450 = vmatprep.mubr.bf16.mxu0 0
        %7451 = vmatmul.mubr.bf16.gmra.mxu0 %v7239
        %v7452 = vpop.f32.mrf.mxu0
        %v7453 = vadd.f32 0.0, %v7452
        %v7454 = vpop.f32.mrf.mxu0
        %v7455 = vpop.f32.mrf.mxu0
        %v7456 = vadd.f32 0.0, %v7455
        %v7457 = vpop.f32.mrf.mxu0
        %7458 = vmatprep.mubr.bf16.mxu0 0
        %7459 = vmatmul.mubr.bf16.gmra.mxu0 %v7240
        %v7460 = vpop.f32.mrf.mxu0
        %v7461 = vadd.f32 0.0, %v7460
        %v7462 = vpop.f32.mrf.mxu0
        %v7463 = vpop.f32.mrf.mxu0
        %v7464 = vadd.f32 0.0, %v7463
        %v7465 = vpop.f32.mrf.mxu0
        %7466 = vdwg.mxu0
        %v7467 = vadd.f32 %v7161, %v7341
        %v7468 = vadd.f32 %v7162, %v7344
        %v7469 = vadd.f32 %v7163, %v7349
        %v7470 = vadd.f32 %v7164, %v7352
        %v7471 = vadd.f32 %v7165, %v7357
        %v7472 = vadd.f32 %v7166, %v7360
        %v7473 = vadd.f32 %v7167, %v7365
        %v7474 = vadd.f32 %v7168, %v7368
        %v7475 = vadd.f32 %v7169, %v7373
        %v7476 = vadd.f32 %v7170, %v7376
        %v7477 = vadd.f32 %v7171, %v7381
        %v7478 = vadd.f32 %v7172, %v7384
        %v7479 = vadd.f32 %v7173, %v7389
        %v7480 = vadd.f32 %v7174, %v7392
        %v7481 = vadd.f32 %v7175, %v7397
        %v7482 = vadd.f32 %v7176, %v7400
        %v7483 = vadd.f32 %v7177, %v7405
        %v7484 = vadd.f32 %v7178, %v7408
        %v7485 = vadd.f32 %v7179, %v7413
        %v7486 = vadd.f32 %v7180, %v7416
        %v7487 = vadd.f32 %v7181, %v7421
        %v7488 = vadd.f32 %v7182, %v7424
        %v7489 = vadd.f32 %v7183, %v7429
        %v7490 = vadd.f32 %v7184, %v7432
        %v7491 = vadd.f32 %v7185, %v7437
        %v7492 = vadd.f32 %v7186, %v7440
        %v7493 = vadd.f32 %v7187, %v7445
        %v7494 = vadd.f32 %v7188, %v7448
        %v7495 = vadd.f32 %v7189, %v7453
        %v7496 = vadd.f32 %v7190, %v7456
        %v7497 = vadd.f32 %v7191, %v7461
        %v7498 = vadd.f32 %v7192, %v7464
        %v7499 = vld [vmem:[#allocation3 + $0x19] sm:$0xff]
        %v7500 = vld [vmem:[#allocation3 + $0x21] sm:$0xff]
        %v7501 = vld [vmem:[#allocation3 + $0x29] sm:$0xff]
        %v7502 = vld [vmem:[#allocation3 + $0x31] sm:$0xff]
        %v7503 = vld [vmem:[#allocation3 + $0x39] sm:$0xff]
        %v7504 = vld [vmem:[#allocation3 + $0x41] sm:$0xff]
        %v7505 = vld [vmem:[#allocation3 + $0x49] sm:$0xff]
        %v7506 = vld [vmem:[#allocation3 + $0x51] sm:$0xff]
        %v7507 = vld [vmem:[#allocation3 + $0x59] sm:$0xff]
        %v7508 = vld [vmem:[#allocation3 + $0x61] sm:$0xff]
        %v7509 = vld [vmem:[#allocation3 + $0x69] sm:$0xff]
        %v7510 = vld [vmem:[#allocation3 + $0x71] sm:$0xff]
        %v7511 = vld [vmem:[#allocation3 + $0x79] sm:$0xff]
        %v7512 = vld [vmem:[#allocation3 + $0x81] sm:$0xff]
        %v7513 = vld [vmem:[#allocation3 + $0x89] sm:$0xff]
        %v7514 = vld [vmem:[#allocation3 + $0x91] sm:$0xff]
        %v7515 = vld [vmem:[#allocation3 + $0x99] sm:$0xff]
        %v7516 = vld [vmem:[#allocation3 + $0xa1] sm:$0xff]
        %v7517 = vld [vmem:[#allocation3 + $0xa9] sm:$0xff]
        %v7518 = vld [vmem:[#allocation3 + $0xb1] sm:$0xff]
        %v7519 = vld [vmem:[#allocation3 + $0xb9] sm:$0xff]
        %v7520 = vld [vmem:[#allocation3 + $0xc1] sm:$0xff]
        %v7521 = vld [vmem:[#allocation3 + $0xc9] sm:$0xff]
        %v7522 = vld [vmem:[#allocation3 + $0xd1] sm:$0xff]
        %v7523 = vld [vmem:[#allocation3 + $0xd9] sm:$0xff]
        %v7524 = vld [vmem:[#allocation3 + $0xe1] sm:$0xff]
        %v7525 = vld [vmem:[#allocation3 + $0xe9] sm:$0xff]
        %v7526 = vld [vmem:[#allocation3 + $0xf1] sm:$0xff]
        %v7527 = vld [vmem:[#allocation3 + $0xf9] sm:$0xff]
        %v7528 = vld [vmem:[#allocation3 + $0x101] sm:$0xff]
        %v7529 = vld [vmem:[#allocation3 + $0x109] sm:$0xff]
        %v7530 = vld [vmem:[#allocation3 + $0x111] sm:$0xff]
        %v7531 = vsel %vm2609, %v7499, 0.0
        %v7532 = vsel %vm2610, %v7500, 0.0
        %v7533 = vsel %vm2611, %v7501, 0.0
        %v7534 = vsel %vm2612, %v7502, 0.0
        %v7535 = vsel %vm2613, %v7503, 0.0
        %v7536 = vsel %vm2614, %v7504, 0.0
        %v7537 = vsel %vm2615, %v7505, 0.0
        %v7538 = vsel %vm2616, %v7506, 0.0
        %v7539 = vsel %vm2617, %v7507, 0.0
        %v7540 = vsel %vm2618, %v7508, 0.0
        %v7541 = vsel %vm2619, %v7509, 0.0
        %v7542 = vsel %vm2620, %v7510, 0.0
        %v7543 = vsel %vm2621, %v7511, 0.0
        %v7544 = vsel %vm2622, %v7512, 0.0
        %v7545 = vsel %vm2623, %v7513, 0.0
        %v7546 = vsel %vm2624, %v7514, 0.0
        %v7547 = vsel %vm2625, %v7515, 0.0
        %v7548 = vsel %vm2626, %v7516, 0.0
        %v7549 = vsel %vm2627, %v7517, 0.0
        %v7550 = vsel %vm2628, %v7518, 0.0
        %v7551 = vsel %vm2629, %v7519, 0.0
        %v7552 = vsel %vm2630, %v7520, 0.0
        %v7553 = vsel %vm2631, %v7521, 0.0
        %v7554 = vsel %vm2632, %v7522, 0.0
        %v7555 = vsel %vm2633, %v7523, 0.0
        %v7556 = vsel %vm2634, %v7524, 0.0
        %v7557 = vsel %vm2635, %v7525, 0.0
        %v7558 = vsel %vm2636, %v7526, 0.0
        %v7559 = vsel %vm2637, %v7527, 0.0
        %v7560 = vsel %vm2638, %v7528, 0.0
        %v7561 = vsel %vm2639, %v7529, 0.0
        %v7562 = vsel %vm2640, %v7530, 0.0
        %v7563 = vpack.c.bf16 %v7532, %v7531
        %v7564 = vpack.c.bf16 %v7534, %v7533
        %v7565 = vpack.c.bf16 %v7536, %v7535
        %v7566 = vpack.c.bf16 %v7538, %v7537
        %v7567 = vpack.c.bf16 %v7540, %v7539
        %v7568 = vpack.c.bf16 %v7542, %v7541
        %v7569 = vpack.c.bf16 %v7544, %v7543
        %v7570 = vpack.c.bf16 %v7546, %v7545
        %v7571 = vpack.c.bf16 %v7548, %v7547
        %v7572 = vpack.c.bf16 %v7550, %v7549
        %v7573 = vpack.c.bf16 %v7552, %v7551
        %v7574 = vpack.c.bf16 %v7554, %v7553
        %v7575 = vpack.c.bf16 %v7556, %v7555
        %v7576 = vpack.c.bf16 %v7558, %v7557
        %v7577 = vpack.c.bf16 %v7560, %v7559
        %v7578 = vpack.c.bf16 %v7562, %v7561
        %s7579 = scalar_lea.vmem %s7, 320
        %v7580 = vld [vmem:[%s7579] sm:$0xf]
        %v7581 = vld [vmem:[%s7579 + $0x4] sm:$0xf]
        %v7582 = vld [vmem:[%s7579 + $0x8] sm:$0xf]
        %v7583 = vld [vmem:[%s7579 + $0xc] sm:$0xf]
        %v7584 = vld [vmem:[%s7579 + $0x10] sm:$0xf]
        %v7585 = vld [vmem:[%s7579 + $0x14] sm:$0xf]
        %v7586 = vld [vmem:[%s7579 + $0x18] sm:$0xf]
        %v7587 = vld [vmem:[%s7579 + $0x1c] sm:$0xf]
        %v7588 = vld [vmem:[%s7579 + $0x20] sm:$0xf]
        %v7589 = vld [vmem:[%s7579 + $0x24] sm:$0xf]
        %v7590 = vld [vmem:[%s7579 + $0x28] sm:$0xf]
        %v7591 = vld [vmem:[%s7579 + $0x2c] sm:$0xf]
        %v7592 = vld [vmem:[%s7579 + $0x30] sm:$0xf]
        %v7593 = vld [vmem:[%s7579 + $0x34] sm:$0xf]
        %v7594 = vld [vmem:[%s7579 + $0x38] sm:$0xf]
        %v7595 = vld [vmem:[%s7579 + $0x3c] sm:$0xf]
        %v7612 = vunpack.c.l.b16 %v7580
        %v7613 = vunpack.c.l.b16 %v7581
        %v7614 = vunpack.c.l.b16 %v7582
        %v7615 = vunpack.c.l.b16 %v7583
        %v7616 = vunpack.c.l.b16 %v7584
        %v7617 = vunpack.c.l.b16 %v7585
        %v7618 = vunpack.c.l.b16 %v7586
        %v7619 = vunpack.c.l.b16 %v7587
        %v7620 = vunpack.c.l.b16 %v7588
        %v7621 = vunpack.c.l.b16 %v7589
        %v7622 = vunpack.c.l.b16 %v7590
        %v7623 = vunpack.c.l.b16 %v7591
        %v7624 = vunpack.c.l.b16 %v7592
        %v7625 = vunpack.c.l.b16 %v7593
        %v7626 = vunpack.c.l.b16 %v7594
        %v7627 = vunpack.c.l.b16 %v7595
        %v7628 = vpack.c.b16 %v7613, %v7612
        %v7629 = vpack.c.b16 %v7615, %v7614
        %v7630 = vpack.c.b16 %v7617, %v7616
        %v7631 = vpack.c.b16 %v7619, %v7618
        %v7632 = vpack.c.b16 %v7621, %v7620
        %v7633 = vpack.c.b16 %v7623, %v7622
        %v7634 = vpack.c.b16 %v7625, %v7624
        %v7635 = vpack.c.b16 %v7627, %v7626
        %7644 = vmatprep.subr.bf16.mxu0 0
        %7645 = vmatpush1.bf16.msra.mxu0 %v7635
        %7646 = vmatprep.subr.bf16.mxu0 0
        %7647 = vmatpush1.bf16.msra.mxu0 %v7634
        %7648 = vmatprep.subr.bf16.mxu0 0
        %7649 = vmatpush1.bf16.msra.mxu0 %v7633
        %7650 = vmatprep.subr.bf16.mxu0 0
        %7651 = vmatpush1.bf16.msra.mxu0 %v7632
        %7652 = vmatprep.subr.bf16.mxu0 0
        %7653 = vmatpush1.bf16.msra.mxu0 %v7631
        %7654 = vmatprep.subr.bf16.mxu0 0
        %7655 = vmatpush1.bf16.msra.mxu0 %v7630
        %7656 = vmatprep.subr.bf16.mxu0 0
        %7657 = vmatpush1.bf16.msra.mxu0 %v7629
        %7658 = vmatprep.subr.bf16.mxu0 0
        %7659 = vmatpush1.bf16.msra.mxu0 %v7628
        %7660 = vmatprep.subr.bf16.mxu0 0
        %7661 = vmatpush2.bf16.msra.mxu0 0
        %7662 = vmatprep.subr.bf16.mxu0 0
        %7663 = vmatpush2.bf16.msra.mxu0 0
        %7664 = vmatprep.subr.bf16.mxu0 0
        %7665 = vmatpush2.bf16.msra.mxu0 0
        %7666 = vmatprep.subr.bf16.mxu0 0
        %7667 = vmatpush2.bf16.msra.mxu0 0
        %7668 = vmatprep.subr.bf16.mxu0 0
        %7669 = vmatpush2.bf16.msra.mxu0 0
        %7670 = vmatprep.subr.bf16.mxu0 0
        %7671 = vmatpush2.bf16.msra.mxu0 0
        %7672 = vmatprep.subr.bf16.mxu0 0
        %7673 = vmatpush2.bf16.msra.mxu0 0
        %7674 = vmatprep.subr.bf16.mxu0 0
        %7675 = vmatpush2.bf16.msra.mxu0 0
        %7676 = vmatprep.mubr.bf16.mxu0 0
        %7677 = vmatmul.mubr.bf16.gmra.mxu0 %v7563
        %v7678 = vpop.f32.mrf.mxu0
        %v7679 = vadd.f32 0.0, %v7678
        %v7680 = vpop.f32.mrf.mxu0
        %v7681 = vpop.f32.mrf.mxu0
        %v7682 = vadd.f32 0.0, %v7681
        %v7683 = vpop.f32.mrf.mxu0
        %7684 = vmatprep.mubr.bf16.mxu0 0
        %7685 = vmatmul.mubr.bf16.gmra.mxu0 %v7564
        %v7686 = vpop.f32.mrf.mxu0
        %v7687 = vadd.f32 0.0, %v7686
        %v7688 = vpop.f32.mrf.mxu0
        %v7689 = vpop.f32.mrf.mxu0
        %v7690 = vadd.f32 0.0, %v7689
        %v7691 = vpop.f32.mrf.mxu0
        %7692 = vmatprep.mubr.bf16.mxu0 0
        %7693 = vmatmul.mubr.bf16.gmra.mxu0 %v7565
        %v7694 = vpop.f32.mrf.mxu0
        %v7695 = vadd.f32 0.0, %v7694
        %v7696 = vpop.f32.mrf.mxu0
        %v7697 = vpop.f32.mrf.mxu0
        %v7698 = vadd.f32 0.0, %v7697
        %v7699 = vpop.f32.mrf.mxu0
        %7700 = vmatprep.mubr.bf16.mxu0 0
        %7701 = vmatmul.mubr.bf16.gmra.mxu0 %v7566
        %v7702 = vpop.f32.mrf.mxu0
        %v7703 = vadd.f32 0.0, %v7702
        %v7704 = vpop.f32.mrf.mxu0
        %v7705 = vpop.f32.mrf.mxu0
        %v7706 = vadd.f32 0.0, %v7705
        %v7707 = vpop.f32.mrf.mxu0
        %7708 = vmatprep.mubr.bf16.mxu0 0
        %7709 = vmatmul.mubr.bf16.gmra.mxu0 %v7567
        %v7710 = vpop.f32.mrf.mxu0
        %v7711 = vadd.f32 0.0, %v7710
        %v7712 = vpop.f32.mrf.mxu0
        %v7713 = vpop.f32.mrf.mxu0
        %v7714 = vadd.f32 0.0, %v7713
        %v7715 = vpop.f32.mrf.mxu0
        %7716 = vmatprep.mubr.bf16.mxu0 0
        %7717 = vmatmul.mubr.bf16.gmra.mxu0 %v7568
        %v7718 = vpop.f32.mrf.mxu0
        %v7719 = vadd.f32 0.0, %v7718
        %v7720 = vpop.f32.mrf.mxu0
        %v7721 = vpop.f32.mrf.mxu0
        %v7722 = vadd.f32 0.0, %v7721
        %v7723 = vpop.f32.mrf.mxu0
        %7724 = vmatprep.mubr.bf16.mxu0 0
        %7725 = vmatmul.mubr.bf16.gmra.mxu0 %v7569
        %v7726 = vpop.f32.mrf.mxu0
        %v7727 = vadd.f32 0.0, %v7726
        %v7728 = vpop.f32.mrf.mxu0
        %v7729 = vpop.f32.mrf.mxu0
        %v7730 = vadd.f32 0.0, %v7729
        %v7731 = vpop.f32.mrf.mxu0
        %7732 = vmatprep.mubr.bf16.mxu0 0
        %7733 = vmatmul.mubr.bf16.gmra.mxu0 %v7570
        %v7734 = vpop.f32.mrf.mxu0
        %v7735 = vadd.f32 0.0, %v7734
        %v7736 = vpop.f32.mrf.mxu0
        %v7737 = vpop.f32.mrf.mxu0
        %v7738 = vadd.f32 0.0, %v7737
        %v7739 = vpop.f32.mrf.mxu0
        %7740 = vmatprep.mubr.bf16.mxu0 0
        %7741 = vmatmul.mubr.bf16.gmra.mxu0 %v7571
        %v7742 = vpop.f32.mrf.mxu0
        %v7743 = vadd.f32 0.0, %v7742
        %v7744 = vpop.f32.mrf.mxu0
        %v7745 = vpop.f32.mrf.mxu0
        %v7746 = vadd.f32 0.0, %v7745
        %v7747 = vpop.f32.mrf.mxu0
        %7748 = vmatprep.mubr.bf16.mxu0 0
        %7749 = vmatmul.mubr.bf16.gmra.mxu0 %v7572
        %v7750 = vpop.f32.mrf.mxu0
        %v7751 = vadd.f32 0.0, %v7750
        %v7752 = vpop.f32.mrf.mxu0
        %v7753 = vpop.f32.mrf.mxu0
        %v7754 = vadd.f32 0.0, %v7753
        %v7755 = vpop.f32.mrf.mxu0
        %7756 = vmatprep.mubr.bf16.mxu0 0
        %7757 = vmatmul.mubr.bf16.gmra.mxu0 %v7573
        %v7758 = vpop.f32.mrf.mxu0
        %v7759 = vadd.f32 0.0, %v7758
        %v7760 = vpop.f32.mrf.mxu0
        %v7761 = vpop.f32.mrf.mxu0
        %v7762 = vadd.f32 0.0, %v7761
        %v7763 = vpop.f32.mrf.mxu0
        %7764 = vmatprep.mubr.bf16.mxu0 0
        %7765 = vmatmul.mubr.bf16.gmra.mxu0 %v7574
        %v7766 = vpop.f32.mrf.mxu0
        %v7767 = vadd.f32 0.0, %v7766
        %v7768 = vpop.f32.mrf.mxu0
        %v7769 = vpop.f32.mrf.mxu0
        %v7770 = vadd.f32 0.0, %v7769
        %v7771 = vpop.f32.mrf.mxu0
        %7772 = vmatprep.mubr.bf16.mxu0 0
        %7773 = vmatmul.mubr.bf16.gmra.mxu0 %v7575
        %v7774 = vpop.f32.mrf.mxu0
        %v7775 = vadd.f32 0.0, %v7774
        %v7776 = vpop.f32.mrf.mxu0
        %v7777 = vpop.f32.mrf.mxu0
        %v7778 = vadd.f32 0.0, %v7777
        %v7779 = vpop.f32.mrf.mxu0
        %7780 = vmatprep.mubr.bf16.mxu0 0
        %7781 = vmatmul.mubr.bf16.gmra.mxu0 %v7576
        %v7782 = vpop.f32.mrf.mxu0
        %v7783 = vadd.f32 0.0, %v7782
        %v7784 = vpop.f32.mrf.mxu0
        %v7785 = vpop.f32.mrf.mxu0
        %v7786 = vadd.f32 0.0, %v7785
        %v7787 = vpop.f32.mrf.mxu0
        %7788 = vmatprep.mubr.bf16.mxu0 0
        %7789 = vmatmul.mubr.bf16.gmra.mxu0 %v7577
        %v7790 = vpop.f32.mrf.mxu0
        %v7791 = vadd.f32 0.0, %v7790
        %v7792 = vpop.f32.mrf.mxu0
        %v7793 = vpop.f32.mrf.mxu0
        %v7794 = vadd.f32 0.0, %v7793
        %v7795 = vpop.f32.mrf.mxu0
        %7796 = vmatprep.mubr.bf16.mxu0 0
        %7797 = vmatmul.mubr.bf16.gmra.mxu0 %v7578
        %v7798 = vpop.f32.mrf.mxu0
        %v7799 = vadd.f32 0.0, %v7798
        %v7800 = vpop.f32.mrf.mxu0
        %v7801 = vpop.f32.mrf.mxu0
        %v7802 = vadd.f32 0.0, %v7801
        %v7803 = vpop.f32.mrf.mxu0
        %7804 = vdwg.mxu0
        %v7805 = vadd.f32 %v7467, %v7679
        %v7806 = vadd.f32 %v7468, %v7682
        %v7807 = vadd.f32 %v7469, %v7687
        %v7808 = vadd.f32 %v7470, %v7690
        %v7809 = vadd.f32 %v7471, %v7695
        %v7810 = vadd.f32 %v7472, %v7698
        %v7811 = vadd.f32 %v7473, %v7703
        %v7812 = vadd.f32 %v7474, %v7706
        %v7813 = vadd.f32 %v7475, %v7711
        %v7814 = vadd.f32 %v7476, %v7714
        %v7815 = vadd.f32 %v7477, %v7719
        %v7816 = vadd.f32 %v7478, %v7722
        %v7817 = vadd.f32 %v7479, %v7727
        %v7818 = vadd.f32 %v7480, %v7730
        %v7819 = vadd.f32 %v7481, %v7735
        %v7820 = vadd.f32 %v7482, %v7738
        %v7821 = vadd.f32 %v7483, %v7743
        %v7822 = vadd.f32 %v7484, %v7746
        %v7823 = vadd.f32 %v7485, %v7751
        %v7824 = vadd.f32 %v7486, %v7754
        %v7825 = vadd.f32 %v7487, %v7759
        %v7826 = vadd.f32 %v7488, %v7762
        %v7827 = vadd.f32 %v7489, %v7767
        %v7828 = vadd.f32 %v7490, %v7770
        %v7829 = vadd.f32 %v7491, %v7775
        %v7830 = vadd.f32 %v7492, %v7778
        %v7831 = vadd.f32 %v7493, %v7783
        %v7832 = vadd.f32 %v7494, %v7786
        %v7833 = vadd.f32 %v7495, %v7791
        %v7834 = vadd.f32 %v7496, %v7794
        %v7835 = vadd.f32 %v7497, %v7799
        %v7836 = vadd.f32 %v7498, %v7802
        %v7837 = vld [vmem:[#allocation3 + $0x27] sm:$0xff]
        %v7838 = vld [vmem:[#allocation3 + $0x2f] sm:$0xff]
        %v7839 = vld [vmem:[#allocation3 + $0x37] sm:$0xff]
        %v7840 = vld [vmem:[#allocation3 + $0x3f] sm:$0xff]
        %v7841 = vld [vmem:[#allocation3 + $0x47] sm:$0xff]
        %v7842 = vld [vmem:[#allocation3 + $0x4f] sm:$0xff]
        %v7843 = vld [vmem:[#allocation3 + $0x57] sm:$0xff]
        %v7844 = vld [vmem:[#allocation3 + $0x5f] sm:$0xff]
        %v7845 = vld [vmem:[#allocation3 + $0x67] sm:$0xff]
        %v7846 = vld [vmem:[#allocation3 + $0x6f] sm:$0xff]
        %v7847 = vld [vmem:[#allocation3 + $0x77] sm:$0xff]
        %v7848 = vld [vmem:[#allocation3 + $0x7f] sm:$0xff]
        %v7849 = vld [vmem:[#allocation3 + $0x87] sm:$0xff]
        %v7850 = vld [vmem:[#allocation3 + $0x8f] sm:$0xff]
        %v7851 = vld [vmem:[#allocation3 + $0x97] sm:$0xff]
        %v7852 = vld [vmem:[#allocation3 + $0x9f] sm:$0xff]
        %v7853 = vld [vmem:[#allocation3 + $0xa7] sm:$0xff]
        %v7854 = vld [vmem:[#allocation3 + $0xaf] sm:$0xff]
        %v7855 = vld [vmem:[#allocation3 + $0xb7] sm:$0xff]
        %v7856 = vld [vmem:[#allocation3 + $0xbf] sm:$0xff]
        %v7857 = vld [vmem:[#allocation3 + $0xc7] sm:$0xff]
        %v7858 = vld [vmem:[#allocation3 + $0xcf] sm:$0xff]
        %v7859 = vld [vmem:[#allocation3 + $0xd7] sm:$0xff]
        %v7860 = vld [vmem:[#allocation3 + $0xdf] sm:$0xff]
        %v7861 = vld [vmem:[#allocation3 + $0xe7] sm:$0xff]
        %v7862 = vld [vmem:[#allocation3 + $0xef] sm:$0xff]
        %v7863 = vld [vmem:[#allocation3 + $0xf7] sm:$0xff]
        %v7864 = vld [vmem:[#allocation3 + $0xff] sm:$0xff]
        %v7865 = vld [vmem:[#allocation3 + $0x107] sm:$0xff]
        %v7866 = vld [vmem:[#allocation3 + $0x10f] sm:$0xff]
        %v7867 = vld [vmem:[#allocation3 + $0x117] sm:$0xff]
        %v7868 = vld [vmem:[#allocation3 + $0x11f] sm:$0xff]
        %v7869 = vsel %vm1934, %v7837, 0.0
        %v7870 = vsel %vm1935, %v7838, 0.0
        %v7871 = vsel %vm1936, %v7839, 0.0
        %v7872 = vsel %vm1937, %v7840, 0.0
        %v7873 = vsel %vm1938, %v7841, 0.0
        %v7874 = vsel %vm1939, %v7842, 0.0
        %v7875 = vsel %vm1940, %v7843, 0.0
        %v7876 = vsel %vm1941, %v7844, 0.0
        %v7877 = vsel %vm1942, %v7845, 0.0
        %v7878 = vsel %vm1943, %v7846, 0.0
        %v7879 = vsel %vm1944, %v7847, 0.0
        %v7880 = vsel %vm1945, %v7848, 0.0
        %v7881 = vsel %vm1946, %v7849, 0.0
        %v7882 = vsel %vm1947, %v7850, 0.0
        %v7883 = vsel %vm1948, %v7851, 0.0
        %v7884 = vsel %vm1949, %v7852, 0.0
        %v7885 = vsel %vm1950, %v7853, 0.0
        %v7886 = vsel %vm1951, %v7854, 0.0
        %v7887 = vsel %vm1952, %v7855, 0.0
        %v7888 = vsel %vm1953, %v7856, 0.0
        %v7889 = vsel %vm1954, %v7857, 0.0
        %v7890 = vsel %vm1955, %v7858, 0.0
        %v7891 = vsel %vm1956, %v7859, 0.0
        %v7892 = vsel %vm1957, %v7860, 0.0
        %v7893 = vsel %vm1958, %v7861, 0.0
        %v7894 = vsel %vm1959, %v7862, 0.0
        %v7895 = vsel %vm1960, %v7863, 0.0
        %v7896 = vsel %vm1961, %v7864, 0.0
        %v7897 = vsel %vm1962, %v7865, 0.0
        %v7898 = vsel %vm1963, %v7866, 0.0
        %v7899 = vsel %vm1964, %v7867, 0.0
        %v7900 = vsel %vm1965, %v7868, 0.0
        %v7901 = vpack.c.bf16 %v7870, %v7869
        %v7902 = vpack.c.bf16 %v7872, %v7871
        %v7903 = vpack.c.bf16 %v7874, %v7873
        %v7904 = vpack.c.bf16 %v7876, %v7875
        %v7905 = vpack.c.bf16 %v7878, %v7877
        %v7906 = vpack.c.bf16 %v7880, %v7879
        %v7907 = vpack.c.bf16 %v7882, %v7881
        %v7908 = vpack.c.bf16 %v7884, %v7883
        %v7909 = vpack.c.bf16 %v7886, %v7885
        %v7910 = vpack.c.bf16 %v7888, %v7887
        %v7911 = vpack.c.bf16 %v7890, %v7889
        %v7912 = vpack.c.bf16 %v7892, %v7891
        %v7913 = vpack.c.bf16 %v7894, %v7893
        %v7914 = vpack.c.bf16 %v7896, %v7895
        %v7915 = vpack.c.bf16 %v7898, %v7897
        %v7916 = vpack.c.bf16 %v7900, %v7899
        %s7917 = scalar_lea.vmem %s7, 384
        %v7918 = vld [vmem:[%s7917] sm:$0xf]
        %v7919 = vld [vmem:[%s7917 + $0x4] sm:$0xf]
        %v7920 = vld [vmem:[%s7917 + $0x8] sm:$0xf]
        %v7921 = vld [vmem:[%s7917 + $0xc] sm:$0xf]
        %v7922 = vld [vmem:[%s7917 + $0x10] sm:$0xf]
        %v7923 = vld [vmem:[%s7917 + $0x14] sm:$0xf]
        %v7924 = vld [vmem:[%s7917 + $0x18] sm:$0xf]
        %v7925 = vld [vmem:[%s7917 + $0x1c] sm:$0xf]
        %v7926 = vld [vmem:[%s7917 + $0x20] sm:$0xf]
        %v7927 = vld [vmem:[%s7917 + $0x24] sm:$0xf]
        %v7928 = vld [vmem:[%s7917 + $0x28] sm:$0xf]
        %v7929 = vld [vmem:[%s7917 + $0x2c] sm:$0xf]
        %v7930 = vld [vmem:[%s7917 + $0x30] sm:$0xf]
        %v7931 = vld [vmem:[%s7917 + $0x34] sm:$0xf]
        %v7932 = vld [vmem:[%s7917 + $0x38] sm:$0xf]
        %v7933 = vld [vmem:[%s7917 + $0x3c] sm:$0xf]
        %v7950 = vunpack.c.l.b16 %v7918
        %v7951 = vunpack.c.l.b16 %v7919
        %v7952 = vunpack.c.l.b16 %v7920
        %v7953 = vunpack.c.l.b16 %v7921
        %v7954 = vunpack.c.l.b16 %v7922
        %v7955 = vunpack.c.l.b16 %v7923
        %v7956 = vunpack.c.l.b16 %v7924
        %v7957 = vunpack.c.l.b16 %v7925
        %v7958 = vunpack.c.l.b16 %v7926
        %v7959 = vunpack.c.l.b16 %v7927
        %v7960 = vunpack.c.l.b16 %v7928
        %v7961 = vunpack.c.l.b16 %v7929
        %v7962 = vunpack.c.l.b16 %v7930
        %v7963 = vunpack.c.l.b16 %v7931
        %v7964 = vunpack.c.l.b16 %v7932
        %v7965 = vunpack.c.l.b16 %v7933
        %v7966 = vpack.c.b16 %v7951, %v7950
        %v7967 = vpack.c.b16 %v7953, %v7952
        %v7968 = vpack.c.b16 %v7955, %v7954
        %v7969 = vpack.c.b16 %v7957, %v7956
        %v7970 = vpack.c.b16 %v7959, %v7958
        %v7971 = vpack.c.b16 %v7961, %v7960
        %v7972 = vpack.c.b16 %v7963, %v7962
        %v7973 = vpack.c.b16 %v7965, %v7964
        %7982 = vmatprep.subr.bf16.mxu0 0
        %7983 = vmatpush1.bf16.msra.mxu0 %v7973
        %7984 = vmatprep.subr.bf16.mxu0 0
        %7985 = vmatpush1.bf16.msra.mxu0 %v7972
        %7986 = vmatprep.subr.bf16.mxu0 0
        %7987 = vmatpush1.bf16.msra.mxu0 %v7971
        %7988 = vmatprep.subr.bf16.mxu0 0
        %7989 = vmatpush1.bf16.msra.mxu0 %v7970
        %7990 = vmatprep.subr.bf16.mxu0 0
        %7991 = vmatpush1.bf16.msra.mxu0 %v7969
        %7992 = vmatprep.subr.bf16.mxu0 0
        %7993 = vmatpush1.bf16.msra.mxu0 %v7968
        %7994 = vmatprep.subr.bf16.mxu0 0
        %7995 = vmatpush1.bf16.msra.mxu0 %v7967
        %7996 = vmatprep.subr.bf16.mxu0 0
        %7997 = vmatpush1.bf16.msra.mxu0 %v7966
        %7998 = vmatprep.subr.bf16.mxu0 0
        %7999 = vmatpush2.bf16.msra.mxu0 0
        %8000 = vmatprep.subr.bf16.mxu0 0
        %8001 = vmatpush2.bf16.msra.mxu0 0
        %8002 = vmatprep.subr.bf16.mxu0 0
        %8003 = vmatpush2.bf16.msra.mxu0 0
        %8004 = vmatprep.subr.bf16.mxu0 0
        %8005 = vmatpush2.bf16.msra.mxu0 0
        %8006 = vmatprep.subr.bf16.mxu0 0
        %8007 = vmatpush2.bf16.msra.mxu0 0
        %8008 = vmatprep.subr.bf16.mxu0 0
        %8009 = vmatpush2.bf16.msra.mxu0 0
        %8010 = vmatprep.subr.bf16.mxu0 0
        %8011 = vmatpush2.bf16.msra.mxu0 0
        %8012 = vmatprep.subr.bf16.mxu0 0
        %8013 = vmatpush2.bf16.msra.mxu0 0
        %8014 = vmatprep.mubr.bf16.mxu0 0
        %8015 = vmatmul.mubr.bf16.gmra.mxu0 %v7901
        %v8016 = vpop.f32.mrf.mxu0
        %v8017 = vadd.f32 0.0, %v8016
        %v8018 = vpop.f32.mrf.mxu0
        %v8019 = vpop.f32.mrf.mxu0
        %v8020 = vadd.f32 0.0, %v8019
        %v8021 = vpop.f32.mrf.mxu0
        %8022 = vmatprep.mubr.bf16.mxu0 0
        %8023 = vmatmul.mubr.bf16.gmra.mxu0 %v7902
        %v8024 = vpop.f32.mrf.mxu0
        %v8025 = vadd.f32 0.0, %v8024
        %v8026 = vpop.f32.mrf.mxu0
        %v8027 = vpop.f32.mrf.mxu0
        %v8028 = vadd.f32 0.0, %v8027
        %v8029 = vpop.f32.mrf.mxu0
        %8030 = vmatprep.mubr.bf16.mxu0 0
        %8031 = vmatmul.mubr.bf16.gmra.mxu0 %v7903
        %v8032 = vpop.f32.mrf.mxu0
        %v8033 = vadd.f32 0.0, %v8032
        %v8034 = vpop.f32.mrf.mxu0
        %v8035 = vpop.f32.mrf.mxu0
        %v8036 = vadd.f32 0.0, %v8035
        %v8037 = vpop.f32.mrf.mxu0
        %8038 = vmatprep.mubr.bf16.mxu0 0
        %8039 = vmatmul.mubr.bf16.gmra.mxu0 %v7904
        %v8040 = vpop.f32.mrf.mxu0
        %v8041 = vadd.f32 0.0, %v8040
        %v8042 = vpop.f32.mrf.mxu0
        %v8043 = vpop.f32.mrf.mxu0
        %v8044 = vadd.f32 0.0, %v8043
        %v8045 = vpop.f32.mrf.mxu0
        %8046 = vmatprep.mubr.bf16.mxu0 0
        %8047 = vmatmul.mubr.bf16.gmra.mxu0 %v7905
        %v8048 = vpop.f32.mrf.mxu0
        %v8049 = vadd.f32 0.0, %v8048
        %v8050 = vpop.f32.mrf.mxu0
        %v8051 = vpop.f32.mrf.mxu0
        %v8052 = vadd.f32 0.0, %v8051
        %v8053 = vpop.f32.mrf.mxu0
        %8054 = vmatprep.mubr.bf16.mxu0 0
        %8055 = vmatmul.mubr.bf16.gmra.mxu0 %v7906
        %v8056 = vpop.f32.mrf.mxu0
        %v8057 = vadd.f32 0.0, %v8056
        %v8058 = vpop.f32.mrf.mxu0
        %v8059 = vpop.f32.mrf.mxu0
        %v8060 = vadd.f32 0.0, %v8059
        %v8061 = vpop.f32.mrf.mxu0
        %8062 = vmatprep.mubr.bf16.mxu0 0
        %8063 = vmatmul.mubr.bf16.gmra.mxu0 %v7907
        %v8064 = vpop.f32.mrf.mxu0
        %v8065 = vadd.f32 0.0, %v8064
        %v8066 = vpop.f32.mrf.mxu0
        %v8067 = vpop.f32.mrf.mxu0
        %v8068 = vadd.f32 0.0, %v8067
        %v8069 = vpop.f32.mrf.mxu0
        %8070 = vmatprep.mubr.bf16.mxu0 0
        %8071 = vmatmul.mubr.bf16.gmra.mxu0 %v7908
        %v8072 = vpop.f32.mrf.mxu0
        %v8073 = vadd.f32 0.0, %v8072
        %v8074 = vpop.f32.mrf.mxu0
        %v8075 = vpop.f32.mrf.mxu0
        %v8076 = vadd.f32 0.0, %v8075
        %v8077 = vpop.f32.mrf.mxu0
        %8078 = vmatprep.mubr.bf16.mxu0 0
        %8079 = vmatmul.mubr.bf16.gmra.mxu0 %v7909
        %v8080 = vpop.f32.mrf.mxu0
        %v8081 = vadd.f32 0.0, %v8080
        %v8082 = vpop.f32.mrf.mxu0
        %v8083 = vpop.f32.mrf.mxu0
        %v8084 = vadd.f32 0.0, %v8083
        %v8085 = vpop.f32.mrf.mxu0
        %8086 = vmatprep.mubr.bf16.mxu0 0
        %8087 = vmatmul.mubr.bf16.gmra.mxu0 %v7910
        %v8088 = vpop.f32.mrf.mxu0
        %v8089 = vadd.f32 0.0, %v8088
        %v8090 = vpop.f32.mrf.mxu0
        %v8091 = vpop.f32.mrf.mxu0
        %v8092 = vadd.f32 0.0, %v8091
        %v8093 = vpop.f32.mrf.mxu0
        %8094 = vmatprep.mubr.bf16.mxu0 0
        %8095 = vmatmul.mubr.bf16.gmra.mxu0 %v7911
        %v8096 = vpop.f32.mrf.mxu0
        %v8097 = vadd.f32 0.0, %v8096
        %v8098 = vpop.f32.mrf.mxu0
        %v8099 = vpop.f32.mrf.mxu0
        %v8100 = vadd.f32 0.0, %v8099
        %v8101 = vpop.f32.mrf.mxu0
        %8102 = vmatprep.mubr.bf16.mxu0 0
        %8103 = vmatmul.mubr.bf16.gmra.mxu0 %v7912
        %v8104 = vpop.f32.mrf.mxu0
        %v8105 = vadd.f32 0.0, %v8104
        %v8106 = vpop.f32.mrf.mxu0
        %v8107 = vpop.f32.mrf.mxu0
        %v8108 = vadd.f32 0.0, %v8107
        %v8109 = vpop.f32.mrf.mxu0
        %8110 = vmatprep.mubr.bf16.mxu0 0
        %8111 = vmatmul.mubr.bf16.gmra.mxu0 %v7913
        %v8112 = vpop.f32.mrf.mxu0
        %v8113 = vadd.f32 0.0, %v8112
        %v8114 = vpop.f32.mrf.mxu0
        %v8115 = vpop.f32.mrf.mxu0
        %v8116 = vadd.f32 0.0, %v8115
        %v8117 = vpop.f32.mrf.mxu0
        %8118 = vmatprep.mubr.bf16.mxu0 0
        %8119 = vmatmul.mubr.bf16.gmra.mxu0 %v7914
        %v8120 = vpop.f32.mrf.mxu0
        %v8121 = vadd.f32 0.0, %v8120
        %v8122 = vpop.f32.mrf.mxu0
        %v8123 = vpop.f32.mrf.mxu0
        %v8124 = vadd.f32 0.0, %v8123
        %v8125 = vpop.f32.mrf.mxu0
        %8126 = vmatprep.mubr.bf16.mxu0 0
        %8127 = vmatmul.mubr.bf16.gmra.mxu0 %v7915
        %v8128 = vpop.f32.mrf.mxu0
        %v8129 = vadd.f32 0.0, %v8128
        %v8130 = vpop.f32.mrf.mxu0
        %v8131 = vpop.f32.mrf.mxu0
        %v8132 = vadd.f32 0.0, %v8131
        %v8133 = vpop.f32.mrf.mxu0
        %8134 = vmatprep.mubr.bf16.mxu0 0
        %8135 = vmatmul.mubr.bf16.gmra.mxu0 %v7916
        %v8136 = vpop.f32.mrf.mxu0
        %v8137 = vadd.f32 0.0, %v8136
        %v8138 = vpop.f32.mrf.mxu0
        %v8139 = vpop.f32.mrf.mxu0
        %v8140 = vadd.f32 0.0, %v8139
        %v8141 = vpop.f32.mrf.mxu0
        %8142 = vdwg.mxu0
        %v8143 = vadd.f32 %v7805, %v8017
        %v8144 = vadd.f32 %v7806, %v8020
        %v8145 = vadd.f32 %v7807, %v8025
        %v8146 = vadd.f32 %v7808, %v8028
        %v8147 = vadd.f32 %v7809, %v8033
        %v8148 = vadd.f32 %v7810, %v8036
        %v8149 = vadd.f32 %v7811, %v8041
        %v8150 = vadd.f32 %v7812, %v8044
        %v8151 = vadd.f32 %v7813, %v8049
        %v8152 = vadd.f32 %v7814, %v8052
        %v8153 = vadd.f32 %v7815, %v8057
        %v8154 = vadd.f32 %v7816, %v8060
        %v8155 = vadd.f32 %v7817, %v8065
        %v8156 = vadd.f32 %v7818, %v8068
        %v8157 = vadd.f32 %v7819, %v8073
        %v8158 = vadd.f32 %v7820, %v8076
        %v8159 = vadd.f32 %v7821, %v8081
        %v8160 = vadd.f32 %v7822, %v8084
        %v8161 = vadd.f32 %v7823, %v8089
        %v8162 = vadd.f32 %v7824, %v8092
        %v8163 = vadd.f32 %v7825, %v8097
        %v8164 = vadd.f32 %v7826, %v8100
        %v8165 = vadd.f32 %v7827, %v8105
        %v8166 = vadd.f32 %v7828, %v8108
        %v8167 = vadd.f32 %v7829, %v8113
        %v8168 = vadd.f32 %v7830, %v8116
        %v8169 = vadd.f32 %v7831, %v8121
        %v8170 = vadd.f32 %v7832, %v8124
        %v8171 = vadd.f32 %v7833, %v8129
        %v8172 = vadd.f32 %v7834, %v8132
        %v8173 = vadd.f32 %v7835, %v8137
        %v8174 = vadd.f32 %v7836, %v8140
        %v8175 = vld [vmem:[#allocation3 + $0x28] sm:$0xff]
        %v8176 = vld [vmem:[#allocation3 + $0x30] sm:$0xff]
        %v8177 = vld [vmem:[#allocation3 + $0x38] sm:$0xff]
        %v8178 = vld [vmem:[#allocation3 + $0x40] sm:$0xff]
        %v8179 = vld [vmem:[#allocation3 + $0x48] sm:$0xff]
        %v8180 = vld [vmem:[#allocation3 + $0x50] sm:$0xff]
        %v8181 = vld [vmem:[#allocation3 + $0x58] sm:$0xff]
        %v8182 = vld [vmem:[#allocation3 + $0x60] sm:$0xff]
        %v8183 = vld [vmem:[#allocation3 + $0x68] sm:$0xff]
        %v8184 = vld [vmem:[#allocation3 + $0x70] sm:$0xff]
        %v8185 = vld [vmem:[#allocation3 + $0x78] sm:$0xff]
        %v8186 = vld [vmem:[#allocation3 + $0x80] sm:$0xff]
        %v8187 = vld [vmem:[#allocation3 + $0x88] sm:$0xff]
        %v8188 = vld [vmem:[#allocation3 + $0x90] sm:$0xff]
        %v8189 = vld [vmem:[#allocation3 + $0x98] sm:$0xff]
        %v8190 = vld [vmem:[#allocation3 + $0xa0] sm:$0xff]
        %v8191 = vld [vmem:[#allocation3 + $0xa8] sm:$0xff]
        %v8192 = vld [vmem:[#allocation3 + $0xb0] sm:$0xff]
        %v8193 = vld [vmem:[#allocation3 + $0xb8] sm:$0xff]
        %v8194 = vld [vmem:[#allocation3 + $0xc0] sm:$0xff]
        %v8195 = vld [vmem:[#allocation3 + $0xc8] sm:$0xff]
        %v8196 = vld [vmem:[#allocation3 + $0xd0] sm:$0xff]
        %v8197 = vld [vmem:[#allocation3 + $0xd8] sm:$0xff]
        %v8198 = vld [vmem:[#allocation3 + $0xe0] sm:$0xff]
        %v8199 = vld [vmem:[#allocation3 + $0xe8] sm:$0xff]
        %v8200 = vld [vmem:[#allocation3 + $0xf0] sm:$0xff]
        %v8201 = vld [vmem:[#allocation3 + $0xf8] sm:$0xff]
        %v8202 = vld [vmem:[#allocation3 + $0x100] sm:$0xff]
        %v8203 = vld [vmem:[#allocation3 + $0x108] sm:$0xff]
        %v8204 = vld [vmem:[#allocation3 + $0x110] sm:$0xff]
        %v8205 = vld [vmem:[#allocation3 + $0x118] sm:$0xff]
        %v8206 = vld [vmem:[#allocation3 + $0x120] sm:$0xff]
        %v8207 = vpack.c.bf16 %v8176, %v8175
        %v8208 = vpack.c.bf16 %v8178, %v8177
        %v8209 = vpack.c.bf16 %v8180, %v8179
        %v8210 = vpack.c.bf16 %v8182, %v8181
        %v8211 = vpack.c.bf16 %v8184, %v8183
        %v8212 = vpack.c.bf16 %v8186, %v8185
        %v8213 = vpack.c.bf16 %v8188, %v8187
        %v8214 = vpack.c.bf16 %v8190, %v8189
        %v8215 = vpack.c.bf16 %v8192, %v8191
        %v8216 = vpack.c.bf16 %v8194, %v8193
        %v8217 = vpack.c.bf16 %v8196, %v8195
        %v8218 = vpack.c.bf16 %v8198, %v8197
        %v8219 = vpack.c.bf16 %v8200, %v8199
        %v8220 = vpack.c.bf16 %v8202, %v8201
        %v8221 = vpack.c.bf16 %v8204, %v8203
        %v8222 = vpack.c.bf16 %v8206, %v8205
        %s8223 = scalar_lea.vmem %s7, 448
        %v8224 = vld [vmem:[%s8223] sm:$0xf]
        %v8225 = vld [vmem:[%s8223 + $0x4] sm:$0xf]
        %v8226 = vld [vmem:[%s8223 + $0x8] sm:$0xf]
        %v8227 = vld [vmem:[%s8223 + $0xc] sm:$0xf]
        %v8228 = vld [vmem:[%s8223 + $0x10] sm:$0xf]
        %v8229 = vld [vmem:[%s8223 + $0x14] sm:$0xf]
        %v8230 = vld [vmem:[%s8223 + $0x18] sm:$0xf]
        %v8231 = vld [vmem:[%s8223 + $0x1c] sm:$0xf]
        %v8232 = vld [vmem:[%s8223 + $0x20] sm:$0xf]
        %v8233 = vld [vmem:[%s8223 + $0x24] sm:$0xf]
        %v8234 = vld [vmem:[%s8223 + $0x28] sm:$0xf]
        %v8235 = vld [vmem:[%s8223 + $0x2c] sm:$0xf]
        %v8236 = vld [vmem:[%s8223 + $0x30] sm:$0xf]
        %v8237 = vld [vmem:[%s8223 + $0x34] sm:$0xf]
        %v8238 = vld [vmem:[%s8223 + $0x38] sm:$0xf]
        %v8239 = vld [vmem:[%s8223 + $0x3c] sm:$0xf]
        %v8256 = vunpack.c.l.b16 %v8224
        %v8257 = vunpack.c.l.b16 %v8225
        %v8258 = vunpack.c.l.b16 %v8226
        %v8259 = vunpack.c.l.b16 %v8227
        %v8260 = vunpack.c.l.b16 %v8228
        %v8261 = vunpack.c.l.b16 %v8229
        %v8262 = vunpack.c.l.b16 %v8230
        %v8263 = vunpack.c.l.b16 %v8231
        %v8264 = vunpack.c.l.b16 %v8232
        %v8265 = vunpack.c.l.b16 %v8233
        %v8266 = vunpack.c.l.b16 %v8234
        %v8267 = vunpack.c.l.b16 %v8235
        %v8268 = vunpack.c.l.b16 %v8236
        %v8269 = vunpack.c.l.b16 %v8237
        %v8270 = vunpack.c.l.b16 %v8238
        %v8271 = vunpack.c.l.b16 %v8239
        %v8272 = vpack.c.b16 %v8257, %v8256
        %v8273 = vpack.c.b16 %v8259, %v8258
        %v8274 = vpack.c.b16 %v8261, %v8260
        %v8275 = vpack.c.b16 %v8263, %v8262
        %v8276 = vpack.c.b16 %v8265, %v8264
        %v8277 = vpack.c.b16 %v8267, %v8266
        %v8278 = vpack.c.b16 %v8269, %v8268
        %v8279 = vpack.c.b16 %v8271, %v8270
        %8288 = vmatprep.subr.bf16.mxu0 0
        %8289 = vmatpush1.bf16.msra.mxu0 %v8279
        %8290 = vmatprep.subr.bf16.mxu0 0
        %8291 = vmatpush1.bf16.msra.mxu0 %v8278
        %8292 = vmatprep.subr.bf16.mxu0 0
        %8293 = vmatpush1.bf16.msra.mxu0 %v8277
        %8294 = vmatprep.subr.bf16.mxu0 0
        %8295 = vmatpush1.bf16.msra.mxu0 %v8276
        %8296 = vmatprep.subr.bf16.mxu0 0
        %8297 = vmatpush1.bf16.msra.mxu0 %v8275
        %8298 = vmatprep.subr.bf16.mxu0 0
        %8299 = vmatpush1.bf16.msra.mxu0 %v8274
        %8300 = vmatprep.subr.bf16.mxu0 0
        %8301 = vmatpush1.bf16.msra.mxu0 %v8273
        %8302 = vmatprep.subr.bf16.mxu0 0
        %8303 = vmatpush1.bf16.msra.mxu0 %v8272
        %8304 = vmatprep.subr.bf16.mxu0 0
        %8305 = vmatpush2.bf16.msra.mxu0 0
        %8306 = vmatprep.subr.bf16.mxu0 0
        %8307 = vmatpush2.bf16.msra.mxu0 0
        %8308 = vmatprep.subr.bf16.mxu0 0
        %8309 = vmatpush2.bf16.msra.mxu0 0
        %8310 = vmatprep.subr.bf16.mxu0 0
        %8311 = vmatpush2.bf16.msra.mxu0 0
        %8312 = vmatprep.subr.bf16.mxu0 0
        %8313 = vmatpush2.bf16.msra.mxu0 0
        %8314 = vmatprep.subr.bf16.mxu0 0
        %8315 = vmatpush2.bf16.msra.mxu0 0
        %8316 = vmatprep.subr.bf16.mxu0 0
        %8317 = vmatpush2.bf16.msra.mxu0 0
        %8318 = vmatprep.subr.bf16.mxu0 0
        %8319 = vmatpush2.bf16.msra.mxu0 0
        %8320 = vmatprep.mubr.bf16.mxu0 0
        %8321 = vmatmul.mubr.bf16.gmra.mxu0 %v8207
        %v8322 = vpop.f32.mrf.mxu0
        %v8323 = vadd.f32 0.0, %v8322
        %v8324 = vpop.f32.mrf.mxu0
        %v8325 = vpop.f32.mrf.mxu0
        %v8326 = vadd.f32 0.0, %v8325
        %v8327 = vpop.f32.mrf.mxu0
        %8328 = vmatprep.mubr.bf16.mxu0 0
        %8329 = vmatmul.mubr.bf16.gmra.mxu0 %v8208
        %v8330 = vpop.f32.mrf.mxu0
        %v8331 = vadd.f32 0.0, %v8330
        %v8332 = vpop.f32.mrf.mxu0
        %v8333 = vpop.f32.mrf.mxu0
        %v8334 = vadd.f32 0.0, %v8333
        %v8335 = vpop.f32.mrf.mxu0
        %8336 = vmatprep.mubr.bf16.mxu0 0
        %8337 = vmatmul.mubr.bf16.gmra.mxu0 %v8209
        %v8338 = vpop.f32.mrf.mxu0
        %v8339 = vadd.f32 0.0, %v8338
        %v8340 = vpop.f32.mrf.mxu0
        %v8341 = vpop.f32.mrf.mxu0
        %v8342 = vadd.f32 0.0, %v8341
        %v8343 = vpop.f32.mrf.mxu0
        %8344 = vmatprep.mubr.bf16.mxu0 0
        %8345 = vmatmul.mubr.bf16.gmra.mxu0 %v8210
        %v8346 = vpop.f32.mrf.mxu0
        %v8347 = vadd.f32 0.0, %v8346
        %v8348 = vpop.f32.mrf.mxu0
        %v8349 = vpop.f32.mrf.mxu0
        %v8350 = vadd.f32 0.0, %v8349
        %v8351 = vpop.f32.mrf.mxu0
        %8352 = vmatprep.mubr.bf16.mxu0 0
        %8353 = vmatmul.mubr.bf16.gmra.mxu0 %v8211
        %v8354 = vpop.f32.mrf.mxu0
        %v8355 = vadd.f32 0.0, %v8354
        %v8356 = vpop.f32.mrf.mxu0
        %v8357 = vpop.f32.mrf.mxu0
        %v8358 = vadd.f32 0.0, %v8357
        %v8359 = vpop.f32.mrf.mxu0
        %8360 = vmatprep.mubr.bf16.mxu0 0
        %8361 = vmatmul.mubr.bf16.gmra.mxu0 %v8212
        %v8362 = vpop.f32.mrf.mxu0
        %v8363 = vadd.f32 0.0, %v8362
        %v8364 = vpop.f32.mrf.mxu0
        %v8365 = vpop.f32.mrf.mxu0
        %v8366 = vadd.f32 0.0, %v8365
        %v8367 = vpop.f32.mrf.mxu0
        %8368 = vmatprep.mubr.bf16.mxu0 0
        %8369 = vmatmul.mubr.bf16.gmra.mxu0 %v8213
        %v8370 = vpop.f32.mrf.mxu0
        %v8371 = vadd.f32 0.0, %v8370
        %v8372 = vpop.f32.mrf.mxu0
        %v8373 = vpop.f32.mrf.mxu0
        %v8374 = vadd.f32 0.0, %v8373
        %v8375 = vpop.f32.mrf.mxu0
        %8376 = vmatprep.mubr.bf16.mxu0 0
        %8377 = vmatmul.mubr.bf16.gmra.mxu0 %v8214
        %v8378 = vpop.f32.mrf.mxu0
        %v8379 = vadd.f32 0.0, %v8378
        %v8380 = vpop.f32.mrf.mxu0
        %v8381 = vpop.f32.mrf.mxu0
        %v8382 = vadd.f32 0.0, %v8381
        %v8383 = vpop.f32.mrf.mxu0
        %8384 = vmatprep.mubr.bf16.mxu0 0
        %8385 = vmatmul.mubr.bf16.gmra.mxu0 %v8215
        %v8386 = vpop.f32.mrf.mxu0
        %v8387 = vadd.f32 0.0, %v8386
        %v8388 = vpop.f32.mrf.mxu0
        %v8389 = vpop.f32.mrf.mxu0
        %v8390 = vadd.f32 0.0, %v8389
        %v8391 = vpop.f32.mrf.mxu0
        %8392 = vmatprep.mubr.bf16.mxu0 0
        %8393 = vmatmul.mubr.bf16.gmra.mxu0 %v8216
        %v8394 = vpop.f32.mrf.mxu0
        %v8395 = vadd.f32 0.0, %v8394
        %v8396 = vpop.f32.mrf.mxu0
        %v8397 = vpop.f32.mrf.mxu0
        %v8398 = vadd.f32 0.0, %v8397
        %v8399 = vpop.f32.mrf.mxu0
        %8400 = vmatprep.mubr.bf16.mxu0 0
        %8401 = vmatmul.mubr.bf16.gmra.mxu0 %v8217
        %v8402 = vpop.f32.mrf.mxu0
        %v8403 = vadd.f32 0.0, %v8402
        %v8404 = vpop.f32.mrf.mxu0
        %v8405 = vpop.f32.mrf.mxu0
        %v8406 = vadd.f32 0.0, %v8405
        %v8407 = vpop.f32.mrf.mxu0
        %8408 = vmatprep.mubr.bf16.mxu0 0
        %8409 = vmatmul.mubr.bf16.gmra.mxu0 %v8218
        %v8410 = vpop.f32.mrf.mxu0
        %v8411 = vadd.f32 0.0, %v8410
        %v8412 = vpop.f32.mrf.mxu0
        %v8413 = vpop.f32.mrf.mxu0
        %v8414 = vadd.f32 0.0, %v8413
        %v8415 = vpop.f32.mrf.mxu0
        %8416 = vmatprep.mubr.bf16.mxu0 0
        %8417 = vmatmul.mubr.bf16.gmra.mxu0 %v8219
        %v8418 = vpop.f32.mrf.mxu0
        %v8419 = vadd.f32 0.0, %v8418
        %v8420 = vpop.f32.mrf.mxu0
        %v8421 = vpop.f32.mrf.mxu0
        %v8422 = vadd.f32 0.0, %v8421
        %v8423 = vpop.f32.mrf.mxu0
        %8424 = vmatprep.mubr.bf16.mxu0 0
        %8425 = vmatmul.mubr.bf16.gmra.mxu0 %v8220
        %v8426 = vpop.f32.mrf.mxu0
        %v8427 = vadd.f32 0.0, %v8426
        %v8428 = vpop.f32.mrf.mxu0
        %v8429 = vpop.f32.mrf.mxu0
        %v8430 = vadd.f32 0.0, %v8429
        %v8431 = vpop.f32.mrf.mxu0
        %8432 = vmatprep.mubr.bf16.mxu0 0
        %8433 = vmatmul.mubr.bf16.gmra.mxu0 %v8221
        %v8434 = vpop.f32.mrf.mxu0
        %v8435 = vadd.f32 0.0, %v8434
        %v8436 = vpop.f32.mrf.mxu0
        %v8437 = vpop.f32.mrf.mxu0
        %v8438 = vadd.f32 0.0, %v8437
        %v8439 = vpop.f32.mrf.mxu0
        %8440 = vmatprep.mubr.bf16.mxu0 0
        %8441 = vmatmul.mubr.bf16.gmra.mxu0 %v8222
        %v8442 = vpop.f32.mrf.mxu0
        %v8443 = vadd.f32 0.0, %v8442
        %v8444 = vpop.f32.mrf.mxu0
        %v8445 = vpop.f32.mrf.mxu0
        %v8446 = vadd.f32 0.0, %v8445
        %v8447 = vpop.f32.mrf.mxu0
        %8448 = vdwg.mxu0
        %v8449 = vadd.f32 %v8143, %v8323
        %v8450 = vadd.f32 %v8144, %v8326
        %v8451 = vadd.f32 %v8145, %v8331
        %v8452 = vadd.f32 %v8146, %v8334
        %v8453 = vadd.f32 %v8147, %v8339
        %v8454 = vadd.f32 %v8148, %v8342
        %v8455 = vadd.f32 %v8149, %v8347
        %v8456 = vadd.f32 %v8150, %v8350
        %v8457 = vadd.f32 %v8151, %v8355
        %v8458 = vadd.f32 %v8152, %v8358
        %v8459 = vadd.f32 %v8153, %v8363
        %v8460 = vadd.f32 %v8154, %v8366
        %v8461 = vadd.f32 %v8155, %v8371
        %v8462 = vadd.f32 %v8156, %v8374
        %v8463 = vadd.f32 %v8157, %v8379
        %v8464 = vadd.f32 %v8158, %v8382
        %v8465 = vadd.f32 %v8159, %v8387
        %v8466 = vadd.f32 %v8160, %v8390
        %v8467 = vadd.f32 %v8161, %v8395
        %v8468 = vadd.f32 %v8162, %v8398
        %v8469 = vadd.f32 %v8163, %v8403
        %v8470 = vadd.f32 %v8164, %v8406
        %v8471 = vadd.f32 %v8165, %v8411
        %v8472 = vadd.f32 %v8166, %v8414
        %v8473 = vadd.f32 %v8167, %v8419
        %v8474 = vadd.f32 %v8168, %v8422
        %v8475 = vadd.f32 %v8169, %v8427
        %v8476 = vadd.f32 %v8170, %v8430
        %v8477 = vadd.f32 %v8171, %v8435
        %v8478 = vadd.f32 %v8172, %v8438
        %v8479 = vadd.f32 %v8173, %v8443
        %v8480 = vadd.f32 %v8174, %v8446
        %v8481 = vld [vmem:[#allocation3 + $0x29] sm:$0xff]
        %v8482 = vld [vmem:[#allocation3 + $0x31] sm:$0xff]
        %v8483 = vld [vmem:[#allocation3 + $0x39] sm:$0xff]
        %v8484 = vld [vmem:[#allocation3 + $0x41] sm:$0xff]
        %v8485 = vld [vmem:[#allocation3 + $0x49] sm:$0xff]
        %v8486 = vld [vmem:[#allocation3 + $0x51] sm:$0xff]
        %v8487 = vld [vmem:[#allocation3 + $0x59] sm:$0xff]
        %v8488 = vld [vmem:[#allocation3 + $0x61] sm:$0xff]
        %v8489 = vld [vmem:[#allocation3 + $0x69] sm:$0xff]
        %v8490 = vld [vmem:[#allocation3 + $0x71] sm:$0xff]
        %v8491 = vld [vmem:[#allocation3 + $0x79] sm:$0xff]
        %v8492 = vld [vmem:[#allocation3 + $0x81] sm:$0xff]
        %v8493 = vld [vmem:[#allocation3 + $0x89] sm:$0xff]
        %v8494 = vld [vmem:[#allocation3 + $0x91] sm:$0xff]
        %v8495 = vld [vmem:[#allocation3 + $0x99] sm:$0xff]
        %v8496 = vld [vmem:[#allocation3 + $0xa1] sm:$0xff]
        %v8497 = vld [vmem:[#allocation3 + $0xa9] sm:$0xff]
        %v8498 = vld [vmem:[#allocation3 + $0xb1] sm:$0xff]
        %v8499 = vld [vmem:[#allocation3 + $0xb9] sm:$0xff]
        %v8500 = vld [vmem:[#allocation3 + $0xc1] sm:$0xff]
        %v8501 = vld [vmem:[#allocation3 + $0xc9] sm:$0xff]
        %v8502 = vld [vmem:[#allocation3 + $0xd1] sm:$0xff]
        %v8503 = vld [vmem:[#allocation3 + $0xd9] sm:$0xff]
        %v8504 = vld [vmem:[#allocation3 + $0xe1] sm:$0xff]
        %v8505 = vld [vmem:[#allocation3 + $0xe9] sm:$0xff]
        %v8506 = vld [vmem:[#allocation3 + $0xf1] sm:$0xff]
        %v8507 = vld [vmem:[#allocation3 + $0xf9] sm:$0xff]
        %v8508 = vld [vmem:[#allocation3 + $0x101] sm:$0xff]
        %v8509 = vld [vmem:[#allocation3 + $0x109] sm:$0xff]
        %v8510 = vld [vmem:[#allocation3 + $0x111] sm:$0xff]
        %v8511 = vld [vmem:[#allocation3 + $0x119] sm:$0xff]
        %v8512 = vld [vmem:[#allocation3 + $0x121] sm:$0xff]
        %v8513 = vsel %vm2609, %v8481, 0.0
        %v8514 = vsel %vm2610, %v8482, 0.0
        %v8515 = vsel %vm2611, %v8483, 0.0
        %v8516 = vsel %vm2612, %v8484, 0.0
        %v8517 = vsel %vm2613, %v8485, 0.0
        %v8518 = vsel %vm2614, %v8486, 0.0
        %v8519 = vsel %vm2615, %v8487, 0.0
        %v8520 = vsel %vm2616, %v8488, 0.0
        %v8521 = vsel %vm2617, %v8489, 0.0
        %v8522 = vsel %vm2618, %v8490, 0.0
        %v8523 = vsel %vm2619, %v8491, 0.0
        %v8524 = vsel %vm2620, %v8492, 0.0
        %v8525 = vsel %vm2621, %v8493, 0.0
        %v8526 = vsel %vm2622, %v8494, 0.0
        %v8527 = vsel %vm2623, %v8495, 0.0
        %v8528 = vsel %vm2624, %v8496, 0.0
        %v8529 = vsel %vm2625, %v8497, 0.0
        %v8530 = vsel %vm2626, %v8498, 0.0
        %v8531 = vsel %vm2627, %v8499, 0.0
        %v8532 = vsel %vm2628, %v8500, 0.0
        %v8533 = vsel %vm2629, %v8501, 0.0
        %v8534 = vsel %vm2630, %v8502, 0.0
        %v8535 = vsel %vm2631, %v8503, 0.0
        %v8536 = vsel %vm2632, %v8504, 0.0
        %v8537 = vsel %vm2633, %v8505, 0.0
        %v8538 = vsel %vm2634, %v8506, 0.0
        %v8539 = vsel %vm2635, %v8507, 0.0
        %v8540 = vsel %vm2636, %v8508, 0.0
        %v8541 = vsel %vm2637, %v8509, 0.0
        %v8542 = vsel %vm2638, %v8510, 0.0
        %v8543 = vsel %vm2639, %v8511, 0.0
        %v8544 = vsel %vm2640, %v8512, 0.0
        %v8545 = vpack.c.bf16 %v8514, %v8513
        %v8546 = vpack.c.bf16 %v8516, %v8515
        %v8547 = vpack.c.bf16 %v8518, %v8517
        %v8548 = vpack.c.bf16 %v8520, %v8519
        %v8549 = vpack.c.bf16 %v8522, %v8521
        %v8550 = vpack.c.bf16 %v8524, %v8523
        %v8551 = vpack.c.bf16 %v8526, %v8525
        %v8552 = vpack.c.bf16 %v8528, %v8527
        %v8553 = vpack.c.bf16 %v8530, %v8529
        %v8554 = vpack.c.bf16 %v8532, %v8531
        %v8555 = vpack.c.bf16 %v8534, %v8533
        %v8556 = vpack.c.bf16 %v8536, %v8535
        %v8557 = vpack.c.bf16 %v8538, %v8537
        %v8558 = vpack.c.bf16 %v8540, %v8539
        %v8559 = vpack.c.bf16 %v8542, %v8541
        %v8560 = vpack.c.bf16 %v8544, %v8543
        %s8561 = scalar_lea.vmem %s7, 512
        %v8562 = vld [vmem:[%s8561] sm:$0xf]
        %v8563 = vld [vmem:[%s8561 + $0x4] sm:$0xf]
        %v8564 = vld [vmem:[%s8561 + $0x8] sm:$0xf]
        %v8565 = vld [vmem:[%s8561 + $0xc] sm:$0xf]
        %v8566 = vld [vmem:[%s8561 + $0x10] sm:$0xf]
        %v8567 = vld [vmem:[%s8561 + $0x14] sm:$0xf]
        %v8568 = vld [vmem:[%s8561 + $0x18] sm:$0xf]
        %v8569 = vld [vmem:[%s8561 + $0x1c] sm:$0xf]
        %v8570 = vld [vmem:[%s8561 + $0x20] sm:$0xf]
        %v8571 = vld [vmem:[%s8561 + $0x24] sm:$0xf]
        %v8572 = vld [vmem:[%s8561 + $0x28] sm:$0xf]
        %v8573 = vld [vmem:[%s8561 + $0x2c] sm:$0xf]
        %v8574 = vld [vmem:[%s8561 + $0x30] sm:$0xf]
        %v8575 = vld [vmem:[%s8561 + $0x34] sm:$0xf]
        %v8576 = vld [vmem:[%s8561 + $0x38] sm:$0xf]
        %v8577 = vld [vmem:[%s8561 + $0x3c] sm:$0xf]
        %v8594 = vunpack.c.l.b16 %v8562
        %v8595 = vunpack.c.l.b16 %v8563
        %v8596 = vunpack.c.l.b16 %v8564
        %v8597 = vunpack.c.l.b16 %v8565
        %v8598 = vunpack.c.l.b16 %v8566
        %v8599 = vunpack.c.l.b16 %v8567
        %v8600 = vunpack.c.l.b16 %v8568
        %v8601 = vunpack.c.l.b16 %v8569
        %v8602 = vunpack.c.l.b16 %v8570
        %v8603 = vunpack.c.l.b16 %v8571
        %v8604 = vunpack.c.l.b16 %v8572
        %v8605 = vunpack.c.l.b16 %v8573
        %v8606 = vunpack.c.l.b16 %v8574
        %v8607 = vunpack.c.l.b16 %v8575
        %v8608 = vunpack.c.l.b16 %v8576
        %v8609 = vunpack.c.l.b16 %v8577
        %v8610 = vpack.c.b16 %v8595, %v8594
        %v8611 = vpack.c.b16 %v8597, %v8596
        %v8612 = vpack.c.b16 %v8599, %v8598
        %v8613 = vpack.c.b16 %v8601, %v8600
        %v8614 = vpack.c.b16 %v8603, %v8602
        %v8615 = vpack.c.b16 %v8605, %v8604
        %v8616 = vpack.c.b16 %v8607, %v8606
        %v8617 = vpack.c.b16 %v8609, %v8608
        %8626 = vmatprep.subr.bf16.mxu0 0
        %8627 = vmatpush1.bf16.msra.mxu0 %v8617
        %8628 = vmatprep.subr.bf16.mxu0 0
        %8629 = vmatpush1.bf16.msra.mxu0 %v8616
        %8630 = vmatprep.subr.bf16.mxu0 0
        %8631 = vmatpush1.bf16.msra.mxu0 %v8615
        %8632 = vmatprep.subr.bf16.mxu0 0
        %8633 = vmatpush1.bf16.msra.mxu0 %v8614
        %8634 = vmatprep.subr.bf16.mxu0 0
        %8635 = vmatpush1.bf16.msra.mxu0 %v8613
        %8636 = vmatprep.subr.bf16.mxu0 0
        %8637 = vmatpush1.bf16.msra.mxu0 %v8612
        %8638 = vmatprep.subr.bf16.mxu0 0
        %8639 = vmatpush1.bf16.msra.mxu0 %v8611
        %8640 = vmatprep.subr.bf16.mxu0 0
        %8641 = vmatpush1.bf16.msra.mxu0 %v8610
        %8642 = vmatprep.subr.bf16.mxu0 0
        %8643 = vmatpush2.bf16.msra.mxu0 0
        %8644 = vmatprep.subr.bf16.mxu0 0
        %8645 = vmatpush2.bf16.msra.mxu0 0
        %8646 = vmatprep.subr.bf16.mxu0 0
        %8647 = vmatpush2.bf16.msra.mxu0 0
        %8648 = vmatprep.subr.bf16.mxu0 0
        %8649 = vmatpush2.bf16.msra.mxu0 0
        %8650 = vmatprep.subr.bf16.mxu0 0
        %8651 = vmatpush2.bf16.msra.mxu0 0
        %8652 = vmatprep.subr.bf16.mxu0 0
        %8653 = vmatpush2.bf16.msra.mxu0 0
        %8654 = vmatprep.subr.bf16.mxu0 0
        %8655 = vmatpush2.bf16.msra.mxu0 0
        %8656 = vmatprep.subr.bf16.mxu0 0
        %8657 = vmatpush2.bf16.msra.mxu0 0
        %8658 = vmatprep.mubr.bf16.mxu0 0
        %8659 = vmatmul.mubr.bf16.gmra.mxu0 %v8545
        %v8660 = vpop.f32.mrf.mxu0
        %v8661 = vadd.f32 0.0, %v8660
        %v8662 = vpop.f32.mrf.mxu0
        %v8663 = vpop.f32.mrf.mxu0
        %v8664 = vadd.f32 0.0, %v8663
        %v8665 = vpop.f32.mrf.mxu0
        %8666 = vmatprep.mubr.bf16.mxu0 0
        %8667 = vmatmul.mubr.bf16.gmra.mxu0 %v8546
        %v8668 = vpop.f32.mrf.mxu0
        %v8669 = vadd.f32 0.0, %v8668
        %v8670 = vpop.f32.mrf.mxu0
        %v8671 = vpop.f32.mrf.mxu0
        %v8672 = vadd.f32 0.0, %v8671
        %v8673 = vpop.f32.mrf.mxu0
        %8674 = vmatprep.mubr.bf16.mxu0 0
        %8675 = vmatmul.mubr.bf16.gmra.mxu0 %v8547
        %v8676 = vpop.f32.mrf.mxu0
        %v8677 = vadd.f32 0.0, %v8676
        %v8678 = vpop.f32.mrf.mxu0
        %v8679 = vpop.f32.mrf.mxu0
        %v8680 = vadd.f32 0.0, %v8679
        %v8681 = vpop.f32.mrf.mxu0
        %8682 = vmatprep.mubr.bf16.mxu0 0
        %8683 = vmatmul.mubr.bf16.gmra.mxu0 %v8548
        %v8684 = vpop.f32.mrf.mxu0
        %v8685 = vadd.f32 0.0, %v8684
        %v8686 = vpop.f32.mrf.mxu0
        %v8687 = vpop.f32.mrf.mxu0
        %v8688 = vadd.f32 0.0, %v8687
        %v8689 = vpop.f32.mrf.mxu0
        %8690 = vmatprep.mubr.bf16.mxu0 0
        %8691 = vmatmul.mubr.bf16.gmra.mxu0 %v8549
        %v8692 = vpop.f32.mrf.mxu0
        %v8693 = vadd.f32 0.0, %v8692
        %v8694 = vpop.f32.mrf.mxu0
        %v8695 = vpop.f32.mrf.mxu0
        %v8696 = vadd.f32 0.0, %v8695
        %v8697 = vpop.f32.mrf.mxu0
        %8698 = vmatprep.mubr.bf16.mxu0 0
        %8699 = vmatmul.mubr.bf16.gmra.mxu0 %v8550
        %v8700 = vpop.f32.mrf.mxu0
        %v8701 = vadd.f32 0.0, %v8700
        %v8702 = vpop.f32.mrf.mxu0
        %v8703 = vpop.f32.mrf.mxu0
        %v8704 = vadd.f32 0.0, %v8703
        %v8705 = vpop.f32.mrf.mxu0
        %8706 = vmatprep.mubr.bf16.mxu0 0
        %8707 = vmatmul.mubr.bf16.gmra.mxu0 %v8551
        %v8708 = vpop.f32.mrf.mxu0
        %v8709 = vadd.f32 0.0, %v8708
        %v8710 = vpop.f32.mrf.mxu0
        %v8711 = vpop.f32.mrf.mxu0
        %v8712 = vadd.f32 0.0, %v8711
        %v8713 = vpop.f32.mrf.mxu0
        %8714 = vmatprep.mubr.bf16.mxu0 0
        %8715 = vmatmul.mubr.bf16.gmra.mxu0 %v8552
        %v8716 = vpop.f32.mrf.mxu0
        %v8717 = vadd.f32 0.0, %v8716
        %v8718 = vpop.f32.mrf.mxu0
        %v8719 = vpop.f32.mrf.mxu0
        %v8720 = vadd.f32 0.0, %v8719
        %v8721 = vpop.f32.mrf.mxu0
        %8722 = vmatprep.mubr.bf16.mxu0 0
        %8723 = vmatmul.mubr.bf16.gmra.mxu0 %v8553
        %v8724 = vpop.f32.mrf.mxu0
        %v8725 = vadd.f32 0.0, %v8724
        %v8726 = vpop.f32.mrf.mxu0
        %v8727 = vpop.f32.mrf.mxu0
        %v8728 = vadd.f32 0.0, %v8727
        %v8729 = vpop.f32.mrf.mxu0
        %8730 = vmatprep.mubr.bf16.mxu0 0
        %8731 = vmatmul.mubr.bf16.gmra.mxu0 %v8554
        %v8732 = vpop.f32.mrf.mxu0
        %v8733 = vadd.f32 0.0, %v8732
        %v8734 = vpop.f32.mrf.mxu0
        %v8735 = vpop.f32.mrf.mxu0
        %v8736 = vadd.f32 0.0, %v8735
        %v8737 = vpop.f32.mrf.mxu0
        %8738 = vmatprep.mubr.bf16.mxu0 0
        %8739 = vmatmul.mubr.bf16.gmra.mxu0 %v8555
        %v8740 = vpop.f32.mrf.mxu0
        %v8741 = vadd.f32 0.0, %v8740
        %v8742 = vpop.f32.mrf.mxu0
        %v8743 = vpop.f32.mrf.mxu0
        %v8744 = vadd.f32 0.0, %v8743
        %v8745 = vpop.f32.mrf.mxu0
        %8746 = vmatprep.mubr.bf16.mxu0 0
        %8747 = vmatmul.mubr.bf16.gmra.mxu0 %v8556
        %v8748 = vpop.f32.mrf.mxu0
        %v8749 = vadd.f32 0.0, %v8748
        %v8750 = vpop.f32.mrf.mxu0
        %v8751 = vpop.f32.mrf.mxu0
        %v8752 = vadd.f32 0.0, %v8751
        %v8753 = vpop.f32.mrf.mxu0
        %8754 = vmatprep.mubr.bf16.mxu0 0
        %8755 = vmatmul.mubr.bf16.gmra.mxu0 %v8557
        %v8756 = vpop.f32.mrf.mxu0
        %v8757 = vadd.f32 0.0, %v8756
        %v8758 = vpop.f32.mrf.mxu0
        %v8759 = vpop.f32.mrf.mxu0
        %v8760 = vadd.f32 0.0, %v8759
        %v8761 = vpop.f32.mrf.mxu0
        %8762 = vmatprep.mubr.bf16.mxu0 0
        %8763 = vmatmul.mubr.bf16.gmra.mxu0 %v8558
        %v8764 = vpop.f32.mrf.mxu0
        %v8765 = vadd.f32 0.0, %v8764
        %v8766 = vpop.f32.mrf.mxu0
        %v8767 = vpop.f32.mrf.mxu0
        %v8768 = vadd.f32 0.0, %v8767
        %v8769 = vpop.f32.mrf.mxu0
        %8770 = vmatprep.mubr.bf16.mxu0 0
        %8771 = vmatmul.mubr.bf16.gmra.mxu0 %v8559
        %v8772 = vpop.f32.mrf.mxu0
        %v8773 = vadd.f32 0.0, %v8772
        %v8774 = vpop.f32.mrf.mxu0
        %v8775 = vpop.f32.mrf.mxu0
        %v8776 = vadd.f32 0.0, %v8775
        %v8777 = vpop.f32.mrf.mxu0
        %8778 = vmatprep.mubr.bf16.mxu0 0
        %8779 = vmatmul.mubr.bf16.gmra.mxu0 %v8560
        %v8780 = vpop.f32.mrf.mxu0
        %v8781 = vadd.f32 0.0, %v8780
        %v8782 = vpop.f32.mrf.mxu0
        %v8783 = vpop.f32.mrf.mxu0
        %v8784 = vadd.f32 0.0, %v8783
        %v8785 = vpop.f32.mrf.mxu0
        %8786 = vdwg.mxu0
        %v8787 = vadd.f32 %v8449, %v8661
        %v8788 = vadd.f32 %v8450, %v8664
        %v8789 = vadd.f32 %v8451, %v8669
        %v8790 = vadd.f32 %v8452, %v8672
        %v8791 = vadd.f32 %v8453, %v8677
        %v8792 = vadd.f32 %v8454, %v8680
        %v8793 = vadd.f32 %v8455, %v8685
        %v8794 = vadd.f32 %v8456, %v8688
        %v8795 = vadd.f32 %v8457, %v8693
        %v8796 = vadd.f32 %v8458, %v8696
        %v8797 = vadd.f32 %v8459, %v8701
        %v8798 = vadd.f32 %v8460, %v8704
        %v8799 = vadd.f32 %v8461, %v8709
        %v8800 = vadd.f32 %v8462, %v8712
        %v8801 = vadd.f32 %v8463, %v8717
        %v8802 = vadd.f32 %v8464, %v8720
        %v8803 = vadd.f32 %v8465, %v8725
        %v8804 = vadd.f32 %v8466, %v8728
        %v8805 = vadd.f32 %v8467, %v8733
        %v8806 = vadd.f32 %v8468, %v8736
        %v8807 = vadd.f32 %v8469, %v8741
        %v8808 = vadd.f32 %v8470, %v8744
        %v8809 = vadd.f32 %v8471, %v8749
        %v8810 = vadd.f32 %v8472, %v8752
        %v8811 = vadd.f32 %v8473, %v8757
        %v8812 = vadd.f32 %v8474, %v8760
        %v8813 = vadd.f32 %v8475, %v8765
        %v8814 = vadd.f32 %v8476, %v8768
        %v8815 = vadd.f32 %v8477, %v8773
        %v8816 = vadd.f32 %v8478, %v8776
        %v8817 = vadd.f32 %v8479, %v8781
        %v8818 = vadd.f32 %v8480, %v8784
        %v8820 = vlaneseq
        %v8821 = vshrl.u32 %v8820, 7
        %v8822 = vsub.s32 0, %v8821
        %v8823 = vrot.slane %v5899, %v8822
        %v8825 = vadd.f32 %v8787, %v8823
        %v8826 = vadd.f32 %v8788, %v8823
        %v8827 = vadd.f32 %v8789, %v8823
        %v8828 = vadd.f32 %v8790, %v8823
        %v8829 = vadd.f32 %v8791, %v8823
        %v8830 = vadd.f32 %v8792, %v8823
        %v8831 = vadd.f32 %v8793, %v8823
        %v8832 = vadd.f32 %v8794, %v8823
        %v8833 = vadd.f32 %v8795, %v8823
        %v8834 = vadd.f32 %v8796, %v8823
        %v8835 = vadd.f32 %v8797, %v8823
        %v8836 = vadd.f32 %v8798, %v8823
        %v8837 = vadd.f32 %v8799, %v8823
        %v8838 = vadd.f32 %v8800, %v8823
        %v8839 = vadd.f32 %v8801, %v8823
        %v8840 = vadd.f32 %v8802, %v8823
        %v8841 = vadd.f32 %v8803, %v8823
        %v8842 = vadd.f32 %v8804, %v8823
        %v8843 = vadd.f32 %v8805, %v8823
        %v8844 = vadd.f32 %v8806, %v8823
        %v8845 = vadd.f32 %v8807, %v8823
        %v8846 = vadd.f32 %v8808, %v8823
        %v8847 = vadd.f32 %v8809, %v8823
        %v8848 = vadd.f32 %v8810, %v8823
        %v8849 = vadd.f32 %v8811, %v8823
        %v8850 = vadd.f32 %v8812, %v8823
        %v8851 = vadd.f32 %v8813, %v8823
        %v8852 = vadd.f32 %v8814, %v8823
        %v8853 = vadd.f32 %v8815, %v8823
        %v8854 = vadd.f32 %v8816, %v8823
        %v8855 = vadd.f32 %v8817, %v8823
        %v8856 = vadd.f32 %v8818, %v8823
        %v8857 = vpack.c.bf16 %v922, %v921
        %v8858 = vpack.c.bf16 %v924, %v923
        %v8859 = vpack.c.bf16 %v926, %v925
        %v8860 = vpack.c.bf16 %v928, %v927
        %v8861 = vpack.c.bf16 %v930, %v929
        %v8862 = vpack.c.bf16 %v932, %v931
        %v8863 = vpack.c.bf16 %v934, %v933
        %v8864 = vpack.c.bf16 %v936, %v935
        %v8865 = vpack.c.bf16 %v938, %v937
        %v8866 = vpack.c.bf16 %v940, %v939
        %v8867 = vpack.c.bf16 %v942, %v941
        %v8868 = vpack.c.bf16 %v944, %v943
        %v8869 = vpack.c.bf16 %v946, %v945
        %v8870 = vpack.c.bf16 %v948, %v947
        %v8871 = vpack.c.bf16 %v950, %v949
        %v8872 = vpack.c.bf16 %v952, %v951
        %v8873 = vld [vmem:[%s11] sm:$0xf]
        %v8874 = vld [vmem:[%s11 + $0x4] sm:$0xf]
        %v8875 = vld [vmem:[%s11 + $0x8] sm:$0xf]
        %v8876 = vld [vmem:[%s11 + $0xc] sm:$0xf]
        %v8877 = vld [vmem:[%s11 + $0x10] sm:$0xf]
        %v8878 = vld [vmem:[%s11 + $0x14] sm:$0xf]
        %v8879 = vld [vmem:[%s11 + $0x18] sm:$0xf]
        %v8880 = vld [vmem:[%s11 + $0x1c] sm:$0xf]
        %v8881 = vld [vmem:[%s12] sm:$0x1]
        %v8883 = vlaneseq
        %v8884 = vshrl.u32 %v8883, 7
        %v8885 = vsub.s32 0, %v8884
        %v8886 = vrot.slane %v8881, %v8885
        %v8896 = vunpack.c.l.b16 %v8873
        %v8897 = vunpack.c.l.b16 %v8874
        %v8898 = vunpack.c.l.b16 %v8875
        %v8899 = vunpack.c.l.b16 %v8876
        %v8900 = vunpack.c.l.b16 %v8877
        %v8901 = vunpack.c.l.b16 %v8878
        %v8902 = vunpack.c.l.b16 %v8879
        %v8903 = vunpack.c.l.b16 %v8880
        %v8904 = vpack.c.b16 %v8897, %v8896
        %v8905 = vpack.c.b16 %v8899, %v8898
        %v8906 = vpack.c.b16 %v8901, %v8900
        %v8907 = vpack.c.b16 %v8903, %v8902
        %v8913 = vsel %vm963, %v8857, 0
        %v8916 = vsel %vm963, %v8858, 0
        %v8919 = vsel %vm963, %v8859, 0
        %v8922 = vsel %vm963, %v8860, 0
        %v8925 = vsel %vm963, %v8861, 0
        %v8928 = vsel %vm963, %v8862, 0
        %v8931 = vsel %vm963, %v8863, 0
        %v8934 = vsel %vm963, %v8864, 0
        %v8937 = vsel %vm963, %v8865, 0
        %v8940 = vsel %vm963, %v8866, 0
        %v8943 = vsel %vm963, %v8867, 0
        %v8946 = vsel %vm963, %v8868, 0
        %v8949 = vsel %vm963, %v8869, 0
        %v8952 = vsel %vm963, %v8870, 0
        %v8955 = vsel %vm963, %v8871, 0
        %v8958 = vsel %vm963, %v8872, 0
        %8960 = vmatprep.subr.bf16.mxu0 0
        %8961 = vmatpush1.bf16.msra.mxu0 0
        %8962 = vmatprep.subr.bf16.mxu0 0
        %8963 = vmatpush1.bf16.msra.mxu0 0
        %8964 = vmatprep.subr.bf16.mxu0 0
        %8965 = vmatpush1.bf16.msra.mxu0 0
        %8966 = vmatprep.subr.bf16.mxu0 0
        %8967 = vmatpush1.bf16.msra.mxu0 0
        %8968 = vmatprep.subr.bf16.mxu0 0
        %8969 = vmatpush1.bf16.msra.mxu0 %v8907
        %8970 = vmatprep.subr.bf16.mxu0 0
        %8971 = vmatpush1.bf16.msra.mxu0 %v8906
        %8972 = vmatprep.subr.bf16.mxu0 0
        %8973 = vmatpush1.bf16.msra.mxu0 %v8905
        %8974 = vmatprep.subr.bf16.mxu0 0
        %8975 = vmatpush1.bf16.msra.mxu0 %v8904
        %8976 = vmatprep.subr.bf16.mxu0 0
        %8977 = vmatpush2.bf16.msra.mxu0 0
        %8978 = vmatprep.subr.bf16.mxu0 0
        %8979 = vmatpush2.bf16.msra.mxu0 0
        %8980 = vmatprep.subr.bf16.mxu0 0
        %8981 = vmatpush2.bf16.msra.mxu0 0
        %8982 = vmatprep.subr.bf16.mxu0 0
        %8983 = vmatpush2.bf16.msra.mxu0 0
        %8984 = vmatprep.subr.bf16.mxu0 0
        %8985 = vmatpush2.bf16.msra.mxu0 0
        %8986 = vmatprep.subr.bf16.mxu0 0
        %8987 = vmatpush2.bf16.msra.mxu0 0
        %8988 = vmatprep.subr.bf16.mxu0 0
        %8989 = vmatpush2.bf16.msra.mxu0 0
        %8990 = vmatprep.subr.bf16.mxu0 0
        %8991 = vmatpush2.bf16.msra.mxu0 0
        %8992 = vmatprep.mubr.bf16.mxu0 0
        %8993 = vmatmul.mubr.bf16.gmra.mxu0 %v8913
        %v8994 = vpop.f32.mrf.mxu0
        %v8995 = vadd.f32 %v8886, %v8994
        %v8996 = vpop.f32.mrf.mxu0
        %v8997 = vpop.f32.mrf.mxu0
        %v8998 = vadd.f32 %v8886, %v8997
        %v8999 = vpop.f32.mrf.mxu0
        %9000 = vmatprep.mubr.bf16.mxu0 0
        %9001 = vmatmul.mubr.bf16.gmra.mxu0 %v8916
        %v9002 = vpop.f32.mrf.mxu0
        %v9003 = vadd.f32 %v8886, %v9002
        %v9004 = vpop.f32.mrf.mxu0
        %v9005 = vpop.f32.mrf.mxu0
        %v9006 = vadd.f32 %v8886, %v9005
        %v9007 = vpop.f32.mrf.mxu0
        %9008 = vmatprep.mubr.bf16.mxu0 0
        %9009 = vmatmul.mubr.bf16.gmra.mxu0 %v8919
        %v9010 = vpop.f32.mrf.mxu0
        %v9011 = vadd.f32 %v8886, %v9010
        %v9012 = vpop.f32.mrf.mxu0
        %v9013 = vpop.f32.mrf.mxu0
        %v9014 = vadd.f32 %v8886, %v9013
        %v9015 = vpop.f32.mrf.mxu0
        %9016 = vmatprep.mubr.bf16.mxu0 0
        %9017 = vmatmul.mubr.bf16.gmra.mxu0 %v8922
        %v9018 = vpop.f32.mrf.mxu0
        %v9019 = vadd.f32 %v8886, %v9018
        %v9020 = vpop.f32.mrf.mxu0
        %v9021 = vpop.f32.mrf.mxu0
        %v9022 = vadd.f32 %v8886, %v9021
        %v9023 = vpop.f32.mrf.mxu0
        %9024 = vmatprep.mubr.bf16.mxu0 0
        %9025 = vmatmul.mubr.bf16.gmra.mxu0 %v8925
        %v9026 = vpop.f32.mrf.mxu0
        %v9027 = vadd.f32 %v8886, %v9026
        %v9028 = vpop.f32.mrf.mxu0
        %v9029 = vpop.f32.mrf.mxu0
        %v9030 = vadd.f32 %v8886, %v9029
        %v9031 = vpop.f32.mrf.mxu0
        %9032 = vmatprep.mubr.bf16.mxu0 0
        %9033 = vmatmul.mubr.bf16.gmra.mxu0 %v8928
        %v9034 = vpop.f32.mrf.mxu0
        %v9035 = vadd.f32 %v8886, %v9034
        %v9036 = vpop.f32.mrf.mxu0
        %v9037 = vpop.f32.mrf.mxu0
        %v9038 = vadd.f32 %v8886, %v9037
        %v9039 = vpop.f32.mrf.mxu0
        %9040 = vmatprep.mubr.bf16.mxu0 0
        %9041 = vmatmul.mubr.bf16.gmra.mxu0 %v8931
        %v9042 = vpop.f32.mrf.mxu0
        %v9043 = vadd.f32 %v8886, %v9042
        %v9044 = vpop.f32.mrf.mxu0
        %v9045 = vpop.f32.mrf.mxu0
        %v9046 = vadd.f32 %v8886, %v9045
        %v9047 = vpop.f32.mrf.mxu0
        %9048 = vmatprep.mubr.bf16.mxu0 0
        %9049 = vmatmul.mubr.bf16.gmra.mxu0 %v8934
        %v9050 = vpop.f32.mrf.mxu0
        %v9051 = vadd.f32 %v8886, %v9050
        %v9052 = vpop.f32.mrf.mxu0
        %v9053 = vpop.f32.mrf.mxu0
        %v9054 = vadd.f32 %v8886, %v9053
        %v9055 = vpop.f32.mrf.mxu0
        %9056 = vmatprep.mubr.bf16.mxu0 0
        %9057 = vmatmul.mubr.bf16.gmra.mxu0 %v8937
        %v9058 = vpop.f32.mrf.mxu0
        %v9059 = vadd.f32 %v8886, %v9058
        %v9060 = vpop.f32.mrf.mxu0
        %v9061 = vpop.f32.mrf.mxu0
        %v9062 = vadd.f32 %v8886, %v9061
        %v9063 = vpop.f32.mrf.mxu0
        %9064 = vmatprep.mubr.bf16.mxu0 0
        %9065 = vmatmul.mubr.bf16.gmra.mxu0 %v8940
        %v9066 = vpop.f32.mrf.mxu0
        %v9067 = vadd.f32 %v8886, %v9066
        %v9068 = vpop.f32.mrf.mxu0
        %v9069 = vpop.f32.mrf.mxu0
        %v9070 = vadd.f32 %v8886, %v9069
        %v9071 = vpop.f32.mrf.mxu0
        %9072 = vmatprep.mubr.bf16.mxu0 0
        %9073 = vmatmul.mubr.bf16.gmra.mxu0 %v8943
        %v9074 = vpop.f32.mrf.mxu0
        %v9075 = vadd.f32 %v8886, %v9074
        %v9076 = vpop.f32.mrf.mxu0
        %v9077 = vpop.f32.mrf.mxu0
        %v9078 = vadd.f32 %v8886, %v9077
        %v9079 = vpop.f32.mrf.mxu0
        %9080 = vmatprep.mubr.bf16.mxu0 0
        %9081 = vmatmul.mubr.bf16.gmra.mxu0 %v8946
        %v9082 = vpop.f32.mrf.mxu0
        %v9083 = vadd.f32 %v8886, %v9082
        %v9084 = vpop.f32.mrf.mxu0
        %v9085 = vpop.f32.mrf.mxu0
        %v9086 = vadd.f32 %v8886, %v9085
        %v9087 = vpop.f32.mrf.mxu0
        %9088 = vmatprep.mubr.bf16.mxu0 0
        %9089 = vmatmul.mubr.bf16.gmra.mxu0 %v8949
        %v9090 = vpop.f32.mrf.mxu0
        %v9091 = vadd.f32 %v8886, %v9090
        %v9092 = vpop.f32.mrf.mxu0
        %v9093 = vpop.f32.mrf.mxu0
        %v9094 = vadd.f32 %v8886, %v9093
        %v9095 = vpop.f32.mrf.mxu0
        %9096 = vmatprep.mubr.bf16.mxu0 0
        %9097 = vmatmul.mubr.bf16.gmra.mxu0 %v8952
        %v9098 = vpop.f32.mrf.mxu0
        %v9099 = vadd.f32 %v8886, %v9098
        %v9100 = vpop.f32.mrf.mxu0
        %v9101 = vpop.f32.mrf.mxu0
        %v9102 = vadd.f32 %v8886, %v9101
        %v9103 = vpop.f32.mrf.mxu0
        %9104 = vmatprep.mubr.bf16.mxu0 0
        %9105 = vmatmul.mubr.bf16.gmra.mxu0 %v8955
        %v9106 = vpop.f32.mrf.mxu0
        %v9107 = vadd.f32 %v8886, %v9106
        %v9108 = vpop.f32.mrf.mxu0
        %v9109 = vpop.f32.mrf.mxu0
        %v9110 = vadd.f32 %v8886, %v9109
        %v9111 = vpop.f32.mrf.mxu0
        %9112 = vmatprep.mubr.bf16.mxu0 0
        %9113 = vmatmul.mubr.bf16.gmra.mxu0 %v8958
        %v9114 = vpop.f32.mrf.mxu0
        %v9115 = vadd.f32 %v8886, %v9114
        %v9116 = vpop.f32.mrf.mxu0
        %v9117 = vpop.f32.mrf.mxu0
        %v9118 = vadd.f32 %v8886, %v9117
        %v9119 = vpop.f32.mrf.mxu0
        %9120 = vdwg.mxu0
        %v9121 = vadd.f32 %v8995, %v8825
        %v9122 = vadd.f32 %v8998, %v8826
        %v9123 = vadd.f32 %v9003, %v8827
        %v9124 = vadd.f32 %v9006, %v8828
        %v9125 = vadd.f32 %v9011, %v8829
        %v9126 = vadd.f32 %v9014, %v8830
        %v9127 = vadd.f32 %v9019, %v8831
        %v9128 = vadd.f32 %v9022, %v8832
        %v9129 = vadd.f32 %v9027, %v8833
        %v9130 = vadd.f32 %v9030, %v8834
        %v9131 = vadd.f32 %v9035, %v8835
        %v9132 = vadd.f32 %v9038, %v8836
        %v9133 = vadd.f32 %v9043, %v8837
        %v9134 = vadd.f32 %v9046, %v8838
        %v9135 = vadd.f32 %v9051, %v8839
        %v9136 = vadd.f32 %v9054, %v8840
        %v9137 = vadd.f32 %v9059, %v8841
        %v9138 = vadd.f32 %v9062, %v8842
        %v9139 = vadd.f32 %v9067, %v8843
        %v9140 = vadd.f32 %v9070, %v8844
        %v9141 = vadd.f32 %v9075, %v8845
        %v9142 = vadd.f32 %v9078, %v8846
        %v9143 = vadd.f32 %v9083, %v8847
        %v9144 = vadd.f32 %v9086, %v8848
        %v9145 = vadd.f32 %v9091, %v8849
        %v9146 = vadd.f32 %v9094, %v8850
        %v9147 = vadd.f32 %v9099, %v8851
        %v9148 = vadd.f32 %v9102, %v8852
        %v9149 = vadd.f32 %v9107, %v8853
        %v9150 = vadd.f32 %v9110, %v8854
        %v9151 = vadd.f32 %v9115, %v8855
        %v9152 = vadd.f32 %v9118, %v8856
        %9153 = vst [vmem:[%s433] sm:$0xff] %v9121
        %9154 = vst [vmem:[%s433 + $0x8] sm:$0xff] %v9122
        %9155 = vst [vmem:[%s433 + $0x10] sm:$0xff] %v9123
        %9156 = vst [vmem:[%s433 + $0x18] sm:$0xff] %v9124
        %9157 = vst [vmem:[%s433 + $0x20] sm:$0xff] %v9125
        %9158 = vst [vmem:[%s433 + $0x28] sm:$0xff] %v9126
        %9159 = vst [vmem:[%s433 + $0x30] sm:$0xff] %v9127
        %9160 = vst [vmem:[%s433 + $0x38] sm:$0xff] %v9128
        %9161 = vst [vmem:[%s433 + $0x40] sm:$0xff] %v9129
        %9162 = vst [vmem:[%s433 + $0x48] sm:$0xff] %v9130
        %9163 = vst [vmem:[%s433 + $0x50] sm:$0xff] %v9131
        %9164 = vst [vmem:[%s433 + $0x58] sm:$0xff] %v9132
        %9165 = vst [vmem:[%s433 + $0x60] sm:$0xff] %v9133
        %9166 = vst [vmem:[%s433 + $0x68] sm:$0xff] %v9134
        %9167 = vst [vmem:[%s433 + $0x70] sm:$0xff] %v9135
        %9168 = vst [vmem:[%s433 + $0x78] sm:$0xff] %v9136
        %9169 = vst [vmem:[%s433 + $0x80] sm:$0xff] %v9137
        %9170 = vst [vmem:[%s433 + $0x88] sm:$0xff] %v9138
        %9171 = vst [vmem:[%s433 + $0x90] sm:$0xff] %v9139
        %9172 = vst [vmem:[%s433 + $0x98] sm:$0xff] %v9140
        %9173 = vst [vmem:[%s433 + $0xa0] sm:$0xff] %v9141
        %9174 = vst [vmem:[%s433 + $0xa8] sm:$0xff] %v9142
        %9175 = vst [vmem:[%s433 + $0xb0] sm:$0xff] %v9143
        %9176 = vst [vmem:[%s433 + $0xb8] sm:$0xff] %v9144
        %9177 = vst [vmem:[%s433 + $0xc0] sm:$0xff] %v9145
        %9178 = vst [vmem:[%s433 + $0xc8] sm:$0xff] %v9146
        %9179 = vst [vmem:[%s433 + $0xd0] sm:$0xff] %v9147
        %9180 = vst [vmem:[%s433 + $0xd8] sm:$0xff] %v9148
        %9181 = vst [vmem:[%s433 + $0xe0] sm:$0xff] %v9149
        %9182 = vst [vmem:[%s433 + $0xe8] sm:$0xff] %v9150
        %9183 = vst [vmem:[%s433 + $0xf0] sm:$0xff] %v9151
        %9184 = vst [vmem:[%s433 + $0xf8] sm:$0xff] %v9152
        %s9185 = sand.u32 %s313, 1
        %s9186 = scalar_lea.sflag [#allocation5], %s9185
        %s9187 = sand.u32 %s313, 1
        %s9188 = smul.addr %s9187, 256
        %s9189 = scalar_lea.vmem [#allocation4], %s9188
        // Predicated region
        $region73: #{tpu_custom_call.1} parent=71 // pred_check
          %p9190 = pneg %p323
        $region74: #{tpu_custom_call.1} parent=71 // pred_check_branch
          %9192 = sbr.rel (%p9190) target = $region76
        $region75: #{tpu_custom_call.1} parent=71 // pred_region
          %s9194 = ssub.s32 4096, 4096
          %9195 = vsyncadd %s9186, %s9194
          %s9196 = smul.addr %s27, 32
          %s9197 = smul.addr %s9196, 128
          %s9198 = scalar_lea.hbm %s13, %s9197
          %s9199 = sshll.u32 %s9189, 4
          %s9200 = int_to_ptr.vmem [resolvable:$true] %s9199
          %9205 = dma.vmem_to_hbm [thread:$0]  %s9200, 4096, %s9198, %s9186, 128, 128, 8
        $region76: #{tpu_custom_call.1} parent=71 // pred_fallthru
          _
      $region72: #{tpu_custom_call.1} parent=5 // pred_fallthru
        _
      %p9206 = scmp.le.s32.totalorder 2, %s22
      // Predicated region
      $region77: #{tpu_custom_call.1} parent=5 // pred_check
        %p9207 = pneg %p9206
      $region78: #{tpu_custom_call.1} parent=5 // pred_check_branch
        %9209 = sbr.rel (%p9207) target = $region80
      $region79: #{tpu_custom_call.1} parent=5 // pred_region
        %s9210 = ssub.s32 %s22, 2
        // Predicated region
        $region81: #{tpu_custom_call.1} parent=79 // pred_check
          %p9211 = pneg %p329
        $region82: #{tpu_custom_call.1} parent=79 // pred_check_branch
          %9213 = sbr.rel (%p9211) target = $region84
        $region83: #{tpu_custom_call.1} parent=79 // pred_region
          %s9214 = sand.u32 %s314, 1
          %s9215 = scalar_lea.sflag [#allocation5], %s9214
          %s9216 = sand.u32 %s314, 1
          %s9217 = smul.addr %s9216, 256
          %s9218 = scalar_lea.vmem [#allocation4], %s9217
          %9219 = dma.done %s9215, 4096
        $region84: #{tpu_custom_call.1} parent=79 // pred_fallthru
          _
      $region80: #{tpu_custom_call.1} parent=5 // pred_fallthru
        _
    $region6: #{tpu_custom_call.1} parent=1 // loop_footer
      %s26 = sadd.s32 1, %s22
    $region7: #{tpu_custom_call.1} parent=1 // loop_footer_branch
      %21 = sbr.rel target = $region3
    $region8: #{tpu_custom_call.1} parent=1 // loop_exit
      _
    %9220 = vsyncpa [#allocation5], 1
    %s9221 = scalar_lea.sflag [#allocation5], 1
    %9222 = vsyncpa %s9221, 1

</llo_original>
